<compile_context>
chip_gen: v5e
topology: v5e:2x2
jax: 0.10.0
libtpu: 0.0.40
codegen_flags: <defaults>
</compile_context>

<pallas_src>
from functools import partial

import jax
import jax.numpy as jnp
from jax.experimental import pallas as pl
from jax.experimental.pallas import tpu as pltpu

# Hidden sizes fixed by the module's __init__ (6000/10, 4000/10, 2000/10,
# 200/10) and their 128-lane-aligned padded versions.
N6, N4, N2, N10 = 600, 400, 200, 20
N6P, N4P, N2P, N10P = 640, 512, 256, 128


def gbnn_kernel(pM_ref, dt_ref,
                sw1, sw2, sw3, sw4, sw5, sae_b,
                pw1, pw2, pw3, dw1, dw2, dw3,
                g2w, g4w, g6w, g3c, g5c,
                bs1, bs2, bs3,
                h7, h8, h9, hb,
                out_ref):
    f32, bf16 = jnp.float32, jnp.bfloat16
    mm = lambda a, b: jnp.dot(a, b, preferred_element_type=f32)
    c = lambda a: a.astype(bf16)

    # --- SAE stack (purely linear in the reference forward; chained biases
    #     pre-folded into sae_b by the wrapper).
    x = mm(pM_ref[...], sw1[...])                     # (TM, 512)
    x = mm(c(x), sw2[...])                            # (TM, 256)
    x = mm(c(x), sw3[...])                            # (TM, 128)
    x = mm(c(x), sw4[...])                            # (TM, 256)
    p1b = c(mm(c(x), sw5[...]) + sae_b[...])          # (TM, 512) == p_M1 (padded)
    dtb = dt_ref[...]                                 # (TM, d_pad) == d_M1.T (padded)

    # --- stage 1: stage1 = gnet_2(gnet_1([p_M1 | d_t]))  (cat via split weights)
    b1 = mm(p1b, pw1[...]) + mm(dtb, dw1[...])        # (TM, 640)
    s1b = c(mm(c(b1), g2w[...]) + bs1[...])           # (TM, 256)
    # head 1 accumulated immediately (independent MXU work between stages)
    y = mm(s1b, h7[...]) + hb[...]                    # (TM, d_pad)

    # --- stage 2: gnet_4(gnet_3([pd_pair | stage1]))
    b2 = mm(p1b, pw2[...]) + mm(dtb, dw2[...]) + mm(s1b, g3c[...])
    s2b = c(mm(c(b2), g4w[...]) + bs2[...])
    y = y + mm(s2b, h8[...])

    # --- stage 3: gnet_6(gnet_5([pd_pair | stage2]))
    b3 = mm(p1b, pw3[...]) + mm(dtb, dw3[...]) + mm(s2b, g5c[...])
    s3b = c(mm(c(b3), g6w[...]) + bs3[...])
    y = y + mm(s3b, h9[...])

    # /3 is folded into h7/h8/h9 and hb.  Padded lanes end up sigmoid(0)=0.5
    # and are sliced off in the wrapper.
    out_ref[...] = jax.nn.sigmoid(y)


def _pad2(x, rows, cols):
    return jnp.pad(x, ((0, rows - x.shape[0]), (0, cols - x.shape[1])))


def _auto_config():
    """(tile_m, vmem_limit_bytes) per TPU generation."""
    try:
        kind = jax.devices()[0].device_kind.lower()
    except Exception:
        kind = ""
    if "v7" in kind:                 # 64 MiB physical VMEM, 2 TensorCores
        return 256, 40 << 20
    if "v5" in kind or "v6" in kind:  # 128 MiB physical VMEM
        return 512, 96 << 20
    return 256, 40 << 20             # conservative default


_BUFFERED = getattr(pl, "Buffered", None)


def _resident_spec(shape):
    """Constant-index (VMEM-resident) spec; single-buffered when supported."""
    if _BUFFERED is not None:
        try:
            return pl.BlockSpec(shape, lambda i: (0, 0),
                                pipeline_mode=_BUFFERED(1))
        except TypeError:
            pass
    return pl.BlockSpec(shape, lambda i: (0, 0))


@partial(jax.jit, static_argnames=("tile_m",))
def gbnn_forward(p_M, d_M, params, tile_m=None):
    """GBNN forward.  tile_m=None auto-selects per TPU generation."""
    bf16 = jnp.bfloat16
    num_p = p_M.shape[0]
    num_d = d_M.shape[0]
    d_pad = ((num_d + 127) // 128) * 128

    auto_tm, vmem_limit = _auto_config()
    tm = min(tile_m if tile_m is not None else auto_tm, num_p)
    if tm < num_p:
        tm = max(8, (tm // 8) * 8)
    if pl.cdiv(num_p, tm) < 2 and num_p >= 16:
        # keep >= 2 grid steps so the "parallel" row axis can feed both v7x cores
        tm = ((num_p + 1) // 2 + 7) // 8 * 8

    W = lambda n: params[n + "_w"]
    B = lambda n: params[n + "_b"]

    # ---- disease branch hoisted out of the kernel (grid-invariant, tiny) ----
    d_M1 = d_M @ W("d_dense") + B("d_dense")                    # (num_d, num_p)
    d_t = _pad2(d_M1.T, num_p, d_pad).astype(bf16)              # (num_p, d_pad)
    p_in = p_M.astype(bf16)

    # ---- SAE weights zero-padded to 128-aligned widths, bf16; folded bias f32
    sw1 = _pad2(W("sae_1"), num_p, N4P).astype(bf16)
    sw2 = _pad2(W("sae_2"), N4P, N2P).astype(bf16)
    sw3 = _pad2(W("sae_3"), N2P, N10P).astype(bf16)
    sw4 = _pad2(W("sae_4"), N10P, N2P).astype(bf16)
    sw5 = _pad2(W("sae_5"), N2P, N4P).astype(bf16)
    sae_b = ((((B("sae_1") @ W("sae_2") + B("sae_2")) @ W("sae_3") + B("sae_3"))
              @ W("sae_4") + B("sae_4")) @ W("sae_5") + B("sae_5"))
    sae_b = _pad2(sae_b, 1, N4P)

    # ---- gnet_1/3/5 weights split along their input axis (torch.cat(dim=1))
    #      into p_M1-part, d_t-part, and (for 3/5) stage-feedback part.
    g1, g3, g5 = W("gnet_1"), W("gnet_3"), W("gnet_5")
    pw1 = _pad2(g1[:N4], N4P, N6P).astype(bf16)
    dw1 = _pad2(g1[N4:], d_pad, N6P).astype(bf16)
    pw2 = _pad2(g3[:N4], N4P, N6P).astype(bf16)
    dw2 = _pad2(g3[N4:N4 + num_d], d_pad, N6P).astype(bf16)
    g3c = _pad2(g3[N4 + num_d:], N2P, N6P).astype(bf16)
    pw3 = _pad2(g5[:N4], N4P, N6P).astype(bf16)
    dw3 = _pad2(g5[N4:N4 + num_d], d_pad, N6P).astype(bf16)
    g5c = _pad2(g5[N4 + num_d:], N2P, N6P).astype(bf16)

    g2w = _pad2(W("gnet_2"), N6P, N2P).astype(bf16)
    g4w = _pad2(W("gnet_4"), N6P, N2P).astype(bf16)
    g6w = _pad2(W("gnet_6"), N6P, N2P).astype(bf16)

    # Folded stage biases (exact: no nonlinearity between gnet_{1,3,5} and {2,4,6})
    bs1 = _pad2(B("gnet_1") @ W("gnet_2") + B("gnet_2"), 1, N2P)
    bs2 = _pad2(B("gnet_3") @ W("gnet_4") + B("gnet_4"), 1, N2P)
    bs3 = _pad2(B("gnet_5") @ W("gnet_6") + B("gnet_6"), 1, N2P)

    # Heads with /3 folded in, output lanes zero-padded to d_pad
    h7 = _pad2(W("gnet_7") / 3.0, N2P, d_pad).astype(bf16)
    h8 = _pad2(W("gnet_8") / 3.0, N2P, d_pad).astype(bf16)
    h9 = _pad2(W("gnet_9") / 3.0, N2P, d_pad).astype(bf16)
    hb = _pad2((B("gnet_7") + B("gnet_8") + B("gnet_9")) / 3.0, 1, d_pad)

    inputs = [p_in, d_t,
              sw1, sw2, sw3, sw4, sw5, sae_b,
              pw1, pw2, pw3, dw1, dw2, dw3,
              g2w, g4w, g6w, g3c, g5c,
              bs1, bs2, bs3,
              h7, h8, h9, hb]

    row_spec_p = pl.BlockSpec((tm, num_p), lambda i: (i, 0))
    row_spec_d = pl.BlockSpec((tm, d_pad), lambda i: (i, 0))
    resident = [_resident_spec(w.shape) for w in inputs[2:]]
    in_specs = [row_spec_p, row_spec_d] + resident
    out_spec = pl.BlockSpec((tm, d_pad), lambda i: (i, 0))

    per_row_macs = (
        num_p * N4P + N4P * N2P + N2P * N10P + N10P * N2P + N2P * N4P  # SAE
        + 3 * (N4P + d_pad) * N6P                                      # base chunks
        + 2 * N2P * N6P                                                # stage feedback
        + 3 * N6P * N2P                                                # gnet_2/4/6
        + 3 * N2P * d_pad                                              # heads
    )
    cost = pl.CostEstimate(
        flops=2 * num_p * per_row_macs,
        transcendentals=num_p * d_pad,
        bytes_accessed=sum(int(a.size) * a.dtype.itemsize for a in inputs)
        + num_p * d_pad * 4,
    )

    out = pl.pallas_call(
        gbnn_kernel,
        out_shape=jax.ShapeDtypeStruct((num_p, d_pad), jnp.float32),
        grid=(pl.cdiv(num_p, tm),),
        in_specs=in_specs,
        out_specs=out_spec,
        compiler_params=pltpu.CompilerParams(
            dimension_semantics=("parallel",),
            vmem_limit_bytes=vmem_limit,
        ),
        cost_estimate=cost,
    )(*inputs)
    # Padded output lanes hold sigmoid(0)=0.5 -- never expose the unsliced buffer.
    return out[:, :num_d]


def init_params(key, num_p, num_d):
    """Deterministic synthetic parameters (weights as (in, out), biases as (1, out))."""
    shapes = {
        "sae_1": (num_p, N4), "sae_2": (N4, N2), "sae_3": (N2, N10),
        "sae_4": (N10, N2), "sae_5": (N2, N4),
        "d_dense": (num_d, num_p),
        "gnet_1": (N4 + num_d, N6), "gnet_2": (N6, N2),
        "gnet_3": (N4 + num_d + N2, N6), "gnet_4": (N6, N2),
        "gnet_5": (N4 + num_d + N2, N6), "gnet_6": (N6, N2),
        "gnet_7": (N2, num_d), "gnet_8": (N2, num_d), "gnet_9": (N2, num_d),
    }
    params = {}
    keys = jax.random.split(key, 2 * len(shapes))
    for i, (name, (fin, fout)) in enumerate(shapes.items()):
        kw, kb = keys[2 * i], keys[2 * i + 1]
        scale = 1.0 / jnp.sqrt(jnp.float32(fin))
        params[name + "_w"] = jax.random.normal(kw, (fin, fout), jnp.float32) * scale
        params[name + "_b"] = jax.random.normal(kb, (1, fout), jnp.float32) * scale
    return params


def gbnn_reference(p_M, d_M, params):
    """Pure-JAX f32 replica of the PyTorch forward (for correctness checking)."""
    lin = lambda x, n: x @ params[n + "_w"] + params[n + "_b"]
    p1 = lin(lin(lin(lin(lin(p_M, "sae_1"), "sae_2"), "sae_3"), "sae_4"), "sae_5")
    d1 = lin(d_M, "d_dense")
    pd = jnp.concatenate([p1, d1.T], axis=1)
    s1 = lin(lin(pd, "gnet_1"), "gnet_2")
    f1 = lin(s1, "gnet_7")
    s2 = lin(lin(jnp.concatenate([pd, s1], axis=1), "gnet_3"), "gnet_4")
    f2 = lin(s2, "gnet_8")
    s3 = lin(lin(jnp.concatenate([pd, s2], axis=1), "gnet_5"), "gnet_6")
    f3 = lin(s3, "gnet_9")
    return jax.nn.sigmoid((f1 + f2 + f3) / 3.0)


if __name__ == "__main__":
    num_p, num_d = 32, 16   # small synthetic problem sizes
    key = jax.random.PRNGKey(0)
    kp, kd, kw = jax.random.split(key, 3)
    p_M = jax.random.normal(kp, (num_p, num_p), jnp.float32)  # piRNA similarity matrix
    d_M = jax.random.normal(kd, (num_d, num_d), jnp.float32)  # disease similarity matrix
    params = init_params(kw, num_p, num_d)

    out = gbnn_forward(p_M, d_M, params)
    out = jax.block_until_ready(out)
    assert out.shape == (num_p, num_d) and out.dtype == jnp.float32
    assert bool(jnp.all(jnp.isfinite(out)))

    ref = gbnn_reference(p_M, d_M, params)
    # Loose tolerance: kernel uses bf16 weights / bf16 inter-layer casts with
    # f32 MXU accumulation; outputs are post-sigmoid in [0, 1].
    max_err = float(jnp.max(jnp.abs(out - ref)))
    assert max_err < 0.1, f"mismatch vs f32 reference: max abs err {max_err}"
    print("KERNEL_OK")
</pallas_src>

<mosaic_0001>
module attributes {stable_mosaic.version = 11 : i64} {
  func.func @gbnn_kernel(%arg0: i32, %arg1: memref<16x32xbf16, #tpu.memory_space<vmem>>, %arg2: memref<16x128xbf16, #tpu.memory_space<vmem>>, %arg3: memref<32x512xbf16, #tpu.memory_space<vmem>>, %arg4: memref<512x256xbf16, #tpu.memory_space<vmem>>, %arg5: memref<256x128xbf16, #tpu.memory_space<vmem>>, %arg6: memref<128x256xbf16, #tpu.memory_space<vmem>>, %arg7: memref<256x512xbf16, #tpu.memory_space<vmem>>, %arg8: memref<1x512xf32, #tpu.memory_space<vmem>>, %arg9: memref<512x640xbf16, #tpu.memory_space<vmem>>, %arg10: memref<512x640xbf16, #tpu.memory_space<vmem>>, %arg11: memref<512x640xbf16, #tpu.memory_space<vmem>>, %arg12: memref<128x640xbf16, #tpu.memory_space<vmem>>, %arg13: memref<128x640xbf16, #tpu.memory_space<vmem>>, %arg14: memref<128x640xbf16, #tpu.memory_space<vmem>>, %arg15: memref<640x256xbf16, #tpu.memory_space<vmem>>, %arg16: memref<640x256xbf16, #tpu.memory_space<vmem>>, %arg17: memref<640x256xbf16, #tpu.memory_space<vmem>>, %arg18: memref<256x640xbf16, #tpu.memory_space<vmem>>, %arg19: memref<256x640xbf16, #tpu.memory_space<vmem>>, %arg20: memref<1x256xf32, #tpu.memory_space<vmem>>, %arg21: memref<1x256xf32, #tpu.memory_space<vmem>>, %arg22: memref<1x256xf32, #tpu.memory_space<vmem>>, %arg23: memref<256x128xbf16, #tpu.memory_space<vmem>>, %arg24: memref<256x128xbf16, #tpu.memory_space<vmem>>, %arg25: memref<256x128xbf16, #tpu.memory_space<vmem>>, %arg26: memref<1x128xf32, #tpu.memory_space<vmem>>, %arg27: memref<16x128xf32, #tpu.memory_space<vmem>>) attributes {dimension_semantics = [#tpu.dimension_semantics<parallel>], iteration_bounds = array<i64: 2>, scalar_prefetch = 0 : i64, scratch_operands = 0 : i64, tpu.core_type = #tpu.core_type<tc>, window_params = [{transform_indices = @transform_0, window_bounds = array<i64: 16, 32>}, {transform_indices = @transform_1, window_bounds = array<i64: 16, 128>}, {pipeline_mode = #tpu.pipeline_mode<synchronous>, transform_indices = @transform_2, window_bounds = array<i64: 32, 512>}, {pipeline_mode = #tpu.pipeline_mode<synchronous>, transform_indices = @transform_3, window_bounds = array<i64: 512, 256>}, {pipeline_mode = #tpu.pipeline_mode<synchronous>, transform_indices = @transform_4, window_bounds = array<i64: 256, 128>}, {pipeline_mode = #tpu.pipeline_mode<synchronous>, transform_indices = @transform_5, window_bounds = array<i64: 128, 256>}, {pipeline_mode = #tpu.pipeline_mode<synchronous>, transform_indices = @transform_6, window_bounds = array<i64: 256, 512>}, {pipeline_mode = #tpu.pipeline_mode<synchronous>, transform_indices = @transform_7, window_bounds = array<i64: 1, 512>}, {pipeline_mode = #tpu.pipeline_mode<synchronous>, transform_indices = @transform_8, window_bounds = array<i64: 512, 640>}, {pipeline_mode = #tpu.pipeline_mode<synchronous>, transform_indices = @transform_9, window_bounds = array<i64: 512, 640>}, {pipeline_mode = #tpu.pipeline_mode<synchronous>, transform_indices = @transform_10, window_bounds = array<i64: 512, 640>}, {pipeline_mode = #tpu.pipeline_mode<synchronous>, transform_indices = @transform_11, window_bounds = array<i64: 128, 640>}, {pipeline_mode = #tpu.pipeline_mode<synchronous>, transform_indices = @transform_12, window_bounds = array<i64: 128, 640>}, {pipeline_mode = #tpu.pipeline_mode<synchronous>, transform_indices = @transform_13, window_bounds = array<i64: 128, 640>}, {pipeline_mode = #tpu.pipeline_mode<synchronous>, transform_indices = @transform_14, window_bounds = array<i64: 640, 256>}, {pipeline_mode = #tpu.pipeline_mode<synchronous>, transform_indices = @transform_15, window_bounds = array<i64: 640, 256>}, {pipeline_mode = #tpu.pipeline_mode<synchronous>, transform_indices = @transform_16, window_bounds = array<i64: 640, 256>}, {pipeline_mode = #tpu.pipeline_mode<synchronous>, transform_indices = @transform_17, window_bounds = array<i64: 256, 640>}, {pipeline_mode = #tpu.pipeline_mode<synchronous>, transform_indices = @transform_18, window_bounds = array<i64: 256, 640>}, {pipeline_mode = #tpu.pipeline_mode<synchronous>, transform_indices = @transform_19, window_bounds = array<i64: 1, 256>}, {pipeline_mode = #tpu.pipeline_mode<synchronous>, transform_indices = @transform_20, window_bounds = array<i64: 1, 256>}, {pipeline_mode = #tpu.pipeline_mode<synchronous>, transform_indices = @transform_21, window_bounds = array<i64: 1, 256>}, {pipeline_mode = #tpu.pipeline_mode<synchronous>, transform_indices = @transform_22, window_bounds = array<i64: 256, 128>}, {pipeline_mode = #tpu.pipeline_mode<synchronous>, transform_indices = @transform_23, window_bounds = array<i64: 256, 128>}, {pipeline_mode = #tpu.pipeline_mode<synchronous>, transform_indices = @transform_24, window_bounds = array<i64: 256, 128>}, {pipeline_mode = #tpu.pipeline_mode<synchronous>, transform_indices = @transform_25, window_bounds = array<i64: 1, 128>}, {transform_indices = @transform_26, window_bounds = array<i64: 16, 128>}]} {
    %c0 = arith.constant 0 : index
    %c0_0 = arith.constant 0 : index
    %0 = vector.load %arg1[%c0, %c0_0] : memref<16x32xbf16, #tpu.memory_space<vmem>>, vector<16x32xbf16>
    %c0_1 = arith.constant 0 : index
    %c0_2 = arith.constant 0 : index
    %1 = vector.load %arg3[%c0_1, %c0_2] : memref<32x512xbf16, #tpu.memory_space<vmem>>, vector<32x512xbf16>
    %cst = arith.constant dense<0.000000e+00> : vector<16x512xf32>
    %2 = tpu.matmul %0, %1, %cst {dimension_numbers = #tpu.dot_dimension_numbers<[1], [0], [0], [1], [0, 0, 1, 1], [], []>} : vector<16x32xbf16>, vector<32x512xbf16>, vector<16x512xf32> -> vector<16x512xf32>
    %3 = arith.truncf %2 : vector<16x512xf32> to vector<16x512xbf16>
    %c0_3 = arith.constant 0 : index
    %c0_4 = arith.constant 0 : index
    %4 = vector.load %arg4[%c0_3, %c0_4] : memref<512x256xbf16, #tpu.memory_space<vmem>>, vector<512x256xbf16>
    %cst_5 = arith.constant dense<0.000000e+00> : vector<16x256xf32>
    %5 = tpu.matmul %3, %4, %cst_5 {dimension_numbers = #tpu.dot_dimension_numbers<[1], [0], [0], [1], [0, 0, 1, 1], [], []>} : vector<16x512xbf16>, vector<512x256xbf16>, vector<16x256xf32> -> vector<16x256xf32>
    %6 = arith.truncf %5 : vector<16x256xf32> to vector<16x256xbf16>
    %c0_6 = arith.constant 0 : index
    %c0_7 = arith.constant 0 : index
    %7 = vector.load %arg5[%c0_6, %c0_7] : memref<256x128xbf16, #tpu.memory_space<vmem>>, vector<256x128xbf16>
    %cst_8 = arith.constant dense<0.000000e+00> : vector<16x128xf32>
    %8 = tpu.matmul %6, %7, %cst_8 {dimension_numbers = #tpu.dot_dimension_numbers<[1], [0], [0], [1], [0, 0, 1, 1], [], []>} : vector<16x256xbf16>, vector<256x128xbf16>, vector<16x128xf32> -> vector<16x128xf32>
    %9 = arith.truncf %8 : vector<16x128xf32> to vector<16x128xbf16>
    %c0_9 = arith.constant 0 : index
    %c0_10 = arith.constant 0 : index
    %10 = vector.load %arg6[%c0_9, %c0_10] : memref<128x256xbf16, #tpu.memory_space<vmem>>, vector<128x256xbf16>
    %cst_11 = arith.constant dense<0.000000e+00> : vector<16x256xf32>
    %11 = tpu.matmul %9, %10, %cst_11 {dimension_numbers = #tpu.dot_dimension_numbers<[1], [0], [0], [1], [0, 0, 1, 1], [], []>} : vector<16x128xbf16>, vector<128x256xbf16>, vector<16x256xf32> -> vector<16x256xf32>
    %12 = arith.truncf %11 : vector<16x256xf32> to vector<16x256xbf16>
    %c0_12 = arith.constant 0 : index
    %c0_13 = arith.constant 0 : index
    %13 = vector.load %arg7[%c0_12, %c0_13] : memref<256x512xbf16, #tpu.memory_space<vmem>>, vector<256x512xbf16>
    %cst_14 = arith.constant dense<0.000000e+00> : vector<16x512xf32>
    %14 = tpu.matmul %12, %13, %cst_14 {dimension_numbers = #tpu.dot_dimension_numbers<[1], [0], [0], [1], [0, 0, 1, 1], [], []>} : vector<16x256xbf16>, vector<256x512xbf16>, vector<16x512xf32> -> vector<16x512xf32>
    %c0_15 = arith.constant 0 : index
    %c0_16 = arith.constant 0 : index
    %15 = vector.load %arg8[%c0_15, %c0_16] : memref<1x512xf32, #tpu.memory_space<vmem>>, vector<1x512xf32>
    %16 = vector.broadcast %15 : vector<1x512xf32> to vector<16x512xf32>
    %17 = arith.addf %14, %16 : vector<16x512xf32>
    %18 = arith.truncf %17 : vector<16x512xf32> to vector<16x512xbf16>
    %c0_17 = arith.constant 0 : index
    %c0_18 = arith.constant 0 : index
    %19 = vector.load %arg2[%c0_17, %c0_18] : memref<16x128xbf16, #tpu.memory_space<vmem>>, vector<16x128xbf16>
    %c0_19 = arith.constant 0 : index
    %c0_20 = arith.constant 0 : index
    %20 = vector.load %arg9[%c0_19, %c0_20] : memref<512x640xbf16, #tpu.memory_space<vmem>>, vector<512x640xbf16>
    %cst_21 = arith.constant dense<0.000000e+00> : vector<16x640xf32>
    %21 = tpu.matmul %18, %20, %cst_21 {dimension_numbers = #tpu.dot_dimension_numbers<[1], [0], [0], [1], [0, 0, 1, 1], [], []>} : vector<16x512xbf16>, vector<512x640xbf16>, vector<16x640xf32> -> vector<16x640xf32>
    %c0_22 = arith.constant 0 : index
    %c0_23 = arith.constant 0 : index
    %22 = vector.load %arg12[%c0_22, %c0_23] : memref<128x640xbf16, #tpu.memory_space<vmem>>, vector<128x640xbf16>
    %cst_24 = arith.constant dense<0.000000e+00> : vector<16x640xf32>
    %23 = tpu.matmul %19, %22, %cst_24 {dimension_numbers = #tpu.dot_dimension_numbers<[1], [0], [0], [1], [0, 0, 1, 1], [], []>} : vector<16x128xbf16>, vector<128x640xbf16>, vector<16x640xf32> -> vector<16x640xf32>
    %24 = arith.addf %21, %23 : vector<16x640xf32>
    %25 = arith.truncf %24 : vector<16x640xf32> to vector<16x640xbf16>
    %c0_25 = arith.constant 0 : index
    %c0_26 = arith.constant 0 : index
    %26 = vector.load %arg15[%c0_25, %c0_26] : memref<640x256xbf16, #tpu.memory_space<vmem>>, vector<640x256xbf16>
    %cst_27 = arith.constant dense<0.000000e+00> : vector<16x256xf32>
    %27 = tpu.matmul %25, %26, %cst_27 {dimension_numbers = #tpu.dot_dimension_numbers<[1], [0], [0], [1], [0, 0, 1, 1], [], []>} : vector<16x640xbf16>, vector<640x256xbf16>, vector<16x256xf32> -> vector<16x256xf32>
    %c0_28 = arith.constant 0 : index
    %c0_29 = arith.constant 0 : index
    %28 = vector.load %arg20[%c0_28, %c0_29] : memref<1x256xf32, #tpu.memory_space<vmem>>, vector<1x256xf32>
    %29 = vector.broadcast %28 : vector<1x256xf32> to vector<16x256xf32>
    %30 = arith.addf %27, %29 : vector<16x256xf32>
    %31 = arith.truncf %30 : vector<16x256xf32> to vector<16x256xbf16>
    %c0_30 = arith.constant 0 : index
    %c0_31 = arith.constant 0 : index
    %32 = vector.load %arg23[%c0_30, %c0_31] : memref<256x128xbf16, #tpu.memory_space<vmem>>, vector<256x128xbf16>
    %cst_32 = arith.constant dense<0.000000e+00> : vector<16x128xf32>
    %33 = tpu.matmul %31, %32, %cst_32 {dimension_numbers = #tpu.dot_dimension_numbers<[1], [0], [0], [1], [0, 0, 1, 1], [], []>} : vector<16x256xbf16>, vector<256x128xbf16>, vector<16x128xf32> -> vector<16x128xf32>
    %c0_33 = arith.constant 0 : index
    %c0_34 = arith.constant 0 : index
    %34 = vector.load %arg26[%c0_33, %c0_34] : memref<1x128xf32, #tpu.memory_space<vmem>>, vector<1x128xf32>
    %35 = vector.broadcast %34 : vector<1x128xf32> to vector<16x128xf32>
    %36 = arith.addf %33, %35 : vector<16x128xf32>
    %c0_35 = arith.constant 0 : index
    %c0_36 = arith.constant 0 : index
    %37 = vector.load %arg10[%c0_35, %c0_36] : memref<512x640xbf16, #tpu.memory_space<vmem>>, vector<512x640xbf16>
    %cst_37 = arith.constant dense<0.000000e+00> : vector<16x640xf32>
    %38 = tpu.matmul %18, %37, %cst_37 {dimension_numbers = #tpu.dot_dimension_numbers<[1], [0], [0], [1], [0, 0, 1, 1], [], []>} : vector<16x512xbf16>, vector<512x640xbf16>, vector<16x640xf32> -> vector<16x640xf32>
    %c0_38 = arith.constant 0 : index
    %c0_39 = arith.constant 0 : index
    %39 = vector.load %arg13[%c0_38, %c0_39] : memref<128x640xbf16, #tpu.memory_space<vmem>>, vector<128x640xbf16>
    %cst_40 = arith.constant dense<0.000000e+00> : vector<16x640xf32>
    %40 = tpu.matmul %19, %39, %cst_40 {dimension_numbers = #tpu.dot_dimension_numbers<[1], [0], [0], [1], [0, 0, 1, 1], [], []>} : vector<16x128xbf16>, vector<128x640xbf16>, vector<16x640xf32> -> vector<16x640xf32>
    %41 = arith.addf %38, %40 : vector<16x640xf32>
    %c0_41 = arith.constant 0 : index
    %c0_42 = arith.constant 0 : index
    %42 = vector.load %arg18[%c0_41, %c0_42] : memref<256x640xbf16, #tpu.memory_space<vmem>>, vector<256x640xbf16>
    %cst_43 = arith.constant dense<0.000000e+00> : vector<16x640xf32>
    %43 = tpu.matmul %31, %42, %cst_43 {dimension_numbers = #tpu.dot_dimension_numbers<[1], [0], [0], [1], [0, 0, 1, 1], [], []>} : vector<16x256xbf16>, vector<256x640xbf16>, vector<16x640xf32> -> vector<16x640xf32>
    %44 = arith.addf %41, %43 : vector<16x640xf32>
    %45 = arith.truncf %44 : vector<16x640xf32> to vector<16x640xbf16>
    %c0_44 = arith.constant 0 : index
    %c0_45 = arith.constant 0 : index
    %46 = vector.load %arg16[%c0_44, %c0_45] : memref<640x256xbf16, #tpu.memory_space<vmem>>, vector<640x256xbf16>
    %cst_46 = arith.constant dense<0.000000e+00> : vector<16x256xf32>
    %47 = tpu.matmul %45, %46, %cst_46 {dimension_numbers = #tpu.dot_dimension_numbers<[1], [0], [0], [1], [0, 0, 1, 1], [], []>} : vector<16x640xbf16>, vector<640x256xbf16>, vector<16x256xf32> -> vector<16x256xf32>
    %c0_47 = arith.constant 0 : index
    %c0_48 = arith.constant 0 : index
    %48 = vector.load %arg21[%c0_47, %c0_48] : memref<1x256xf32, #tpu.memory_space<vmem>>, vector<1x256xf32>
    %49 = vector.broadcast %48 : vector<1x256xf32> to vector<16x256xf32>
    %50 = arith.addf %47, %49 : vector<16x256xf32>
    %51 = arith.truncf %50 : vector<16x256xf32> to vector<16x256xbf16>
    %c0_49 = arith.constant 0 : index
    %c0_50 = arith.constant 0 : index
    %52 = vector.load %arg24[%c0_49, %c0_50] : memref<256x128xbf16, #tpu.memory_space<vmem>>, vector<256x128xbf16>
    %cst_51 = arith.constant dense<0.000000e+00> : vector<16x128xf32>
    %53 = tpu.matmul %51, %52, %cst_51 {dimension_numbers = #tpu.dot_dimension_numbers<[1], [0], [0], [1], [0, 0, 1, 1], [], []>} : vector<16x256xbf16>, vector<256x128xbf16>, vector<16x128xf32> -> vector<16x128xf32>
    %54 = arith.addf %36, %53 : vector<16x128xf32>
    %c0_52 = arith.constant 0 : index
    %c0_53 = arith.constant 0 : index
    %55 = vector.load %arg11[%c0_52, %c0_53] : memref<512x640xbf16, #tpu.memory_space<vmem>>, vector<512x640xbf16>
    %cst_54 = arith.constant dense<0.000000e+00> : vector<16x640xf32>
    %56 = tpu.matmul %18, %55, %cst_54 {dimension_numbers = #tpu.dot_dimension_numbers<[1], [0], [0], [1], [0, 0, 1, 1], [], []>} : vector<16x512xbf16>, vector<512x640xbf16>, vector<16x640xf32> -> vector<16x640xf32>
    %c0_55 = arith.constant 0 : index
    %c0_56 = arith.constant 0 : index
    %57 = vector.load %arg14[%c0_55, %c0_56] : memref<128x640xbf16, #tpu.memory_space<vmem>>, vector<128x640xbf16>
    %cst_57 = arith.constant dense<0.000000e+00> : vector<16x640xf32>
    %58 = tpu.matmul %19, %57, %cst_57 {dimension_numbers = #tpu.dot_dimension_numbers<[1], [0], [0], [1], [0, 0, 1, 1], [], []>} : vector<16x128xbf16>, vector<128x640xbf16>, vector<16x640xf32> -> vector<16x640xf32>
    %59 = arith.addf %56, %58 : vector<16x640xf32>
    %c0_58 = arith.constant 0 : index
    %c0_59 = arith.constant 0 : index
    %60 = vector.load %arg19[%c0_58, %c0_59] : memref<256x640xbf16, #tpu.memory_space<vmem>>, vector<256x640xbf16>
    %cst_60 = arith.constant dense<0.000000e+00> : vector<16x640xf32>
    %61 = tpu.matmul %51, %60, %cst_60 {dimension_numbers = #tpu.dot_dimension_numbers<[1], [0], [0], [1], [0, 0, 1, 1], [], []>} : vector<16x256xbf16>, vector<256x640xbf16>, vector<16x640xf32> -> vector<16x640xf32>
    %62 = arith.addf %59, %61 : vector<16x640xf32>
    %63 = arith.truncf %62 : vector<16x640xf32> to vector<16x640xbf16>
    %c0_61 = arith.constant 0 : index
    %c0_62 = arith.constant 0 : index
    %64 = vector.load %arg17[%c0_61, %c0_62] : memref<640x256xbf16, #tpu.memory_space<vmem>>, vector<640x256xbf16>
    %cst_63 = arith.constant dense<0.000000e+00> : vector<16x256xf32>
    %65 = tpu.matmul %63, %64, %cst_63 {dimension_numbers = #tpu.dot_dimension_numbers<[1], [0], [0], [1], [0, 0, 1, 1], [], []>} : vector<16x640xbf16>, vector<640x256xbf16>, vector<16x256xf32> -> vector<16x256xf32>
    %c0_64 = arith.constant 0 : index
    %c0_65 = arith.constant 0 : index
    %66 = vector.load %arg22[%c0_64, %c0_65] : memref<1x256xf32, #tpu.memory_space<vmem>>, vector<1x256xf32>
    %67 = vector.broadcast %66 : vector<1x256xf32> to vector<16x256xf32>
    %68 = arith.addf %65, %67 : vector<16x256xf32>
    %69 = arith.truncf %68 : vector<16x256xf32> to vector<16x256xbf16>
    %c0_66 = arith.constant 0 : index
    %c0_67 = arith.constant 0 : index
    %70 = vector.load %arg25[%c0_66, %c0_67] : memref<256x128xbf16, #tpu.memory_space<vmem>>, vector<256x128xbf16>
    %cst_68 = arith.constant dense<0.000000e+00> : vector<16x128xf32>
    %71 = tpu.matmul %69, %70, %cst_68 {dimension_numbers = #tpu.dot_dimension_numbers<[1], [0], [0], [1], [0, 0, 1, 1], [], []>} : vector<16x256xbf16>, vector<256x128xbf16>, vector<16x128xf32> -> vector<16x128xf32>
    %72 = arith.addf %54, %71 : vector<16x128xf32>
    %73 = arith.negf %72 : vector<16x128xf32>
    %74 = math.exp %73 : vector<16x128xf32>
    %cst_69 = arith.constant 1.000000e+00 : f32
    %75 = vector.broadcast %cst_69 : f32 to vector<16x128xf32>
    %76 = arith.addf %75, %74 : vector<16x128xf32>
    %77 = arith.divf %75, %76 : vector<16x128xf32>
    %c0_70 = arith.constant 0 : index
    %c0_71 = arith.constant 0 : index
    %78 = vector.load %arg27[%c0_70, %c0_71] : memref<16x128xf32, #tpu.memory_space<vmem>>, vector<16x128xf32>
    tpu.vector_store %arg27[%c0_70, %c0_71], %77 {strides = array<i32>} : memref<16x128xf32, #tpu.memory_space<vmem>>, vector<16x128xf32>,
    return
  }
  func.func @transform_0(%arg0: i32) -> (i32, i32) {
    %c0_i32 = arith.constant 0 : i32
    %c0_i32_0 = arith.constant 0 : i32
    return %arg0, %c0_i32 : i32, i32
  }
  func.func @transform_1(%arg0: i32) -> (i32, i32) {
    %c0_i32 = arith.constant 0 : i32
    %c0_i32_0 = arith.constant 0 : i32
    return %arg0, %c0_i32 : i32, i32
  }
  func.func @transform_2(%arg0: i32) -> (i32, i32) {
    %c0_i32 = arith.constant 0 : i32
    %c0_i32_0 = arith.constant 0 : i32
    %c0_i32_1 = arith.constant 0 : i32
    return %c0_i32, %c0_i32_0 : i32, i32
  }
  func.func @transform_3(%arg0: i32) -> (i32, i32) {
    %c0_i32 = arith.constant 0 : i32
    %c0_i32_0 = arith.constant 0 : i32
    %c0_i32_1 = arith.constant 0 : i32
    return %c0_i32, %c0_i32_0 : i32, i32
  }
  func.func @transform_4(%arg0: i32) -> (i32, i32) {
    %c0_i32 = arith.constant 0 : i32
    %c0_i32_0 = arith.constant 0 : i32
    %c0_i32_1 = arith.constant 0 : i32
    return %c0_i32, %c0_i32_0 : i32, i32
  }
  func.func @transform_5(%arg0: i32) -> (i32, i32) {
    %c0_i32 = arith.constant 0 : i32
    %c0_i32_0 = arith.constant 0 : i32
    %c0_i32_1 = arith.constant 0 : i32
    return %c0_i32, %c0_i32_0 : i32, i32
  }
  func.func @transform_6(%arg0: i32) -> (i32, i32) {
    %c0_i32 = arith.constant 0 : i32
    %c0_i32_0 = arith.constant 0 : i32
    %c0_i32_1 = arith.constant 0 : i32
    return %c0_i32, %c0_i32_0 : i32, i32
  }
  func.func @transform_7(%arg0: i32) -> (i32, i32) {
    %c0_i32 = arith.constant 0 : i32
    %c0_i32_0 = arith.constant 0 : i32
    %c0_i32_1 = arith.constant 0 : i32
    return %c0_i32, %c0_i32_0 : i32, i32
  }
  func.func @transform_8(%arg0: i32) -> (i32, i32) {
    %c0_i32 = arith.constant 0 : i32
    %c0_i32_0 = arith.constant 0 : i32
    %c0_i32_1 = arith.constant 0 : i32
    return %c0_i32, %c0_i32_0 : i32, i32
  }
  func.func @transform_9(%arg0: i32) -> (i32, i32) {
    %c0_i32 = arith.constant 0 : i32
    %c0_i32_0 = arith.constant 0 : i32
    %c0_i32_1 = arith.constant 0 : i32
    return %c0_i32, %c0_i32_0 : i32, i32
  }
  func.func @transform_10(%arg0: i32) -> (i32, i32) {
    %c0_i32 = arith.constant 0 : i32
    %c0_i32_0 = arith.constant 0 : i32
    %c0_i32_1 = arith.constant 0 : i32
    return %c0_i32, %c0_i32_0 : i32, i32
  }
  func.func @transform_11(%arg0: i32) -> (i32, i32) {
    %c0_i32 = arith.constant 0 : i32
    %c0_i32_0 = arith.constant 0 : i32
    %c0_i32_1 = arith.constant 0 : i32
    return %c0_i32, %c0_i32_0 : i32, i32
  }
  func.func @transform_12(%arg0: i32) -> (i32, i32) {
    %c0_i32 = arith.constant 0 : i32
    %c0_i32_0 = arith.constant 0 : i32
    %c0_i32_1 = arith.constant 0 : i32
    return %c0_i32, %c0_i32_0 : i32, i32
  }
  func.func @transform_13(%arg0: i32) -> (i32, i32) {
    %c0_i32 = arith.constant 0 : i32
    %c0_i32_0 = arith.constant 0 : i32
    %c0_i32_1 = arith.constant 0 : i32
    return %c0_i32, %c0_i32_0 : i32, i32
  }
  func.func @transform_14(%arg0: i32) -> (i32, i32) {
    %c0_i32 = arith.constant 0 : i32
    %c0_i32_0 = arith.constant 0 : i32
    %c0_i32_1 = arith.constant 0 : i32
    return %c0_i32, %c0_i32_0 : i32, i32
  }
  func.func @transform_15(%arg0: i32) -> (i32, i32) {
    %c0_i32 = arith.constant 0 : i32
    %c0_i32_0 = arith.constant 0 : i32
    %c0_i32_1 = arith.constant 0 : i32
    return %c0_i32, %c0_i32_0 : i32, i32
  }
  func.func @transform_16(%arg0: i32) -> (i32, i32) {
    %c0_i32 = arith.constant 0 : i32
    %c0_i32_0 = arith.constant 0 : i32
    %c0_i32_1 = arith.constant 0 : i32
    return %c0_i32, %c0_i32_0 : i32, i32
  }
  func.func @transform_17(%arg0: i32) -> (i32, i32) {
    %c0_i32 = arith.constant 0 : i32
    %c0_i32_0 = arith.constant 0 : i32
    %c0_i32_1 = arith.constant 0 : i32
    return %c0_i32, %c0_i32_0 : i32, i32
  }
  func.func @transform_18(%arg0: i32) -> (i32, i32) {
    %c0_i32 = arith.constant 0 : i32
    %c0_i32_0 = arith.constant 0 : i32
    %c0_i32_1 = arith.constant 0 : i32
    return %c0_i32, %c0_i32_0 : i32, i32
  }
  func.func @transform_19(%arg0: i32) -> (i32, i32) {
    %c0_i32 = arith.constant 0 : i32
    %c0_i32_0 = arith.constant 0 : i32
    %c0_i32_1 = arith.constant 0 : i32
    return %c0_i32, %c0_i32_0 : i32, i32
  }
  func.func @transform_20(%arg0: i32) -> (i32, i32) {
    %c0_i32 = arith.constant 0 : i32
    %c0_i32_0 = arith.constant 0 : i32
    %c0_i32_1 = arith.constant 0 : i32
    return %c0_i32, %c0_i32_0 : i32, i32
  }
  func.func @transform_21(%arg0: i32) -> (i32, i32) {
    %c0_i32 = arith.constant 0 : i32
    %c0_i32_0 = arith.constant 0 : i32
    %c0_i32_1 = arith.constant 0 : i32
    return %c0_i32, %c0_i32_0 : i32, i32
  }
  func.func @transform_22(%arg0: i32) -> (i32, i32) {
    %c0_i32 = arith.constant 0 : i32
    %c0_i32_0 = arith.constant 0 : i32
    %c0_i32_1 = arith.constant 0 : i32
    return %c0_i32, %c0_i32_0 : i32, i32
  }
  func.func @transform_23(%arg0: i32) -> (i32, i32) {
    %c0_i32 = arith.constant 0 : i32
    %c0_i32_0 = arith.constant 0 : i32
    %c0_i32_1 = arith.constant 0 : i32
    return %c0_i32, %c0_i32_0 : i32, i32
  }
  func.func @transform_24(%arg0: i32) -> (i32, i32) {
    %c0_i32 = arith.constant 0 : i32
    %c0_i32_0 = arith.constant 0 : i32
    %c0_i32_1 = arith.constant 0 : i32
    return %c0_i32, %c0_i32_0 : i32, i32
  }
  func.func @transform_25(%arg0: i32) -> (i32, i32) {
    %c0_i32 = arith.constant 0 : i32
    %c0_i32_0 = arith.constant 0 : i32
    %c0_i32_1 = arith.constant 0 : i32
    return %c0_i32, %c0_i32_0 : i32, i32
  }
  func.func @transform_26(%arg0: i32) -> (i32, i32) {
    %c0_i32 = arith.constant 0 : i32
    %c0_i32_0 = arith.constant 0 : i32
    return %arg0, %c0_i32 : i32, i32
  }
}

</mosaic_0001>

<llo_original>
// kernel: gbnn_forward.1
$region0: #{gbnn_forward.1}
  #allocation0 [shape = 'u32[]', space=smem, size = 0x4, offset = 0x4, fixed_abs, tag = 'smem constant byte address 0x4 - core index']
  #allocation1 [shape = 'u32[72,128]{1,0:T(1,128)}', space=vmem, size = 0x9000, scoped, tag = 'internal scratch']
  %s0 = inlined_call_operand.vmem [shape: bf16[32,32], index: 0, kind: input, shape index: {}]
  %s1 = inlined_call_operand.vmem [shape: bf16[32,128], index: 1, kind: input, shape index: {}]
  %s2 = inlined_call_operand.vmem [shape: bf16[32,512], index: 2, kind: input, shape index: {}]
  %s3 = inlined_call_operand.vmem [shape: bf16[512,256], index: 3, kind: input, shape index: {}]
  %s4 = inlined_call_operand.vmem [shape: bf16[256,128], index: 4, kind: input, shape index: {}]
  %s5 = inlined_call_operand.vmem [shape: bf16[128,256], index: 5, kind: input, shape index: {}]
  %s6 = inlined_call_operand.vmem [shape: bf16[256,512], index: 6, kind: input, shape index: {}]
  %s7 = inlined_call_operand.vmem [shape: f32[1,512], index: 7, kind: input, shape index: {}]
  %s8 = inlined_call_operand.vmem [shape: bf16[512,640], index: 8, kind: input, shape index: {}]
  %s9 = inlined_call_operand.vmem [shape: bf16[512,640], index: 9, kind: input, shape index: {}]
  %s10 = inlined_call_operand.vmem [shape: bf16[512,640], index: 10, kind: input, shape index: {}]
  %s11 = inlined_call_operand.vmem [shape: bf16[128,640], index: 11, kind: input, shape index: {}]
  %s12 = inlined_call_operand.vmem [shape: bf16[128,640], index: 12, kind: input, shape index: {}]
  %s13 = inlined_call_operand.vmem [shape: bf16[128,640], index: 13, kind: input, shape index: {}]
  %s14 = inlined_call_operand.vmem [shape: bf16[640,256], index: 14, kind: input, shape index: {}]
  %s15 = inlined_call_operand.vmem [shape: bf16[640,256], index: 15, kind: input, shape index: {}]
  %s16 = inlined_call_operand.vmem [shape: bf16[640,256], index: 16, kind: input, shape index: {}]
  %s17 = inlined_call_operand.vmem [shape: bf16[256,640], index: 17, kind: input, shape index: {}]
  %s18 = inlined_call_operand.vmem [shape: bf16[256,640], index: 18, kind: input, shape index: {}]
  %s19 = inlined_call_operand.vmem [shape: f32[1,256], index: 19, kind: input, shape index: {}]
  %s20 = inlined_call_operand.vmem [shape: f32[1,256], index: 20, kind: input, shape index: {}]
  %s21 = inlined_call_operand.vmem [shape: f32[1,256], index: 21, kind: input, shape index: {}]
  %s22 = inlined_call_operand.vmem [shape: bf16[256,128], index: 22, kind: input, shape index: {}]
  %s23 = inlined_call_operand.vmem [shape: bf16[256,128], index: 23, kind: input, shape index: {}]
  %s24 = inlined_call_operand.vmem [shape: bf16[256,128], index: 24, kind: input, shape index: {}]
  %s25 = inlined_call_operand.vmem [shape: f32[1,128], index: 25, kind: input, shape index: {}]
  %s26 = inlined_call_operand.vmem [shape: f32[32,128], index: 26, kind: output, shape index: {}]
  %s27 = sld [smem:[#allocation0]]
  $region137: #{gbnn_forward.1} parent=0
    _
  %s29 = ssub.s32 1, %s27
  %s30 = scalar_select 0, %s29, %s27
  loop: start=0, step=1, limit=4
  $region2: #{gbnn_forward.1} parent=0 // loop_pre_header
    _
  $region3: #{gbnn_forward.1} parent=0 // loop_header
    %s32 = sphi 0, %s36
    %p33 = scmp.ge.s32.totalorder %s32, 4
    %s42 = sphi 0, %s44
    %s45 = sphi 0, %s42
    %s46 = sphi 0, %s45
    %s62 = sphi 0, %s46
    %s68 = sphi 0, %s70
    %s71 = sphi 0, %s68
    %s72 = sphi 0, %s71
    %s88 = sphi 0, %s72
    %s92 = sphi 0, %s92
    %s94 = sphi 0, %s92
    %s95 = sphi 0, %s94
    %s109 = sphi 0, %s95
    %s113 = sphi 0, %s113
    %s115 = sphi 0, %s113
    %s116 = sphi 0, %s115
    %s130 = sphi 0, %s116
    %s134 = sphi 0, %s134
    %s136 = sphi 0, %s134
    %s137 = sphi 0, %s136
    %s151 = sphi 0, %s137
    %s155 = sphi 0, %s155
    %s157 = sphi 0, %s155
    %s158 = sphi 0, %s157
    %s172 = sphi 0, %s158
    %s176 = sphi 0, %s176
    %s178 = sphi 0, %s176
    %s179 = sphi 0, %s178
    %s193 = sphi 0, %s179
    %s197 = sphi 0, %s197
    %s199 = sphi 0, %s197
    %s200 = sphi 0, %s199
    %s214 = sphi 0, %s200
    %s218 = sphi 0, %s218
    %s220 = sphi 0, %s218
    %s221 = sphi 0, %s220
    %s235 = sphi 0, %s221
    %s239 = sphi 0, %s239
    %s241 = sphi 0, %s239
    %s242 = sphi 0, %s241
    %s256 = sphi 0, %s242
    %s260 = sphi 0, %s260
    %s262 = sphi 0, %s260
    %s263 = sphi 0, %s262
    %s277 = sphi 0, %s263
    %s281 = sphi 0, %s281
    %s283 = sphi 0, %s281
    %s284 = sphi 0, %s283
    %s298 = sphi 0, %s284
    %s302 = sphi 0, %s302
    %s304 = sphi 0, %s302
    %s305 = sphi 0, %s304
    %s319 = sphi 0, %s305
    %s323 = sphi 0, %s323
    %s325 = sphi 0, %s323
    %s326 = sphi 0, %s325
    %s340 = sphi 0, %s326
    %s344 = sphi 0, %s344
    %s346 = sphi 0, %s344
    %s347 = sphi 0, %s346
    %s361 = sphi 0, %s347
    %s365 = sphi 0, %s365
    %s367 = sphi 0, %s365
    %s368 = sphi 0, %s367
    %s382 = sphi 0, %s368
    %s386 = sphi 0, %s386
    %s388 = sphi 0, %s386
    %s389 = sphi 0, %s388
    %s403 = sphi 0, %s389
    %s407 = sphi 0, %s407
    %s409 = sphi 0, %s407
    %s410 = sphi 0, %s409
    %s424 = sphi 0, %s410
    %s428 = sphi 0, %s428
    %s430 = sphi 0, %s428
    %s431 = sphi 0, %s430
    %s445 = sphi 0, %s431
    %s449 = sphi 0, %s449
    %s451 = sphi 0, %s449
    %s452 = sphi 0, %s451
    %s466 = sphi 0, %s452
    %s470 = sphi 0, %s470
    %s472 = sphi 0, %s470
    %s473 = sphi 0, %s472
    %s487 = sphi 0, %s473
    %s491 = sphi 0, %s491
    %s493 = sphi 0, %s491
    %s494 = sphi 0, %s493
    %s508 = sphi 0, %s494
    %s512 = sphi 0, %s512
    %s514 = sphi 0, %s512
    %s515 = sphi 0, %s514
    %s529 = sphi 0, %s515
    %s533 = sphi 0, %s533
    %s535 = sphi 0, %s533
    %s536 = sphi 0, %s535
    %s550 = sphi 0, %s536
    %s554 = sphi 0, %s554
    %s556 = sphi 0, %s554
    %s557 = sphi 0, %s556
    %s571 = sphi 0, %s557
    %s575 = sphi 0, %s575
    %s577 = sphi 0, %s575
    %s578 = sphi 0, %s577
    %s592 = sphi 0, %s578
    %s598 = sphi 0, %s600
    %s601 = sphi 0, %s598
    %s602 = sphi 0, %s601
    %s618 = sphi 0, %s602
  $region4: #{gbnn_forward.1} parent=0 // loop_header_branch
    %35 = sbr.rel (%p33) target = $region8
  $region5: #{gbnn_forward.1} parent=0 // loop_body
    %s37 = ssub.s32 %s32, 1
    %s38 = ssub.s32 %s32, 2
    %s39 = sadd.s32 %s32, 1
    %s40 = ssub.s32 %s32, %s39
    %p41 = scmp.eq.s32.totalorder %s40, 0
    %s43 = sadd.s32 %s42, 1
    %s44 = scalar_select %p41, %s42, %s43
    %p47 = pneg %p41
    %p48 = scmp.eq.s32.totalorder %s32, 1
    %p49 = por %p47, %p48
    %p50 = scmp.ne.s32.totalorder %s42, %s45
    %p51 = scmp.eq.s32.totalorder %s32, 0
    %p52 = por %p50, %p51
    %p53 = scmp.ne.s32.totalorder %s42, %s45
    %p54 = scmp.eq.s32.totalorder %s37, 1
    %p55 = por %p53, %p54
    %p56 = scmp.ne.s32.totalorder %s45, %s46
    %p57 = scmp.eq.s32.totalorder %s37, 0
    %p58 = por %p56, %p57
    %p59 = scmp.ne.s32.totalorder %s45, %s46
    %p60 = scmp.eq.s32.totalorder %s38, 1
    %p61 = por %p59, %p60
    %p63 = scmp.ne.s32.totalorder %s46, %s62
    %p64 = scmp.eq.s32.totalorder %s38, 0
    %p65 = por %p63, %p64
    %s66 = ssub.s32 %s32, %s39
    %p67 = scmp.eq.s32.totalorder %s66, 0
    %s69 = sadd.s32 %s68, 1
    %s70 = scalar_select %p67, %s68, %s69
    %p73 = pneg %p67
    %p74 = scmp.eq.s32.totalorder %s32, 1
    %p75 = por %p73, %p74
    %p76 = scmp.ne.s32.totalorder %s68, %s71
    %p77 = scmp.eq.s32.totalorder %s32, 0
    %p78 = por %p76, %p77
    %p79 = scmp.ne.s32.totalorder %s68, %s71
    %p80 = scmp.eq.s32.totalorder %s37, 1
    %p81 = por %p79, %p80
    %p82 = scmp.ne.s32.totalorder %s71, %s72
    %p83 = scmp.eq.s32.totalorder %s37, 0
    %p84 = por %p82, %p83
    %p85 = scmp.ne.s32.totalorder %s71, %s72
    %p86 = scmp.eq.s32.totalorder %s38, 1
    %p87 = por %p85, %p86
    %p89 = scmp.ne.s32.totalorder %s72, %s88
    %p90 = scmp.eq.s32.totalorder %s38, 0
    %p91 = por %p89, %p90
    %s93 = sadd.s32 %s92, 1
    %p96 = scmp.eq.s32.totalorder %s32, 1
    %p97 = scmp.ne.s32.totalorder %s92, %s94
    %p98 = scmp.eq.s32.totalorder %s32, 0
    %p99 = por %p97, %p98
    %p100 = scmp.ne.s32.totalorder %s92, %s94
    %p101 = scmp.eq.s32.totalorder %s37, 1
    %p102 = por %p100, %p101
    %p103 = scmp.ne.s32.totalorder %s94, %s95
    %p104 = scmp.eq.s32.totalorder %s37, 0
    %p105 = por %p103, %p104
    %p106 = scmp.ne.s32.totalorder %s94, %s95
    %p107 = scmp.eq.s32.totalorder %s38, 1
    %p108 = por %p106, %p107
    %p110 = scmp.ne.s32.totalorder %s95, %s109
    %p111 = scmp.eq.s32.totalorder %s38, 0
    %p112 = por %p110, %p111
    %s114 = sadd.s32 %s113, 1
    %p117 = scmp.eq.s32.totalorder %s32, 1
    %p118 = scmp.ne.s32.totalorder %s113, %s115
    %p119 = scmp.eq.s32.totalorder %s32, 0
    %p120 = por %p118, %p119
    %p121 = scmp.ne.s32.totalorder %s113, %s115
    %p122 = scmp.eq.s32.totalorder %s37, 1
    %p123 = por %p121, %p122
    %p124 = scmp.ne.s32.totalorder %s115, %s116
    %p125 = scmp.eq.s32.totalorder %s37, 0
    %p126 = por %p124, %p125
    %p127 = scmp.ne.s32.totalorder %s115, %s116
    %p128 = scmp.eq.s32.totalorder %s38, 1
    %p129 = por %p127, %p128
    %p131 = scmp.ne.s32.totalorder %s116, %s130
    %p132 = scmp.eq.s32.totalorder %s38, 0
    %p133 = por %p131, %p132
    %s135 = sadd.s32 %s134, 1
    %p138 = scmp.eq.s32.totalorder %s32, 1
    %p139 = scmp.ne.s32.totalorder %s134, %s136
    %p140 = scmp.eq.s32.totalorder %s32, 0
    %p141 = por %p139, %p140
    %p142 = scmp.ne.s32.totalorder %s134, %s136
    %p143 = scmp.eq.s32.totalorder %s37, 1
    %p144 = por %p142, %p143
    %p145 = scmp.ne.s32.totalorder %s136, %s137
    %p146 = scmp.eq.s32.totalorder %s37, 0
    %p147 = por %p145, %p146
    %p148 = scmp.ne.s32.totalorder %s136, %s137
    %p149 = scmp.eq.s32.totalorder %s38, 1
    %p150 = por %p148, %p149
    %p152 = scmp.ne.s32.totalorder %s137, %s151
    %p153 = scmp.eq.s32.totalorder %s38, 0
    %p154 = por %p152, %p153
    %s156 = sadd.s32 %s155, 1
    %p159 = scmp.eq.s32.totalorder %s32, 1
    %p160 = scmp.ne.s32.totalorder %s155, %s157
    %p161 = scmp.eq.s32.totalorder %s32, 0
    %p162 = por %p160, %p161
    %p163 = scmp.ne.s32.totalorder %s155, %s157
    %p164 = scmp.eq.s32.totalorder %s37, 1
    %p165 = por %p163, %p164
    %p166 = scmp.ne.s32.totalorder %s157, %s158
    %p167 = scmp.eq.s32.totalorder %s37, 0
    %p168 = por %p166, %p167
    %p169 = scmp.ne.s32.totalorder %s157, %s158
    %p170 = scmp.eq.s32.totalorder %s38, 1
    %p171 = por %p169, %p170
    %p173 = scmp.ne.s32.totalorder %s158, %s172
    %p174 = scmp.eq.s32.totalorder %s38, 0
    %p175 = por %p173, %p174
    %s177 = sadd.s32 %s176, 1
    %p180 = scmp.eq.s32.totalorder %s32, 1
    %p181 = scmp.ne.s32.totalorder %s176, %s178
    %p182 = scmp.eq.s32.totalorder %s32, 0
    %p183 = por %p181, %p182
    %p184 = scmp.ne.s32.totalorder %s176, %s178
    %p185 = scmp.eq.s32.totalorder %s37, 1
    %p186 = por %p184, %p185
    %p187 = scmp.ne.s32.totalorder %s178, %s179
    %p188 = scmp.eq.s32.totalorder %s37, 0
    %p189 = por %p187, %p188
    %p190 = scmp.ne.s32.totalorder %s178, %s179
    %p191 = scmp.eq.s32.totalorder %s38, 1
    %p192 = por %p190, %p191
    %p194 = scmp.ne.s32.totalorder %s179, %s193
    %p195 = scmp.eq.s32.totalorder %s38, 0
    %p196 = por %p194, %p195
    %s198 = sadd.s32 %s197, 1
    %p201 = scmp.eq.s32.totalorder %s32, 1
    %p202 = scmp.ne.s32.totalorder %s197, %s199
    %p203 = scmp.eq.s32.totalorder %s32, 0
    %p204 = por %p202, %p203
    %p205 = scmp.ne.s32.totalorder %s197, %s199
    %p206 = scmp.eq.s32.totalorder %s37, 1
    %p207 = por %p205, %p206
    %p208 = scmp.ne.s32.totalorder %s199, %s200
    %p209 = scmp.eq.s32.totalorder %s37, 0
    %p210 = por %p208, %p209
    %p211 = scmp.ne.s32.totalorder %s199, %s200
    %p212 = scmp.eq.s32.totalorder %s38, 1
    %p213 = por %p211, %p212
    %p215 = scmp.ne.s32.totalorder %s200, %s214
    %p216 = scmp.eq.s32.totalorder %s38, 0
    %p217 = por %p215, %p216
    %s219 = sadd.s32 %s218, 1
    %p222 = scmp.eq.s32.totalorder %s32, 1
    %p223 = scmp.ne.s32.totalorder %s218, %s220
    %p224 = scmp.eq.s32.totalorder %s32, 0
    %p225 = por %p223, %p224
    %p226 = scmp.ne.s32.totalorder %s218, %s220
    %p227 = scmp.eq.s32.totalorder %s37, 1
    %p228 = por %p226, %p227
    %p229 = scmp.ne.s32.totalorder %s220, %s221
    %p230 = scmp.eq.s32.totalorder %s37, 0
    %p231 = por %p229, %p230
    %p232 = scmp.ne.s32.totalorder %s220, %s221
    %p233 = scmp.eq.s32.totalorder %s38, 1
    %p234 = por %p232, %p233
    %p236 = scmp.ne.s32.totalorder %s221, %s235
    %p237 = scmp.eq.s32.totalorder %s38, 0
    %p238 = por %p236, %p237
    %s240 = sadd.s32 %s239, 1
    %p243 = scmp.eq.s32.totalorder %s32, 1
    %p244 = scmp.ne.s32.totalorder %s239, %s241
    %p245 = scmp.eq.s32.totalorder %s32, 0
    %p246 = por %p244, %p245
    %p247 = scmp.ne.s32.totalorder %s239, %s241
    %p248 = scmp.eq.s32.totalorder %s37, 1
    %p249 = por %p247, %p248
    %p250 = scmp.ne.s32.totalorder %s241, %s242
    %p251 = scmp.eq.s32.totalorder %s37, 0
    %p252 = por %p250, %p251
    %p253 = scmp.ne.s32.totalorder %s241, %s242
    %p254 = scmp.eq.s32.totalorder %s38, 1
    %p255 = por %p253, %p254
    %p257 = scmp.ne.s32.totalorder %s242, %s256
    %p258 = scmp.eq.s32.totalorder %s38, 0
    %p259 = por %p257, %p258
    %s261 = sadd.s32 %s260, 1
    %p264 = scmp.eq.s32.totalorder %s32, 1
    %p265 = scmp.ne.s32.totalorder %s260, %s262
    %p266 = scmp.eq.s32.totalorder %s32, 0
    %p267 = por %p265, %p266
    %p268 = scmp.ne.s32.totalorder %s260, %s262
    %p269 = scmp.eq.s32.totalorder %s37, 1
    %p270 = por %p268, %p269
    %p271 = scmp.ne.s32.totalorder %s262, %s263
    %p272 = scmp.eq.s32.totalorder %s37, 0
    %p273 = por %p271, %p272
    %p274 = scmp.ne.s32.totalorder %s262, %s263
    %p275 = scmp.eq.s32.totalorder %s38, 1
    %p276 = por %p274, %p275
    %p278 = scmp.ne.s32.totalorder %s263, %s277
    %p279 = scmp.eq.s32.totalorder %s38, 0
    %p280 = por %p278, %p279
    %s282 = sadd.s32 %s281, 1
    %p285 = scmp.eq.s32.totalorder %s32, 1
    %p286 = scmp.ne.s32.totalorder %s281, %s283
    %p287 = scmp.eq.s32.totalorder %s32, 0
    %p288 = por %p286, %p287
    %p289 = scmp.ne.s32.totalorder %s281, %s283
    %p290 = scmp.eq.s32.totalorder %s37, 1
    %p291 = por %p289, %p290
    %p292 = scmp.ne.s32.totalorder %s283, %s284
    %p293 = scmp.eq.s32.totalorder %s37, 0
    %p294 = por %p292, %p293
    %p295 = scmp.ne.s32.totalorder %s283, %s284
    %p296 = scmp.eq.s32.totalorder %s38, 1
    %p297 = por %p295, %p296
    %p299 = scmp.ne.s32.totalorder %s284, %s298
    %p300 = scmp.eq.s32.totalorder %s38, 0
    %p301 = por %p299, %p300
    %s303 = sadd.s32 %s302, 1
    %p306 = scmp.eq.s32.totalorder %s32, 1
    %p307 = scmp.ne.s32.totalorder %s302, %s304
    %p308 = scmp.eq.s32.totalorder %s32, 0
    %p309 = por %p307, %p308
    %p310 = scmp.ne.s32.totalorder %s302, %s304
    %p311 = scmp.eq.s32.totalorder %s37, 1
    %p312 = por %p310, %p311
    %p313 = scmp.ne.s32.totalorder %s304, %s305
    %p314 = scmp.eq.s32.totalorder %s37, 0
    %p315 = por %p313, %p314
    %p316 = scmp.ne.s32.totalorder %s304, %s305
    %p317 = scmp.eq.s32.totalorder %s38, 1
    %p318 = por %p316, %p317
    %p320 = scmp.ne.s32.totalorder %s305, %s319
    %p321 = scmp.eq.s32.totalorder %s38, 0
    %p322 = por %p320, %p321
    %s324 = sadd.s32 %s323, 1
    %p327 = scmp.eq.s32.totalorder %s32, 1
    %p328 = scmp.ne.s32.totalorder %s323, %s325
    %p329 = scmp.eq.s32.totalorder %s32, 0
    %p330 = por %p328, %p329
    %p331 = scmp.ne.s32.totalorder %s323, %s325
    %p332 = scmp.eq.s32.totalorder %s37, 1
    %p333 = por %p331, %p332
    %p334 = scmp.ne.s32.totalorder %s325, %s326
    %p335 = scmp.eq.s32.totalorder %s37, 0
    %p336 = por %p334, %p335
    %p337 = scmp.ne.s32.totalorder %s325, %s326
    %p338 = scmp.eq.s32.totalorder %s38, 1
    %p339 = por %p337, %p338
    %p341 = scmp.ne.s32.totalorder %s326, %s340
    %p342 = scmp.eq.s32.totalorder %s38, 0
    %p343 = por %p341, %p342
    %s345 = sadd.s32 %s344, 1
    %p348 = scmp.eq.s32.totalorder %s32, 1
    %p349 = scmp.ne.s32.totalorder %s344, %s346
    %p350 = scmp.eq.s32.totalorder %s32, 0
    %p351 = por %p349, %p350
    %p352 = scmp.ne.s32.totalorder %s344, %s346
    %p353 = scmp.eq.s32.totalorder %s37, 1
    %p354 = por %p352, %p353
    %p355 = scmp.ne.s32.totalorder %s346, %s347
    %p356 = scmp.eq.s32.totalorder %s37, 0
    %p357 = por %p355, %p356
    %p358 = scmp.ne.s32.totalorder %s346, %s347
    %p359 = scmp.eq.s32.totalorder %s38, 1
    %p360 = por %p358, %p359
    %p362 = scmp.ne.s32.totalorder %s347, %s361
    %p363 = scmp.eq.s32.totalorder %s38, 0
    %p364 = por %p362, %p363
    %s366 = sadd.s32 %s365, 1
    %p369 = scmp.eq.s32.totalorder %s32, 1
    %p370 = scmp.ne.s32.totalorder %s365, %s367
    %p371 = scmp.eq.s32.totalorder %s32, 0
    %p372 = por %p370, %p371
    %p373 = scmp.ne.s32.totalorder %s365, %s367
    %p374 = scmp.eq.s32.totalorder %s37, 1
    %p375 = por %p373, %p374
    %p376 = scmp.ne.s32.totalorder %s367, %s368
    %p377 = scmp.eq.s32.totalorder %s37, 0
    %p378 = por %p376, %p377
    %p379 = scmp.ne.s32.totalorder %s367, %s368
    %p380 = scmp.eq.s32.totalorder %s38, 1
    %p381 = por %p379, %p380
    %p383 = scmp.ne.s32.totalorder %s368, %s382
    %p384 = scmp.eq.s32.totalorder %s38, 0
    %p385 = por %p383, %p384
    %s387 = sadd.s32 %s386, 1
    %p390 = scmp.eq.s32.totalorder %s32, 1
    %p391 = scmp.ne.s32.totalorder %s386, %s388
    %p392 = scmp.eq.s32.totalorder %s32, 0
    %p393 = por %p391, %p392
    %p394 = scmp.ne.s32.totalorder %s386, %s388
    %p395 = scmp.eq.s32.totalorder %s37, 1
    %p396 = por %p394, %p395
    %p397 = scmp.ne.s32.totalorder %s388, %s389
    %p398 = scmp.eq.s32.totalorder %s37, 0
    %p399 = por %p397, %p398
    %p400 = scmp.ne.s32.totalorder %s388, %s389
    %p401 = scmp.eq.s32.totalorder %s38, 1
    %p402 = por %p400, %p401
    %p404 = scmp.ne.s32.totalorder %s389, %s403
    %p405 = scmp.eq.s32.totalorder %s38, 0
    %p406 = por %p404, %p405
    %s408 = sadd.s32 %s407, 1
    %p411 = scmp.eq.s32.totalorder %s32, 1
    %p412 = scmp.ne.s32.totalorder %s407, %s409
    %p413 = scmp.eq.s32.totalorder %s32, 0
    %p414 = por %p412, %p413
    %p415 = scmp.ne.s32.totalorder %s407, %s409
    %p416 = scmp.eq.s32.totalorder %s37, 1
    %p417 = por %p415, %p416
    %p418 = scmp.ne.s32.totalorder %s409, %s410
    %p419 = scmp.eq.s32.totalorder %s37, 0
    %p420 = por %p418, %p419
    %p421 = scmp.ne.s32.totalorder %s409, %s410
    %p422 = scmp.eq.s32.totalorder %s38, 1
    %p423 = por %p421, %p422
    %p425 = scmp.ne.s32.totalorder %s410, %s424
    %p426 = scmp.eq.s32.totalorder %s38, 0
    %p427 = por %p425, %p426
    %s429 = sadd.s32 %s428, 1
    %p432 = scmp.eq.s32.totalorder %s32, 1
    %p433 = scmp.ne.s32.totalorder %s428, %s430
    %p434 = scmp.eq.s32.totalorder %s32, 0
    %p435 = por %p433, %p434
    %p436 = scmp.ne.s32.totalorder %s428, %s430
    %p437 = scmp.eq.s32.totalorder %s37, 1
    %p438 = por %p436, %p437
    %p439 = scmp.ne.s32.totalorder %s430, %s431
    %p440 = scmp.eq.s32.totalorder %s37, 0
    %p441 = por %p439, %p440
    %p442 = scmp.ne.s32.totalorder %s430, %s431
    %p443 = scmp.eq.s32.totalorder %s38, 1
    %p444 = por %p442, %p443
    %p446 = scmp.ne.s32.totalorder %s431, %s445
    %p447 = scmp.eq.s32.totalorder %s38, 0
    %p448 = por %p446, %p447
    %s450 = sadd.s32 %s449, 1
    %p453 = scmp.eq.s32.totalorder %s32, 1
    %p454 = scmp.ne.s32.totalorder %s449, %s451
    %p455 = scmp.eq.s32.totalorder %s32, 0
    %p456 = por %p454, %p455
    %p457 = scmp.ne.s32.totalorder %s449, %s451
    %p458 = scmp.eq.s32.totalorder %s37, 1
    %p459 = por %p457, %p458
    %p460 = scmp.ne.s32.totalorder %s451, %s452
    %p461 = scmp.eq.s32.totalorder %s37, 0
    %p462 = por %p460, %p461
    %p463 = scmp.ne.s32.totalorder %s451, %s452
    %p464 = scmp.eq.s32.totalorder %s38, 1
    %p465 = por %p463, %p464
    %p467 = scmp.ne.s32.totalorder %s452, %s466
    %p468 = scmp.eq.s32.totalorder %s38, 0
    %p469 = por %p467, %p468
    %s471 = sadd.s32 %s470, 1
    %p474 = scmp.eq.s32.totalorder %s32, 1
    %p475 = scmp.ne.s32.totalorder %s470, %s472
    %p476 = scmp.eq.s32.totalorder %s32, 0
    %p477 = por %p475, %p476
    %p478 = scmp.ne.s32.totalorder %s470, %s472
    %p479 = scmp.eq.s32.totalorder %s37, 1
    %p480 = por %p478, %p479
    %p481 = scmp.ne.s32.totalorder %s472, %s473
    %p482 = scmp.eq.s32.totalorder %s37, 0
    %p483 = por %p481, %p482
    %p484 = scmp.ne.s32.totalorder %s472, %s473
    %p485 = scmp.eq.s32.totalorder %s38, 1
    %p486 = por %p484, %p485
    %p488 = scmp.ne.s32.totalorder %s473, %s487
    %p489 = scmp.eq.s32.totalorder %s38, 0
    %p490 = por %p488, %p489
    %s492 = sadd.s32 %s491, 1
    %p495 = scmp.eq.s32.totalorder %s32, 1
    %p496 = scmp.ne.s32.totalorder %s491, %s493
    %p497 = scmp.eq.s32.totalorder %s32, 0
    %p498 = por %p496, %p497
    %p499 = scmp.ne.s32.totalorder %s491, %s493
    %p500 = scmp.eq.s32.totalorder %s37, 1
    %p501 = por %p499, %p500
    %p502 = scmp.ne.s32.totalorder %s493, %s494
    %p503 = scmp.eq.s32.totalorder %s37, 0
    %p504 = por %p502, %p503
    %p505 = scmp.ne.s32.totalorder %s493, %s494
    %p506 = scmp.eq.s32.totalorder %s38, 1
    %p507 = por %p505, %p506
    %p509 = scmp.ne.s32.totalorder %s494, %s508
    %p510 = scmp.eq.s32.totalorder %s38, 0
    %p511 = por %p509, %p510
    %s513 = sadd.s32 %s512, 1
    %p516 = scmp.eq.s32.totalorder %s32, 1
    %p517 = scmp.ne.s32.totalorder %s512, %s514
    %p518 = scmp.eq.s32.totalorder %s32, 0
    %p519 = por %p517, %p518
    %p520 = scmp.ne.s32.totalorder %s512, %s514
    %p521 = scmp.eq.s32.totalorder %s37, 1
    %p522 = por %p520, %p521
    %p523 = scmp.ne.s32.totalorder %s514, %s515
    %p524 = scmp.eq.s32.totalorder %s37, 0
    %p525 = por %p523, %p524
    %p526 = scmp.ne.s32.totalorder %s514, %s515
    %p527 = scmp.eq.s32.totalorder %s38, 1
    %p528 = por %p526, %p527
    %p530 = scmp.ne.s32.totalorder %s515, %s529
    %p531 = scmp.eq.s32.totalorder %s38, 0
    %p532 = por %p530, %p531
    %s534 = sadd.s32 %s533, 1
    %p537 = scmp.eq.s32.totalorder %s32, 1
    %p538 = scmp.ne.s32.totalorder %s533, %s535
    %p539 = scmp.eq.s32.totalorder %s32, 0
    %p540 = por %p538, %p539
    %p541 = scmp.ne.s32.totalorder %s533, %s535
    %p542 = scmp.eq.s32.totalorder %s37, 1
    %p543 = por %p541, %p542
    %p544 = scmp.ne.s32.totalorder %s535, %s536
    %p545 = scmp.eq.s32.totalorder %s37, 0
    %p546 = por %p544, %p545
    %p547 = scmp.ne.s32.totalorder %s535, %s536
    %p548 = scmp.eq.s32.totalorder %s38, 1
    %p549 = por %p547, %p548
    %p551 = scmp.ne.s32.totalorder %s536, %s550
    %p552 = scmp.eq.s32.totalorder %s38, 0
    %p553 = por %p551, %p552
    %s555 = sadd.s32 %s554, 1
    %p558 = scmp.eq.s32.totalorder %s32, 1
    %p559 = scmp.ne.s32.totalorder %s554, %s556
    %p560 = scmp.eq.s32.totalorder %s32, 0
    %p561 = por %p559, %p560
    %p562 = scmp.ne.s32.totalorder %s554, %s556
    %p563 = scmp.eq.s32.totalorder %s37, 1
    %p564 = por %p562, %p563
    %p565 = scmp.ne.s32.totalorder %s556, %s557
    %p566 = scmp.eq.s32.totalorder %s37, 0
    %p567 = por %p565, %p566
    %p568 = scmp.ne.s32.totalorder %s556, %s557
    %p569 = scmp.eq.s32.totalorder %s38, 1
    %p570 = por %p568, %p569
    %p572 = scmp.ne.s32.totalorder %s557, %s571
    %p573 = scmp.eq.s32.totalorder %s38, 0
    %p574 = por %p572, %p573
    %s576 = sadd.s32 %s575, 1
    %p579 = scmp.eq.s32.totalorder %s32, 1
    %p580 = scmp.ne.s32.totalorder %s575, %s577
    %p581 = scmp.eq.s32.totalorder %s32, 0
    %p582 = por %p580, %p581
    %p583 = scmp.ne.s32.totalorder %s575, %s577
    %p584 = scmp.eq.s32.totalorder %s37, 1
    %p585 = por %p583, %p584
    %p586 = scmp.ne.s32.totalorder %s577, %s578
    %p587 = scmp.eq.s32.totalorder %s37, 0
    %p588 = por %p586, %p587
    %p589 = scmp.ne.s32.totalorder %s577, %s578
    %p590 = scmp.eq.s32.totalorder %s38, 1
    %p591 = por %p589, %p590
    %p593 = scmp.ne.s32.totalorder %s578, %s592
    %p594 = scmp.eq.s32.totalorder %s38, 0
    %p595 = por %p593, %p594
    %s596 = ssub.s32 %s32, %s39
    %p597 = scmp.eq.s32.totalorder %s596, 0
    %s599 = sadd.s32 %s598, 1
    %s600 = scalar_select %p597, %s598, %s599
    %p603 = pneg %p597
    %p604 = scmp.eq.s32.totalorder %s32, 1
    %p605 = por %p603, %p604
    %p606 = scmp.ne.s32.totalorder %s598, %s601
    %p607 = scmp.eq.s32.totalorder %s32, 0
    %p608 = por %p606, %p607
    %p609 = scmp.ne.s32.totalorder %s598, %s601
    %p610 = scmp.eq.s32.totalorder %s37, 1
    %p611 = por %p609, %p610
    %p612 = scmp.ne.s32.totalorder %s601, %s602
    %p613 = scmp.eq.s32.totalorder %s37, 0
    %p614 = por %p612, %p613
    %p615 = scmp.ne.s32.totalorder %s601, %s602
    %p616 = scmp.eq.s32.totalorder %s38, 1
    %p617 = por %p615, %p616
    %p619 = scmp.ne.s32.totalorder %s602, %s618
    %p620 = scmp.eq.s32.totalorder %s38, 0
    %p621 = por %p619, %p620
    %p622 = scmp.le.s32.totalorder 1, %s32
    %p623 = scmp.lt.s32.totalorder %s32, 3
    %p624 = pnand %p622, %p623
    %p625 = pneg %p624
    // Predicated region
    $region9: #{gbnn_forward.1} parent=5 // pred_check
      _
    $region10: #{gbnn_forward.1} parent=5 // pred_check_branch
      %627 = sbr.rel (%p624) target = $region12
    $region11: #{gbnn_forward.1} parent=5 // pred_region
      %s628 = ssub.s32 %s32, 1
      // Predicated region
      $region13: #{gbnn_forward.1} parent=11 // pred_check
        %p629 = pneg %p105
      $region14: #{gbnn_forward.1} parent=11 // pred_check_branch
        %631 = sbr.rel (%p629) target = $region16
      $region15: #{gbnn_forward.1} parent=11 // pred_region
        _
      $region16: #{gbnn_forward.1} parent=11 // pred_fallthru
        _
      // Predicated region
      $region17: #{gbnn_forward.1} parent=11 // pred_check
        %p632 = pneg %p126
      $region18: #{gbnn_forward.1} parent=11 // pred_check_branch
        %634 = sbr.rel (%p632) target = $region20
      $region19: #{gbnn_forward.1} parent=11 // pred_region
        _
      $region20: #{gbnn_forward.1} parent=11 // pred_fallthru
        _
      // Predicated region
      $region21: #{gbnn_forward.1} parent=11 // pred_check
        %p635 = pneg %p147
      $region22: #{gbnn_forward.1} parent=11 // pred_check_branch
        %637 = sbr.rel (%p635) target = $region24
      $region23: #{gbnn_forward.1} parent=11 // pred_region
        _
      $region24: #{gbnn_forward.1} parent=11 // pred_fallthru
        _
      // Predicated region
      $region25: #{gbnn_forward.1} parent=11 // pred_check
        %p638 = pneg %p168
      $region26: #{gbnn_forward.1} parent=11 // pred_check_branch
        %640 = sbr.rel (%p638) target = $region28
      $region27: #{gbnn_forward.1} parent=11 // pred_region
        _
      $region28: #{gbnn_forward.1} parent=11 // pred_fallthru
        _
      // Predicated region
      $region29: #{gbnn_forward.1} parent=11 // pred_check
        %p641 = pneg %p189
      $region30: #{gbnn_forward.1} parent=11 // pred_check_branch
        %643 = sbr.rel (%p641) target = $region32
      $region31: #{gbnn_forward.1} parent=11 // pred_region
        _
      $region32: #{gbnn_forward.1} parent=11 // pred_fallthru
        _
      // Predicated region
      $region33: #{gbnn_forward.1} parent=11 // pred_check
        %p644 = pneg %p210
      $region34: #{gbnn_forward.1} parent=11 // pred_check_branch
        %646 = sbr.rel (%p644) target = $region36
      $region35: #{gbnn_forward.1} parent=11 // pred_region
        _
      $region36: #{gbnn_forward.1} parent=11 // pred_fallthru
        _
      // Predicated region
      $region37: #{gbnn_forward.1} parent=11 // pred_check
        %p647 = pneg %p231
      $region38: #{gbnn_forward.1} parent=11 // pred_check_branch
        %649 = sbr.rel (%p647) target = $region40
      $region39: #{gbnn_forward.1} parent=11 // pred_region
        _
      $region40: #{gbnn_forward.1} parent=11 // pred_fallthru
        _
      // Predicated region
      $region41: #{gbnn_forward.1} parent=11 // pred_check
        %p650 = pneg %p252
      $region42: #{gbnn_forward.1} parent=11 // pred_check_branch
        %652 = sbr.rel (%p650) target = $region44
      $region43: #{gbnn_forward.1} parent=11 // pred_region
        _
      $region44: #{gbnn_forward.1} parent=11 // pred_fallthru
        _
      // Predicated region
      $region45: #{gbnn_forward.1} parent=11 // pred_check
        %p653 = pneg %p273
      $region46: #{gbnn_forward.1} parent=11 // pred_check_branch
        %655 = sbr.rel (%p653) target = $region48
      $region47: #{gbnn_forward.1} parent=11 // pred_region
        _
      $region48: #{gbnn_forward.1} parent=11 // pred_fallthru
        _
      // Predicated region
      $region49: #{gbnn_forward.1} parent=11 // pred_check
        %p656 = pneg %p294
      $region50: #{gbnn_forward.1} parent=11 // pred_check_branch
        %658 = sbr.rel (%p656) target = $region52
      $region51: #{gbnn_forward.1} parent=11 // pred_region
        _
      $region52: #{gbnn_forward.1} parent=11 // pred_fallthru
        _
      // Predicated region
      $region53: #{gbnn_forward.1} parent=11 // pred_check
        %p659 = pneg %p315
      $region54: #{gbnn_forward.1} parent=11 // pred_check_branch
        %661 = sbr.rel (%p659) target = $region56
      $region55: #{gbnn_forward.1} parent=11 // pred_region
        _
      $region56: #{gbnn_forward.1} parent=11 // pred_fallthru
        _
      // Predicated region
      $region57: #{gbnn_forward.1} parent=11 // pred_check
        %p662 = pneg %p336
      $region58: #{gbnn_forward.1} parent=11 // pred_check_branch
        %664 = sbr.rel (%p662) target = $region60
      $region59: #{gbnn_forward.1} parent=11 // pred_region
        _
      $region60: #{gbnn_forward.1} parent=11 // pred_fallthru
        _
      // Predicated region
      $region61: #{gbnn_forward.1} parent=11 // pred_check
        %p665 = pneg %p357
      $region62: #{gbnn_forward.1} parent=11 // pred_check_branch
        %667 = sbr.rel (%p665) target = $region64
      $region63: #{gbnn_forward.1} parent=11 // pred_region
        _
      $region64: #{gbnn_forward.1} parent=11 // pred_fallthru
        _
      // Predicated region
      $region65: #{gbnn_forward.1} parent=11 // pred_check
        %p668 = pneg %p378
      $region66: #{gbnn_forward.1} parent=11 // pred_check_branch
        %670 = sbr.rel (%p668) target = $region68
      $region67: #{gbnn_forward.1} parent=11 // pred_region
        _
      $region68: #{gbnn_forward.1} parent=11 // pred_fallthru
        _
      // Predicated region
      $region69: #{gbnn_forward.1} parent=11 // pred_check
        %p671 = pneg %p399
      $region70: #{gbnn_forward.1} parent=11 // pred_check_branch
        %673 = sbr.rel (%p671) target = $region72
      $region71: #{gbnn_forward.1} parent=11 // pred_region
        _
      $region72: #{gbnn_forward.1} parent=11 // pred_fallthru
        _
      // Predicated region
      $region73: #{gbnn_forward.1} parent=11 // pred_check
        %p674 = pneg %p420
      $region74: #{gbnn_forward.1} parent=11 // pred_check_branch
        %676 = sbr.rel (%p674) target = $region76
      $region75: #{gbnn_forward.1} parent=11 // pred_region
        _
      $region76: #{gbnn_forward.1} parent=11 // pred_fallthru
        _
      // Predicated region
      $region77: #{gbnn_forward.1} parent=11 // pred_check
        %p677 = pneg %p441
      $region78: #{gbnn_forward.1} parent=11 // pred_check_branch
        %679 = sbr.rel (%p677) target = $region80
      $region79: #{gbnn_forward.1} parent=11 // pred_region
        _
      $region80: #{gbnn_forward.1} parent=11 // pred_fallthru
        _
      // Predicated region
      $region81: #{gbnn_forward.1} parent=11 // pred_check
        %p680 = pneg %p462
      $region82: #{gbnn_forward.1} parent=11 // pred_check_branch
        %682 = sbr.rel (%p680) target = $region84
      $region83: #{gbnn_forward.1} parent=11 // pred_region
        _
      $region84: #{gbnn_forward.1} parent=11 // pred_fallthru
        _
      // Predicated region
      $region85: #{gbnn_forward.1} parent=11 // pred_check
        %p683 = pneg %p483
      $region86: #{gbnn_forward.1} parent=11 // pred_check_branch
        %685 = sbr.rel (%p683) target = $region88
      $region87: #{gbnn_forward.1} parent=11 // pred_region
        _
      $region88: #{gbnn_forward.1} parent=11 // pred_fallthru
        _
      // Predicated region
      $region89: #{gbnn_forward.1} parent=11 // pred_check
        %p686 = pneg %p504
      $region90: #{gbnn_forward.1} parent=11 // pred_check_branch
        %688 = sbr.rel (%p686) target = $region92
      $region91: #{gbnn_forward.1} parent=11 // pred_region
        _
      $region92: #{gbnn_forward.1} parent=11 // pred_fallthru
        _
      // Predicated region
      $region93: #{gbnn_forward.1} parent=11 // pred_check
        %p689 = pneg %p525
      $region94: #{gbnn_forward.1} parent=11 // pred_check_branch
        %691 = sbr.rel (%p689) target = $region96
      $region95: #{gbnn_forward.1} parent=11 // pred_region
        _
      $region96: #{gbnn_forward.1} parent=11 // pred_fallthru
        _
      // Predicated region
      $region97: #{gbnn_forward.1} parent=11 // pred_check
        %p692 = pneg %p546
      $region98: #{gbnn_forward.1} parent=11 // pred_check_branch
        %694 = sbr.rel (%p692) target = $region100
      $region99: #{gbnn_forward.1} parent=11 // pred_region
        _
      $region100: #{gbnn_forward.1} parent=11 // pred_fallthru
        _
      // Predicated region
      $region101: #{gbnn_forward.1} parent=11 // pred_check
        %p695 = pneg %p567
      $region102: #{gbnn_forward.1} parent=11 // pred_check_branch
        %697 = sbr.rel (%p695) target = $region104
      $region103: #{gbnn_forward.1} parent=11 // pred_region
        _
      $region104: #{gbnn_forward.1} parent=11 // pred_fallthru
        _
      // Predicated region
      $region105: #{gbnn_forward.1} parent=11 // pred_check
        %p698 = pneg %p588
      $region106: #{gbnn_forward.1} parent=11 // pred_check_branch
        %700 = sbr.rel (%p698) target = $region108
      $region107: #{gbnn_forward.1} parent=11 // pred_region
        _
      $region108: #{gbnn_forward.1} parent=11 // pred_fallthru
        _
    $region12: #{gbnn_forward.1} parent=5 // pred_fallthru
      _
    %p701 = scmp.lt.s32.totalorder %s32, 2
    // Predicated region
    $region109: #{gbnn_forward.1} parent=5 // pred_check
      %p702 = pneg %p701
    $region110: #{gbnn_forward.1} parent=5 // pred_check_branch
      %704 = sbr.rel (%p702) target = $region112
    $region111: #{gbnn_forward.1} parent=5 // pred_region
      // Predicated region
      $region113: #{gbnn_forward.1} parent=111 // pred_check
        %p705 = pneg %p52
      $region114: #{gbnn_forward.1} parent=111 // pred_check_branch
        %707 = sbr.rel (%p705) target = $region116
      $region115: #{gbnn_forward.1} parent=111 // pred_region
        %s708 = smul.u32 2, %s32
        %p709 = scmp.lt.s32.totalorder %s708, 3
        %s710 = scalar_select %p709, %s708, 3
        %s711 = smul.addr %s710, 4
        %s712 = scalar_lea.vmem %s0, %s711
        %s713 = smul.u32 2, %s32
      $region116: #{gbnn_forward.1} parent=111 // pred_fallthru
        _
      // Predicated region
      $region117: #{gbnn_forward.1} parent=111 // pred_check
        %p714 = pneg %p78
      $region118: #{gbnn_forward.1} parent=111 // pred_check_branch
        %716 = sbr.rel (%p714) target = $region120
      $region119: #{gbnn_forward.1} parent=111 // pred_region
        %s717 = smul.u32 2, %s32
        %p718 = scmp.lt.s32.totalorder %s717, 3
        %s719 = scalar_select %p718, %s717, 3
        %s720 = smul.addr %s719, 4
        %s721 = scalar_lea.vmem %s1, %s720
        %s722 = smul.u32 2, %s32
      $region120: #{gbnn_forward.1} parent=111 // pred_fallthru
        _
    $region112: #{gbnn_forward.1} parent=5 // pred_fallthru
      _
    %p723 = scmp.le.s32.totalorder 1, %s32
    %p724 = scmp.lt.s32.totalorder %s32, 3
    %p725 = pnand %p723, %p724
    %p726 = pneg %p725
    // Predicated region
    $region121: #{gbnn_forward.1} parent=5 // pred_check
      _
    $region122: #{gbnn_forward.1} parent=5 // pred_check_branch
      %728 = sbr.rel (%p725) target = $region124
    $region123: #{gbnn_forward.1} parent=5 // pred_region
      %s729 = ssub.s32 %s32, 1
      %s730 = smul.u32 2, %s37
      %p731 = scmp.lt.s32.totalorder %s730, 3
      %s732 = scalar_select %p731, %s730, 3
      %s733 = smul.addr %s732, 4
      %s734 = scalar_lea.vmem %s0, %s733
      %p735 = pneg %p58
      %p736 = pneg %p55
      %s737 = smul.u32 2, %s37
      %p738 = scmp.lt.s32.totalorder %s737, 3
      %s739 = scalar_select %p738, %s737, 3
      %s740 = smul.addr %s739, 4
      %s741 = scalar_lea.vmem %s1, %s740
      %p742 = pneg %p84
      %p743 = pneg %p81
      %p744 = pneg %p105
      %p745 = pneg %p102
      %p746 = pneg %p126
      %p747 = pneg %p123
      %p748 = pneg %p147
      %p749 = pneg %p144
      %p750 = pneg %p168
      %p751 = pneg %p165
      %p752 = pneg %p189
      %p753 = pneg %p186
      %p754 = pneg %p210
      %p755 = pneg %p207
      %p756 = pneg %p231
      %p757 = pneg %p228
      %p758 = pneg %p252
      %p759 = pneg %p249
      %p760 = pneg %p273
      %p761 = pneg %p270
      %p762 = pneg %p294
      %p763 = pneg %p291
      %p764 = pneg %p315
      %p765 = pneg %p312
      %p766 = pneg %p336
      %p767 = pneg %p333
      %p768 = pneg %p357
      %p769 = pneg %p354
      %p770 = pneg %p378
      %p771 = pneg %p375
      %p772 = pneg %p399
      %p773 = pneg %p396
      %p774 = pneg %p420
      %p775 = pneg %p417
      %p776 = pneg %p441
      %p777 = pneg %p438
      %p778 = pneg %p462
      %p779 = pneg %p459
      %p780 = pneg %p483
      %p781 = pneg %p480
      %p782 = pneg %p504
      %p783 = pneg %p501
      %p784 = pneg %p525
      %p785 = pneg %p522
      %p786 = pneg %p546
      %p787 = pneg %p543
      %p788 = pneg %p567
      %p789 = pneg %p564
      %p790 = pneg %p588
      %p791 = pneg %p585
      %p792 = pneg %p614
      %p793 = pneg %p611
      %s794 = smul.u32 2, %s37
      %p795 = scmp.lt.s32.totalorder %s794, 3
      %s796 = scalar_select %p795, %s794, 3
      %s797 = smul.addr %s796, 8
      %s798 = scalar_lea.vmem %s26, %s797
      %s799 = smul.u32 2, %s37
      %p800 = scmp.lt.s32.totalorder %s799, 3
      %s801 = scalar_select %p800, %s799, 3
      %s802 = smul.addr %s801, 4
      %s803 = scalar_lea.vmem %s0, %s802
      %s804 = smul.u32 2, %s37
      %s805 = smul.u32 2, %s37
      %p806 = scmp.lt.s32.totalorder %s805, 3
      %s807 = scalar_select %p806, %s805, 3
      %s808 = smul.addr %s807, 4
      %s809 = scalar_lea.vmem %s1, %s808
      %s810 = smul.u32 2, %s37
      %s811 = smul.u32 2, %s37
      %p812 = scmp.lt.s32.totalorder %s811, 3
      %s813 = scalar_select %p812, %s811, 3
      %s814 = smul.addr %s813, 8
      %s815 = scalar_lea.vmem %s26, %s814
      %s816 = smul.u32 2, %s37
      %v818 = vld [vmem:[%s803] sm:$0xf]
      %v819 = vld [vmem:[%s803 + $0x4] sm:$0xf]
      %v820 = vld [vmem:[%s2] sm:$0xff]
      %v821 = vld [vmem:[%s2 + $0x8] sm:$0xff]
      %v822 = vld [vmem:[%s2 + $0x10] sm:$0xff]
      %v823 = vld [vmem:[%s2 + $0x18] sm:$0xff]
      %v824 = vld [vmem:[%s2 + $0x20] sm:$0xff]
      %v825 = vld [vmem:[%s2 + $0x28] sm:$0xff]
      %v826 = vld [vmem:[%s2 + $0x30] sm:$0xff]
      %v827 = vld [vmem:[%s2 + $0x38] sm:$0xff]
      %v830 = vunpack.c.l.b16 %v818
      %v831 = vunpack.c.l.b16 %v819
      %v832 = vpack.c.b16 %v831, %v830
      %v841 = vunpack.c.l.b16 %v820
      %v842 = vunpack.c.h.b16 %v820
      %v843 = vunpack.c.l.b16 %v821
      %v844 = vunpack.c.h.b16 %v821
      %v845 = vunpack.c.l.b16 %v822
      %v846 = vunpack.c.h.b16 %v822
      %v847 = vunpack.c.l.b16 %v823
      %v848 = vunpack.c.h.b16 %v823
      %v849 = vunpack.c.l.b16 %v824
      %v850 = vunpack.c.h.b16 %v824
      %v851 = vunpack.c.l.b16 %v825
      %v852 = vunpack.c.h.b16 %v825
      %v853 = vunpack.c.l.b16 %v826
      %v854 = vunpack.c.h.b16 %v826
      %v855 = vunpack.c.l.b16 %v827
      %v856 = vunpack.c.h.b16 %v827
      %v857 = vpack.c.b16 %v845, %v841
      %v858 = vpack.c.b16 %v846, %v842
      %v859 = vpack.c.b16 %v847, %v843
      %v860 = vpack.c.b16 %v848, %v844
      %v861 = vpack.c.b16 %v853, %v849
      %v862 = vpack.c.b16 %v854, %v850
      %v863 = vpack.c.b16 %v855, %v851
      %v864 = vpack.c.b16 %v856, %v852
      %vm873 = vcmask 261120
      %v875 = vsel %vm873, %v832, 0
      %877 = vmatpush.bf16.msra.mxu0 0
      %878 = vmatpush.bf16.msra.mxu0 0
      %879 = vmatpush.bf16.msra.mxu0 0
      %880 = vmatpush.bf16.msra.mxu0 0
      %881 = vmatpush.bf16.msra.mxu0 0
      %882 = vmatpush.bf16.msra.mxu0 0
      %883 = vmatpush.bf16.msra.mxu0 %v861
      %884 = vmatpush.bf16.msra.mxu0 %v857
      %885 = vmatmul.bf16.gmra.mxu0 %v875
      %v886 = vpop.f32.mrf.mxu0
      %v887 = vadd.f32 0.0, %v886
      %v888 = vpop.f32.mrf.mxu0
      %v889 = vadd.f32 0.0, %v888
      %890 = vdwg.mxu0
      %891 = vmatpush.bf16.msra.mxu0 0
      %892 = vmatpush.bf16.msra.mxu0 0
      %893 = vmatpush.bf16.msra.mxu0 0
      %894 = vmatpush.bf16.msra.mxu0 0
      %895 = vmatpush.bf16.msra.mxu0 0
      %896 = vmatpush.bf16.msra.mxu0 0
      %897 = vmatpush.bf16.msra.mxu0 %v862
      %898 = vmatpush.bf16.msra.mxu0 %v858
      %899 = vmatmul.bf16.gmra.mxu0 %v875
      %v900 = vpop.f32.mrf.mxu0
      %v901 = vadd.f32 0.0, %v900
      %v902 = vpop.f32.mrf.mxu0
      %v903 = vadd.f32 0.0, %v902
      %904 = vdwg.mxu0
      %905 = vmatpush.bf16.msra.mxu0 0
      %906 = vmatpush.bf16.msra.mxu0 0
      %907 = vmatpush.bf16.msra.mxu0 0
      %908 = vmatpush.bf16.msra.mxu0 0
      %909 = vmatpush.bf16.msra.mxu0 0
      %910 = vmatpush.bf16.msra.mxu0 0
      %911 = vmatpush.bf16.msra.mxu0 %v863
      %912 = vmatpush.bf16.msra.mxu0 %v859
      %913 = vmatmul.bf16.gmra.mxu0 %v875
      %v914 = vpop.f32.mrf.mxu0
      %v915 = vadd.f32 0.0, %v914
      %v916 = vpop.f32.mrf.mxu0
      %v917 = vadd.f32 0.0, %v916
      %918 = vdwg.mxu0
      %919 = vmatpush.bf16.msra.mxu0 0
      %920 = vmatpush.bf16.msra.mxu0 0
      %921 = vmatpush.bf16.msra.mxu0 0
      %922 = vmatpush.bf16.msra.mxu0 0
      %923 = vmatpush.bf16.msra.mxu0 0
      %924 = vmatpush.bf16.msra.mxu0 0
      %925 = vmatpush.bf16.msra.mxu0 %v864
      %926 = vmatpush.bf16.msra.mxu0 %v860
      %927 = vmatmul.bf16.gmra.mxu0 %v875
      %v928 = vpop.f32.mrf.mxu0
      %v929 = vadd.f32 0.0, %v928
      %v930 = vpop.f32.mrf.mxu0
      %v931 = vadd.f32 0.0, %v930
      %932 = vdwg.mxu0
      %v933 = vpack.c.bf16 %v889, %v887
      %v934 = vpack.c.bf16 %v903, %v901
      %v935 = vpack.c.bf16 %v917, %v915
      %v936 = vpack.c.bf16 %v931, %v929
      %v937 = vld [vmem:[%s3] sm:$0xff]
      %v938 = vld [vmem:[%s3 + $0x8] sm:$0xff]
      %v939 = vld [vmem:[%s3 + $0x10] sm:$0xff]
      %v940 = vld [vmem:[%s3 + $0x18] sm:$0xff]
      %v941 = vld [vmem:[%s3 + $0x20] sm:$0xff]
      %v942 = vld [vmem:[%s3 + $0x28] sm:$0xff]
      %v943 = vld [vmem:[%s3 + $0x30] sm:$0xff]
      %v944 = vld [vmem:[%s3 + $0x38] sm:$0xff]
      %v945 = vld [vmem:[%s3 + $0x40] sm:$0xff]
      %v946 = vld [vmem:[%s3 + $0x48] sm:$0xff]
      %v947 = vld [vmem:[%s3 + $0x50] sm:$0xff]
      %v948 = vld [vmem:[%s3 + $0x58] sm:$0xff]
      %v949 = vld [vmem:[%s3 + $0x60] sm:$0xff]
      %v950 = vld [vmem:[%s3 + $0x68] sm:$0xff]
      %v951 = vld [vmem:[%s3 + $0x70] sm:$0xff]
      %v952 = vld [vmem:[%s3 + $0x78] sm:$0xff]
      %v953 = vld [vmem:[%s3 + $0x80] sm:$0xff]
      %v954 = vld [vmem:[%s3 + $0x88] sm:$0xff]
      %v955 = vld [vmem:[%s3 + $0x90] sm:$0xff]
      %v956 = vld [vmem:[%s3 + $0x98] sm:$0xff]
      %v957 = vld [vmem:[%s3 + $0xa0] sm:$0xff]
      %v958 = vld [vmem:[%s3 + $0xa8] sm:$0xff]
      %v959 = vld [vmem:[%s3 + $0xb0] sm:$0xff]
      %v960 = vld [vmem:[%s3 + $0xb8] sm:$0xff]
      %v961 = vld [vmem:[%s3 + $0xc0] sm:$0xff]
      %v962 = vld [vmem:[%s3 + $0xc8] sm:$0xff]
      %v963 = vld [vmem:[%s3 + $0xd0] sm:$0xff]
      %v964 = vld [vmem:[%s3 + $0xd8] sm:$0xff]
      %v965 = vld [vmem:[%s3 + $0xe0] sm:$0xff]
      %v966 = vld [vmem:[%s3 + $0xe8] sm:$0xff]
      %v967 = vld [vmem:[%s3 + $0xf0] sm:$0xff]
      %v968 = vld [vmem:[%s3 + $0xf8] sm:$0xff]
      %v969 = vld [vmem:[%s3 + $0x100] sm:$0xff]
      %v970 = vld [vmem:[%s3 + $0x108] sm:$0xff]
      %v971 = vld [vmem:[%s3 + $0x110] sm:$0xff]
      %v972 = vld [vmem:[%s3 + $0x118] sm:$0xff]
      %v973 = vld [vmem:[%s3 + $0x120] sm:$0xff]
      %v974 = vld [vmem:[%s3 + $0x128] sm:$0xff]
      %v975 = vld [vmem:[%s3 + $0x130] sm:$0xff]
      %v976 = vld [vmem:[%s3 + $0x138] sm:$0xff]
      %v977 = vld [vmem:[%s3 + $0x140] sm:$0xff]
      %v978 = vld [vmem:[%s3 + $0x148] sm:$0xff]
      %v979 = vld [vmem:[%s3 + $0x150] sm:$0xff]
      %v980 = vld [vmem:[%s3 + $0x158] sm:$0xff]
      %v981 = vld [vmem:[%s3 + $0x160] sm:$0xff]
      %v982 = vld [vmem:[%s3 + $0x168] sm:$0xff]
      %v983 = vld [vmem:[%s3 + $0x170] sm:$0xff]
      %v984 = vld [vmem:[%s3 + $0x178] sm:$0xff]
      %v985 = vld [vmem:[%s3 + $0x180] sm:$0xff]
      %v986 = vld [vmem:[%s3 + $0x188] sm:$0xff]
      %v987 = vld [vmem:[%s3 + $0x190] sm:$0xff]
      %v988 = vld [vmem:[%s3 + $0x198] sm:$0xff]
      %v989 = vld [vmem:[%s3 + $0x1a0] sm:$0xff]
      %v990 = vld [vmem:[%s3 + $0x1a8] sm:$0xff]
      %v991 = vld [vmem:[%s3 + $0x1b0] sm:$0xff]
      %v992 = vld [vmem:[%s3 + $0x1b8] sm:$0xff]
      %v993 = vld [vmem:[%s3 + $0x1c0] sm:$0xff]
      %v994 = vld [vmem:[%s3 + $0x1c8] sm:$0xff]
      %v995 = vld [vmem:[%s3 + $0x1d0] sm:$0xff]
      %v996 = vld [vmem:[%s3 + $0x1d8] sm:$0xff]
      %v997 = vld [vmem:[%s3 + $0x1e0] sm:$0xff]
      %v998 = vld [vmem:[%s3 + $0x1e8] sm:$0xff]
      %v999 = vld [vmem:[%s3 + $0x1f0] sm:$0xff]
      %v1000 = vld [vmem:[%s3 + $0x1f8] sm:$0xff]
      %v1065 = vunpack.c.l.b16 %v937
      %v1066 = vunpack.c.h.b16 %v937
      %v1067 = vunpack.c.l.b16 %v938
      %v1068 = vunpack.c.h.b16 %v938
      %v1069 = vunpack.c.l.b16 %v939
      %v1070 = vunpack.c.h.b16 %v939
      %v1071 = vunpack.c.l.b16 %v940
      %v1072 = vunpack.c.h.b16 %v940
      %v1073 = vunpack.c.l.b16 %v941
      %v1074 = vunpack.c.h.b16 %v941
      %v1075 = vunpack.c.l.b16 %v942
      %v1076 = vunpack.c.h.b16 %v942
      %v1077 = vunpack.c.l.b16 %v943
      %v1078 = vunpack.c.h.b16 %v943
      %v1079 = vunpack.c.l.b16 %v944
      %v1080 = vunpack.c.h.b16 %v944
      %v1081 = vunpack.c.l.b16 %v945
      %v1082 = vunpack.c.h.b16 %v945
      %v1083 = vunpack.c.l.b16 %v946
      %v1084 = vunpack.c.h.b16 %v946
      %v1085 = vunpack.c.l.b16 %v947
      %v1086 = vunpack.c.h.b16 %v947
      %v1087 = vunpack.c.l.b16 %v948
      %v1088 = vunpack.c.h.b16 %v948
      %v1089 = vunpack.c.l.b16 %v949
      %v1090 = vunpack.c.h.b16 %v949
      %v1091 = vunpack.c.l.b16 %v950
      %v1092 = vunpack.c.h.b16 %v950
      %v1093 = vunpack.c.l.b16 %v951
      %v1094 = vunpack.c.h.b16 %v951
      %v1095 = vunpack.c.l.b16 %v952
      %v1096 = vunpack.c.h.b16 %v952
      %v1097 = vunpack.c.l.b16 %v953
      %v1098 = vunpack.c.h.b16 %v953
      %v1099 = vunpack.c.l.b16 %v954
      %v1100 = vunpack.c.h.b16 %v954
      %v1101 = vunpack.c.l.b16 %v955
      %v1102 = vunpack.c.h.b16 %v955
      %v1103 = vunpack.c.l.b16 %v956
      %v1104 = vunpack.c.h.b16 %v956
      %v1105 = vunpack.c.l.b16 %v957
      %v1106 = vunpack.c.h.b16 %v957
      %v1107 = vunpack.c.l.b16 %v958
      %v1108 = vunpack.c.h.b16 %v958
      %v1109 = vunpack.c.l.b16 %v959
      %v1110 = vunpack.c.h.b16 %v959
      %v1111 = vunpack.c.l.b16 %v960
      %v1112 = vunpack.c.h.b16 %v960
      %v1113 = vunpack.c.l.b16 %v961
      %v1114 = vunpack.c.h.b16 %v961
      %v1115 = vunpack.c.l.b16 %v962
      %v1116 = vunpack.c.h.b16 %v962
      %v1117 = vunpack.c.l.b16 %v963
      %v1118 = vunpack.c.h.b16 %v963
      %v1119 = vunpack.c.l.b16 %v964
      %v1120 = vunpack.c.h.b16 %v964
      %v1121 = vunpack.c.l.b16 %v965
      %v1122 = vunpack.c.h.b16 %v965
      %v1123 = vunpack.c.l.b16 %v966
      %v1124 = vunpack.c.h.b16 %v966
      %v1125 = vunpack.c.l.b16 %v967
      %v1126 = vunpack.c.h.b16 %v967
      %v1127 = vunpack.c.l.b16 %v968
      %v1128 = vunpack.c.h.b16 %v968
      %v1129 = vunpack.c.l.b16 %v969
      %v1130 = vunpack.c.h.b16 %v969
      %v1131 = vunpack.c.l.b16 %v970
      %v1132 = vunpack.c.h.b16 %v970
      %v1133 = vunpack.c.l.b16 %v971
      %v1134 = vunpack.c.h.b16 %v971
      %v1135 = vunpack.c.l.b16 %v972
      %v1136 = vunpack.c.h.b16 %v972
      %v1137 = vunpack.c.l.b16 %v973
      %v1138 = vunpack.c.h.b16 %v973
      %v1139 = vunpack.c.l.b16 %v974
      %v1140 = vunpack.c.h.b16 %v974
      %v1141 = vunpack.c.l.b16 %v975
      %v1142 = vunpack.c.h.b16 %v975
      %v1143 = vunpack.c.l.b16 %v976
      %v1144 = vunpack.c.h.b16 %v976
      %v1145 = vunpack.c.l.b16 %v977
      %v1146 = vunpack.c.h.b16 %v977
      %v1147 = vunpack.c.l.b16 %v978
      %v1148 = vunpack.c.h.b16 %v978
      %v1149 = vunpack.c.l.b16 %v979
      %v1150 = vunpack.c.h.b16 %v979
      %v1151 = vunpack.c.l.b16 %v980
      %v1152 = vunpack.c.h.b16 %v980
      %v1153 = vunpack.c.l.b16 %v981
      %v1154 = vunpack.c.h.b16 %v981
      %v1155 = vunpack.c.l.b16 %v982
      %v1156 = vunpack.c.h.b16 %v982
      %v1157 = vunpack.c.l.b16 %v983
      %v1158 = vunpack.c.h.b16 %v983
      %v1159 = vunpack.c.l.b16 %v984
      %v1160 = vunpack.c.h.b16 %v984
      %v1161 = vunpack.c.l.b16 %v985
      %v1162 = vunpack.c.h.b16 %v985
      %v1163 = vunpack.c.l.b16 %v986
      %v1164 = vunpack.c.h.b16 %v986
      %v1165 = vunpack.c.l.b16 %v987
      %v1166 = vunpack.c.h.b16 %v987
      %v1167 = vunpack.c.l.b16 %v988
      %v1168 = vunpack.c.h.b16 %v988
      %v1169 = vunpack.c.l.b16 %v989
      %v1170 = vunpack.c.h.b16 %v989
      %v1171 = vunpack.c.l.b16 %v990
      %v1172 = vunpack.c.h.b16 %v990
      %v1173 = vunpack.c.l.b16 %v991
      %v1174 = vunpack.c.h.b16 %v991
      %v1175 = vunpack.c.l.b16 %v992
      %v1176 = vunpack.c.h.b16 %v992
      %v1177 = vunpack.c.l.b16 %v993
      %v1178 = vunpack.c.h.b16 %v993
      %v1179 = vunpack.c.l.b16 %v994
      %v1180 = vunpack.c.h.b16 %v994
      %v1181 = vunpack.c.l.b16 %v995
      %v1182 = vunpack.c.h.b16 %v995
      %v1183 = vunpack.c.l.b16 %v996
      %v1184 = vunpack.c.h.b16 %v996
      %v1185 = vunpack.c.l.b16 %v997
      %v1186 = vunpack.c.h.b16 %v997
      %v1187 = vunpack.c.l.b16 %v998
      %v1188 = vunpack.c.h.b16 %v998
      %v1189 = vunpack.c.l.b16 %v999
      %v1190 = vunpack.c.h.b16 %v999
      %v1191 = vunpack.c.l.b16 %v1000
      %v1192 = vunpack.c.h.b16 %v1000
      %v1193 = vpack.c.b16 %v1067, %v1065
      %v1194 = vpack.c.b16 %v1068, %v1066
      %v1195 = vpack.c.b16 %v1071, %v1069
      %v1196 = vpack.c.b16 %v1072, %v1070
      %v1197 = vpack.c.b16 %v1075, %v1073
      %v1198 = vpack.c.b16 %v1076, %v1074
      %v1199 = vpack.c.b16 %v1079, %v1077
      %v1200 = vpack.c.b16 %v1080, %v1078
      %v1201 = vpack.c.b16 %v1083, %v1081
      %v1202 = vpack.c.b16 %v1084, %v1082
      %v1203 = vpack.c.b16 %v1087, %v1085
      %v1204 = vpack.c.b16 %v1088, %v1086
      %v1205 = vpack.c.b16 %v1091, %v1089
      %v1206 = vpack.c.b16 %v1092, %v1090
      %v1207 = vpack.c.b16 %v1095, %v1093
      %v1208 = vpack.c.b16 %v1096, %v1094
      %v1209 = vpack.c.b16 %v1099, %v1097
      %v1210 = vpack.c.b16 %v1100, %v1098
      %v1211 = vpack.c.b16 %v1103, %v1101
      %v1212 = vpack.c.b16 %v1104, %v1102
      %v1213 = vpack.c.b16 %v1107, %v1105
      %v1214 = vpack.c.b16 %v1108, %v1106
      %v1215 = vpack.c.b16 %v1111, %v1109
      %v1216 = vpack.c.b16 %v1112, %v1110
      %v1217 = vpack.c.b16 %v1115, %v1113
      %v1218 = vpack.c.b16 %v1116, %v1114
      %v1219 = vpack.c.b16 %v1119, %v1117
      %v1220 = vpack.c.b16 %v1120, %v1118
      %v1221 = vpack.c.b16 %v1123, %v1121
      %v1222 = vpack.c.b16 %v1124, %v1122
      %v1223 = vpack.c.b16 %v1127, %v1125
      %v1224 = vpack.c.b16 %v1128, %v1126
      %v1225 = vpack.c.b16 %v1131, %v1129
      %v1226 = vpack.c.b16 %v1132, %v1130
      %v1227 = vpack.c.b16 %v1135, %v1133
      %v1228 = vpack.c.b16 %v1136, %v1134
      %v1229 = vpack.c.b16 %v1139, %v1137
      %v1230 = vpack.c.b16 %v1140, %v1138
      %v1231 = vpack.c.b16 %v1143, %v1141
      %v1232 = vpack.c.b16 %v1144, %v1142
      %v1233 = vpack.c.b16 %v1147, %v1145
      %v1234 = vpack.c.b16 %v1148, %v1146
      %v1235 = vpack.c.b16 %v1151, %v1149
      %v1236 = vpack.c.b16 %v1152, %v1150
      %v1237 = vpack.c.b16 %v1155, %v1153
      %v1238 = vpack.c.b16 %v1156, %v1154
      %v1239 = vpack.c.b16 %v1159, %v1157
      %v1240 = vpack.c.b16 %v1160, %v1158
      %v1241 = vpack.c.b16 %v1163, %v1161
      %v1242 = vpack.c.b16 %v1164, %v1162
      %v1243 = vpack.c.b16 %v1167, %v1165
      %v1244 = vpack.c.b16 %v1168, %v1166
      %v1245 = vpack.c.b16 %v1171, %v1169
      %v1246 = vpack.c.b16 %v1172, %v1170
      %v1247 = vpack.c.b16 %v1175, %v1173
      %v1248 = vpack.c.b16 %v1176, %v1174
      %v1249 = vpack.c.b16 %v1179, %v1177
      %v1250 = vpack.c.b16 %v1180, %v1178
      %v1251 = vpack.c.b16 %v1183, %v1181
      %v1252 = vpack.c.b16 %v1184, %v1182
      %v1253 = vpack.c.b16 %v1187, %v1185
      %v1254 = vpack.c.b16 %v1188, %v1186
      %v1255 = vpack.c.b16 %v1191, %v1189
      %v1256 = vpack.c.b16 %v1192, %v1190
      %1321 = vmatpush.bf16.msra.mxu0 %v1207
      %1322 = vmatpush.bf16.msra.mxu0 %v1205
      %1323 = vmatpush.bf16.msra.mxu0 %v1203
      %1324 = vmatpush.bf16.msra.mxu0 %v1201
      %1325 = vmatpush.bf16.msra.mxu0 %v1199
      %1326 = vmatpush.bf16.msra.mxu0 %v1197
      %1327 = vmatpush.bf16.msra.mxu0 %v1195
      %1328 = vmatpush.bf16.msra.mxu0 %v1193
      %1329 = vmatmul.bf16.gmra.mxu0 %v933
      %v1330 = vpop.f32.mrf.mxu0
      %v1331 = vadd.f32 0.0, %v1330
      %v1332 = vpop.f32.mrf.mxu0
      %v1333 = vadd.f32 0.0, %v1332
      %1334 = vdwg.mxu0
      %1335 = vmatpush.bf16.msra.mxu0 %v1223
      %1336 = vmatpush.bf16.msra.mxu0 %v1221
      %1337 = vmatpush.bf16.msra.mxu0 %v1219
      %1338 = vmatpush.bf16.msra.mxu0 %v1217
      %1339 = vmatpush.bf16.msra.mxu0 %v1215
      %1340 = vmatpush.bf16.msra.mxu0 %v1213
      %1341 = vmatpush.bf16.msra.mxu0 %v1211
      %1342 = vmatpush.bf16.msra.mxu0 %v1209
      %1343 = vmatmul.bf16.gmra.mxu0 %v934
      %v1344 = vpop.f32.mrf.mxu0
      %v1345 = vadd.f32 %v1331, %v1344
      %v1346 = vpop.f32.mrf.mxu0
      %v1347 = vadd.f32 %v1333, %v1346
      %1348 = vdwg.mxu0
      %1349 = vmatpush.bf16.msra.mxu0 %v1239
      %1350 = vmatpush.bf16.msra.mxu0 %v1237
      %1351 = vmatpush.bf16.msra.mxu0 %v1235
      %1352 = vmatpush.bf16.msra.mxu0 %v1233
      %1353 = vmatpush.bf16.msra.mxu0 %v1231
      %1354 = vmatpush.bf16.msra.mxu0 %v1229
      %1355 = vmatpush.bf16.msra.mxu0 %v1227
      %1356 = vmatpush.bf16.msra.mxu0 %v1225
      %1357 = vmatmul.bf16.gmra.mxu0 %v935
      %v1358 = vpop.f32.mrf.mxu0
      %v1359 = vadd.f32 %v1345, %v1358
      %v1360 = vpop.f32.mrf.mxu0
      %v1361 = vadd.f32 %v1347, %v1360
      %1362 = vdwg.mxu0
      %1363 = vmatpush.bf16.msra.mxu0 %v1255
      %1364 = vmatpush.bf16.msra.mxu0 %v1253
      %1365 = vmatpush.bf16.msra.mxu0 %v1251
      %1366 = vmatpush.bf16.msra.mxu0 %v1249
      %1367 = vmatpush.bf16.msra.mxu0 %v1247
      %1368 = vmatpush.bf16.msra.mxu0 %v1245
      %1369 = vmatpush.bf16.msra.mxu0 %v1243
      %1370 = vmatpush.bf16.msra.mxu0 %v1241
      %1371 = vmatmul.bf16.gmra.mxu0 %v936
      %v1372 = vpop.f32.mrf.mxu0
      %v1373 = vadd.f32 %v1359, %v1372
      %v1374 = vpop.f32.mrf.mxu0
      %v1375 = vadd.f32 %v1361, %v1374
      %1376 = vdwg.mxu0
      %1377 = vmatpush.bf16.msra.mxu0 %v1208
      %1378 = vmatpush.bf16.msra.mxu0 %v1206
      %1379 = vmatpush.bf16.msra.mxu0 %v1204
      %1380 = vmatpush.bf16.msra.mxu0 %v1202
      %1381 = vmatpush.bf16.msra.mxu0 %v1200
      %1382 = vmatpush.bf16.msra.mxu0 %v1198
      %1383 = vmatpush.bf16.msra.mxu0 %v1196
      %1384 = vmatpush.bf16.msra.mxu0 %v1194
      %1385 = vmatmul.bf16.gmra.mxu0 %v933
      %v1386 = vpop.f32.mrf.mxu0
      %v1387 = vadd.f32 0.0, %v1386
      %v1388 = vpop.f32.mrf.mxu0
      %v1389 = vadd.f32 0.0, %v1388
      %1390 = vdwg.mxu0
      %1391 = vmatpush.bf16.msra.mxu0 %v1224
      %1392 = vmatpush.bf16.msra.mxu0 %v1222
      %1393 = vmatpush.bf16.msra.mxu0 %v1220
      %1394 = vmatpush.bf16.msra.mxu0 %v1218
      %1395 = vmatpush.bf16.msra.mxu0 %v1216
      %1396 = vmatpush.bf16.msra.mxu0 %v1214
      %1397 = vmatpush.bf16.msra.mxu0 %v1212
      %1398 = vmatpush.bf16.msra.mxu0 %v1210
      %1399 = vmatmul.bf16.gmra.mxu0 %v934
      %v1400 = vpop.f32.mrf.mxu0
      %v1401 = vadd.f32 %v1387, %v1400
      %v1402 = vpop.f32.mrf.mxu0
      %v1403 = vadd.f32 %v1389, %v1402
      %1404 = vdwg.mxu0
      %1405 = vmatpush.bf16.msra.mxu0 %v1240
      %1406 = vmatpush.bf16.msra.mxu0 %v1238
      %1407 = vmatpush.bf16.msra.mxu0 %v1236
      %1408 = vmatpush.bf16.msra.mxu0 %v1234
      %1409 = vmatpush.bf16.msra.mxu0 %v1232
      %1410 = vmatpush.bf16.msra.mxu0 %v1230
      %1411 = vmatpush.bf16.msra.mxu0 %v1228
      %1412 = vmatpush.bf16.msra.mxu0 %v1226
      %1413 = vmatmul.bf16.gmra.mxu0 %v935
      %v1414 = vpop.f32.mrf.mxu0
      %v1415 = vadd.f32 %v1401, %v1414
      %v1416 = vpop.f32.mrf.mxu0
      %v1417 = vadd.f32 %v1403, %v1416
      %1418 = vdwg.mxu0
      %1419 = vmatpush.bf16.msra.mxu0 %v1256
      %1420 = vmatpush.bf16.msra.mxu0 %v1254
      %1421 = vmatpush.bf16.msra.mxu0 %v1252
      %1422 = vmatpush.bf16.msra.mxu0 %v1250
      %1423 = vmatpush.bf16.msra.mxu0 %v1248
      %1424 = vmatpush.bf16.msra.mxu0 %v1246
      %1425 = vmatpush.bf16.msra.mxu0 %v1244
      %1426 = vmatpush.bf16.msra.mxu0 %v1242
      %1427 = vmatmul.bf16.gmra.mxu0 %v936
      %v1428 = vpop.f32.mrf.mxu0
      %v1429 = vadd.f32 %v1415, %v1428
      %v1430 = vpop.f32.mrf.mxu0
      %v1431 = vadd.f32 %v1417, %v1430
      %1432 = vdwg.mxu0
      %v1433 = vpack.c.bf16 %v1375, %v1373
      %v1434 = vpack.c.bf16 %v1431, %v1429
      %v1435 = vld [vmem:[%s4] sm:$0xf]
      %v1436 = vld [vmem:[%s4 + $0x4] sm:$0xf]
      %v1437 = vld [vmem:[%s4 + $0x8] sm:$0xf]
      %v1438 = vld [vmem:[%s4 + $0xc] sm:$0xf]
      %v1439 = vld [vmem:[%s4 + $0x10] sm:$0xf]
      %v1440 = vld [vmem:[%s4 + $0x14] sm:$0xf]
      %v1441 = vld [vmem:[%s4 + $0x18] sm:$0xf]
      %v1442 = vld [vmem:[%s4 + $0x1c] sm:$0xf]
      %v1443 = vld [vmem:[%s4 + $0x20] sm:$0xf]
      %v1444 = vld [vmem:[%s4 + $0x24] sm:$0xf]
      %v1445 = vld [vmem:[%s4 + $0x28] sm:$0xf]
      %v1446 = vld [vmem:[%s4 + $0x2c] sm:$0xf]
      %v1447 = vld [vmem:[%s4 + $0x30] sm:$0xf]
      %v1448 = vld [vmem:[%s4 + $0x34] sm:$0xf]
      %v1449 = vld [vmem:[%s4 + $0x38] sm:$0xf]
      %v1450 = vld [vmem:[%s4 + $0x3c] sm:$0xf]
      %v1451 = vld [vmem:[%s4 + $0x40] sm:$0xf]
      %v1452 = vld [vmem:[%s4 + $0x44] sm:$0xf]
      %v1453 = vld [vmem:[%s4 + $0x48] sm:$0xf]
      %v1454 = vld [vmem:[%s4 + $0x4c] sm:$0xf]
      %v1455 = vld [vmem:[%s4 + $0x50] sm:$0xf]
      %v1456 = vld [vmem:[%s4 + $0x54] sm:$0xf]
      %v1457 = vld [vmem:[%s4 + $0x58] sm:$0xf]
      %v1458 = vld [vmem:[%s4 + $0x5c] sm:$0xf]
      %v1459 = vld [vmem:[%s4 + $0x60] sm:$0xf]
      %v1460 = vld [vmem:[%s4 + $0x64] sm:$0xf]
      %v1461 = vld [vmem:[%s4 + $0x68] sm:$0xf]
      %v1462 = vld [vmem:[%s4 + $0x6c] sm:$0xf]
      %v1463 = vld [vmem:[%s4 + $0x70] sm:$0xf]
      %v1464 = vld [vmem:[%s4 + $0x74] sm:$0xf]
      %v1465 = vld [vmem:[%s4 + $0x78] sm:$0xf]
      %v1466 = vld [vmem:[%s4 + $0x7c] sm:$0xf]
      %v1499 = vunpack.c.l.b16 %v1435
      %v1500 = vunpack.c.l.b16 %v1436
      %v1501 = vunpack.c.l.b16 %v1437
      %v1502 = vunpack.c.l.b16 %v1438
      %v1503 = vunpack.c.l.b16 %v1439
      %v1504 = vunpack.c.l.b16 %v1440
      %v1505 = vunpack.c.l.b16 %v1441
      %v1506 = vunpack.c.l.b16 %v1442
      %v1507 = vunpack.c.l.b16 %v1443
      %v1508 = vunpack.c.l.b16 %v1444
      %v1509 = vunpack.c.l.b16 %v1445
      %v1510 = vunpack.c.l.b16 %v1446
      %v1511 = vunpack.c.l.b16 %v1447
      %v1512 = vunpack.c.l.b16 %v1448
      %v1513 = vunpack.c.l.b16 %v1449
      %v1514 = vunpack.c.l.b16 %v1450
      %v1515 = vunpack.c.l.b16 %v1451
      %v1516 = vunpack.c.l.b16 %v1452
      %v1517 = vunpack.c.l.b16 %v1453
      %v1518 = vunpack.c.l.b16 %v1454
      %v1519 = vunpack.c.l.b16 %v1455
      %v1520 = vunpack.c.l.b16 %v1456
      %v1521 = vunpack.c.l.b16 %v1457
      %v1522 = vunpack.c.l.b16 %v1458
      %v1523 = vunpack.c.l.b16 %v1459
      %v1524 = vunpack.c.l.b16 %v1460
      %v1525 = vunpack.c.l.b16 %v1461
      %v1526 = vunpack.c.l.b16 %v1462
      %v1527 = vunpack.c.l.b16 %v1463
      %v1528 = vunpack.c.l.b16 %v1464
      %v1529 = vunpack.c.l.b16 %v1465
      %v1530 = vunpack.c.l.b16 %v1466
      %v1531 = vpack.c.b16 %v1500, %v1499
      %v1532 = vpack.c.b16 %v1502, %v1501
      %v1533 = vpack.c.b16 %v1504, %v1503
      %v1534 = vpack.c.b16 %v1506, %v1505
      %v1535 = vpack.c.b16 %v1508, %v1507
      %v1536 = vpack.c.b16 %v1510, %v1509
      %v1537 = vpack.c.b16 %v1512, %v1511
      %v1538 = vpack.c.b16 %v1514, %v1513
      %v1539 = vpack.c.b16 %v1516, %v1515
      %v1540 = vpack.c.b16 %v1518, %v1517
      %v1541 = vpack.c.b16 %v1520, %v1519
      %v1542 = vpack.c.b16 %v1522, %v1521
      %v1543 = vpack.c.b16 %v1524, %v1523
      %v1544 = vpack.c.b16 %v1526, %v1525
      %v1545 = vpack.c.b16 %v1528, %v1527
      %v1546 = vpack.c.b16 %v1530, %v1529
      %1563 = vmatpush.bf16.msra.mxu0 %v1538
      %1564 = vmatpush.bf16.msra.mxu0 %v1537
      %1565 = vmatpush.bf16.msra.mxu0 %v1536
      %1566 = vmatpush.bf16.msra.mxu0 %v1535
      %1567 = vmatpush.bf16.msra.mxu0 %v1534
      %1568 = vmatpush.bf16.msra.mxu0 %v1533
      %1569 = vmatpush.bf16.msra.mxu0 %v1532
      %1570 = vmatpush.bf16.msra.mxu0 %v1531
      %1571 = vmatmul.bf16.gmra.mxu0 %v1433
      %v1572 = vpop.f32.mrf.mxu0
      %v1573 = vadd.f32 0.0, %v1572
      %v1574 = vpop.f32.mrf.mxu0
      %v1575 = vadd.f32 0.0, %v1574
      %1576 = vdwg.mxu0
      %1577 = vmatpush.bf16.msra.mxu0 %v1546
      %1578 = vmatpush.bf16.msra.mxu0 %v1545
      %1579 = vmatpush.bf16.msra.mxu0 %v1544
      %1580 = vmatpush.bf16.msra.mxu0 %v1543
      %1581 = vmatpush.bf16.msra.mxu0 %v1542
      %1582 = vmatpush.bf16.msra.mxu0 %v1541
      %1583 = vmatpush.bf16.msra.mxu0 %v1540
      %1584 = vmatpush.bf16.msra.mxu0 %v1539
      %1585 = vmatmul.bf16.gmra.mxu0 %v1434
      %v1586 = vpop.f32.mrf.mxu0
      %v1587 = vadd.f32 %v1573, %v1586
      %v1588 = vpop.f32.mrf.mxu0
      %v1589 = vadd.f32 %v1575, %v1588
      %1590 = vdwg.mxu0
      %v1591 = vpack.c.bf16 %v1589, %v1587
      %v1592 = vld [vmem:[%s5] sm:$0xff]
      %v1593 = vld [vmem:[%s5 + $0x8] sm:$0xff]
      %v1594 = vld [vmem:[%s5 + $0x10] sm:$0xff]
      %v1595 = vld [vmem:[%s5 + $0x18] sm:$0xff]
      %v1596 = vld [vmem:[%s5 + $0x20] sm:$0xff]
      %v1597 = vld [vmem:[%s5 + $0x28] sm:$0xff]
      %v1598 = vld [vmem:[%s5 + $0x30] sm:$0xff]
      %v1599 = vld [vmem:[%s5 + $0x38] sm:$0xff]
      %v1600 = vld [vmem:[%s5 + $0x40] sm:$0xff]
      %v1601 = vld [vmem:[%s5 + $0x48] sm:$0xff]
      %v1602 = vld [vmem:[%s5 + $0x50] sm:$0xff]
      %v1603 = vld [vmem:[%s5 + $0x58] sm:$0xff]
      %v1604 = vld [vmem:[%s5 + $0x60] sm:$0xff]
      %v1605 = vld [vmem:[%s5 + $0x68] sm:$0xff]
      %v1606 = vld [vmem:[%s5 + $0x70] sm:$0xff]
      %v1607 = vld [vmem:[%s5 + $0x78] sm:$0xff]
      %v1624 = vunpack.c.l.b16 %v1592
      %v1625 = vunpack.c.h.b16 %v1592
      %v1626 = vunpack.c.l.b16 %v1593
      %v1627 = vunpack.c.h.b16 %v1593
      %v1628 = vunpack.c.l.b16 %v1594
      %v1629 = vunpack.c.h.b16 %v1594
      %v1630 = vunpack.c.l.b16 %v1595
      %v1631 = vunpack.c.h.b16 %v1595
      %v1632 = vunpack.c.l.b16 %v1596
      %v1633 = vunpack.c.h.b16 %v1596
      %v1634 = vunpack.c.l.b16 %v1597
      %v1635 = vunpack.c.h.b16 %v1597
      %v1636 = vunpack.c.l.b16 %v1598
      %v1637 = vunpack.c.h.b16 %v1598
      %v1638 = vunpack.c.l.b16 %v1599
      %v1639 = vunpack.c.h.b16 %v1599
      %v1640 = vunpack.c.l.b16 %v1600
      %v1641 = vunpack.c.h.b16 %v1600
      %v1642 = vunpack.c.l.b16 %v1601
      %v1643 = vunpack.c.h.b16 %v1601
      %v1644 = vunpack.c.l.b16 %v1602
      %v1645 = vunpack.c.h.b16 %v1602
      %v1646 = vunpack.c.l.b16 %v1603
      %v1647 = vunpack.c.h.b16 %v1603
      %v1648 = vunpack.c.l.b16 %v1604
      %v1649 = vunpack.c.h.b16 %v1604
      %v1650 = vunpack.c.l.b16 %v1605
      %v1651 = vunpack.c.h.b16 %v1605
      %v1652 = vunpack.c.l.b16 %v1606
      %v1653 = vunpack.c.h.b16 %v1606
      %v1654 = vunpack.c.l.b16 %v1607
      %v1655 = vunpack.c.h.b16 %v1607
      %v1656 = vpack.c.b16 %v1626, %v1624
      %v1657 = vpack.c.b16 %v1627, %v1625
      %v1658 = vpack.c.b16 %v1630, %v1628
      %v1659 = vpack.c.b16 %v1631, %v1629
      %v1660 = vpack.c.b16 %v1634, %v1632
      %v1661 = vpack.c.b16 %v1635, %v1633
      %v1662 = vpack.c.b16 %v1638, %v1636
      %v1663 = vpack.c.b16 %v1639, %v1637
      %v1664 = vpack.c.b16 %v1642, %v1640
      %v1665 = vpack.c.b16 %v1643, %v1641
      %v1666 = vpack.c.b16 %v1646, %v1644
      %v1667 = vpack.c.b16 %v1647, %v1645
      %v1668 = vpack.c.b16 %v1650, %v1648
      %v1669 = vpack.c.b16 %v1651, %v1649
      %v1670 = vpack.c.b16 %v1654, %v1652
      %v1671 = vpack.c.b16 %v1655, %v1653
      %1688 = vmatpush.bf16.msra.mxu0 %v1670
      %1689 = vmatpush.bf16.msra.mxu0 %v1668
      %1690 = vmatpush.bf16.msra.mxu0 %v1666
      %1691 = vmatpush.bf16.msra.mxu0 %v1664
      %1692 = vmatpush.bf16.msra.mxu0 %v1662
      %1693 = vmatpush.bf16.msra.mxu0 %v1660
      %1694 = vmatpush.bf16.msra.mxu0 %v1658
      %1695 = vmatpush.bf16.msra.mxu0 %v1656
      %1696 = vmatmul.bf16.gmra.mxu0 %v1591
      %v1697 = vpop.f32.mrf.mxu0
      %v1698 = vadd.f32 0.0, %v1697
      %v1699 = vpop.f32.mrf.mxu0
      %v1700 = vadd.f32 0.0, %v1699
      %1701 = vdwg.mxu0
      %1702 = vmatpush.bf16.msra.mxu0 %v1671
      %1703 = vmatpush.bf16.msra.mxu0 %v1669
      %1704 = vmatpush.bf16.msra.mxu0 %v1667
      %1705 = vmatpush.bf16.msra.mxu0 %v1665
      %1706 = vmatpush.bf16.msra.mxu0 %v1663
      %1707 = vmatpush.bf16.msra.mxu0 %v1661
      %1708 = vmatpush.bf16.msra.mxu0 %v1659
      %1709 = vmatpush.bf16.msra.mxu0 %v1657
      %1710 = vmatmul.bf16.gmra.mxu0 %v1591
      %v1711 = vpop.f32.mrf.mxu0
      %v1712 = vadd.f32 0.0, %v1711
      %v1713 = vpop.f32.mrf.mxu0
      %v1714 = vadd.f32 0.0, %v1713
      %1715 = vdwg.mxu0
      %v1716 = vpack.c.bf16 %v1700, %v1698
      %v1717 = vpack.c.bf16 %v1714, %v1712
      %v1718 = vld [vmem:[%s6] sm:$0xff]
      %v1719 = vld [vmem:[%s6 + $0x8] sm:$0xff]
      %v1720 = vld [vmem:[%s6 + $0x10] sm:$0xff]
      %v1721 = vld [vmem:[%s6 + $0x18] sm:$0xff]
      %v1722 = vld [vmem:[%s6 + $0x20] sm:$0xff]
      %v1723 = vld [vmem:[%s6 + $0x28] sm:$0xff]
      %v1724 = vld [vmem:[%s6 + $0x30] sm:$0xff]
      %v1725 = vld [vmem:[%s6 + $0x38] sm:$0xff]
      %v1726 = vld [vmem:[%s6 + $0x40] sm:$0xff]
      %v1727 = vld [vmem:[%s6 + $0x48] sm:$0xff]
      %v1728 = vld [vmem:[%s6 + $0x50] sm:$0xff]
      %v1729 = vld [vmem:[%s6 + $0x58] sm:$0xff]
      %v1730 = vld [vmem:[%s6 + $0x60] sm:$0xff]
      %v1731 = vld [vmem:[%s6 + $0x68] sm:$0xff]
      %v1732 = vld [vmem:[%s6 + $0x70] sm:$0xff]
      %v1733 = vld [vmem:[%s6 + $0x78] sm:$0xff]
      %v1734 = vld [vmem:[%s6 + $0x80] sm:$0xff]
      %v1735 = vld [vmem:[%s6 + $0x88] sm:$0xff]
      %v1736 = vld [vmem:[%s6 + $0x90] sm:$0xff]
      %v1737 = vld [vmem:[%s6 + $0x98] sm:$0xff]
      %v1738 = vld [vmem:[%s6 + $0xa0] sm:$0xff]
      %v1739 = vld [vmem:[%s6 + $0xa8] sm:$0xff]
      %v1740 = vld [vmem:[%s6 + $0xb0] sm:$0xff]
      %v1741 = vld [vmem:[%s6 + $0xb8] sm:$0xff]
      %v1742 = vld [vmem:[%s6 + $0xc0] sm:$0xff]
      %v1743 = vld [vmem:[%s6 + $0xc8] sm:$0xff]
      %v1744 = vld [vmem:[%s6 + $0xd0] sm:$0xff]
      %v1745 = vld [vmem:[%s6 + $0xd8] sm:$0xff]
      %v1746 = vld [vmem:[%s6 + $0xe0] sm:$0xff]
      %v1747 = vld [vmem:[%s6 + $0xe8] sm:$0xff]
      %v1748 = vld [vmem:[%s6 + $0xf0] sm:$0xff]
      %v1749 = vld [vmem:[%s6 + $0xf8] sm:$0xff]
      %v1750 = vld [vmem:[%s6 + $0x100] sm:$0xff]
      %v1751 = vld [vmem:[%s6 + $0x108] sm:$0xff]
      %v1752 = vld [vmem:[%s6 + $0x110] sm:$0xff]
      %v1753 = vld [vmem:[%s6 + $0x118] sm:$0xff]
      %v1754 = vld [vmem:[%s6 + $0x120] sm:$0xff]
      %v1755 = vld [vmem:[%s6 + $0x128] sm:$0xff]
      %v1756 = vld [vmem:[%s6 + $0x130] sm:$0xff]
      %v1757 = vld [vmem:[%s6 + $0x138] sm:$0xff]
      %v1758 = vld [vmem:[%s6 + $0x140] sm:$0xff]
      %v1759 = vld [vmem:[%s6 + $0x148] sm:$0xff]
      %v1760 = vld [vmem:[%s6 + $0x150] sm:$0xff]
      %v1761 = vld [vmem:[%s6 + $0x158] sm:$0xff]
      %v1762 = vld [vmem:[%s6 + $0x160] sm:$0xff]
      %v1763 = vld [vmem:[%s6 + $0x168] sm:$0xff]
      %v1764 = vld [vmem:[%s6 + $0x170] sm:$0xff]
      %v1765 = vld [vmem:[%s6 + $0x178] sm:$0xff]
      %v1766 = vld [vmem:[%s6 + $0x180] sm:$0xff]
      %v1767 = vld [vmem:[%s6 + $0x188] sm:$0xff]
      %v1768 = vld [vmem:[%s6 + $0x190] sm:$0xff]
      %v1769 = vld [vmem:[%s6 + $0x198] sm:$0xff]
      %v1770 = vld [vmem:[%s6 + $0x1a0] sm:$0xff]
      %v1771 = vld [vmem:[%s6 + $0x1a8] sm:$0xff]
      %v1772 = vld [vmem:[%s6 + $0x1b0] sm:$0xff]
      %v1773 = vld [vmem:[%s6 + $0x1b8] sm:$0xff]
      %v1774 = vld [vmem:[%s6 + $0x1c0] sm:$0xff]
      %v1775 = vld [vmem:[%s6 + $0x1c8] sm:$0xff]
      %v1776 = vld [vmem:[%s6 + $0x1d0] sm:$0xff]
      %v1777 = vld [vmem:[%s6 + $0x1d8] sm:$0xff]
      %v1778 = vld [vmem:[%s6 + $0x1e0] sm:$0xff]
      %v1779 = vld [vmem:[%s6 + $0x1e8] sm:$0xff]
      %v1780 = vld [vmem:[%s6 + $0x1f0] sm:$0xff]
      %v1781 = vld [vmem:[%s6 + $0x1f8] sm:$0xff]
      %v1782 = vld [vmem:[%s7] sm:$0xf]
      %v1784 = vperm.slane %v1782, 0
      %v1785 = vperm.slane %v1782, 1
      %v1786 = vperm.slane %v1782, 2
      %v1787 = vperm.slane %v1782, 3
      %v1856 = vunpack.c.l.b16 %v1718
      %v1857 = vunpack.c.h.b16 %v1718
      %v1858 = vunpack.c.l.b16 %v1719
      %v1859 = vunpack.c.h.b16 %v1719
      %v1860 = vunpack.c.l.b16 %v1720
      %v1861 = vunpack.c.h.b16 %v1720
      %v1862 = vunpack.c.l.b16 %v1721
      %v1863 = vunpack.c.h.b16 %v1721
      %v1864 = vunpack.c.l.b16 %v1722
      %v1865 = vunpack.c.h.b16 %v1722
      %v1866 = vunpack.c.l.b16 %v1723
      %v1867 = vunpack.c.h.b16 %v1723
      %v1868 = vunpack.c.l.b16 %v1724
      %v1869 = vunpack.c.h.b16 %v1724
      %v1870 = vunpack.c.l.b16 %v1725
      %v1871 = vunpack.c.h.b16 %v1725
      %v1872 = vunpack.c.l.b16 %v1726
      %v1873 = vunpack.c.h.b16 %v1726
      %v1874 = vunpack.c.l.b16 %v1727
      %v1875 = vunpack.c.h.b16 %v1727
      %v1876 = vunpack.c.l.b16 %v1728
      %v1877 = vunpack.c.h.b16 %v1728
      %v1878 = vunpack.c.l.b16 %v1729
      %v1879 = vunpack.c.h.b16 %v1729
      %v1880 = vunpack.c.l.b16 %v1730
      %v1881 = vunpack.c.h.b16 %v1730
      %v1882 = vunpack.c.l.b16 %v1731
      %v1883 = vunpack.c.h.b16 %v1731
      %v1884 = vunpack.c.l.b16 %v1732
      %v1885 = vunpack.c.h.b16 %v1732
      %v1886 = vunpack.c.l.b16 %v1733
      %v1887 = vunpack.c.h.b16 %v1733
      %v1888 = vunpack.c.l.b16 %v1734
      %v1889 = vunpack.c.h.b16 %v1734
      %v1890 = vunpack.c.l.b16 %v1735
      %v1891 = vunpack.c.h.b16 %v1735
      %v1892 = vunpack.c.l.b16 %v1736
      %v1893 = vunpack.c.h.b16 %v1736
      %v1894 = vunpack.c.l.b16 %v1737
      %v1895 = vunpack.c.h.b16 %v1737
      %v1896 = vunpack.c.l.b16 %v1738
      %v1897 = vunpack.c.h.b16 %v1738
      %v1898 = vunpack.c.l.b16 %v1739
      %v1899 = vunpack.c.h.b16 %v1739
      %v1900 = vunpack.c.l.b16 %v1740
      %v1901 = vunpack.c.h.b16 %v1740
      %v1902 = vunpack.c.l.b16 %v1741
      %v1903 = vunpack.c.h.b16 %v1741
      %v1904 = vunpack.c.l.b16 %v1742
      %v1905 = vunpack.c.h.b16 %v1742
      %v1906 = vunpack.c.l.b16 %v1743
      %v1907 = vunpack.c.h.b16 %v1743
      %v1908 = vunpack.c.l.b16 %v1744
      %v1909 = vunpack.c.h.b16 %v1744
      %v1910 = vunpack.c.l.b16 %v1745
      %v1911 = vunpack.c.h.b16 %v1745
      %v1912 = vunpack.c.l.b16 %v1746
      %v1913 = vunpack.c.h.b16 %v1746
      %v1914 = vunpack.c.l.b16 %v1747
      %v1915 = vunpack.c.h.b16 %v1747
      %v1916 = vunpack.c.l.b16 %v1748
      %v1917 = vunpack.c.h.b16 %v1748
      %v1918 = vunpack.c.l.b16 %v1749
      %v1919 = vunpack.c.h.b16 %v1749
      %v1920 = vunpack.c.l.b16 %v1750
      %v1921 = vunpack.c.h.b16 %v1750
      %v1922 = vunpack.c.l.b16 %v1751
      %v1923 = vunpack.c.h.b16 %v1751
      %v1924 = vunpack.c.l.b16 %v1752
      %v1925 = vunpack.c.h.b16 %v1752
      %v1926 = vunpack.c.l.b16 %v1753
      %v1927 = vunpack.c.h.b16 %v1753
      %v1928 = vunpack.c.l.b16 %v1754
      %v1929 = vunpack.c.h.b16 %v1754
      %v1930 = vunpack.c.l.b16 %v1755
      %v1931 = vunpack.c.h.b16 %v1755
      %v1932 = vunpack.c.l.b16 %v1756
      %v1933 = vunpack.c.h.b16 %v1756
      %v1934 = vunpack.c.l.b16 %v1757
      %v1935 = vunpack.c.h.b16 %v1757
      %v1936 = vunpack.c.l.b16 %v1758
      %v1937 = vunpack.c.h.b16 %v1758
      %v1938 = vunpack.c.l.b16 %v1759
      %v1939 = vunpack.c.h.b16 %v1759
      %v1940 = vunpack.c.l.b16 %v1760
      %v1941 = vunpack.c.h.b16 %v1760
      %v1942 = vunpack.c.l.b16 %v1761
      %v1943 = vunpack.c.h.b16 %v1761
      %v1944 = vunpack.c.l.b16 %v1762
      %v1945 = vunpack.c.h.b16 %v1762
      %v1946 = vunpack.c.l.b16 %v1763
      %v1947 = vunpack.c.h.b16 %v1763
      %v1948 = vunpack.c.l.b16 %v1764
      %v1949 = vunpack.c.h.b16 %v1764
      %v1950 = vunpack.c.l.b16 %v1765
      %v1951 = vunpack.c.h.b16 %v1765
      %v1952 = vunpack.c.l.b16 %v1766
      %v1953 = vunpack.c.h.b16 %v1766
      %v1954 = vunpack.c.l.b16 %v1767
      %v1955 = vunpack.c.h.b16 %v1767
      %v1956 = vunpack.c.l.b16 %v1768
      %v1957 = vunpack.c.h.b16 %v1768
      %v1958 = vunpack.c.l.b16 %v1769
      %v1959 = vunpack.c.h.b16 %v1769
      %v1960 = vunpack.c.l.b16 %v1770
      %v1961 = vunpack.c.h.b16 %v1770
      %v1962 = vunpack.c.l.b16 %v1771
      %v1963 = vunpack.c.h.b16 %v1771
      %v1964 = vunpack.c.l.b16 %v1772
      %v1965 = vunpack.c.h.b16 %v1772
      %v1966 = vunpack.c.l.b16 %v1773
      %v1967 = vunpack.c.h.b16 %v1773
      %v1968 = vunpack.c.l.b16 %v1774
      %v1969 = vunpack.c.h.b16 %v1774
      %v1970 = vunpack.c.l.b16 %v1775
      %v1971 = vunpack.c.h.b16 %v1775
      %v1972 = vunpack.c.l.b16 %v1776
      %v1973 = vunpack.c.h.b16 %v1776
      %v1974 = vunpack.c.l.b16 %v1777
      %v1975 = vunpack.c.h.b16 %v1777
      %v1976 = vunpack.c.l.b16 %v1778
      %v1977 = vunpack.c.h.b16 %v1778
      %v1978 = vunpack.c.l.b16 %v1779
      %v1979 = vunpack.c.h.b16 %v1779
      %v1980 = vunpack.c.l.b16 %v1780
      %v1981 = vunpack.c.h.b16 %v1780
      %v1982 = vunpack.c.l.b16 %v1781
      %v1983 = vunpack.c.h.b16 %v1781
      %v1984 = vpack.c.b16 %v1860, %v1856
      %v1985 = vpack.c.b16 %v1861, %v1857
      %v1986 = vpack.c.b16 %v1862, %v1858
      %v1987 = vpack.c.b16 %v1863, %v1859
      %v1988 = vpack.c.b16 %v1868, %v1864
      %v1989 = vpack.c.b16 %v1869, %v1865
      %v1990 = vpack.c.b16 %v1870, %v1866
      %v1991 = vpack.c.b16 %v1871, %v1867
      %v1992 = vpack.c.b16 %v1876, %v1872
      %v1993 = vpack.c.b16 %v1877, %v1873
      %v1994 = vpack.c.b16 %v1878, %v1874
      %v1995 = vpack.c.b16 %v1879, %v1875
      %v1996 = vpack.c.b16 %v1884, %v1880
      %v1997 = vpack.c.b16 %v1885, %v1881
      %v1998 = vpack.c.b16 %v1886, %v1882
      %v1999 = vpack.c.b16 %v1887, %v1883
      %v2000 = vpack.c.b16 %v1892, %v1888
      %v2001 = vpack.c.b16 %v1893, %v1889
      %v2002 = vpack.c.b16 %v1894, %v1890
      %v2003 = vpack.c.b16 %v1895, %v1891
      %v2004 = vpack.c.b16 %v1900, %v1896
      %v2005 = vpack.c.b16 %v1901, %v1897
      %v2006 = vpack.c.b16 %v1902, %v1898
      %v2007 = vpack.c.b16 %v1903, %v1899
      %v2008 = vpack.c.b16 %v1908, %v1904
      %v2009 = vpack.c.b16 %v1909, %v1905
      %v2010 = vpack.c.b16 %v1910, %v1906
      %v2011 = vpack.c.b16 %v1911, %v1907
      %v2012 = vpack.c.b16 %v1916, %v1912
      %v2013 = vpack.c.b16 %v1917, %v1913
      %v2014 = vpack.c.b16 %v1918, %v1914
      %v2015 = vpack.c.b16 %v1919, %v1915
      %v2016 = vpack.c.b16 %v1924, %v1920
      %v2017 = vpack.c.b16 %v1925, %v1921
      %v2018 = vpack.c.b16 %v1926, %v1922
      %v2019 = vpack.c.b16 %v1927, %v1923
      %v2020 = vpack.c.b16 %v1932, %v1928
      %v2021 = vpack.c.b16 %v1933, %v1929
      %v2022 = vpack.c.b16 %v1934, %v1930
      %v2023 = vpack.c.b16 %v1935, %v1931
      %v2024 = vpack.c.b16 %v1940, %v1936
      %v2025 = vpack.c.b16 %v1941, %v1937
      %v2026 = vpack.c.b16 %v1942, %v1938
      %v2027 = vpack.c.b16 %v1943, %v1939
      %v2028 = vpack.c.b16 %v1948, %v1944
      %v2029 = vpack.c.b16 %v1949, %v1945
      %v2030 = vpack.c.b16 %v1950, %v1946
      %v2031 = vpack.c.b16 %v1951, %v1947
      %v2032 = vpack.c.b16 %v1956, %v1952
      %v2033 = vpack.c.b16 %v1957, %v1953
      %v2034 = vpack.c.b16 %v1958, %v1954
      %v2035 = vpack.c.b16 %v1959, %v1955
      %v2036 = vpack.c.b16 %v1964, %v1960
      %v2037 = vpack.c.b16 %v1965, %v1961
      %v2038 = vpack.c.b16 %v1966, %v1962
      %v2039 = vpack.c.b16 %v1967, %v1963
      %v2040 = vpack.c.b16 %v1972, %v1968
      %v2041 = vpack.c.b16 %v1973, %v1969
      %v2042 = vpack.c.b16 %v1974, %v1970
      %v2043 = vpack.c.b16 %v1975, %v1971
      %v2044 = vpack.c.b16 %v1980, %v1976
      %v2045 = vpack.c.b16 %v1981, %v1977
      %v2046 = vpack.c.b16 %v1982, %v1978
      %v2047 = vpack.c.b16 %v1983, %v1979
      %2112 = vmatpush.bf16.msra.mxu0 %v2012
      %2113 = vmatpush.bf16.msra.mxu0 %v2008
      %2114 = vmatpush.bf16.msra.mxu0 %v2004
      %2115 = vmatpush.bf16.msra.mxu0 %v2000
      %2116 = vmatpush.bf16.msra.mxu0 %v1996
      %2117 = vmatpush.bf16.msra.mxu0 %v1992
      %2118 = vmatpush.bf16.msra.mxu0 %v1988
      %2119 = vmatpush.bf16.msra.mxu0 %v1984
      %2120 = vmatmul.bf16.gmra.mxu0 %v1716
      %v2121 = vpop.f32.mrf.mxu0
      %v2122 = vadd.f32 %v1784, %v2121
      %v2123 = vpop.f32.mrf.mxu0
      %v2124 = vadd.f32 %v1784, %v2123
      %2125 = vdwg.mxu0
      %2126 = vmatpush.bf16.msra.mxu0 %v2044
      %2127 = vmatpush.bf16.msra.mxu0 %v2040
      %2128 = vmatpush.bf16.msra.mxu0 %v2036
      %2129 = vmatpush.bf16.msra.mxu0 %v2032
      %2130 = vmatpush.bf16.msra.mxu0 %v2028
      %2131 = vmatpush.bf16.msra.mxu0 %v2024
      %2132 = vmatpush.bf16.msra.mxu0 %v2020
      %2133 = vmatpush.bf16.msra.mxu0 %v2016
      %2134 = vmatmul.bf16.gmra.mxu0 %v1717
      %v2135 = vpop.f32.mrf.mxu0
      %v2136 = vadd.f32 %v2122, %v2135
      %v2137 = vpop.f32.mrf.mxu0
      %v2138 = vadd.f32 %v2124, %v2137
      %2139 = vdwg.mxu0
      %2140 = vmatpush.bf16.msra.mxu0 %v2013
      %2141 = vmatpush.bf16.msra.mxu0 %v2009
      %2142 = vmatpush.bf16.msra.mxu0 %v2005
      %2143 = vmatpush.bf16.msra.mxu0 %v2001
      %2144 = vmatpush.bf16.msra.mxu0 %v1997
      %2145 = vmatpush.bf16.msra.mxu0 %v1993
      %2146 = vmatpush.bf16.msra.mxu0 %v1989
      %2147 = vmatpush.bf16.msra.mxu0 %v1985
      %2148 = vmatmul.bf16.gmra.mxu0 %v1716
      %v2149 = vpop.f32.mrf.mxu0
      %v2150 = vadd.f32 %v1785, %v2149
      %v2151 = vpop.f32.mrf.mxu0
      %v2152 = vadd.f32 %v1785, %v2151
      %2153 = vdwg.mxu0
      %2154 = vmatpush.bf16.msra.mxu0 %v2045
      %2155 = vmatpush.bf16.msra.mxu0 %v2041
      %2156 = vmatpush.bf16.msra.mxu0 %v2037
      %2157 = vmatpush.bf16.msra.mxu0 %v2033
      %2158 = vmatpush.bf16.msra.mxu0 %v2029
      %2159 = vmatpush.bf16.msra.mxu0 %v2025
      %2160 = vmatpush.bf16.msra.mxu0 %v2021
      %2161 = vmatpush.bf16.msra.mxu0 %v2017
      %2162 = vmatmul.bf16.gmra.mxu0 %v1717
      %v2163 = vpop.f32.mrf.mxu0
      %v2164 = vadd.f32 %v2150, %v2163
      %v2165 = vpop.f32.mrf.mxu0
      %v2166 = vadd.f32 %v2152, %v2165
      %2167 = vdwg.mxu0
      %2168 = vmatpush.bf16.msra.mxu0 %v2014
      %2169 = vmatpush.bf16.msra.mxu0 %v2010
      %2170 = vmatpush.bf16.msra.mxu0 %v2006
      %2171 = vmatpush.bf16.msra.mxu0 %v2002
      %2172 = vmatpush.bf16.msra.mxu0 %v1998
      %2173 = vmatpush.bf16.msra.mxu0 %v1994
      %2174 = vmatpush.bf16.msra.mxu0 %v1990
      %2175 = vmatpush.bf16.msra.mxu0 %v1986
      %2176 = vmatmul.bf16.gmra.mxu0 %v1716
      %v2177 = vpop.f32.mrf.mxu0
      %v2178 = vadd.f32 %v1786, %v2177
      %v2179 = vpop.f32.mrf.mxu0
      %v2180 = vadd.f32 %v1786, %v2179
      %2181 = vdwg.mxu0
      %2182 = vmatpush.bf16.msra.mxu0 %v2046
      %2183 = vmatpush.bf16.msra.mxu0 %v2042
      %2184 = vmatpush.bf16.msra.mxu0 %v2038
      %2185 = vmatpush.bf16.msra.mxu0 %v2034
      %2186 = vmatpush.bf16.msra.mxu0 %v2030
      %2187 = vmatpush.bf16.msra.mxu0 %v2026
      %2188 = vmatpush.bf16.msra.mxu0 %v2022
      %2189 = vmatpush.bf16.msra.mxu0 %v2018
      %2190 = vmatmul.bf16.gmra.mxu0 %v1717
      %v2191 = vpop.f32.mrf.mxu0
      %v2192 = vadd.f32 %v2178, %v2191
      %v2193 = vpop.f32.mrf.mxu0
      %v2194 = vadd.f32 %v2180, %v2193
      %2195 = vdwg.mxu0
      %2196 = vmatpush.bf16.msra.mxu0 %v2015
      %2197 = vmatpush.bf16.msra.mxu0 %v2011
      %2198 = vmatpush.bf16.msra.mxu0 %v2007
      %2199 = vmatpush.bf16.msra.mxu0 %v2003
      %2200 = vmatpush.bf16.msra.mxu0 %v1999
      %2201 = vmatpush.bf16.msra.mxu0 %v1995
      %2202 = vmatpush.bf16.msra.mxu0 %v1991
      %2203 = vmatpush.bf16.msra.mxu0 %v1987
      %2204 = vmatmul.bf16.gmra.mxu0 %v1716
      %v2205 = vpop.f32.mrf.mxu0
      %v2206 = vadd.f32 %v1787, %v2205
      %v2207 = vpop.f32.mrf.mxu0
      %v2208 = vadd.f32 %v1787, %v2207
      %2209 = vdwg.mxu0
      %2210 = vmatpush.bf16.msra.mxu0 %v2047
      %2211 = vmatpush.bf16.msra.mxu0 %v2043
      %2212 = vmatpush.bf16.msra.mxu0 %v2039
      %2213 = vmatpush.bf16.msra.mxu0 %v2035
      %2214 = vmatpush.bf16.msra.mxu0 %v2031
      %2215 = vmatpush.bf16.msra.mxu0 %v2027
      %2216 = vmatpush.bf16.msra.mxu0 %v2023
      %2217 = vmatpush.bf16.msra.mxu0 %v2019
      %2218 = vmatmul.bf16.gmra.mxu0 %v1717
      %v2219 = vpop.f32.mrf.mxu0
      %v2220 = vadd.f32 %v2206, %v2219
      %v2221 = vpop.f32.mrf.mxu0
      %v2222 = vadd.f32 %v2208, %v2221
      %2223 = vdwg.mxu0
      %v2224 = vpack.c.bf16 %v2138, %v2136
      %v2225 = vpack.c.bf16 %v2166, %v2164
      %v2226 = vpack.c.bf16 %v2194, %v2192
      %v2227 = vpack.c.bf16 %v2222, %v2220
      %v2228 = vld [vmem:[%s809] sm:$0xf]
      %v2229 = vld [vmem:[%s809 + $0x4] sm:$0xf]
      %v2230 = vld [vmem:[%s8] sm:$0xff]
      %v2231 = vld [vmem:[%s8 + $0x8] sm:$0xff]
      %v2232 = vld [vmem:[%s8 + $0x10] sm:$0xf]
      %v2233 = vld [vmem:[%s8 + $0x14] sm:$0xff]
      %v2234 = vld [vmem:[%s8 + $0x1c] sm:$0xff]
      %v2235 = vld [vmem:[%s8 + $0x24] sm:$0xf]
      %v2236 = vld [vmem:[%s8 + $0x28] sm:$0xff]
      %v2237 = vld [vmem:[%s8 + $0x30] sm:$0xff]
      %v2238 = vld [vmem:[%s8 + $0x38] sm:$0xf]
      %v2239 = vld [vmem:[%s8 + $0x3c] sm:$0xff]
      %v2240 = vld [vmem:[%s8 + $0x44] sm:$0xff]
      %v2241 = vld [vmem:[%s8 + $0x4c] sm:$0xf]
      %v2242 = vld [vmem:[%s8 + $0x50] sm:$0xff]
      %v2243 = vld [vmem:[%s8 + $0x58] sm:$0xff]
      %v2244 = vld [vmem:[%s8 + $0x60] sm:$0xf]
      %v2245 = vld [vmem:[%s8 + $0x64] sm:$0xff]
      %v2246 = vld [vmem:[%s8 + $0x6c] sm:$0xff]
      %v2247 = vld [vmem:[%s8 + $0x74] sm:$0xf]
      %v2248 = vld [vmem:[%s8 + $0x78] sm:$0xff]
      %v2249 = vld [vmem:[%s8 + $0x80] sm:$0xff]
      %v2250 = vld [vmem:[%s8 + $0x88] sm:$0xf]
      %v2251 = vld [vmem:[%s8 + $0x8c] sm:$0xff]
      %v2252 = vld [vmem:[%s8 + $0x94] sm:$0xff]
      %v2253 = vld [vmem:[%s8 + $0x9c] sm:$0xf]
      %v2254 = vld [vmem:[%s8 + $0xa0] sm:$0xff]
      %v2255 = vld [vmem:[%s8 + $0xa8] sm:$0xff]
      %v2256 = vld [vmem:[%s8 + $0xb0] sm:$0xf]
      %v2257 = vld [vmem:[%s8 + $0xb4] sm:$0xff]
      %v2258 = vld [vmem:[%s8 + $0xbc] sm:$0xff]
      %v2259 = vld [vmem:[%s8 + $0xc4] sm:$0xf]
      %v2260 = vld [vmem:[%s8 + $0xc8] sm:$0xff]
      %v2261 = vld [vmem:[%s8 + $0xd0] sm:$0xff]
      %v2262 = vld [vmem:[%s8 + $0xd8] sm:$0xf]
      %v2263 = vld [vmem:[%s8 + $0xdc] sm:$0xff]
      %v2264 = vld [vmem:[%s8 + $0xe4] sm:$0xff]
      %v2265 = vld [vmem:[%s8 + $0xec] sm:$0xf]
      %v2266 = vld [vmem:[%s8 + $0xf0] sm:$0xff]
      %v2267 = vld [vmem:[%s8 + $0xf8] sm:$0xff]
      %v2268 = vld [vmem:[%s8 + $0x100] sm:$0xf]
      %v2269 = vld [vmem:[%s8 + $0x104] sm:$0xff]
      %v2270 = vld [vmem:[%s8 + $0x10c] sm:$0xff]
      %v2271 = vld [vmem:[%s8 + $0x114] sm:$0xf]
      %v2272 = vld [vmem:[%s8 + $0x118] sm:$0xff]
      %v2273 = vld [vmem:[%s8 + $0x120] sm:$0xff]
      %v2274 = vld [vmem:[%s8 + $0x128] sm:$0xf]
      %v2275 = vld [vmem:[%s8 + $0x12c] sm:$0xff]
      %v2276 = vld [vmem:[%s8 + $0x134] sm:$0xff]
      %v2277 = vld [vmem:[%s8 + $0x13c] sm:$0xf]
      %v2278 = vld [vmem:[%s8 + $0x140] sm:$0xff]
      %v2279 = vld [vmem:[%s8 + $0x148] sm:$0xff]
      %v2280 = vld [vmem:[%s8 + $0x150] sm:$0xf]
      %v2281 = vld [vmem:[%s8 + $0x154] sm:$0xff]
      %v2282 = vld [vmem:[%s8 + $0x15c] sm:$0xff]
      %v2283 = vld [vmem:[%s8 + $0x164] sm:$0xf]
      %v2284 = vld [vmem:[%s8 + $0x168] sm:$0xff]
      %v2285 = vld [vmem:[%s8 + $0x170] sm:$0xff]
      %v2286 = vld [vmem:[%s8 + $0x178] sm:$0xf]
      %v2287 = vld [vmem:[%s8 + $0x17c] sm:$0xff]
      %v2288 = vld [vmem:[%s8 + $0x184] sm:$0xff]
      %v2289 = vld [vmem:[%s8 + $0x18c] sm:$0xf]
      %v2290 = vld [vmem:[%s8 + $0x190] sm:$0xff]
      %v2291 = vld [vmem:[%s8 + $0x198] sm:$0xff]
      %v2292 = vld [vmem:[%s8 + $0x1a0] sm:$0xf]
      %v2293 = vld [vmem:[%s8 + $0x1a4] sm:$0xff]
      %v2294 = vld [vmem:[%s8 + $0x1ac] sm:$0xff]
      %v2295 = vld [vmem:[%s8 + $0x1b4] sm:$0xf]
      %v2296 = vld [vmem:[%s8 + $0x1b8] sm:$0xff]
      %v2297 = vld [vmem:[%s8 + $0x1c0] sm:$0xff]
      %v2298 = vld [vmem:[%s8 + $0x1c8] sm:$0xf]
      %v2299 = vld [vmem:[%s8 + $0x1cc] sm:$0xff]
      %v2300 = vld [vmem:[%s8 + $0x1d4] sm:$0xff]
      %v2301 = vld [vmem:[%s8 + $0x1dc] sm:$0xf]
      %v2302 = vld [vmem:[%s8 + $0x1e0] sm:$0xff]
      %v2303 = vld [vmem:[%s8 + $0x1e8] sm:$0xff]
      %v2304 = vld [vmem:[%s8 + $0x1f0] sm:$0xf]
      %v2305 = vld [vmem:[%s8 + $0x1f4] sm:$0xff]
      %v2306 = vld [vmem:[%s8 + $0x1fc] sm:$0xff]
      %v2307 = vld [vmem:[%s8 + $0x204] sm:$0xf]
      %v2308 = vld [vmem:[%s8 + $0x208] sm:$0xff]
      %v2309 = vld [vmem:[%s8 + $0x210] sm:$0xff]
      %v2310 = vld [vmem:[%s8 + $0x218] sm:$0xf]
      %v2311 = vld [vmem:[%s8 + $0x21c] sm:$0xff]
      %v2312 = vld [vmem:[%s8 + $0x224] sm:$0xff]
      %v2313 = vld [vmem:[%s8 + $0x22c] sm:$0xf]
      %v2314 = vld [vmem:[%s8 + $0x230] sm:$0xff]
      %v2315 = vld [vmem:[%s8 + $0x238] sm:$0xff]
      %v2316 = vld [vmem:[%s8 + $0x240] sm:$0xf]
      %v2317 = vld [vmem:[%s8 + $0x244] sm:$0xff]
      %v2318 = vld [vmem:[%s8 + $0x24c] sm:$0xff]
      %v2319 = vld [vmem:[%s8 + $0x254] sm:$0xf]
      %v2320 = vld [vmem:[%s8 + $0x258] sm:$0xff]
      %v2321 = vld [vmem:[%s8 + $0x260] sm:$0xff]
      %v2322 = vld [vmem:[%s8 + $0x268] sm:$0xf]
      %v2323 = vld [vmem:[%s8 + $0x26c] sm:$0xff]
      %v2324 = vld [vmem:[%s8 + $0x274] sm:$0xff]
      %v2325 = vld [vmem:[%s8 + $0x27c] sm:$0xf]
      %v2326 = vld [vmem:[%s8 + $0x280] sm:$0xff]
      %v2327 = vld [vmem:[%s8 + $0x288] sm:$0xff]
      %v2328 = vld [vmem:[%s8 + $0x290] sm:$0xf]
      %v2329 = vld [vmem:[%s8 + $0x294] sm:$0xff]
      %v2330 = vld [vmem:[%s8 + $0x29c] sm:$0xff]
      %v2331 = vld [vmem:[%s8 + $0x2a4] sm:$0xf]
      %v2332 = vld [vmem:[%s8 + $0x2a8] sm:$0xff]
      %v2333 = vld [vmem:[%s8 + $0x2b0] sm:$0xff]
      %v2334 = vld [vmem:[%s8 + $0x2b8] sm:$0xf]
      %v2335 = vld [vmem:[%s8 + $0x2bc] sm:$0xff]
      %v2336 = vld [vmem:[%s8 + $0x2c4] sm:$0xff]
      %v2337 = vld [vmem:[%s8 + $0x2cc] sm:$0xf]
      %v2338 = vld [vmem:[%s8 + $0x2d0] sm:$0xff]
      %v2339 = vld [vmem:[%s8 + $0x2d8] sm:$0xff]
      %v2340 = vld [vmem:[%s8 + $0x2e0] sm:$0xf]
      %v2341 = vld [vmem:[%s8 + $0x2e4] sm:$0xff]
      %v2342 = vld [vmem:[%s8 + $0x2ec] sm:$0xff]
      %v2343 = vld [vmem:[%s8 + $0x2f4] sm:$0xf]
      %v2344 = vld [vmem:[%s8 + $0x2f8] sm:$0xff]
      %v2345 = vld [vmem:[%s8 + $0x300] sm:$0xff]
      %v2346 = vld [vmem:[%s8 + $0x308] sm:$0xf]
      %v2347 = vld [vmem:[%s8 + $0x30c] sm:$0xff]
      %v2348 = vld [vmem:[%s8 + $0x314] sm:$0xff]
      %v2349 = vld [vmem:[%s8 + $0x31c] sm:$0xf]
      %v2350 = vld [vmem:[%s8 + $0x320] sm:$0xff]
      %v2351 = vld [vmem:[%s8 + $0x328] sm:$0xff]
      %v2352 = vld [vmem:[%s8 + $0x330] sm:$0xf]
      %v2353 = vld [vmem:[%s8 + $0x334] sm:$0xff]
      %v2354 = vld [vmem:[%s8 + $0x33c] sm:$0xff]
      %v2355 = vld [vmem:[%s8 + $0x344] sm:$0xf]
      %v2356 = vld [vmem:[%s8 + $0x348] sm:$0xff]
      %v2357 = vld [vmem:[%s8 + $0x350] sm:$0xff]
      %v2358 = vld [vmem:[%s8 + $0x358] sm:$0xf]
      %v2359 = vld [vmem:[%s8 + $0x35c] sm:$0xff]
      %v2360 = vld [vmem:[%s8 + $0x364] sm:$0xff]
      %v2361 = vld [vmem:[%s8 + $0x36c] sm:$0xf]
      %v2362 = vld [vmem:[%s8 + $0x370] sm:$0xff]
      %v2363 = vld [vmem:[%s8 + $0x378] sm:$0xff]
      %v2364 = vld [vmem:[%s8 + $0x380] sm:$0xf]
      %v2365 = vld [vmem:[%s8 + $0x384] sm:$0xff]
      %v2366 = vld [vmem:[%s8 + $0x38c] sm:$0xff]
      %v2367 = vld [vmem:[%s8 + $0x394] sm:$0xf]
      %v2368 = vld [vmem:[%s8 + $0x398] sm:$0xff]
      %v2369 = vld [vmem:[%s8 + $0x3a0] sm:$0xff]
      %v2370 = vld [vmem:[%s8 + $0x3a8] sm:$0xf]
      %v2371 = vld [vmem:[%s8 + $0x3ac] sm:$0xff]
      %v2372 = vld [vmem:[%s8 + $0x3b4] sm:$0xff]
      %v2373 = vld [vmem:[%s8 + $0x3bc] sm:$0xf]
      %v2374 = vld [vmem:[%s8 + $0x3c0] sm:$0xff]
      %v2375 = vld [vmem:[%s8 + $0x3c8] sm:$0xff]
      %v2376 = vld [vmem:[%s8 + $0x3d0] sm:$0xf]
      %v2377 = vld [vmem:[%s8 + $0x3d4] sm:$0xff]
      %v2378 = vld [vmem:[%s8 + $0x3dc] sm:$0xff]
      %v2379 = vld [vmem:[%s8 + $0x3e4] sm:$0xf]
      %v2380 = vld [vmem:[%s8 + $0x3e8] sm:$0xff]
      %v2381 = vld [vmem:[%s8 + $0x3f0] sm:$0xff]
      %v2382 = vld [vmem:[%s8 + $0x3f8] sm:$0xf]
      %v2383 = vld [vmem:[%s8 + $0x3fc] sm:$0xff]
      %v2384 = vld [vmem:[%s8 + $0x404] sm:$0xff]
      %v2385 = vld [vmem:[%s8 + $0x40c] sm:$0xf]
      %v2386 = vld [vmem:[%s8 + $0x410] sm:$0xff]
      %v2387 = vld [vmem:[%s8 + $0x418] sm:$0xff]
      %v2388 = vld [vmem:[%s8 + $0x420] sm:$0xf]
      %v2389 = vld [vmem:[%s8 + $0x424] sm:$0xff]
      %v2390 = vld [vmem:[%s8 + $0x42c] sm:$0xff]
      %v2391 = vld [vmem:[%s8 + $0x434] sm:$0xf]
      %v2392 = vld [vmem:[%s8 + $0x438] sm:$0xff]
      %v2393 = vld [vmem:[%s8 + $0x440] sm:$0xff]
      %v2394 = vld [vmem:[%s8 + $0x448] sm:$0xf]
      %v2395 = vld [vmem:[%s8 + $0x44c] sm:$0xff]
      %v2396 = vld [vmem:[%s8 + $0x454] sm:$0xff]
      %v2397 = vld [vmem:[%s8 + $0x45c] sm:$0xf]
      %v2398 = vld [vmem:[%s8 + $0x460] sm:$0xff]
      %v2399 = vld [vmem:[%s8 + $0x468] sm:$0xff]
      %v2400 = vld [vmem:[%s8 + $0x470] sm:$0xf]
      %v2401 = vld [vmem:[%s8 + $0x474] sm:$0xff]
      %v2402 = vld [vmem:[%s8 + $0x47c] sm:$0xff]
      %v2403 = vld [vmem:[%s8 + $0x484] sm:$0xf]
      %v2404 = vld [vmem:[%s8 + $0x488] sm:$0xff]
      %v2405 = vld [vmem:[%s8 + $0x490] sm:$0xff]
      %v2406 = vld [vmem:[%s8 + $0x498] sm:$0xf]
      %v2407 = vld [vmem:[%s8 + $0x49c] sm:$0xff]
      %v2408 = vld [vmem:[%s8 + $0x4a4] sm:$0xff]
      %v2409 = vld [vmem:[%s8 + $0x4ac] sm:$0xf]
      %v2410 = vld [vmem:[%s8 + $0x4b0] sm:$0xff]
      %v2411 = vld [vmem:[%s8 + $0x4b8] sm:$0xff]
      %v2412 = vld [vmem:[%s8 + $0x4c0] sm:$0xf]
      %v2413 = vld [vmem:[%s8 + $0x4c4] sm:$0xff]
      %v2414 = vld [vmem:[%s8 + $0x4cc] sm:$0xff]
      %v2415 = vld [vmem:[%s8 + $0x4d4] sm:$0xf]
      %v2416 = vld [vmem:[%s8 + $0x4d8] sm:$0xff]
      %v2417 = vld [vmem:[%s8 + $0x4e0] sm:$0xff]
      %v2418 = vld [vmem:[%s8 + $0x4e8] sm:$0xf]
      %v2419 = vld [vmem:[%s8 + $0x4ec] sm:$0xff]
      %v2420 = vld [vmem:[%s8 + $0x4f4] sm:$0xff]
      %v2421 = vld [vmem:[%s8 + $0x4fc] sm:$0xf]
      %v2422 = vld [vmem:[%s11] sm:$0xff]
      %v2423 = vld [vmem:[%s11 + $0x8] sm:$0xff]
      %v2424 = vld [vmem:[%s11 + $0x10] sm:$0xf]
      %v2425 = vld [vmem:[%s11 + $0x14] sm:$0xff]
      %v2426 = vld [vmem:[%s11 + $0x1c] sm:$0xff]
      %v2427 = vld [vmem:[%s11 + $0x24] sm:$0xf]
      %v2428 = vld [vmem:[%s11 + $0x28] sm:$0xff]
      %v2429 = vld [vmem:[%s11 + $0x30] sm:$0xff]
      %v2430 = vld [vmem:[%s11 + $0x38] sm:$0xf]
      %v2431 = vld [vmem:[%s11 + $0x3c] sm:$0xff]
      %v2432 = vld [vmem:[%s11 + $0x44] sm:$0xff]
      %v2433 = vld [vmem:[%s11 + $0x4c] sm:$0xf]
      %v2434 = vld [vmem:[%s11 + $0x50] sm:$0xff]
      %v2435 = vld [vmem:[%s11 + $0x58] sm:$0xff]
      %v2436 = vld [vmem:[%s11 + $0x60] sm:$0xf]
      %v2437 = vld [vmem:[%s11 + $0x64] sm:$0xff]
      %v2438 = vld [vmem:[%s11 + $0x6c] sm:$0xff]
      %v2439 = vld [vmem:[%s11 + $0x74] sm:$0xf]
      %v2440 = vld [vmem:[%s11 + $0x78] sm:$0xff]
      %v2441 = vld [vmem:[%s11 + $0x80] sm:$0xff]
      %v2442 = vld [vmem:[%s11 + $0x88] sm:$0xf]
      %v2443 = vld [vmem:[%s11 + $0x8c] sm:$0xff]
      %v2444 = vld [vmem:[%s11 + $0x94] sm:$0xff]
      %v2445 = vld [vmem:[%s11 + $0x9c] sm:$0xf]
      %v2446 = vld [vmem:[%s11 + $0xa0] sm:$0xff]
      %v2447 = vld [vmem:[%s11 + $0xa8] sm:$0xff]
      %v2448 = vld [vmem:[%s11 + $0xb0] sm:$0xf]
      %v2449 = vld [vmem:[%s11 + $0xb4] sm:$0xff]
      %v2450 = vld [vmem:[%s11 + $0xbc] sm:$0xff]
      %v2451 = vld [vmem:[%s11 + $0xc4] sm:$0xf]
      %v2452 = vld [vmem:[%s11 + $0xc8] sm:$0xff]
      %v2453 = vld [vmem:[%s11 + $0xd0] sm:$0xff]
      %v2454 = vld [vmem:[%s11 + $0xd8] sm:$0xf]
      %v2455 = vld [vmem:[%s11 + $0xdc] sm:$0xff]
      %v2456 = vld [vmem:[%s11 + $0xe4] sm:$0xff]
      %v2457 = vld [vmem:[%s11 + $0xec] sm:$0xf]
      %v2458 = vld [vmem:[%s11 + $0xf0] sm:$0xff]
      %v2459 = vld [vmem:[%s11 + $0xf8] sm:$0xff]
      %v2460 = vld [vmem:[%s11 + $0x100] sm:$0xf]
      %v2461 = vld [vmem:[%s11 + $0x104] sm:$0xff]
      %v2462 = vld [vmem:[%s11 + $0x10c] sm:$0xff]
      %v2463 = vld [vmem:[%s11 + $0x114] sm:$0xf]
      %v2464 = vld [vmem:[%s11 + $0x118] sm:$0xff]
      %v2465 = vld [vmem:[%s11 + $0x120] sm:$0xff]
      %v2466 = vld [vmem:[%s11 + $0x128] sm:$0xf]
      %v2467 = vld [vmem:[%s11 + $0x12c] sm:$0xff]
      %v2468 = vld [vmem:[%s11 + $0x134] sm:$0xff]
      %v2469 = vld [vmem:[%s11 + $0x13c] sm:$0xf]
      %v2472 = vunpack.c.l.b16 %v2228
      %v2473 = vunpack.c.l.b16 %v2229
      %v2474 = vpack.c.b16 %v2473, %v2472
      %v2524 = vunpack.c.l.b16 %v2422
      %v2525 = vunpack.c.h.b16 %v2422
      %v2526 = vunpack.c.l.b16 %v2423
      %v2527 = vunpack.c.h.b16 %v2423
      %v2528 = vunpack.c.l.b16 %v2424
      %v2529 = vunpack.c.l.b16 %v2425
      %v2530 = vunpack.c.h.b16 %v2425
      %v2531 = vunpack.c.l.b16 %v2426
      %v2532 = vunpack.c.h.b16 %v2426
      %v2533 = vunpack.c.l.b16 %v2427
      %v2534 = vunpack.c.l.b16 %v2428
      %v2535 = vunpack.c.h.b16 %v2428
      %v2536 = vunpack.c.l.b16 %v2429
      %v2537 = vunpack.c.h.b16 %v2429
      %v2538 = vunpack.c.l.b16 %v2430
      %v2539 = vunpack.c.l.b16 %v2431
      %v2540 = vunpack.c.h.b16 %v2431
      %v2541 = vunpack.c.l.b16 %v2432
      %v2542 = vunpack.c.h.b16 %v2432
      %v2543 = vunpack.c.l.b16 %v2433
      %v2544 = vunpack.c.l.b16 %v2434
      %v2545 = vunpack.c.h.b16 %v2434
      %v2546 = vunpack.c.l.b16 %v2435
      %v2547 = vunpack.c.h.b16 %v2435
      %v2548 = vunpack.c.l.b16 %v2436
      %v2549 = vunpack.c.l.b16 %v2437
      %v2550 = vunpack.c.h.b16 %v2437
      %v2551 = vunpack.c.l.b16 %v2438
      %v2552 = vunpack.c.h.b16 %v2438
      %v2553 = vunpack.c.l.b16 %v2439
      %v2554 = vunpack.c.l.b16 %v2440
      %v2555 = vunpack.c.h.b16 %v2440
      %v2556 = vunpack.c.l.b16 %v2441
      %v2557 = vunpack.c.h.b16 %v2441
      %v2558 = vunpack.c.l.b16 %v2442
      %v2559 = vunpack.c.l.b16 %v2443
      %v2560 = vunpack.c.h.b16 %v2443
      %v2561 = vunpack.c.l.b16 %v2444
      %v2562 = vunpack.c.h.b16 %v2444
      %v2563 = vunpack.c.l.b16 %v2445
      %v2564 = vunpack.c.l.b16 %v2446
      %v2565 = vunpack.c.h.b16 %v2446
      %v2566 = vunpack.c.l.b16 %v2447
      %v2567 = vunpack.c.h.b16 %v2447
      %v2568 = vunpack.c.l.b16 %v2448
      %v2569 = vunpack.c.l.b16 %v2449
      %v2570 = vunpack.c.h.b16 %v2449
      %v2571 = vunpack.c.l.b16 %v2450
      %v2572 = vunpack.c.h.b16 %v2450
      %v2573 = vunpack.c.l.b16 %v2451
      %v2574 = vunpack.c.l.b16 %v2452
      %v2575 = vunpack.c.h.b16 %v2452
      %v2576 = vunpack.c.l.b16 %v2453
      %v2577 = vunpack.c.h.b16 %v2453
      %v2578 = vunpack.c.l.b16 %v2454
      %v2579 = vunpack.c.l.b16 %v2455
      %v2580 = vunpack.c.h.b16 %v2455
      %v2581 = vunpack.c.l.b16 %v2456
      %v2582 = vunpack.c.h.b16 %v2456
      %v2583 = vunpack.c.l.b16 %v2457
      %v2584 = vunpack.c.l.b16 %v2458
      %v2585 = vunpack.c.h.b16 %v2458
      %v2586 = vunpack.c.l.b16 %v2459
      %v2587 = vunpack.c.h.b16 %v2459
      %v2588 = vunpack.c.l.b16 %v2460
      %v2589 = vunpack.c.l.b16 %v2461
      %v2590 = vunpack.c.h.b16 %v2461
      %v2591 = vunpack.c.l.b16 %v2462
      %v2592 = vunpack.c.h.b16 %v2462
      %v2593 = vunpack.c.l.b16 %v2463
      %v2594 = vunpack.c.l.b16 %v2464
      %v2595 = vunpack.c.h.b16 %v2464
      %v2596 = vunpack.c.l.b16 %v2465
      %v2597 = vunpack.c.h.b16 %v2465
      %v2598 = vunpack.c.l.b16 %v2466
      %v2599 = vunpack.c.l.b16 %v2467
      %v2600 = vunpack.c.h.b16 %v2467
      %v2601 = vunpack.c.l.b16 %v2468
      %v2602 = vunpack.c.h.b16 %v2468
      %v2603 = vunpack.c.l.b16 %v2469
      %v2604 = vpack.c.b16 %v2529, %v2524
      %v2605 = vpack.c.b16 %v2530, %v2525
      %v2606 = vpack.c.b16 %v2531, %v2526
      %v2607 = vpack.c.b16 %v2532, %v2527
      %v2608 = vpack.c.b16 %v2533, %v2528
      %v2609 = vpack.c.b16 %v2539, %v2534
      %v2610 = vpack.c.b16 %v2540, %v2535
      %v2611 = vpack.c.b16 %v2541, %v2536
      %v2612 = vpack.c.b16 %v2542, %v2537
      %v2613 = vpack.c.b16 %v2543, %v2538
      %v2614 = vpack.c.b16 %v2549, %v2544
      %v2615 = vpack.c.b16 %v2550, %v2545
      %v2616 = vpack.c.b16 %v2551, %v2546
      %v2617 = vpack.c.b16 %v2552, %v2547
      %v2618 = vpack.c.b16 %v2553, %v2548
      %v2619 = vpack.c.b16 %v2559, %v2554
      %v2620 = vpack.c.b16 %v2560, %v2555
      %v2621 = vpack.c.b16 %v2561, %v2556
      %v2622 = vpack.c.b16 %v2562, %v2557
      %v2623 = vpack.c.b16 %v2563, %v2558
      %v2624 = vpack.c.b16 %v2569, %v2564
      %v2625 = vpack.c.b16 %v2570, %v2565
      %v2626 = vpack.c.b16 %v2571, %v2566
      %v2627 = vpack.c.b16 %v2572, %v2567
      %v2628 = vpack.c.b16 %v2573, %v2568
      %v2629 = vpack.c.b16 %v2579, %v2574
      %v2630 = vpack.c.b16 %v2580, %v2575
      %v2631 = vpack.c.b16 %v2581, %v2576
      %v2632 = vpack.c.b16 %v2582, %v2577
      %v2633 = vpack.c.b16 %v2583, %v2578
      %v2634 = vpack.c.b16 %v2589, %v2584
      %v2635 = vpack.c.b16 %v2590, %v2585
      %v2636 = vpack.c.b16 %v2591, %v2586
      %v2637 = vpack.c.b16 %v2592, %v2587
      %v2638 = vpack.c.b16 %v2593, %v2588
      %v2639 = vpack.c.b16 %v2599, %v2594
      %v2640 = vpack.c.b16 %v2600, %v2595
      %v2641 = vpack.c.b16 %v2601, %v2596
      %v2642 = vpack.c.b16 %v2602, %v2597
      %v2643 = vpack.c.b16 %v2603, %v2598
      %2684 = vmatpush.bf16.msra.mxu0 %v2639
      %2685 = vmatpush.bf16.msra.mxu0 %v2634
      %2686 = vmatpush.bf16.msra.mxu0 %v2629
      %2687 = vmatpush.bf16.msra.mxu0 %v2624
      %2688 = vmatpush.bf16.msra.mxu0 %v2619
      %2689 = vmatpush.bf16.msra.mxu0 %v2614
      %2690 = vmatpush.bf16.msra.mxu0 %v2609
      %2691 = vmatpush.bf16.msra.mxu0 %v2604
      %2692 = vmatmul.bf16.gmra.mxu0 %v2474
      %v2693 = vpop.f32.mrf.mxu0
      %v2694 = vadd.f32 0.0, %v2693
      %v2695 = vpop.f32.mrf.mxu0
      %v2696 = vadd.f32 0.0, %v2695
      %2697 = vdwg.mxu0
      %2698 = vmatpush.bf16.msra.mxu0 %v2640
      %2699 = vmatpush.bf16.msra.mxu0 %v2635
      %2700 = vmatpush.bf16.msra.mxu0 %v2630
      %2701 = vmatpush.bf16.msra.mxu0 %v2625
      %2702 = vmatpush.bf16.msra.mxu0 %v2620
      %2703 = vmatpush.bf16.msra.mxu0 %v2615
      %2704 = vmatpush.bf16.msra.mxu0 %v2610
      %2705 = vmatpush.bf16.msra.mxu0 %v2605
      %2706 = vmatmul.bf16.gmra.mxu0 %v2474
      %v2707 = vpop.f32.mrf.mxu0
      %v2708 = vadd.f32 0.0, %v2707
      %v2709 = vpop.f32.mrf.mxu0
      %v2710 = vadd.f32 0.0, %v2709
      %2711 = vdwg.mxu0
      %2712 = vmatpush.bf16.msra.mxu0 %v2641
      %2713 = vmatpush.bf16.msra.mxu0 %v2636
      %2714 = vmatpush.bf16.msra.mxu0 %v2631
      %2715 = vmatpush.bf16.msra.mxu0 %v2626
      %2716 = vmatpush.bf16.msra.mxu0 %v2621
      %2717 = vmatpush.bf16.msra.mxu0 %v2616
      %2718 = vmatpush.bf16.msra.mxu0 %v2611
      %2719 = vmatpush.bf16.msra.mxu0 %v2606
      %2720 = vmatmul.bf16.gmra.mxu0 %v2474
      %v2721 = vpop.f32.mrf.mxu0
      %v2722 = vadd.f32 0.0, %v2721
      %v2723 = vpop.f32.mrf.mxu0
      %v2724 = vadd.f32 0.0, %v2723
      %2725 = vdwg.mxu0
      %2726 = vmatpush.bf16.msra.mxu0 %v2642
      %2727 = vmatpush.bf16.msra.mxu0 %v2637
      %2728 = vmatpush.bf16.msra.mxu0 %v2632
      %2729 = vmatpush.bf16.msra.mxu0 %v2627
      %2730 = vmatpush.bf16.msra.mxu0 %v2622
      %2731 = vmatpush.bf16.msra.mxu0 %v2617
      %2732 = vmatpush.bf16.msra.mxu0 %v2612
      %2733 = vmatpush.bf16.msra.mxu0 %v2607
      %2734 = vmatmul.bf16.gmra.mxu0 %v2474
      %v2735 = vpop.f32.mrf.mxu0
      %v2736 = vadd.f32 0.0, %v2735
      %v2737 = vpop.f32.mrf.mxu0
      %v2738 = vadd.f32 0.0, %v2737
      %2739 = vdwg.mxu0
      %2740 = vmatpush.bf16.msra.mxu0 %v2643
      %2741 = vmatpush.bf16.msra.mxu0 %v2638
      %2742 = vmatpush.bf16.msra.mxu0 %v2633
      %2743 = vmatpush.bf16.msra.mxu0 %v2628
      %2744 = vmatpush.bf16.msra.mxu0 %v2623
      %2745 = vmatpush.bf16.msra.mxu0 %v2618
      %2746 = vmatpush.bf16.msra.mxu0 %v2613
      %2747 = vmatpush.bf16.msra.mxu0 %v2608
      %2748 = vmatmul.bf16.gmra.mxu0 %v2474
      %v2749 = vpop.f32.mrf.mxu0
      %v2750 = vadd.f32 0.0, %v2749
      %v2751 = vpop.f32.mrf.mxu0
      %v2752 = vadd.f32 0.0, %v2751
      %2753 = vdwg.mxu0
      %v2946 = vunpack.c.l.b16 %v2230
      %v2947 = vunpack.c.h.b16 %v2230
      %v2948 = vunpack.c.l.b16 %v2231
      %v2949 = vunpack.c.h.b16 %v2231
      %v2950 = vunpack.c.l.b16 %v2232
      %v2951 = vunpack.c.l.b16 %v2233
      %v2952 = vunpack.c.h.b16 %v2233
      %v2953 = vunpack.c.l.b16 %v2234
      %v2954 = vunpack.c.h.b16 %v2234
      %v2955 = vunpack.c.l.b16 %v2235
      %v2956 = vunpack.c.l.b16 %v2236
      %v2957 = vunpack.c.h.b16 %v2236
      %v2958 = vunpack.c.l.b16 %v2237
      %v2959 = vunpack.c.h.b16 %v2237
      %v2960 = vunpack.c.l.b16 %v2238
      %v2961 = vunpack.c.l.b16 %v2239
      %v2962 = vunpack.c.h.b16 %v2239
      %v2963 = vunpack.c.l.b16 %v2240
      %v2964 = vunpack.c.h.b16 %v2240
      %v2965 = vunpack.c.l.b16 %v2241
      %v2966 = vunpack.c.l.b16 %v2242
      %v2967 = vunpack.c.h.b16 %v2242
      %v2968 = vunpack.c.l.b16 %v2243
      %v2969 = vunpack.c.h.b16 %v2243
      %v2970 = vunpack.c.l.b16 %v2244
      %v2971 = vunpack.c.l.b16 %v2245
      %v2972 = vunpack.c.h.b16 %v2245
      %v2973 = vunpack.c.l.b16 %v2246
      %v2974 = vunpack.c.h.b16 %v2246
      %v2975 = vunpack.c.l.b16 %v2247
      %v2976 = vunpack.c.l.b16 %v2248
      %v2977 = vunpack.c.h.b16 %v2248
      %v2978 = vunpack.c.l.b16 %v2249
      %v2979 = vunpack.c.h.b16 %v2249
      %v2980 = vunpack.c.l.b16 %v2250
      %v2981 = vunpack.c.l.b16 %v2251
      %v2982 = vunpack.c.h.b16 %v2251
      %v2983 = vunpack.c.l.b16 %v2252
      %v2984 = vunpack.c.h.b16 %v2252
      %v2985 = vunpack.c.l.b16 %v2253
      %v2986 = vunpack.c.l.b16 %v2254
      %v2987 = vunpack.c.h.b16 %v2254
      %v2988 = vunpack.c.l.b16 %v2255
      %v2989 = vunpack.c.h.b16 %v2255
      %v2990 = vunpack.c.l.b16 %v2256
      %v2991 = vunpack.c.l.b16 %v2257
      %v2992 = vunpack.c.h.b16 %v2257
      %v2993 = vunpack.c.l.b16 %v2258
      %v2994 = vunpack.c.h.b16 %v2258
      %v2995 = vunpack.c.l.b16 %v2259
      %v2996 = vunpack.c.l.b16 %v2260
      %v2997 = vunpack.c.h.b16 %v2260
      %v2998 = vunpack.c.l.b16 %v2261
      %v2999 = vunpack.c.h.b16 %v2261
      %v3000 = vunpack.c.l.b16 %v2262
      %v3001 = vunpack.c.l.b16 %v2263
      %v3002 = vunpack.c.h.b16 %v2263
      %v3003 = vunpack.c.l.b16 %v2264
      %v3004 = vunpack.c.h.b16 %v2264
      %v3005 = vunpack.c.l.b16 %v2265
      %v3006 = vunpack.c.l.b16 %v2266
      %v3007 = vunpack.c.h.b16 %v2266
      %v3008 = vunpack.c.l.b16 %v2267
      %v3009 = vunpack.c.h.b16 %v2267
      %v3010 = vunpack.c.l.b16 %v2268
      %v3011 = vunpack.c.l.b16 %v2269
      %v3012 = vunpack.c.h.b16 %v2269
      %v3013 = vunpack.c.l.b16 %v2270
      %v3014 = vunpack.c.h.b16 %v2270
      %v3015 = vunpack.c.l.b16 %v2271
      %v3016 = vunpack.c.l.b16 %v2272
      %v3017 = vunpack.c.h.b16 %v2272
      %v3018 = vunpack.c.l.b16 %v2273
      %v3019 = vunpack.c.h.b16 %v2273
      %v3020 = vunpack.c.l.b16 %v2274
      %v3021 = vunpack.c.l.b16 %v2275
      %v3022 = vunpack.c.h.b16 %v2275
      %v3023 = vunpack.c.l.b16 %v2276
      %v3024 = vunpack.c.h.b16 %v2276
      %v3025 = vunpack.c.l.b16 %v2277
      %v3026 = vunpack.c.l.b16 %v2278
      %v3027 = vunpack.c.h.b16 %v2278
      %v3028 = vunpack.c.l.b16 %v2279
      %v3029 = vunpack.c.h.b16 %v2279
      %v3030 = vunpack.c.l.b16 %v2280
      %v3031 = vunpack.c.l.b16 %v2281
      %v3032 = vunpack.c.h.b16 %v2281
      %v3033 = vunpack.c.l.b16 %v2282
      %v3034 = vunpack.c.h.b16 %v2282
      %v3035 = vunpack.c.l.b16 %v2283
      %v3036 = vunpack.c.l.b16 %v2284
      %v3037 = vunpack.c.h.b16 %v2284
      %v3038 = vunpack.c.l.b16 %v2285
      %v3039 = vunpack.c.h.b16 %v2285
      %v3040 = vunpack.c.l.b16 %v2286
      %v3041 = vunpack.c.l.b16 %v2287
      %v3042 = vunpack.c.h.b16 %v2287
      %v3043 = vunpack.c.l.b16 %v2288
      %v3044 = vunpack.c.h.b16 %v2288
      %v3045 = vunpack.c.l.b16 %v2289
      %v3046 = vunpack.c.l.b16 %v2290
      %v3047 = vunpack.c.h.b16 %v2290
      %v3048 = vunpack.c.l.b16 %v2291
      %v3049 = vunpack.c.h.b16 %v2291
      %v3050 = vunpack.c.l.b16 %v2292
      %v3051 = vunpack.c.l.b16 %v2293
      %v3052 = vunpack.c.h.b16 %v2293
      %v3053 = vunpack.c.l.b16 %v2294
      %v3054 = vunpack.c.h.b16 %v2294
      %v3055 = vunpack.c.l.b16 %v2295
      %v3056 = vunpack.c.l.b16 %v2296
      %v3057 = vunpack.c.h.b16 %v2296
      %v3058 = vunpack.c.l.b16 %v2297
      %v3059 = vunpack.c.h.b16 %v2297
      %v3060 = vunpack.c.l.b16 %v2298
      %v3061 = vunpack.c.l.b16 %v2299
      %v3062 = vunpack.c.h.b16 %v2299
      %v3063 = vunpack.c.l.b16 %v2300
      %v3064 = vunpack.c.h.b16 %v2300
      %v3065 = vunpack.c.l.b16 %v2301
      %v3066 = vunpack.c.l.b16 %v2302
      %v3067 = vunpack.c.h.b16 %v2302
      %v3068 = vunpack.c.l.b16 %v2303
      %v3069 = vunpack.c.h.b16 %v2303
      %v3070 = vunpack.c.l.b16 %v2304
      %v3071 = vunpack.c.l.b16 %v2305
      %v3072 = vunpack.c.h.b16 %v2305
      %v3073 = vunpack.c.l.b16 %v2306
      %v3074 = vunpack.c.h.b16 %v2306
      %v3075 = vunpack.c.l.b16 %v2307
      %v3076 = vunpack.c.l.b16 %v2308
      %v3077 = vunpack.c.h.b16 %v2308
      %v3078 = vunpack.c.l.b16 %v2309
      %v3079 = vunpack.c.h.b16 %v2309
      %v3080 = vunpack.c.l.b16 %v2310
      %v3081 = vunpack.c.l.b16 %v2311
      %v3082 = vunpack.c.h.b16 %v2311
      %v3083 = vunpack.c.l.b16 %v2312
      %v3084 = vunpack.c.h.b16 %v2312
      %v3085 = vunpack.c.l.b16 %v2313
      %v3086 = vunpack.c.l.b16 %v2314
      %v3087 = vunpack.c.h.b16 %v2314
      %v3088 = vunpack.c.l.b16 %v2315
      %v3089 = vunpack.c.h.b16 %v2315
      %v3090 = vunpack.c.l.b16 %v2316
      %v3091 = vunpack.c.l.b16 %v2317
      %v3092 = vunpack.c.h.b16 %v2317
      %v3093 = vunpack.c.l.b16 %v2318
      %v3094 = vunpack.c.h.b16 %v2318
      %v3095 = vunpack.c.l.b16 %v2319
      %v3096 = vunpack.c.l.b16 %v2320
      %v3097 = vunpack.c.h.b16 %v2320
      %v3098 = vunpack.c.l.b16 %v2321
      %v3099 = vunpack.c.h.b16 %v2321
      %v3100 = vunpack.c.l.b16 %v2322
      %v3101 = vunpack.c.l.b16 %v2323
      %v3102 = vunpack.c.h.b16 %v2323
      %v3103 = vunpack.c.l.b16 %v2324
      %v3104 = vunpack.c.h.b16 %v2324
      %v3105 = vunpack.c.l.b16 %v2325
      %v3106 = vunpack.c.l.b16 %v2326
      %v3107 = vunpack.c.h.b16 %v2326
      %v3108 = vunpack.c.l.b16 %v2327
      %v3109 = vunpack.c.h.b16 %v2327
      %v3110 = vunpack.c.l.b16 %v2328
      %v3111 = vunpack.c.l.b16 %v2329
      %v3112 = vunpack.c.h.b16 %v2329
      %v3113 = vunpack.c.l.b16 %v2330
      %v3114 = vunpack.c.h.b16 %v2330
      %v3115 = vunpack.c.l.b16 %v2331
      %v3116 = vunpack.c.l.b16 %v2332
      %v3117 = vunpack.c.h.b16 %v2332
      %v3118 = vunpack.c.l.b16 %v2333
      %v3119 = vunpack.c.h.b16 %v2333
      %v3120 = vunpack.c.l.b16 %v2334
      %v3121 = vunpack.c.l.b16 %v2335
      %v3122 = vunpack.c.h.b16 %v2335
      %v3123 = vunpack.c.l.b16 %v2336
      %v3124 = vunpack.c.h.b16 %v2336
      %v3125 = vunpack.c.l.b16 %v2337
      %v3126 = vunpack.c.l.b16 %v2338
      %v3127 = vunpack.c.h.b16 %v2338
      %v3128 = vunpack.c.l.b16 %v2339
      %v3129 = vunpack.c.h.b16 %v2339
      %v3130 = vunpack.c.l.b16 %v2340
      %v3131 = vunpack.c.l.b16 %v2341
      %v3132 = vunpack.c.h.b16 %v2341
      %v3133 = vunpack.c.l.b16 %v2342
      %v3134 = vunpack.c.h.b16 %v2342
      %v3135 = vunpack.c.l.b16 %v2343
      %v3136 = vunpack.c.l.b16 %v2344
      %v3137 = vunpack.c.h.b16 %v2344
      %v3138 = vunpack.c.l.b16 %v2345
      %v3139 = vunpack.c.h.b16 %v2345
      %v3140 = vunpack.c.l.b16 %v2346
      %v3141 = vunpack.c.l.b16 %v2347
      %v3142 = vunpack.c.h.b16 %v2347
      %v3143 = vunpack.c.l.b16 %v2348
      %v3144 = vunpack.c.h.b16 %v2348
      %v3145 = vunpack.c.l.b16 %v2349
      %v3146 = vunpack.c.l.b16 %v2350
      %v3147 = vunpack.c.h.b16 %v2350
      %v3148 = vunpack.c.l.b16 %v2351
      %v3149 = vunpack.c.h.b16 %v2351
      %v3150 = vunpack.c.l.b16 %v2352
      %v3151 = vunpack.c.l.b16 %v2353
      %v3152 = vunpack.c.h.b16 %v2353
      %v3153 = vunpack.c.l.b16 %v2354
      %v3154 = vunpack.c.h.b16 %v2354
      %v3155 = vunpack.c.l.b16 %v2355
      %v3156 = vunpack.c.l.b16 %v2356
      %v3157 = vunpack.c.h.b16 %v2356
      %v3158 = vunpack.c.l.b16 %v2357
      %v3159 = vunpack.c.h.b16 %v2357
      %v3160 = vunpack.c.l.b16 %v2358
      %v3161 = vunpack.c.l.b16 %v2359
      %v3162 = vunpack.c.h.b16 %v2359
      %v3163 = vunpack.c.l.b16 %v2360
      %v3164 = vunpack.c.h.b16 %v2360
      %v3165 = vunpack.c.l.b16 %v2361
      %v3166 = vunpack.c.l.b16 %v2362
      %v3167 = vunpack.c.h.b16 %v2362
      %v3168 = vunpack.c.l.b16 %v2363
      %v3169 = vunpack.c.h.b16 %v2363
      %v3170 = vunpack.c.l.b16 %v2364
      %v3171 = vunpack.c.l.b16 %v2365
      %v3172 = vunpack.c.h.b16 %v2365
      %v3173 = vunpack.c.l.b16 %v2366
      %v3174 = vunpack.c.h.b16 %v2366
      %v3175 = vunpack.c.l.b16 %v2367
      %v3176 = vunpack.c.l.b16 %v2368
      %v3177 = vunpack.c.h.b16 %v2368
      %v3178 = vunpack.c.l.b16 %v2369
      %v3179 = vunpack.c.h.b16 %v2369
      %v3180 = vunpack.c.l.b16 %v2370
      %v3181 = vunpack.c.l.b16 %v2371
      %v3182 = vunpack.c.h.b16 %v2371
      %v3183 = vunpack.c.l.b16 %v2372
      %v3184 = vunpack.c.h.b16 %v2372
      %v3185 = vunpack.c.l.b16 %v2373
      %v3186 = vunpack.c.l.b16 %v2374
      %v3187 = vunpack.c.h.b16 %v2374
      %v3188 = vunpack.c.l.b16 %v2375
      %v3189 = vunpack.c.h.b16 %v2375
      %v3190 = vunpack.c.l.b16 %v2376
      %v3191 = vunpack.c.l.b16 %v2377
      %v3192 = vunpack.c.h.b16 %v2377
      %v3193 = vunpack.c.l.b16 %v2378
      %v3194 = vunpack.c.h.b16 %v2378
      %v3195 = vunpack.c.l.b16 %v2379
      %v3196 = vunpack.c.l.b16 %v2380
      %v3197 = vunpack.c.h.b16 %v2380
      %v3198 = vunpack.c.l.b16 %v2381
      %v3199 = vunpack.c.h.b16 %v2381
      %v3200 = vunpack.c.l.b16 %v2382
      %v3201 = vunpack.c.l.b16 %v2383
      %v3202 = vunpack.c.h.b16 %v2383
      %v3203 = vunpack.c.l.b16 %v2384
      %v3204 = vunpack.c.h.b16 %v2384
      %v3205 = vunpack.c.l.b16 %v2385
      %v3206 = vunpack.c.l.b16 %v2386
      %v3207 = vunpack.c.h.b16 %v2386
      %v3208 = vunpack.c.l.b16 %v2387
      %v3209 = vunpack.c.h.b16 %v2387
      %v3210 = vunpack.c.l.b16 %v2388
      %v3211 = vunpack.c.l.b16 %v2389
      %v3212 = vunpack.c.h.b16 %v2389
      %v3213 = vunpack.c.l.b16 %v2390
      %v3214 = vunpack.c.h.b16 %v2390
      %v3215 = vunpack.c.l.b16 %v2391
      %v3216 = vunpack.c.l.b16 %v2392
      %v3217 = vunpack.c.h.b16 %v2392
      %v3218 = vunpack.c.l.b16 %v2393
      %v3219 = vunpack.c.h.b16 %v2393
      %v3220 = vunpack.c.l.b16 %v2394
      %v3221 = vunpack.c.l.b16 %v2395
      %v3222 = vunpack.c.h.b16 %v2395
      %v3223 = vunpack.c.l.b16 %v2396
      %v3224 = vunpack.c.h.b16 %v2396
      %v3225 = vunpack.c.l.b16 %v2397
      %v3226 = vunpack.c.l.b16 %v2398
      %v3227 = vunpack.c.h.b16 %v2398
      %v3228 = vunpack.c.l.b16 %v2399
      %v3229 = vunpack.c.h.b16 %v2399
      %v3230 = vunpack.c.l.b16 %v2400
      %v3231 = vunpack.c.l.b16 %v2401
      %v3232 = vunpack.c.h.b16 %v2401
      %v3233 = vunpack.c.l.b16 %v2402
      %v3234 = vunpack.c.h.b16 %v2402
      %v3235 = vunpack.c.l.b16 %v2403
      %v3236 = vunpack.c.l.b16 %v2404
      %v3237 = vunpack.c.h.b16 %v2404
      %v3238 = vunpack.c.l.b16 %v2405
      %v3239 = vunpack.c.h.b16 %v2405
      %v3240 = vunpack.c.l.b16 %v2406
      %v3241 = vunpack.c.l.b16 %v2407
      %v3242 = vunpack.c.h.b16 %v2407
      %v3243 = vunpack.c.l.b16 %v2408
      %v3244 = vunpack.c.h.b16 %v2408
      %v3245 = vunpack.c.l.b16 %v2409
      %v3246 = vunpack.c.l.b16 %v2410
      %v3247 = vunpack.c.h.b16 %v2410
      %v3248 = vunpack.c.l.b16 %v2411
      %v3249 = vunpack.c.h.b16 %v2411
      %v3250 = vunpack.c.l.b16 %v2412
      %v3251 = vunpack.c.l.b16 %v2413
      %v3252 = vunpack.c.h.b16 %v2413
      %v3253 = vunpack.c.l.b16 %v2414
      %v3254 = vunpack.c.h.b16 %v2414
      %v3255 = vunpack.c.l.b16 %v2415
      %v3256 = vunpack.c.l.b16 %v2416
      %v3257 = vunpack.c.h.b16 %v2416
      %v3258 = vunpack.c.l.b16 %v2417
      %v3259 = vunpack.c.h.b16 %v2417
      %v3260 = vunpack.c.l.b16 %v2418
      %v3261 = vunpack.c.l.b16 %v2419
      %v3262 = vunpack.c.h.b16 %v2419
      %v3263 = vunpack.c.l.b16 %v2420
      %v3264 = vunpack.c.h.b16 %v2420
      %v3265 = vunpack.c.l.b16 %v2421
      %v3266 = vpack.c.b16 %v2951, %v2946
      %v3267 = vpack.c.b16 %v2952, %v2947
      %v3268 = vpack.c.b16 %v2953, %v2948
      %v3269 = vpack.c.b16 %v2954, %v2949
      %v3270 = vpack.c.b16 %v2955, %v2950
      %v3271 = vpack.c.b16 %v2961, %v2956
      %v3272 = vpack.c.b16 %v2962, %v2957
      %v3273 = vpack.c.b16 %v2963, %v2958
      %v3274 = vpack.c.b16 %v2964, %v2959
      %v3275 = vpack.c.b16 %v2965, %v2960
      %v3276 = vpack.c.b16 %v2971, %v2966
      %v3277 = vpack.c.b16 %v2972, %v2967
      %v3278 = vpack.c.b16 %v2973, %v2968
      %v3279 = vpack.c.b16 %v2974, %v2969
      %v3280 = vpack.c.b16 %v2975, %v2970
      %v3281 = vpack.c.b16 %v2981, %v2976
      %v3282 = vpack.c.b16 %v2982, %v2977
      %v3283 = vpack.c.b16 %v2983, %v2978
      %v3284 = vpack.c.b16 %v2984, %v2979
      %v3285 = vpack.c.b16 %v2985, %v2980
      %v3286 = vpack.c.b16 %v2991, %v2986
      %v3287 = vpack.c.b16 %v2992, %v2987
      %v3288 = vpack.c.b16 %v2993, %v2988
      %v3289 = vpack.c.b16 %v2994, %v2989
      %v3290 = vpack.c.b16 %v2995, %v2990
      %v3291 = vpack.c.b16 %v3001, %v2996
      %v3292 = vpack.c.b16 %v3002, %v2997
      %v3293 = vpack.c.b16 %v3003, %v2998
      %v3294 = vpack.c.b16 %v3004, %v2999
      %v3295 = vpack.c.b16 %v3005, %v3000
      %v3296 = vpack.c.b16 %v3011, %v3006
      %v3297 = vpack.c.b16 %v3012, %v3007
      %v3298 = vpack.c.b16 %v3013, %v3008
      %v3299 = vpack.c.b16 %v3014, %v3009
      %v3300 = vpack.c.b16 %v3015, %v3010
      %v3301 = vpack.c.b16 %v3021, %v3016
      %v3302 = vpack.c.b16 %v3022, %v3017
      %v3303 = vpack.c.b16 %v3023, %v3018
      %v3304 = vpack.c.b16 %v3024, %v3019
      %v3305 = vpack.c.b16 %v3025, %v3020
      %v3306 = vpack.c.b16 %v3031, %v3026
      %v3307 = vpack.c.b16 %v3032, %v3027
      %v3308 = vpack.c.b16 %v3033, %v3028
      %v3309 = vpack.c.b16 %v3034, %v3029
      %v3310 = vpack.c.b16 %v3035, %v3030
      %v3311 = vpack.c.b16 %v3041, %v3036
      %v3312 = vpack.c.b16 %v3042, %v3037
      %v3313 = vpack.c.b16 %v3043, %v3038
      %v3314 = vpack.c.b16 %v3044, %v3039
      %v3315 = vpack.c.b16 %v3045, %v3040
      %v3316 = vpack.c.b16 %v3051, %v3046
      %v3317 = vpack.c.b16 %v3052, %v3047
      %v3318 = vpack.c.b16 %v3053, %v3048
      %v3319 = vpack.c.b16 %v3054, %v3049
      %v3320 = vpack.c.b16 %v3055, %v3050
      %v3321 = vpack.c.b16 %v3061, %v3056
      %v3322 = vpack.c.b16 %v3062, %v3057
      %v3323 = vpack.c.b16 %v3063, %v3058
      %v3324 = vpack.c.b16 %v3064, %v3059
      %v3325 = vpack.c.b16 %v3065, %v3060
      %v3326 = vpack.c.b16 %v3071, %v3066
      %v3327 = vpack.c.b16 %v3072, %v3067
      %v3328 = vpack.c.b16 %v3073, %v3068
      %v3329 = vpack.c.b16 %v3074, %v3069
      %v3330 = vpack.c.b16 %v3075, %v3070
      %v3331 = vpack.c.b16 %v3081, %v3076
      %v3332 = vpack.c.b16 %v3082, %v3077
      %v3333 = vpack.c.b16 %v3083, %v3078
      %v3334 = vpack.c.b16 %v3084, %v3079
      %v3335 = vpack.c.b16 %v3085, %v3080
      %v3336 = vpack.c.b16 %v3091, %v3086
      %v3337 = vpack.c.b16 %v3092, %v3087
      %v3338 = vpack.c.b16 %v3093, %v3088
      %v3339 = vpack.c.b16 %v3094, %v3089
      %v3340 = vpack.c.b16 %v3095, %v3090
      %v3341 = vpack.c.b16 %v3101, %v3096
      %v3342 = vpack.c.b16 %v3102, %v3097
      %v3343 = vpack.c.b16 %v3103, %v3098
      %v3344 = vpack.c.b16 %v3104, %v3099
      %v3345 = vpack.c.b16 %v3105, %v3100
      %v3346 = vpack.c.b16 %v3111, %v3106
      %v3347 = vpack.c.b16 %v3112, %v3107
      %v3348 = vpack.c.b16 %v3113, %v3108
      %v3349 = vpack.c.b16 %v3114, %v3109
      %v3350 = vpack.c.b16 %v3115, %v3110
      %v3351 = vpack.c.b16 %v3121, %v3116
      %v3352 = vpack.c.b16 %v3122, %v3117
      %v3353 = vpack.c.b16 %v3123, %v3118
      %v3354 = vpack.c.b16 %v3124, %v3119
      %v3355 = vpack.c.b16 %v3125, %v3120
      %v3356 = vpack.c.b16 %v3131, %v3126
      %v3357 = vpack.c.b16 %v3132, %v3127
      %v3358 = vpack.c.b16 %v3133, %v3128
      %v3359 = vpack.c.b16 %v3134, %v3129
      %v3360 = vpack.c.b16 %v3135, %v3130
      %v3361 = vpack.c.b16 %v3141, %v3136
      %v3362 = vpack.c.b16 %v3142, %v3137
      %v3363 = vpack.c.b16 %v3143, %v3138
      %v3364 = vpack.c.b16 %v3144, %v3139
      %v3365 = vpack.c.b16 %v3145, %v3140
      %v3366 = vpack.c.b16 %v3151, %v3146
      %v3367 = vpack.c.b16 %v3152, %v3147
      %v3368 = vpack.c.b16 %v3153, %v3148
      %v3369 = vpack.c.b16 %v3154, %v3149
      %v3370 = vpack.c.b16 %v3155, %v3150
      %v3371 = vpack.c.b16 %v3161, %v3156
      %v3372 = vpack.c.b16 %v3162, %v3157
      %v3373 = vpack.c.b16 %v3163, %v3158
      %v3374 = vpack.c.b16 %v3164, %v3159
      %v3375 = vpack.c.b16 %v3165, %v3160
      %v3376 = vpack.c.b16 %v3171, %v3166
      %v3377 = vpack.c.b16 %v3172, %v3167
      %v3378 = vpack.c.b16 %v3173, %v3168
      %v3379 = vpack.c.b16 %v3174, %v3169
      %v3380 = vpack.c.b16 %v3175, %v3170
      %v3381 = vpack.c.b16 %v3181, %v3176
      %v3382 = vpack.c.b16 %v3182, %v3177
      %v3383 = vpack.c.b16 %v3183, %v3178
      %v3384 = vpack.c.b16 %v3184, %v3179
      %v3385 = vpack.c.b16 %v3185, %v3180
      %v3386 = vpack.c.b16 %v3191, %v3186
      %v3387 = vpack.c.b16 %v3192, %v3187
      %v3388 = vpack.c.b16 %v3193, %v3188
      %v3389 = vpack.c.b16 %v3194, %v3189
      %v3390 = vpack.c.b16 %v3195, %v3190
      %v3391 = vpack.c.b16 %v3201, %v3196
      %v3392 = vpack.c.b16 %v3202, %v3197
      %v3393 = vpack.c.b16 %v3203, %v3198
      %v3394 = vpack.c.b16 %v3204, %v3199
      %v3395 = vpack.c.b16 %v3205, %v3200
      %v3396 = vpack.c.b16 %v3211, %v3206
      %v3397 = vpack.c.b16 %v3212, %v3207
      %v3398 = vpack.c.b16 %v3213, %v3208
      %v3399 = vpack.c.b16 %v3214, %v3209
      %v3400 = vpack.c.b16 %v3215, %v3210
      %v3401 = vpack.c.b16 %v3221, %v3216
      %v3402 = vpack.c.b16 %v3222, %v3217
      %v3403 = vpack.c.b16 %v3223, %v3218
      %v3404 = vpack.c.b16 %v3224, %v3219
      %v3405 = vpack.c.b16 %v3225, %v3220
      %v3406 = vpack.c.b16 %v3231, %v3226
      %v3407 = vpack.c.b16 %v3232, %v3227
      %v3408 = vpack.c.b16 %v3233, %v3228
      %v3409 = vpack.c.b16 %v3234, %v3229
      %v3410 = vpack.c.b16 %v3235, %v3230
      %v3411 = vpack.c.b16 %v3241, %v3236
      %v3412 = vpack.c.b16 %v3242, %v3237
      %v3413 = vpack.c.b16 %v3243, %v3238
      %v3414 = vpack.c.b16 %v3244, %v3239
      %v3415 = vpack.c.b16 %v3245, %v3240
      %v3416 = vpack.c.b16 %v3251, %v3246
      %v3417 = vpack.c.b16 %v3252, %v3247
      %v3418 = vpack.c.b16 %v3253, %v3248
      %v3419 = vpack.c.b16 %v3254, %v3249
      %v3420 = vpack.c.b16 %v3255, %v3250
      %v3421 = vpack.c.b16 %v3261, %v3256
      %v3422 = vpack.c.b16 %v3262, %v3257
      %v3423 = vpack.c.b16 %v3263, %v3258
      %v3424 = vpack.c.b16 %v3264, %v3259
      %v3425 = vpack.c.b16 %v3265, %v3260
      %3586 = vmatpush.bf16.msra.mxu0 %v3301
      %3587 = vmatpush.bf16.msra.mxu0 %v3296
      %3588 = vmatpush.bf16.msra.mxu0 %v3291
      %3589 = vmatpush.bf16.msra.mxu0 %v3286
      %3590 = vmatpush.bf16.msra.mxu0 %v3281
      %3591 = vmatpush.bf16.msra.mxu0 %v3276
      %3592 = vmatpush.bf16.msra.mxu0 %v3271
      %3593 = vmatpush.bf16.msra.mxu0 %v3266
      %3594 = vmatmul.bf16.gmra.mxu0 %v2224
      %v3595 = vpop.f32.mrf.mxu0
      %v3596 = vadd.f32 %v2694, %v3595
      %v3597 = vpop.f32.mrf.mxu0
      %v3598 = vadd.f32 %v2696, %v3597
      %3599 = vdwg.mxu0
      %3600 = vmatpush.bf16.msra.mxu0 %v3341
      %3601 = vmatpush.bf16.msra.mxu0 %v3336
      %3602 = vmatpush.bf16.msra.mxu0 %v3331
      %3603 = vmatpush.bf16.msra.mxu0 %v3326
      %3604 = vmatpush.bf16.msra.mxu0 %v3321
      %3605 = vmatpush.bf16.msra.mxu0 %v3316
      %3606 = vmatpush.bf16.msra.mxu0 %v3311
      %3607 = vmatpush.bf16.msra.mxu0 %v3306
      %3608 = vmatmul.bf16.gmra.mxu0 %v2225
      %v3609 = vpop.f32.mrf.mxu0
      %v3610 = vadd.f32 %v3596, %v3609
      %v3611 = vpop.f32.mrf.mxu0
      %v3612 = vadd.f32 %v3598, %v3611
      %3613 = vdwg.mxu0
      %3614 = vmatpush.bf16.msra.mxu0 %v3381
      %3615 = vmatpush.bf16.msra.mxu0 %v3376
      %3616 = vmatpush.bf16.msra.mxu0 %v3371
      %3617 = vmatpush.bf16.msra.mxu0 %v3366
      %3618 = vmatpush.bf16.msra.mxu0 %v3361
      %3619 = vmatpush.bf16.msra.mxu0 %v3356
      %3620 = vmatpush.bf16.msra.mxu0 %v3351
      %3621 = vmatpush.bf16.msra.mxu0 %v3346
      %3622 = vmatmul.bf16.gmra.mxu0 %v2226
      %v3623 = vpop.f32.mrf.mxu0
      %v3624 = vadd.f32 %v3610, %v3623
      %v3625 = vpop.f32.mrf.mxu0
      %v3626 = vadd.f32 %v3612, %v3625
      %3627 = vdwg.mxu0
      %3628 = vmatpush.bf16.msra.mxu0 %v3421
      %3629 = vmatpush.bf16.msra.mxu0 %v3416
      %3630 = vmatpush.bf16.msra.mxu0 %v3411
      %3631 = vmatpush.bf16.msra.mxu0 %v3406
      %3632 = vmatpush.bf16.msra.mxu0 %v3401
      %3633 = vmatpush.bf16.msra.mxu0 %v3396
      %3634 = vmatpush.bf16.msra.mxu0 %v3391
      %3635 = vmatpush.bf16.msra.mxu0 %v3386
      %3636 = vmatmul.bf16.gmra.mxu0 %v2227
      %v3637 = vpop.f32.mrf.mxu0
      %v3638 = vadd.f32 %v3624, %v3637
      %v3639 = vpop.f32.mrf.mxu0
      %v3640 = vadd.f32 %v3626, %v3639
      %3641 = vdwg.mxu0
      %3642 = vmatpush.bf16.msra.mxu0 %v3302
      %3643 = vmatpush.bf16.msra.mxu0 %v3297
      %3644 = vmatpush.bf16.msra.mxu0 %v3292
      %3645 = vmatpush.bf16.msra.mxu0 %v3287
      %3646 = vmatpush.bf16.msra.mxu0 %v3282
      %3647 = vmatpush.bf16.msra.mxu0 %v3277
      %3648 = vmatpush.bf16.msra.mxu0 %v3272
      %3649 = vmatpush.bf16.msra.mxu0 %v3267
      %3650 = vmatmul.bf16.gmra.mxu0 %v2224
      %v3651 = vpop.f32.mrf.mxu0
      %v3652 = vadd.f32 %v2708, %v3651
      %v3653 = vpop.f32.mrf.mxu0
      %v3654 = vadd.f32 %v2710, %v3653
      %3655 = vdwg.mxu0
      %3656 = vmatpush.bf16.msra.mxu0 %v3342
      %3657 = vmatpush.bf16.msra.mxu0 %v3337
      %3658 = vmatpush.bf16.msra.mxu0 %v3332
      %3659 = vmatpush.bf16.msra.mxu0 %v3327
      %3660 = vmatpush.bf16.msra.mxu0 %v3322
      %3661 = vmatpush.bf16.msra.mxu0 %v3317
      %3662 = vmatpush.bf16.msra.mxu0 %v3312
      %3663 = vmatpush.bf16.msra.mxu0 %v3307
      %3664 = vmatmul.bf16.gmra.mxu0 %v2225
      %v3665 = vpop.f32.mrf.mxu0
      %v3666 = vadd.f32 %v3652, %v3665
      %v3667 = vpop.f32.mrf.mxu0
      %v3668 = vadd.f32 %v3654, %v3667
      %3669 = vdwg.mxu0
      %3670 = vmatpush.bf16.msra.mxu0 %v3382
      %3671 = vmatpush.bf16.msra.mxu0 %v3377
      %3672 = vmatpush.bf16.msra.mxu0 %v3372
      %3673 = vmatpush.bf16.msra.mxu0 %v3367
      %3674 = vmatpush.bf16.msra.mxu0 %v3362
      %3675 = vmatpush.bf16.msra.mxu0 %v3357
      %3676 = vmatpush.bf16.msra.mxu0 %v3352
      %3677 = vmatpush.bf16.msra.mxu0 %v3347
      %3678 = vmatmul.bf16.gmra.mxu0 %v2226
      %v3679 = vpop.f32.mrf.mxu0
      %v3680 = vadd.f32 %v3666, %v3679
      %v3681 = vpop.f32.mrf.mxu0
      %v3682 = vadd.f32 %v3668, %v3681
      %3683 = vdwg.mxu0
      %3684 = vmatpush.bf16.msra.mxu0 %v3422
      %3685 = vmatpush.bf16.msra.mxu0 %v3417
      %3686 = vmatpush.bf16.msra.mxu0 %v3412
      %3687 = vmatpush.bf16.msra.mxu0 %v3407
      %3688 = vmatpush.bf16.msra.mxu0 %v3402
      %3689 = vmatpush.bf16.msra.mxu0 %v3397
      %3690 = vmatpush.bf16.msra.mxu0 %v3392
      %3691 = vmatpush.bf16.msra.mxu0 %v3387
      %3692 = vmatmul.bf16.gmra.mxu0 %v2227
      %v3693 = vpop.f32.mrf.mxu0
      %v3694 = vadd.f32 %v3680, %v3693
      %v3695 = vpop.f32.mrf.mxu0
      %v3696 = vadd.f32 %v3682, %v3695
      %3697 = vdwg.mxu0
      %3698 = vmatpush.bf16.msra.mxu0 %v3303
      %3699 = vmatpush.bf16.msra.mxu0 %v3298
      %3700 = vmatpush.bf16.msra.mxu0 %v3293
      %3701 = vmatpush.bf16.msra.mxu0 %v3288
      %3702 = vmatpush.bf16.msra.mxu0 %v3283
      %3703 = vmatpush.bf16.msra.mxu0 %v3278
      %3704 = vmatpush.bf16.msra.mxu0 %v3273
      %3705 = vmatpush.bf16.msra.mxu0 %v3268
      %3706 = vmatmul.bf16.gmra.mxu0 %v2224
      %v3707 = vpop.f32.mrf.mxu0
      %v3708 = vadd.f32 %v2722, %v3707
      %v3709 = vpop.f32.mrf.mxu0
      %v3710 = vadd.f32 %v2724, %v3709
      %3711 = vdwg.mxu0
      %3712 = vmatpush.bf16.msra.mxu0 %v3343
      %3713 = vmatpush.bf16.msra.mxu0 %v3338
      %3714 = vmatpush.bf16.msra.mxu0 %v3333
      %3715 = vmatpush.bf16.msra.mxu0 %v3328
      %3716 = vmatpush.bf16.msra.mxu0 %v3323
      %3717 = vmatpush.bf16.msra.mxu0 %v3318
      %3718 = vmatpush.bf16.msra.mxu0 %v3313
      %3719 = vmatpush.bf16.msra.mxu0 %v3308
      %3720 = vmatmul.bf16.gmra.mxu0 %v2225
      %v3721 = vpop.f32.mrf.mxu0
      %v3722 = vadd.f32 %v3708, %v3721
      %v3723 = vpop.f32.mrf.mxu0
      %v3724 = vadd.f32 %v3710, %v3723
      %3725 = vdwg.mxu0
      %3726 = vmatpush.bf16.msra.mxu0 %v3383
      %3727 = vmatpush.bf16.msra.mxu0 %v3378
      %3728 = vmatpush.bf16.msra.mxu0 %v3373
      %3729 = vmatpush.bf16.msra.mxu0 %v3368
      %3730 = vmatpush.bf16.msra.mxu0 %v3363
      %3731 = vmatpush.bf16.msra.mxu0 %v3358
      %3732 = vmatpush.bf16.msra.mxu0 %v3353
      %3733 = vmatpush.bf16.msra.mxu0 %v3348
      %3734 = vmatmul.bf16.gmra.mxu0 %v2226
      %v3735 = vpop.f32.mrf.mxu0
      %v3736 = vadd.f32 %v3722, %v3735
      %v3737 = vpop.f32.mrf.mxu0
      %v3738 = vadd.f32 %v3724, %v3737
      %3739 = vdwg.mxu0
      %3740 = vmatpush.bf16.msra.mxu0 %v3423
      %3741 = vmatpush.bf16.msra.mxu0 %v3418
      %3742 = vmatpush.bf16.msra.mxu0 %v3413
      %3743 = vmatpush.bf16.msra.mxu0 %v3408
      %3744 = vmatpush.bf16.msra.mxu0 %v3403
      %3745 = vmatpush.bf16.msra.mxu0 %v3398
      %3746 = vmatpush.bf16.msra.mxu0 %v3393
      %3747 = vmatpush.bf16.msra.mxu0 %v3388
      %3748 = vmatmul.bf16.gmra.mxu0 %v2227
      %v3749 = vpop.f32.mrf.mxu0
      %v3750 = vadd.f32 %v3736, %v3749
      %v3751 = vpop.f32.mrf.mxu0
      %v3752 = vadd.f32 %v3738, %v3751
      %3753 = vdwg.mxu0
      %3754 = vmatpush.bf16.msra.mxu0 %v3304
      %3755 = vmatpush.bf16.msra.mxu0 %v3299
      %3756 = vmatpush.bf16.msra.mxu0 %v3294
      %3757 = vmatpush.bf16.msra.mxu0 %v3289
      %3758 = vmatpush.bf16.msra.mxu0 %v3284
      %3759 = vmatpush.bf16.msra.mxu0 %v3279
      %3760 = vmatpush.bf16.msra.mxu0 %v3274
      %3761 = vmatpush.bf16.msra.mxu0 %v3269
      %3762 = vmatmul.bf16.gmra.mxu0 %v2224
      %v3763 = vpop.f32.mrf.mxu0
      %v3764 = vadd.f32 %v2736, %v3763
      %v3765 = vpop.f32.mrf.mxu0
      %v3766 = vadd.f32 %v2738, %v3765
      %3767 = vdwg.mxu0
      %3768 = vmatpush.bf16.msra.mxu0 %v3344
      %3769 = vmatpush.bf16.msra.mxu0 %v3339
      %3770 = vmatpush.bf16.msra.mxu0 %v3334
      %3771 = vmatpush.bf16.msra.mxu0 %v3329
      %3772 = vmatpush.bf16.msra.mxu0 %v3324
      %3773 = vmatpush.bf16.msra.mxu0 %v3319
      %3774 = vmatpush.bf16.msra.mxu0 %v3314
      %3775 = vmatpush.bf16.msra.mxu0 %v3309
      %3776 = vmatmul.bf16.gmra.mxu0 %v2225
      %v3777 = vpop.f32.mrf.mxu0
      %v3778 = vadd.f32 %v3764, %v3777
      %v3779 = vpop.f32.mrf.mxu0
      %v3780 = vadd.f32 %v3766, %v3779
      %3781 = vdwg.mxu0
      %3782 = vmatpush.bf16.msra.mxu0 %v3384
      %3783 = vmatpush.bf16.msra.mxu0 %v3379
      %3784 = vmatpush.bf16.msra.mxu0 %v3374
      %3785 = vmatpush.bf16.msra.mxu0 %v3369
      %3786 = vmatpush.bf16.msra.mxu0 %v3364
      %3787 = vmatpush.bf16.msra.mxu0 %v3359
      %3788 = vmatpush.bf16.msra.mxu0 %v3354
      %3789 = vmatpush.bf16.msra.mxu0 %v3349
      %3790 = vmatmul.bf16.gmra.mxu0 %v2226
      %v3791 = vpop.f32.mrf.mxu0
      %v3792 = vadd.f32 %v3778, %v3791
      %v3793 = vpop.f32.mrf.mxu0
      %v3794 = vadd.f32 %v3780, %v3793
      %3795 = vdwg.mxu0
      %3796 = vmatpush.bf16.msra.mxu0 %v3424
      %3797 = vmatpush.bf16.msra.mxu0 %v3419
      %3798 = vmatpush.bf16.msra.mxu0 %v3414
      %3799 = vmatpush.bf16.msra.mxu0 %v3409
      %3800 = vmatpush.bf16.msra.mxu0 %v3404
      %3801 = vmatpush.bf16.msra.mxu0 %v3399
      %3802 = vmatpush.bf16.msra.mxu0 %v3394
      %3803 = vmatpush.bf16.msra.mxu0 %v3389
      %3804 = vmatmul.bf16.gmra.mxu0 %v2227
      %v3805 = vpop.f32.mrf.mxu0
      %v3806 = vadd.f32 %v3792, %v3805
      %v3807 = vpop.f32.mrf.mxu0
      %v3808 = vadd.f32 %v3794, %v3807
      %3809 = vdwg.mxu0
      %3810 = vmatpush.bf16.msra.mxu0 %v3305
      %3811 = vmatpush.bf16.msra.mxu0 %v3300
      %3812 = vmatpush.bf16.msra.mxu0 %v3295
      %3813 = vmatpush.bf16.msra.mxu0 %v3290
      %3814 = vmatpush.bf16.msra.mxu0 %v3285
      %3815 = vmatpush.bf16.msra.mxu0 %v3280
      %3816 = vmatpush.bf16.msra.mxu0 %v3275
      %3817 = vmatpush.bf16.msra.mxu0 %v3270
      %3818 = vmatmul.bf16.gmra.mxu0 %v2224
      %v3819 = vpop.f32.mrf.mxu0
      %v3820 = vadd.f32 %v2750, %v3819
      %v3821 = vpop.f32.mrf.mxu0
      %v3822 = vadd.f32 %v2752, %v3821
      %3823 = vdwg.mxu0
      %3824 = vmatpush.bf16.msra.mxu0 %v3345
      %3825 = vmatpush.bf16.msra.mxu0 %v3340
      %3826 = vmatpush.bf16.msra.mxu0 %v3335
      %3827 = vmatpush.bf16.msra.mxu0 %v3330
      %3828 = vmatpush.bf16.msra.mxu0 %v3325
      %3829 = vmatpush.bf16.msra.mxu0 %v3320
      %3830 = vmatpush.bf16.msra.mxu0 %v3315
      %3831 = vmatpush.bf16.msra.mxu0 %v3310
      %3832 = vmatmul.bf16.gmra.mxu0 %v2225
      %v3833 = vpop.f32.mrf.mxu0
      %v3834 = vadd.f32 %v3820, %v3833
      %v3835 = vpop.f32.mrf.mxu0
      %v3836 = vadd.f32 %v3822, %v3835
      %3837 = vdwg.mxu0
      %3838 = vmatpush.bf16.msra.mxu0 %v3385
      %3839 = vmatpush.bf16.msra.mxu0 %v3380
      %3840 = vmatpush.bf16.msra.mxu0 %v3375
      %3841 = vmatpush.bf16.msra.mxu0 %v3370
      %3842 = vmatpush.bf16.msra.mxu0 %v3365
      %3843 = vmatpush.bf16.msra.mxu0 %v3360
      %3844 = vmatpush.bf16.msra.mxu0 %v3355
      %3845 = vmatpush.bf16.msra.mxu0 %v3350
      %3846 = vmatmul.bf16.gmra.mxu0 %v2226
      %v3847 = vpop.f32.mrf.mxu0
      %v3848 = vadd.f32 %v3834, %v3847
      %v3849 = vpop.f32.mrf.mxu0
      %v3850 = vadd.f32 %v3836, %v3849
      %3851 = vdwg.mxu0
      %3852 = vmatpush.bf16.msra.mxu0 %v3425
      %3853 = vmatpush.bf16.msra.mxu0 %v3420
      %3854 = vmatpush.bf16.msra.mxu0 %v3415
      %3855 = vmatpush.bf16.msra.mxu0 %v3410
      %3856 = vmatpush.bf16.msra.mxu0 %v3405
      %3857 = vmatpush.bf16.msra.mxu0 %v3400
      %3858 = vmatpush.bf16.msra.mxu0 %v3395
      %3859 = vmatpush.bf16.msra.mxu0 %v3390
      %3860 = vmatmul.bf16.gmra.mxu0 %v2227
      %v3861 = vpop.f32.mrf.mxu0
      %v3862 = vadd.f32 %v3848, %v3861
      %v3863 = vpop.f32.mrf.mxu0
      %v3864 = vadd.f32 %v3850, %v3863
      %3865 = vdwg.mxu0
      %v3866 = vpack.c.bf16 %v3640, %v3638
      %v3867 = vpack.c.bf16 %v3696, %v3694
      %v3868 = vpack.c.bf16 %v3752, %v3750
      %v3869 = vpack.c.bf16 %v3808, %v3806
      %v3870 = vpack.c.bf16 %v3864, %v3862
      %v3871 = vld [vmem:[%s14] sm:$0xff]
      %v3872 = vld [vmem:[%s14 + $0x8] sm:$0xff]
      %v3873 = vld [vmem:[%s14 + $0x10] sm:$0xff]
      %v3874 = vld [vmem:[%s14 + $0x18] sm:$0xff]
      %v3875 = vld [vmem:[%s14 + $0x20] sm:$0xff]
      %v3876 = vld [vmem:[%s14 + $0x28] sm:$0xff]
      %v3877 = vld [vmem:[%s14 + $0x30] sm:$0xff]
      %v3878 = vld [vmem:[%s14 + $0x38] sm:$0xff]
      %v3879 = vld [vmem:[%s14 + $0x40] sm:$0xff]
      %v3880 = vld [vmem:[%s14 + $0x48] sm:$0xff]
      %v3881 = vld [vmem:[%s14 + $0x50] sm:$0xff]
      %v3882 = vld [vmem:[%s14 + $0x58] sm:$0xff]
      %v3883 = vld [vmem:[%s14 + $0x60] sm:$0xff]
      %v3884 = vld [vmem:[%s14 + $0x68] sm:$0xff]
      %v3885 = vld [vmem:[%s14 + $0x70] sm:$0xff]
      %v3886 = vld [vmem:[%s14 + $0x78] sm:$0xff]
      %v3887 = vld [vmem:[%s14 + $0x80] sm:$0xff]
      %v3888 = vld [vmem:[%s14 + $0x88] sm:$0xff]
      %v3889 = vld [vmem:[%s14 + $0x90] sm:$0xff]
      %v3890 = vld [vmem:[%s14 + $0x98] sm:$0xff]
      %v3891 = vld [vmem:[%s14 + $0xa0] sm:$0xff]
      %v3892 = vld [vmem:[%s14 + $0xa8] sm:$0xff]
      %v3893 = vld [vmem:[%s14 + $0xb0] sm:$0xff]
      %v3894 = vld [vmem:[%s14 + $0xb8] sm:$0xff]
      %v3895 = vld [vmem:[%s14 + $0xc0] sm:$0xff]
      %v3896 = vld [vmem:[%s14 + $0xc8] sm:$0xff]
      %v3897 = vld [vmem:[%s14 + $0xd0] sm:$0xff]
      %v3898 = vld [vmem:[%s14 + $0xd8] sm:$0xff]
      %v3899 = vld [vmem:[%s14 + $0xe0] sm:$0xff]
      %v3900 = vld [vmem:[%s14 + $0xe8] sm:$0xff]
      %v3901 = vld [vmem:[%s14 + $0xf0] sm:$0xff]
      %v3902 = vld [vmem:[%s14 + $0xf8] sm:$0xff]
      %v3903 = vld [vmem:[%s14 + $0x100] sm:$0xff]
      %v3904 = vld [vmem:[%s14 + $0x108] sm:$0xff]
      %v3905 = vld [vmem:[%s14 + $0x110] sm:$0xff]
      %v3906 = vld [vmem:[%s14 + $0x118] sm:$0xff]
      %v3907 = vld [vmem:[%s14 + $0x120] sm:$0xff]
      %v3908 = vld [vmem:[%s14 + $0x128] sm:$0xff]
      %v3909 = vld [vmem:[%s14 + $0x130] sm:$0xff]
      %v3910 = vld [vmem:[%s14 + $0x138] sm:$0xff]
      %v3911 = vld [vmem:[%s14 + $0x140] sm:$0xff]
      %v3912 = vld [vmem:[%s14 + $0x148] sm:$0xff]
      %v3913 = vld [vmem:[%s14 + $0x150] sm:$0xff]
      %v3914 = vld [vmem:[%s14 + $0x158] sm:$0xff]
      %v3915 = vld [vmem:[%s14 + $0x160] sm:$0xff]
      %v3916 = vld [vmem:[%s14 + $0x168] sm:$0xff]
      %v3917 = vld [vmem:[%s14 + $0x170] sm:$0xff]
      %v3918 = vld [vmem:[%s14 + $0x178] sm:$0xff]
      %v3919 = vld [vmem:[%s14 + $0x180] sm:$0xff]
      %v3920 = vld [vmem:[%s14 + $0x188] sm:$0xff]
      %v3921 = vld [vmem:[%s14 + $0x190] sm:$0xff]
      %v3922 = vld [vmem:[%s14 + $0x198] sm:$0xff]
      %v3923 = vld [vmem:[%s14 + $0x1a0] sm:$0xff]
      %v3924 = vld [vmem:[%s14 + $0x1a8] sm:$0xff]
      %v3925 = vld [vmem:[%s14 + $0x1b0] sm:$0xff]
      %v3926 = vld [vmem:[%s14 + $0x1b8] sm:$0xff]
      %v3927 = vld [vmem:[%s14 + $0x1c0] sm:$0xff]
      %v3928 = vld [vmem:[%s14 + $0x1c8] sm:$0xff]
      %v3929 = vld [vmem:[%s14 + $0x1d0] sm:$0xff]
      %v3930 = vld [vmem:[%s14 + $0x1d8] sm:$0xff]
      %v3931 = vld [vmem:[%s14 + $0x1e0] sm:$0xff]
      %v3932 = vld [vmem:[%s14 + $0x1e8] sm:$0xff]
      %v3933 = vld [vmem:[%s14 + $0x1f0] sm:$0xff]
      %v3934 = vld [vmem:[%s14 + $0x1f8] sm:$0xff]
      %v3935 = vld [vmem:[%s14 + $0x200] sm:$0xff]
      %v3936 = vld [vmem:[%s14 + $0x208] sm:$0xff]
      %v3937 = vld [vmem:[%s14 + $0x210] sm:$0xff]
      %v3938 = vld [vmem:[%s14 + $0x218] sm:$0xff]
      %v3939 = vld [vmem:[%s14 + $0x220] sm:$0xff]
      %v3940 = vld [vmem:[%s14 + $0x228] sm:$0xff]
      %v3941 = vld [vmem:[%s14 + $0x230] sm:$0xff]
      %v3942 = vld [vmem:[%s14 + $0x238] sm:$0xff]
      %v3943 = vld [vmem:[%s14 + $0x240] sm:$0xff]
      %v3944 = vld [vmem:[%s14 + $0x248] sm:$0xff]
      %v3945 = vld [vmem:[%s14 + $0x250] sm:$0xff]
      %v3946 = vld [vmem:[%s14 + $0x258] sm:$0xff]
      %v3947 = vld [vmem:[%s14 + $0x260] sm:$0xff]
      %v3948 = vld [vmem:[%s14 + $0x268] sm:$0xff]
      %v3949 = vld [vmem:[%s14 + $0x270] sm:$0xff]
      %v3950 = vld [vmem:[%s14 + $0x278] sm:$0xff]
      %v3951 = vld [vmem:[%s19] sm:$0x3]
      %v3953 = vperm.slane %v3951, 0
      %v3954 = vperm.slane %v3951, 1
      %v4037 = vunpack.c.l.b16 %v3871
      %v4038 = vunpack.c.h.b16 %v3871
      %v4039 = vunpack.c.l.b16 %v3872
      %v4040 = vunpack.c.h.b16 %v3872
      %v4041 = vunpack.c.l.b16 %v3873
      %v4042 = vunpack.c.h.b16 %v3873
      %v4043 = vunpack.c.l.b16 %v3874
      %v4044 = vunpack.c.h.b16 %v3874
      %v4045 = vunpack.c.l.b16 %v3875
      %v4046 = vunpack.c.h.b16 %v3875
      %v4047 = vunpack.c.l.b16 %v3876
      %v4048 = vunpack.c.h.b16 %v3876
      %v4049 = vunpack.c.l.b16 %v3877
      %v4050 = vunpack.c.h.b16 %v3877
      %v4051 = vunpack.c.l.b16 %v3878
      %v4052 = vunpack.c.h.b16 %v3878
      %v4053 = vunpack.c.l.b16 %v3879
      %v4054 = vunpack.c.h.b16 %v3879
      %v4055 = vunpack.c.l.b16 %v3880
      %v4056 = vunpack.c.h.b16 %v3880
      %v4057 = vunpack.c.l.b16 %v3881
      %v4058 = vunpack.c.h.b16 %v3881
      %v4059 = vunpack.c.l.b16 %v3882
      %v4060 = vunpack.c.h.b16 %v3882
      %v4061 = vunpack.c.l.b16 %v3883
      %v4062 = vunpack.c.h.b16 %v3883
      %v4063 = vunpack.c.l.b16 %v3884
      %v4064 = vunpack.c.h.b16 %v3884
      %v4065 = vunpack.c.l.b16 %v3885
      %v4066 = vunpack.c.h.b16 %v3885
      %v4067 = vunpack.c.l.b16 %v3886
      %v4068 = vunpack.c.h.b16 %v3886
      %v4069 = vunpack.c.l.b16 %v3887
      %v4070 = vunpack.c.h.b16 %v3887
      %v4071 = vunpack.c.l.b16 %v3888
      %v4072 = vunpack.c.h.b16 %v3888
      %v4073 = vunpack.c.l.b16 %v3889
      %v4074 = vunpack.c.h.b16 %v3889
      %v4075 = vunpack.c.l.b16 %v3890
      %v4076 = vunpack.c.h.b16 %v3890
      %v4077 = vunpack.c.l.b16 %v3891
      %v4078 = vunpack.c.h.b16 %v3891
      %v4079 = vunpack.c.l.b16 %v3892
      %v4080 = vunpack.c.h.b16 %v3892
      %v4081 = vunpack.c.l.b16 %v3893
      %v4082 = vunpack.c.h.b16 %v3893
      %v4083 = vunpack.c.l.b16 %v3894
      %v4084 = vunpack.c.h.b16 %v3894
      %v4085 = vunpack.c.l.b16 %v3895
      %v4086 = vunpack.c.h.b16 %v3895
      %v4087 = vunpack.c.l.b16 %v3896
      %v4088 = vunpack.c.h.b16 %v3896
      %v4089 = vunpack.c.l.b16 %v3897
      %v4090 = vunpack.c.h.b16 %v3897
      %v4091 = vunpack.c.l.b16 %v3898
      %v4092 = vunpack.c.h.b16 %v3898
      %v4093 = vunpack.c.l.b16 %v3899
      %v4094 = vunpack.c.h.b16 %v3899
      %v4095 = vunpack.c.l.b16 %v3900
      %v4096 = vunpack.c.h.b16 %v3900
      %v4097 = vunpack.c.l.b16 %v3901
      %v4098 = vunpack.c.h.b16 %v3901
      %v4099 = vunpack.c.l.b16 %v3902
      %v4100 = vunpack.c.h.b16 %v3902
      %v4101 = vunpack.c.l.b16 %v3903
      %v4102 = vunpack.c.h.b16 %v3903
      %v4103 = vunpack.c.l.b16 %v3904
      %v4104 = vunpack.c.h.b16 %v3904
      %v4105 = vunpack.c.l.b16 %v3905
      %v4106 = vunpack.c.h.b16 %v3905
      %v4107 = vunpack.c.l.b16 %v3906
      %v4108 = vunpack.c.h.b16 %v3906
      %v4109 = vunpack.c.l.b16 %v3907
      %v4110 = vunpack.c.h.b16 %v3907
      %v4111 = vunpack.c.l.b16 %v3908
      %v4112 = vunpack.c.h.b16 %v3908
      %v4113 = vunpack.c.l.b16 %v3909
      %v4114 = vunpack.c.h.b16 %v3909
      %v4115 = vunpack.c.l.b16 %v3910
      %v4116 = vunpack.c.h.b16 %v3910
      %v4117 = vunpack.c.l.b16 %v3911
      %v4118 = vunpack.c.h.b16 %v3911
      %v4119 = vunpack.c.l.b16 %v3912
      %v4120 = vunpack.c.h.b16 %v3912
      %v4121 = vunpack.c.l.b16 %v3913
      %v4122 = vunpack.c.h.b16 %v3913
      %v4123 = vunpack.c.l.b16 %v3914
      %v4124 = vunpack.c.h.b16 %v3914
      %v4125 = vunpack.c.l.b16 %v3915
      %v4126 = vunpack.c.h.b16 %v3915
      %v4127 = vunpack.c.l.b16 %v3916
      %v4128 = vunpack.c.h.b16 %v3916
      %v4129 = vunpack.c.l.b16 %v3917
      %v4130 = vunpack.c.h.b16 %v3917
      %v4131 = vunpack.c.l.b16 %v3918
      %v4132 = vunpack.c.h.b16 %v3918
      %v4133 = vunpack.c.l.b16 %v3919
      %v4134 = vunpack.c.h.b16 %v3919
      %v4135 = vunpack.c.l.b16 %v3920
      %v4136 = vunpack.c.h.b16 %v3920
      %v4137 = vunpack.c.l.b16 %v3921
      %v4138 = vunpack.c.h.b16 %v3921
      %v4139 = vunpack.c.l.b16 %v3922
      %v4140 = vunpack.c.h.b16 %v3922
      %v4141 = vunpack.c.l.b16 %v3923
      %v4142 = vunpack.c.h.b16 %v3923
      %v4143 = vunpack.c.l.b16 %v3924
      %v4144 = vunpack.c.h.b16 %v3924
      %v4145 = vunpack.c.l.b16 %v3925
      %v4146 = vunpack.c.h.b16 %v3925
      %v4147 = vunpack.c.l.b16 %v3926
      %v4148 = vunpack.c.h.b16 %v3926
      %v4149 = vunpack.c.l.b16 %v3927
      %v4150 = vunpack.c.h.b16 %v3927
      %v4151 = vunpack.c.l.b16 %v3928
      %v4152 = vunpack.c.h.b16 %v3928
      %v4153 = vunpack.c.l.b16 %v3929
      %v4154 = vunpack.c.h.b16 %v3929
      %v4155 = vunpack.c.l.b16 %v3930
      %v4156 = vunpack.c.h.b16 %v3930
      %v4157 = vunpack.c.l.b16 %v3931
      %v4158 = vunpack.c.h.b16 %v3931
      %v4159 = vunpack.c.l.b16 %v3932
      %v4160 = vunpack.c.h.b16 %v3932
      %v4161 = vunpack.c.l.b16 %v3933
      %v4162 = vunpack.c.h.b16 %v3933
      %v4163 = vunpack.c.l.b16 %v3934
      %v4164 = vunpack.c.h.b16 %v3934
      %v4165 = vunpack.c.l.b16 %v3935
      %v4166 = vunpack.c.h.b16 %v3935
      %v4167 = vunpack.c.l.b16 %v3936
      %v4168 = vunpack.c.h.b16 %v3936
      %v4169 = vunpack.c.l.b16 %v3937
      %v4170 = vunpack.c.h.b16 %v3937
      %v4171 = vunpack.c.l.b16 %v3938
      %v4172 = vunpack.c.h.b16 %v3938
      %v4173 = vunpack.c.l.b16 %v3939
      %v4174 = vunpack.c.h.b16 %v3939
      %v4175 = vunpack.c.l.b16 %v3940
      %v4176 = vunpack.c.h.b16 %v3940
      %v4177 = vunpack.c.l.b16 %v3941
      %v4178 = vunpack.c.h.b16 %v3941
      %v4179 = vunpack.c.l.b16 %v3942
      %v4180 = vunpack.c.h.b16 %v3942
      %v4181 = vunpack.c.l.b16 %v3943
      %v4182 = vunpack.c.h.b16 %v3943
      %v4183 = vunpack.c.l.b16 %v3944
      %v4184 = vunpack.c.h.b16 %v3944
      %v4185 = vunpack.c.l.b16 %v3945
      %v4186 = vunpack.c.h.b16 %v3945
      %v4187 = vunpack.c.l.b16 %v3946
      %v4188 = vunpack.c.h.b16 %v3946
      %v4189 = vunpack.c.l.b16 %v3947
      %v4190 = vunpack.c.h.b16 %v3947
      %v4191 = vunpack.c.l.b16 %v3948
      %v4192 = vunpack.c.h.b16 %v3948
      %v4193 = vunpack.c.l.b16 %v3949
      %v4194 = vunpack.c.h.b16 %v3949
      %v4195 = vunpack.c.l.b16 %v3950
      %v4196 = vunpack.c.h.b16 %v3950
      %v4197 = vpack.c.b16 %v4039, %v4037
      %v4198 = vpack.c.b16 %v4040, %v4038
      %v4199 = vpack.c.b16 %v4043, %v4041
      %v4200 = vpack.c.b16 %v4044, %v4042
      %v4201 = vpack.c.b16 %v4047, %v4045
      %v4202 = vpack.c.b16 %v4048, %v4046
      %v4203 = vpack.c.b16 %v4051, %v4049
      %v4204 = vpack.c.b16 %v4052, %v4050
      %v4205 = vpack.c.b16 %v4055, %v4053
      %v4206 = vpack.c.b16 %v4056, %v4054
      %v4207 = vpack.c.b16 %v4059, %v4057
      %v4208 = vpack.c.b16 %v4060, %v4058
      %v4209 = vpack.c.b16 %v4063, %v4061
      %v4210 = vpack.c.b16 %v4064, %v4062
      %v4211 = vpack.c.b16 %v4067, %v4065
      %v4212 = vpack.c.b16 %v4068, %v4066
      %v4213 = vpack.c.b16 %v4071, %v4069
      %v4214 = vpack.c.b16 %v4072, %v4070
      %v4215 = vpack.c.b16 %v4075, %v4073
      %v4216 = vpack.c.b16 %v4076, %v4074
      %v4217 = vpack.c.b16 %v4079, %v4077
      %v4218 = vpack.c.b16 %v4080, %v4078
      %v4219 = vpack.c.b16 %v4083, %v4081
      %v4220 = vpack.c.b16 %v4084, %v4082
      %v4221 = vpack.c.b16 %v4087, %v4085
      %v4222 = vpack.c.b16 %v4088, %v4086
      %v4223 = vpack.c.b16 %v4091, %v4089
      %v4224 = vpack.c.b16 %v4092, %v4090
      %v4225 = vpack.c.b16 %v4095, %v4093
      %v4226 = vpack.c.b16 %v4096, %v4094
      %v4227 = vpack.c.b16 %v4099, %v4097
      %v4228 = vpack.c.b16 %v4100, %v4098
      %v4229 = vpack.c.b16 %v4103, %v4101
      %v4230 = vpack.c.b16 %v4104, %v4102
      %v4231 = vpack.c.b16 %v4107, %v4105
      %v4232 = vpack.c.b16 %v4108, %v4106
      %v4233 = vpack.c.b16 %v4111, %v4109
      %v4234 = vpack.c.b16 %v4112, %v4110
      %v4235 = vpack.c.b16 %v4115, %v4113
      %v4236 = vpack.c.b16 %v4116, %v4114
      %v4237 = vpack.c.b16 %v4119, %v4117
      %v4238 = vpack.c.b16 %v4120, %v4118
      %v4239 = vpack.c.b16 %v4123, %v4121
      %v4240 = vpack.c.b16 %v4124, %v4122
      %v4241 = vpack.c.b16 %v4127, %v4125
      %v4242 = vpack.c.b16 %v4128, %v4126
      %v4243 = vpack.c.b16 %v4131, %v4129
      %v4244 = vpack.c.b16 %v4132, %v4130
      %v4245 = vpack.c.b16 %v4135, %v4133
      %v4246 = vpack.c.b16 %v4136, %v4134
      %v4247 = vpack.c.b16 %v4139, %v4137
      %v4248 = vpack.c.b16 %v4140, %v4138
      %v4249 = vpack.c.b16 %v4143, %v4141
      %v4250 = vpack.c.b16 %v4144, %v4142
      %v4251 = vpack.c.b16 %v4147, %v4145
      %v4252 = vpack.c.b16 %v4148, %v4146
      %v4253 = vpack.c.b16 %v4151, %v4149
      %v4254 = vpack.c.b16 %v4152, %v4150
      %v4255 = vpack.c.b16 %v4155, %v4153
      %v4256 = vpack.c.b16 %v4156, %v4154
      %v4257 = vpack.c.b16 %v4159, %v4157
      %v4258 = vpack.c.b16 %v4160, %v4158
      %v4259 = vpack.c.b16 %v4163, %v4161
      %v4260 = vpack.c.b16 %v4164, %v4162
      %v4261 = vpack.c.b16 %v4167, %v4165
      %v4262 = vpack.c.b16 %v4168, %v4166
      %v4263 = vpack.c.b16 %v4171, %v4169
      %v4264 = vpack.c.b16 %v4172, %v4170
      %v4265 = vpack.c.b16 %v4175, %v4173
      %v4266 = vpack.c.b16 %v4176, %v4174
      %v4267 = vpack.c.b16 %v4179, %v4177
      %v4268 = vpack.c.b16 %v4180, %v4178
      %v4269 = vpack.c.b16 %v4183, %v4181
      %v4270 = vpack.c.b16 %v4184, %v4182
      %v4271 = vpack.c.b16 %v4187, %v4185
      %v4272 = vpack.c.b16 %v4188, %v4186
      %v4273 = vpack.c.b16 %v4191, %v4189
      %v4274 = vpack.c.b16 %v4192, %v4190
      %v4275 = vpack.c.b16 %v4195, %v4193
      %v4276 = vpack.c.b16 %v4196, %v4194
      %4357 = vmatpush.bf16.msra.mxu0 %v4211
      %4358 = vmatpush.bf16.msra.mxu0 %v4209
      %4359 = vmatpush.bf16.msra.mxu0 %v4207
      %4360 = vmatpush.bf16.msra.mxu0 %v4205
      %4361 = vmatpush.bf16.msra.mxu0 %v4203
      %4362 = vmatpush.bf16.msra.mxu0 %v4201
      %4363 = vmatpush.bf16.msra.mxu0 %v4199
      %4364 = vmatpush.bf16.msra.mxu0 %v4197
      %4365 = vmatmul.bf16.gmra.mxu0 %v3866
      %v4366 = vpop.f32.mrf.mxu0
      %v4367 = vadd.f32 %v3953, %v4366
      %v4368 = vpop.f32.mrf.mxu0
      %v4369 = vadd.f32 %v3953, %v4368
      %4370 = vdwg.mxu0
      %4371 = vmatpush.bf16.msra.mxu0 %v4227
      %4372 = vmatpush.bf16.msra.mxu0 %v4225
      %4373 = vmatpush.bf16.msra.mxu0 %v4223
      %4374 = vmatpush.bf16.msra.mxu0 %v4221
      %4375 = vmatpush.bf16.msra.mxu0 %v4219
      %4376 = vmatpush.bf16.msra.mxu0 %v4217
      %4377 = vmatpush.bf16.msra.mxu0 %v4215
      %4378 = vmatpush.bf16.msra.mxu0 %v4213
      %4379 = vmatmul.bf16.gmra.mxu0 %v3867
      %v4380 = vpop.f32.mrf.mxu0
      %v4381 = vadd.f32 %v4367, %v4380
      %v4382 = vpop.f32.mrf.mxu0
      %v4383 = vadd.f32 %v4369, %v4382
      %4384 = vdwg.mxu0
      %4385 = vmatpush.bf16.msra.mxu0 %v4243
      %4386 = vmatpush.bf16.msra.mxu0 %v4241
      %4387 = vmatpush.bf16.msra.mxu0 %v4239
      %4388 = vmatpush.bf16.msra.mxu0 %v4237
      %4389 = vmatpush.bf16.msra.mxu0 %v4235
      %4390 = vmatpush.bf16.msra.mxu0 %v4233
      %4391 = vmatpush.bf16.msra.mxu0 %v4231
      %4392 = vmatpush.bf16.msra.mxu0 %v4229
      %4393 = vmatmul.bf16.gmra.mxu0 %v3868
      %v4394 = vpop.f32.mrf.mxu0
      %v4395 = vadd.f32 %v4381, %v4394
      %v4396 = vpop.f32.mrf.mxu0
      %v4397 = vadd.f32 %v4383, %v4396
      %4398 = vdwg.mxu0
      %4399 = vmatpush.bf16.msra.mxu0 %v4259
      %4400 = vmatpush.bf16.msra.mxu0 %v4257
      %4401 = vmatpush.bf16.msra.mxu0 %v4255
      %4402 = vmatpush.bf16.msra.mxu0 %v4253
      %4403 = vmatpush.bf16.msra.mxu0 %v4251
      %4404 = vmatpush.bf16.msra.mxu0 %v4249
      %4405 = vmatpush.bf16.msra.mxu0 %v4247
      %4406 = vmatpush.bf16.msra.mxu0 %v4245
      %4407 = vmatmul.bf16.gmra.mxu0 %v3869
      %v4408 = vpop.f32.mrf.mxu0
      %v4409 = vadd.f32 %v4395, %v4408
      %v4410 = vpop.f32.mrf.mxu0
      %v4411 = vadd.f32 %v4397, %v4410
      %4412 = vdwg.mxu0
      %4413 = vmatpush.bf16.msra.mxu0 %v4275
      %4414 = vmatpush.bf16.msra.mxu0 %v4273
      %4415 = vmatpush.bf16.msra.mxu0 %v4271
      %4416 = vmatpush.bf16.msra.mxu0 %v4269
      %4417 = vmatpush.bf16.msra.mxu0 %v4267
      %4418 = vmatpush.bf16.msra.mxu0 %v4265
      %4419 = vmatpush.bf16.msra.mxu0 %v4263
      %4420 = vmatpush.bf16.msra.mxu0 %v4261
      %4421 = vmatmul.bf16.gmra.mxu0 %v3870
      %v4422 = vpop.f32.mrf.mxu0
      %v4423 = vadd.f32 %v4409, %v4422
      %v4424 = vpop.f32.mrf.mxu0
      %v4425 = vadd.f32 %v4411, %v4424
      %4426 = vdwg.mxu0
      %4427 = vmatpush.bf16.msra.mxu0 %v4212
      %4428 = vmatpush.bf16.msra.mxu0 %v4210
      %4429 = vmatpush.bf16.msra.mxu0 %v4208
      %4430 = vmatpush.bf16.msra.mxu0 %v4206
      %4431 = vmatpush.bf16.msra.mxu0 %v4204
      %4432 = vmatpush.bf16.msra.mxu0 %v4202
      %4433 = vmatpush.bf16.msra.mxu0 %v4200
      %4434 = vmatpush.bf16.msra.mxu0 %v4198
      %4435 = vmatmul.bf16.gmra.mxu0 %v3866
      %v4436 = vpop.f32.mrf.mxu0
      %v4437 = vadd.f32 %v3954, %v4436
      %v4438 = vpop.f32.mrf.mxu0
      %v4439 = vadd.f32 %v3954, %v4438
      %4440 = vdwg.mxu0
      %4441 = vmatpush.bf16.msra.mxu0 %v4228
      %4442 = vmatpush.bf16.msra.mxu0 %v4226
      %4443 = vmatpush.bf16.msra.mxu0 %v4224
      %4444 = vmatpush.bf16.msra.mxu0 %v4222
      %4445 = vmatpush.bf16.msra.mxu0 %v4220
      %4446 = vmatpush.bf16.msra.mxu0 %v4218
      %4447 = vmatpush.bf16.msra.mxu0 %v4216
      %4448 = vmatpush.bf16.msra.mxu0 %v4214
      %4449 = vmatmul.bf16.gmra.mxu0 %v3867
      %v4450 = vpop.f32.mrf.mxu0
      %v4451 = vadd.f32 %v4437, %v4450
      %v4452 = vpop.f32.mrf.mxu0
      %v4453 = vadd.f32 %v4439, %v4452
      %4454 = vdwg.mxu0
      %4455 = vmatpush.bf16.msra.mxu0 %v4244
      %4456 = vmatpush.bf16.msra.mxu0 %v4242
      %4457 = vmatpush.bf16.msra.mxu0 %v4240
      %4458 = vmatpush.bf16.msra.mxu0 %v4238
      %4459 = vmatpush.bf16.msra.mxu0 %v4236
      %4460 = vmatpush.bf16.msra.mxu0 %v4234
      %4461 = vmatpush.bf16.msra.mxu0 %v4232
      %4462 = vmatpush.bf16.msra.mxu0 %v4230
      %4463 = vmatmul.bf16.gmra.mxu0 %v3868
      %v4464 = vpop.f32.mrf.mxu0
      %v4465 = vadd.f32 %v4451, %v4464
      %v4466 = vpop.f32.mrf.mxu0
      %v4467 = vadd.f32 %v4453, %v4466
      %4468 = vdwg.mxu0
      %4469 = vmatpush.bf16.msra.mxu0 %v4260
      %4470 = vmatpush.bf16.msra.mxu0 %v4258
      %4471 = vmatpush.bf16.msra.mxu0 %v4256
      %4472 = vmatpush.bf16.msra.mxu0 %v4254
      %4473 = vmatpush.bf16.msra.mxu0 %v4252
      %4474 = vmatpush.bf16.msra.mxu0 %v4250
      %4475 = vmatpush.bf16.msra.mxu0 %v4248
      %4476 = vmatpush.bf16.msra.mxu0 %v4246
      %4477 = vmatmul.bf16.gmra.mxu0 %v3869
      %v4478 = vpop.f32.mrf.mxu0
      %v4479 = vadd.f32 %v4465, %v4478
      %v4480 = vpop.f32.mrf.mxu0
      %v4481 = vadd.f32 %v4467, %v4480
      %4482 = vdwg.mxu0
      %4483 = vmatpush.bf16.msra.mxu0 %v4276
      %4484 = vmatpush.bf16.msra.mxu0 %v4274
      %4485 = vmatpush.bf16.msra.mxu0 %v4272
      %4486 = vmatpush.bf16.msra.mxu0 %v4270
      %4487 = vmatpush.bf16.msra.mxu0 %v4268
      %4488 = vmatpush.bf16.msra.mxu0 %v4266
      %4489 = vmatpush.bf16.msra.mxu0 %v4264
      %4490 = vmatpush.bf16.msra.mxu0 %v4262
      %4491 = vmatmul.bf16.gmra.mxu0 %v3870
      %v4492 = vpop.f32.mrf.mxu0
      %v4493 = vadd.f32 %v4479, %v4492
      %v4494 = vpop.f32.mrf.mxu0
      %v4495 = vadd.f32 %v4481, %v4494
      %4496 = vdwg.mxu0
      %v4497 = vpack.c.bf16 %v4425, %v4423
      %v4498 = vpack.c.bf16 %v4495, %v4493
      %v4499 = vld [vmem:[%s22] sm:$0xf]
      %v4500 = vld [vmem:[%s22 + $0x4] sm:$0xf]
      %v4501 = vld [vmem:[%s22 + $0x8] sm:$0xf]
      %v4502 = vld [vmem:[%s22 + $0xc] sm:$0xf]
      %v4503 = vld [vmem:[%s22 + $0x10] sm:$0xf]
      %v4504 = vld [vmem:[%s22 + $0x14] sm:$0xf]
      %v4505 = vld [vmem:[%s22 + $0x18] sm:$0xf]
      %v4506 = vld [vmem:[%s22 + $0x1c] sm:$0xf]
      %v4507 = vld [vmem:[%s22 + $0x20] sm:$0xf]
      %v4508 = vld [vmem:[%s22 + $0x24] sm:$0xf]
      %v4509 = vld [vmem:[%s22 + $0x28] sm:$0xf]
      %v4510 = vld [vmem:[%s22 + $0x2c] sm:$0xf]
      %v4511 = vld [vmem:[%s22 + $0x30] sm:$0xf]
      %v4512 = vld [vmem:[%s22 + $0x34] sm:$0xf]
      %v4513 = vld [vmem:[%s22 + $0x38] sm:$0xf]
      %v4514 = vld [vmem:[%s22 + $0x3c] sm:$0xf]
      %v4515 = vld [vmem:[%s22 + $0x40] sm:$0xf]
      %v4516 = vld [vmem:[%s22 + $0x44] sm:$0xf]
      %v4517 = vld [vmem:[%s22 + $0x48] sm:$0xf]
      %v4518 = vld [vmem:[%s22 + $0x4c] sm:$0xf]
      %v4519 = vld [vmem:[%s22 + $0x50] sm:$0xf]
      %v4520 = vld [vmem:[%s22 + $0x54] sm:$0xf]
      %v4521 = vld [vmem:[%s22 + $0x58] sm:$0xf]
      %v4522 = vld [vmem:[%s22 + $0x5c] sm:$0xf]
      %v4523 = vld [vmem:[%s22 + $0x60] sm:$0xf]
      %v4524 = vld [vmem:[%s22 + $0x64] sm:$0xf]
      %v4525 = vld [vmem:[%s22 + $0x68] sm:$0xf]
      %v4526 = vld [vmem:[%s22 + $0x6c] sm:$0xf]
      %v4527 = vld [vmem:[%s22 + $0x70] sm:$0xf]
      %v4528 = vld [vmem:[%s22 + $0x74] sm:$0xf]
      %v4529 = vld [vmem:[%s22 + $0x78] sm:$0xf]
      %v4530 = vld [vmem:[%s22 + $0x7c] sm:$0xf]
      %v4531 = vld [vmem:[%s25] sm:$0x1]
      %v4533 = vperm.slane %v4531, 0
      %v4567 = vunpack.c.l.b16 %v4499
      %v4568 = vunpack.c.l.b16 %v4500
      %v4569 = vunpack.c.l.b16 %v4501
      %v4570 = vunpack.c.l.b16 %v4502
      %v4571 = vunpack.c.l.b16 %v4503
      %v4572 = vunpack.c.l.b16 %v4504
      %v4573 = vunpack.c.l.b16 %v4505
      %v4574 = vunpack.c.l.b16 %v4506
      %v4575 = vunpack.c.l.b16 %v4507
      %v4576 = vunpack.c.l.b16 %v4508
      %v4577 = vunpack.c.l.b16 %v4509
      %v4578 = vunpack.c.l.b16 %v4510
      %v4579 = vunpack.c.l.b16 %v4511
      %v4580 = vunpack.c.l.b16 %v4512
      %v4581 = vunpack.c.l.b16 %v4513
      %v4582 = vunpack.c.l.b16 %v4514
      %v4583 = vunpack.c.l.b16 %v4515
      %v4584 = vunpack.c.l.b16 %v4516
      %v4585 = vunpack.c.l.b16 %v4517
      %v4586 = vunpack.c.l.b16 %v4518
      %v4587 = vunpack.c.l.b16 %v4519
      %v4588 = vunpack.c.l.b16 %v4520
      %v4589 = vunpack.c.l.b16 %v4521
      %v4590 = vunpack.c.l.b16 %v4522
      %v4591 = vunpack.c.l.b16 %v4523
      %v4592 = vunpack.c.l.b16 %v4524
      %v4593 = vunpack.c.l.b16 %v4525
      %v4594 = vunpack.c.l.b16 %v4526
      %v4595 = vunpack.c.l.b16 %v4527
      %v4596 = vunpack.c.l.b16 %v4528
      %v4597 = vunpack.c.l.b16 %v4529
      %v4598 = vunpack.c.l.b16 %v4530
      %v4599 = vpack.c.b16 %v4568, %v4567
      %v4600 = vpack.c.b16 %v4570, %v4569
      %v4601 = vpack.c.b16 %v4572, %v4571
      %v4602 = vpack.c.b16 %v4574, %v4573
      %v4603 = vpack.c.b16 %v4576, %v4575
      %v4604 = vpack.c.b16 %v4578, %v4577
      %v4605 = vpack.c.b16 %v4580, %v4579
      %v4606 = vpack.c.b16 %v4582, %v4581
      %v4607 = vpack.c.b16 %v4584, %v4583
      %v4608 = vpack.c.b16 %v4586, %v4585
      %v4609 = vpack.c.b16 %v4588, %v4587
      %v4610 = vpack.c.b16 %v4590, %v4589
      %v4611 = vpack.c.b16 %v4592, %v4591
      %v4612 = vpack.c.b16 %v4594, %v4593
      %v4613 = vpack.c.b16 %v4596, %v4595
      %v4614 = vpack.c.b16 %v4598, %v4597
      %4631 = vmatpush.bf16.msra.mxu0 %v4606
      %4632 = vmatpush.bf16.msra.mxu0 %v4605
      %4633 = vmatpush.bf16.msra.mxu0 %v4604
      %4634 = vmatpush.bf16.msra.mxu0 %v4603
      %4635 = vmatpush.bf16.msra.mxu0 %v4602
      %4636 = vmatpush.bf16.msra.mxu0 %v4601
      %4637 = vmatpush.bf16.msra.mxu0 %v4600
      %4638 = vmatpush.bf16.msra.mxu0 %v4599
      %4639 = vmatmul.bf16.gmra.mxu0 %v4497
      %v4640 = vpop.f32.mrf.mxu0
      %v4641 = vadd.f32 %v4533, %v4640
      %v4642 = vpop.f32.mrf.mxu0
      %v4643 = vadd.f32 %v4533, %v4642
      %4644 = vdwg.mxu0
      %4645 = vmatpush.bf16.msra.mxu0 %v4614
      %4646 = vmatpush.bf16.msra.mxu0 %v4613
      %4647 = vmatpush.bf16.msra.mxu0 %v4612
      %4648 = vmatpush.bf16.msra.mxu0 %v4611
      %4649 = vmatpush.bf16.msra.mxu0 %v4610
      %4650 = vmatpush.bf16.msra.mxu0 %v4609
      %4651 = vmatpush.bf16.msra.mxu0 %v4608
      %4652 = vmatpush.bf16.msra.mxu0 %v4607
      %4653 = vmatmul.bf16.gmra.mxu0 %v4498
      %v4654 = vpop.f32.mrf.mxu0
      %v4655 = vadd.f32 %v4641, %v4654
      %v4656 = vpop.f32.mrf.mxu0
      %v4657 = vadd.f32 %v4643, %v4656
      %4658 = vdwg.mxu0
      %v4659 = vld [vmem:[%s9] sm:$0xff]
      %v4660 = vld [vmem:[%s9 + $0x8] sm:$0xff]
      %v4661 = vld [vmem:[%s9 + $0x10] sm:$0xf]
      %v4662 = vld [vmem:[%s9 + $0x14] sm:$0xff]
      %v4663 = vld [vmem:[%s9 + $0x1c] sm:$0xff]
      %v4664 = vld [vmem:[%s9 + $0x24] sm:$0xf]
      %v4665 = vld [vmem:[%s9 + $0x28] sm:$0xff]
      %v4666 = vld [vmem:[%s9 + $0x30] sm:$0xff]
      %v4667 = vld [vmem:[%s9 + $0x38] sm:$0xf]
      %v4668 = vld [vmem:[%s9 + $0x3c] sm:$0xff]
      %v4669 = vld [vmem:[%s9 + $0x44] sm:$0xff]
      %v4670 = vld [vmem:[%s9 + $0x4c] sm:$0xf]
      %v4671 = vld [vmem:[%s9 + $0x50] sm:$0xff]
      %v4672 = vld [vmem:[%s9 + $0x58] sm:$0xff]
      %v4673 = vld [vmem:[%s9 + $0x60] sm:$0xf]
      %v4674 = vld [vmem:[%s9 + $0x64] sm:$0xff]
      %v4675 = vld [vmem:[%s9 + $0x6c] sm:$0xff]
      %v4676 = vld [vmem:[%s9 + $0x74] sm:$0xf]
      %v4677 = vld [vmem:[%s9 + $0x78] sm:$0xff]
      %v4678 = vld [vmem:[%s9 + $0x80] sm:$0xff]
      %v4679 = vld [vmem:[%s9 + $0x88] sm:$0xf]
      %v4680 = vld [vmem:[%s9 + $0x8c] sm:$0xff]
      %v4681 = vld [vmem:[%s9 + $0x94] sm:$0xff]
      %v4682 = vld [vmem:[%s9 + $0x9c] sm:$0xf]
      %v4683 = vld [vmem:[%s9 + $0xa0] sm:$0xff]
      %v4684 = vld [vmem:[%s9 + $0xa8] sm:$0xff]
      %v4685 = vld [vmem:[%s9 + $0xb0] sm:$0xf]
      %v4686 = vld [vmem:[%s9 + $0xb4] sm:$0xff]
      %v4687 = vld [vmem:[%s9 + $0xbc] sm:$0xff]
      %v4688 = vld [vmem:[%s9 + $0xc4] sm:$0xf]
      %v4689 = vld [vmem:[%s9 + $0xc8] sm:$0xff]
      %v4690 = vld [vmem:[%s9 + $0xd0] sm:$0xff]
      %v4691 = vld [vmem:[%s9 + $0xd8] sm:$0xf]
      %v4692 = vld [vmem:[%s9 + $0xdc] sm:$0xff]
      %v4693 = vld [vmem:[%s9 + $0xe4] sm:$0xff]
      %v4694 = vld [vmem:[%s9 + $0xec] sm:$0xf]
      %v4695 = vld [vmem:[%s9 + $0xf0] sm:$0xff]
      %v4696 = vld [vmem:[%s9 + $0xf8] sm:$0xff]
      %v4697 = vld [vmem:[%s9 + $0x100] sm:$0xf]
      %v4698 = vld [vmem:[%s9 + $0x104] sm:$0xff]
      %v4699 = vld [vmem:[%s9 + $0x10c] sm:$0xff]
      %v4700 = vld [vmem:[%s9 + $0x114] sm:$0xf]
      %v4701 = vld [vmem:[%s9 + $0x118] sm:$0xff]
      %v4702 = vld [vmem:[%s9 + $0x120] sm:$0xff]
      %v4703 = vld [vmem:[%s9 + $0x128] sm:$0xf]
      %v4704 = vld [vmem:[%s9 + $0x12c] sm:$0xff]
      %v4705 = vld [vmem:[%s9 + $0x134] sm:$0xff]
      %v4706 = vld [vmem:[%s9 + $0x13c] sm:$0xf]
      %v4707 = vld [vmem:[%s9 + $0x140] sm:$0xff]
      %v4708 = vld [vmem:[%s9 + $0x148] sm:$0xff]
      %v4709 = vld [vmem:[%s9 + $0x150] sm:$0xf]
      %v4710 = vld [vmem:[%s9 + $0x154] sm:$0xff]
      %v4711 = vld [vmem:[%s9 + $0x15c] sm:$0xff]
      %v4712 = vld [vmem:[%s9 + $0x164] sm:$0xf]
      %v4713 = vld [vmem:[%s9 + $0x168] sm:$0xff]
      %v4714 = vld [vmem:[%s9 + $0x170] sm:$0xff]
      %v4715 = vld [vmem:[%s9 + $0x178] sm:$0xf]
      %v4716 = vld [vmem:[%s9 + $0x17c] sm:$0xff]
      %v4717 = vld [vmem:[%s9 + $0x184] sm:$0xff]
      %v4718 = vld [vmem:[%s9 + $0x18c] sm:$0xf]
      %v4719 = vld [vmem:[%s9 + $0x190] sm:$0xff]
      %v4720 = vld [vmem:[%s9 + $0x198] sm:$0xff]
      %v4721 = vld [vmem:[%s9 + $0x1a0] sm:$0xf]
      %v4722 = vld [vmem:[%s9 + $0x1a4] sm:$0xff]
      %v4723 = vld [vmem:[%s9 + $0x1ac] sm:$0xff]
      %v4724 = vld [vmem:[%s9 + $0x1b4] sm:$0xf]
      %v4725 = vld [vmem:[%s9 + $0x1b8] sm:$0xff]
      %v4726 = vld [vmem:[%s9 + $0x1c0] sm:$0xff]
      %v4727 = vld [vmem:[%s9 + $0x1c8] sm:$0xf]
      %v4728 = vld [vmem:[%s9 + $0x1cc] sm:$0xff]
      %v4729 = vld [vmem:[%s9 + $0x1d4] sm:$0xff]
      %v4730 = vld [vmem:[%s9 + $0x1dc] sm:$0xf]
      %v4731 = vld [vmem:[%s9 + $0x1e0] sm:$0xff]
      %v4732 = vld [vmem:[%s9 + $0x1e8] sm:$0xff]
      %v4733 = vld [vmem:[%s9 + $0x1f0] sm:$0xf]
      %v4734 = vld [vmem:[%s9 + $0x1f4] sm:$0xff]
      %v4735 = vld [vmem:[%s9 + $0x1fc] sm:$0xff]
      %v4736 = vld [vmem:[%s9 + $0x204] sm:$0xf]
      %v4737 = vld [vmem:[%s9 + $0x208] sm:$0xff]
      %v4738 = vld [vmem:[%s9 + $0x210] sm:$0xff]
      %v4739 = vld [vmem:[%s9 + $0x218] sm:$0xf]
      %v4740 = vld [vmem:[%s9 + $0x21c] sm:$0xff]
      %v4741 = vld [vmem:[%s9 + $0x224] sm:$0xff]
      %v4742 = vld [vmem:[%s9 + $0x22c] sm:$0xf]
      %v4743 = vld [vmem:[%s9 + $0x230] sm:$0xff]
      %v4744 = vld [vmem:[%s9 + $0x238] sm:$0xff]
      %v4745 = vld [vmem:[%s9 + $0x240] sm:$0xf]
      %v4746 = vld [vmem:[%s9 + $0x244] sm:$0xff]
      %v4747 = vld [vmem:[%s9 + $0x24c] sm:$0xff]
      %v4748 = vld [vmem:[%s9 + $0x254] sm:$0xf]
      %v4749 = vld [vmem:[%s9 + $0x258] sm:$0xff]
      %v4750 = vld [vmem:[%s9 + $0x260] sm:$0xff]
      %v4751 = vld [vmem:[%s9 + $0x268] sm:$0xf]
      %v4752 = vld [vmem:[%s9 + $0x26c] sm:$0xff]
      %v4753 = vld [vmem:[%s9 + $0x274] sm:$0xff]
      %v4754 = vld [vmem:[%s9 + $0x27c] sm:$0xf]
      %v4755 = vld [vmem:[%s9 + $0x280] sm:$0xff]
      %v4756 = vld [vmem:[%s9 + $0x288] sm:$0xff]
      %v4757 = vld [vmem:[%s9 + $0x290] sm:$0xf]
      %v4758 = vld [vmem:[%s9 + $0x294] sm:$0xff]
      %v4759 = vld [vmem:[%s9 + $0x29c] sm:$0xff]
      %v4760 = vld [vmem:[%s9 + $0x2a4] sm:$0xf]
      %v4761 = vld [vmem:[%s9 + $0x2a8] sm:$0xff]
      %v4762 = vld [vmem:[%s9 + $0x2b0] sm:$0xff]
      %v4763 = vld [vmem:[%s9 + $0x2b8] sm:$0xf]
      %v4764 = vld [vmem:[%s9 + $0x2bc] sm:$0xff]
      %v4765 = vld [vmem:[%s9 + $0x2c4] sm:$0xff]
      %v4766 = vld [vmem:[%s9 + $0x2cc] sm:$0xf]
      %v4767 = vld [vmem:[%s9 + $0x2d0] sm:$0xff]
      %v4768 = vld [vmem:[%s9 + $0x2d8] sm:$0xff]
      %v4769 = vld [vmem:[%s9 + $0x2e0] sm:$0xf]
      %v4770 = vld [vmem:[%s9 + $0x2e4] sm:$0xff]
      %v4771 = vld [vmem:[%s9 + $0x2ec] sm:$0xff]
      %v4772 = vld [vmem:[%s9 + $0x2f4] sm:$0xf]
      %v4773 = vld [vmem:[%s9 + $0x2f8] sm:$0xff]
      %v4774 = vld [vmem:[%s9 + $0x300] sm:$0xff]
      %v4775 = vld [vmem:[%s9 + $0x308] sm:$0xf]
      %v4776 = vld [vmem:[%s9 + $0x30c] sm:$0xff]
      %v4777 = vld [vmem:[%s9 + $0x314] sm:$0xff]
      %v4778 = vld [vmem:[%s9 + $0x31c] sm:$0xf]
      %v4779 = vld [vmem:[%s9 + $0x320] sm:$0xff]
      %v4780 = vld [vmem:[%s9 + $0x328] sm:$0xff]
      %v4781 = vld [vmem:[%s9 + $0x330] sm:$0xf]
      %v4782 = vld [vmem:[%s9 + $0x334] sm:$0xff]
      %v4783 = vld [vmem:[%s9 + $0x33c] sm:$0xff]
      %v4784 = vld [vmem:[%s9 + $0x344] sm:$0xf]
      %v4785 = vld [vmem:[%s9 + $0x348] sm:$0xff]
      %v4786 = vld [vmem:[%s9 + $0x350] sm:$0xff]
      %v4787 = vld [vmem:[%s9 + $0x358] sm:$0xf]
      %v4788 = vld [vmem:[%s9 + $0x35c] sm:$0xff]
      %v4789 = vld [vmem:[%s9 + $0x364] sm:$0xff]
      %v4790 = vld [vmem:[%s9 + $0x36c] sm:$0xf]
      %v4791 = vld [vmem:[%s9 + $0x370] sm:$0xff]
      %v4792 = vld [vmem:[%s9 + $0x378] sm:$0xff]
      %v4793 = vld [vmem:[%s9 + $0x380] sm:$0xf]
      %v4794 = vld [vmem:[%s9 + $0x384] sm:$0xff]
      %v4795 = vld [vmem:[%s9 + $0x38c] sm:$0xff]
      %v4796 = vld [vmem:[%s9 + $0x394] sm:$0xf]
      %v4797 = vld [vmem:[%s9 + $0x398] sm:$0xff]
      %v4798 = vld [vmem:[%s9 + $0x3a0] sm:$0xff]
      %v4799 = vld [vmem:[%s9 + $0x3a8] sm:$0xf]
      %v4800 = vld [vmem:[%s9 + $0x3ac] sm:$0xff]
      %v4801 = vld [vmem:[%s9 + $0x3b4] sm:$0xff]
      %v4802 = vld [vmem:[%s9 + $0x3bc] sm:$0xf]
      %v4803 = vld [vmem:[%s9 + $0x3c0] sm:$0xff]
      %v4804 = vld [vmem:[%s9 + $0x3c8] sm:$0xff]
      %v4805 = vld [vmem:[%s9 + $0x3d0] sm:$0xf]
      %v4806 = vld [vmem:[%s9 + $0x3d4] sm:$0xff]
      %v4807 = vld [vmem:[%s9 + $0x3dc] sm:$0xff]
      %v4808 = vld [vmem:[%s9 + $0x3e4] sm:$0xf]
      %v4809 = vld [vmem:[%s9 + $0x3e8] sm:$0xff]
      %v4810 = vld [vmem:[%s9 + $0x3f0] sm:$0xff]
      %v4811 = vld [vmem:[%s9 + $0x3f8] sm:$0xf]
      %v4812 = vld [vmem:[%s9 + $0x3fc] sm:$0xff]
      %v4813 = vld [vmem:[%s9 + $0x404] sm:$0xff]
      %v4814 = vld [vmem:[%s9 + $0x40c] sm:$0xf]
      %v4815 = vld [vmem:[%s9 + $0x410] sm:$0xff]
      %v4816 = vld [vmem:[%s9 + $0x418] sm:$0xff]
      %v4817 = vld [vmem:[%s9 + $0x420] sm:$0xf]
      %v4818 = vld [vmem:[%s9 + $0x424] sm:$0xff]
      %v4819 = vld [vmem:[%s9 + $0x42c] sm:$0xff]
      %v4820 = vld [vmem:[%s9 + $0x434] sm:$0xf]
      %v4821 = vld [vmem:[%s9 + $0x438] sm:$0xff]
      %v4822 = vld [vmem:[%s9 + $0x440] sm:$0xff]
      %v4823 = vld [vmem:[%s9 + $0x448] sm:$0xf]
      %v4824 = vld [vmem:[%s9 + $0x44c] sm:$0xff]
      %v4825 = vld [vmem:[%s9 + $0x454] sm:$0xff]
      %v4826 = vld [vmem:[%s9 + $0x45c] sm:$0xf]
      %v4827 = vld [vmem:[%s9 + $0x460] sm:$0xff]
      %v4828 = vld [vmem:[%s9 + $0x468] sm:$0xff]
      %v4829 = vld [vmem:[%s9 + $0x470] sm:$0xf]
      %v4830 = vld [vmem:[%s9 + $0x474] sm:$0xff]
      %v4831 = vld [vmem:[%s9 + $0x47c] sm:$0xff]
      %v4832 = vld [vmem:[%s9 + $0x484] sm:$0xf]
      %v4833 = vld [vmem:[%s9 + $0x488] sm:$0xff]
      %v4834 = vld [vmem:[%s9 + $0x490] sm:$0xff]
      %v4835 = vld [vmem:[%s9 + $0x498] sm:$0xf]
      %v4836 = vld [vmem:[%s9 + $0x49c] sm:$0xff]
      %v4837 = vld [vmem:[%s9 + $0x4a4] sm:$0xff]
      %v4838 = vld [vmem:[%s9 + $0x4ac] sm:$0xf]
      %v4839 = vld [vmem:[%s9 + $0x4b0] sm:$0xff]
      %v4840 = vld [vmem:[%s9 + $0x4b8] sm:$0xff]
      %v4841 = vld [vmem:[%s9 + $0x4c0] sm:$0xf]
      %v4842 = vld [vmem:[%s9 + $0x4c4] sm:$0xff]
      %v4843 = vld [vmem:[%s9 + $0x4cc] sm:$0xff]
      %v4844 = vld [vmem:[%s9 + $0x4d4] sm:$0xf]
      %v4845 = vld [vmem:[%s9 + $0x4d8] sm:$0xff]
      %v4846 = vld [vmem:[%s9 + $0x4e0] sm:$0xff]
      %v4847 = vld [vmem:[%s9 + $0x4e8] sm:$0xf]
      %v4848 = vld [vmem:[%s9 + $0x4ec] sm:$0xff]
      %v4849 = vld [vmem:[%s9 + $0x4f4] sm:$0xff]
      %v4850 = vld [vmem:[%s9 + $0x4fc] sm:$0xf]
      %v4851 = vld [vmem:[%s12] sm:$0xff]
      %v4852 = vld [vmem:[%s12 + $0x8] sm:$0xff]
      %v4853 = vld [vmem:[%s12 + $0x10] sm:$0xf]
      %v4854 = vld [vmem:[%s12 + $0x14] sm:$0xff]
      %v4855 = vld [vmem:[%s12 + $0x1c] sm:$0xff]
      %v4856 = vld [vmem:[%s12 + $0x24] sm:$0xf]
      %v4857 = vld [vmem:[%s12 + $0x28] sm:$0xff]
      %v4858 = vld [vmem:[%s12 + $0x30] sm:$0xff]
      %v4859 = vld [vmem:[%s12 + $0x38] sm:$0xf]
      %v4860 = vld [vmem:[%s12 + $0x3c] sm:$0xff]
      %v4861 = vld [vmem:[%s12 + $0x44] sm:$0xff]
      %v4862 = vld [vmem:[%s12 + $0x4c] sm:$0xf]
      %v4863 = vld [vmem:[%s12 + $0x50] sm:$0xff]
      %v4864 = vld [vmem:[%s12 + $0x58] sm:$0xff]
      %v4865 = vld [vmem:[%s12 + $0x60] sm:$0xf]
      %v4866 = vld [vmem:[%s12 + $0x64] sm:$0xff]
      %v4867 = vld [vmem:[%s12 + $0x6c] sm:$0xff]
      %v4868 = vld [vmem:[%s12 + $0x74] sm:$0xf]
      %v4869 = vld [vmem:[%s12 + $0x78] sm:$0xff]
      %v4870 = vld [vmem:[%s12 + $0x80] sm:$0xff]
      %v4871 = vld [vmem:[%s12 + $0x88] sm:$0xf]
      %v4872 = vld [vmem:[%s12 + $0x8c] sm:$0xff]
      %v4873 = vld [vmem:[%s12 + $0x94] sm:$0xff]
      %v4874 = vld [vmem:[%s12 + $0x9c] sm:$0xf]
      %v4875 = vld [vmem:[%s12 + $0xa0] sm:$0xff]
      %v4876 = vld [vmem:[%s12 + $0xa8] sm:$0xff]
      %v4877 = vld [vmem:[%s12 + $0xb0] sm:$0xf]
      %v4878 = vld [vmem:[%s12 + $0xb4] sm:$0xff]
      %v4879 = vld [vmem:[%s12 + $0xbc] sm:$0xff]
      %v4880 = vld [vmem:[%s12 + $0xc4] sm:$0xf]
      %v4881 = vld [vmem:[%s12 + $0xc8] sm:$0xff]
      %v4882 = vld [vmem:[%s12 + $0xd0] sm:$0xff]
      %v4883 = vld [vmem:[%s12 + $0xd8] sm:$0xf]
      %v4884 = vld [vmem:[%s12 + $0xdc] sm:$0xff]
      %v4885 = vld [vmem:[%s12 + $0xe4] sm:$0xff]
      %v4886 = vld [vmem:[%s12 + $0xec] sm:$0xf]
      %v4887 = vld [vmem:[%s12 + $0xf0] sm:$0xff]
      %v4888 = vld [vmem:[%s12 + $0xf8] sm:$0xff]
      %v4889 = vld [vmem:[%s12 + $0x100] sm:$0xf]
      %v4890 = vld [vmem:[%s12 + $0x104] sm:$0xff]
      %v4891 = vld [vmem:[%s12 + $0x10c] sm:$0xff]
      %v4892 = vld [vmem:[%s12 + $0x114] sm:$0xf]
      %v4893 = vld [vmem:[%s12 + $0x118] sm:$0xff]
      %v4894 = vld [vmem:[%s12 + $0x120] sm:$0xff]
      %v4895 = vld [vmem:[%s12 + $0x128] sm:$0xf]
      %v4896 = vld [vmem:[%s12 + $0x12c] sm:$0xff]
      %v4897 = vld [vmem:[%s12 + $0x134] sm:$0xff]
      %v4898 = vld [vmem:[%s12 + $0x13c] sm:$0xf]
      %v4947 = vunpack.c.l.b16 %v4851
      %v4948 = vunpack.c.h.b16 %v4851
      %v4949 = vunpack.c.l.b16 %v4852
      %v4950 = vunpack.c.h.b16 %v4852
      %v4951 = vunpack.c.l.b16 %v4853
      %v4952 = vunpack.c.l.b16 %v4854
      %v4953 = vunpack.c.h.b16 %v4854
      %v4954 = vunpack.c.l.b16 %v4855
      %v4955 = vunpack.c.h.b16 %v4855
      %v4956 = vunpack.c.l.b16 %v4856
      %v4957 = vunpack.c.l.b16 %v4857
      %v4958 = vunpack.c.h.b16 %v4857
      %v4959 = vunpack.c.l.b16 %v4858
      %v4960 = vunpack.c.h.b16 %v4858
      %v4961 = vunpack.c.l.b16 %v4859
      %v4962 = vunpack.c.l.b16 %v4860
      %v4963 = vunpack.c.h.b16 %v4860
      %v4964 = vunpack.c.l.b16 %v4861
      %v4965 = vunpack.c.h.b16 %v4861
      %v4966 = vunpack.c.l.b16 %v4862
      %v4967 = vunpack.c.l.b16 %v4863
      %v4968 = vunpack.c.h.b16 %v4863
      %v4969 = vunpack.c.l.b16 %v4864
      %v4970 = vunpack.c.h.b16 %v4864
      %v4971 = vunpack.c.l.b16 %v4865
      %v4972 = vunpack.c.l.b16 %v4866
      %v4973 = vunpack.c.h.b16 %v4866
      %v4974 = vunpack.c.l.b16 %v4867
      %v4975 = vunpack.c.h.b16 %v4867
      %v4976 = vunpack.c.l.b16 %v4868
      %v4977 = vunpack.c.l.b16 %v4869
      %v4978 = vunpack.c.h.b16 %v4869
      %v4979 = vunpack.c.l.b16 %v4870
      %v4980 = vunpack.c.h.b16 %v4870
      %v4981 = vunpack.c.l.b16 %v4871
      %v4982 = vunpack.c.l.b16 %v4872
      %v4983 = vunpack.c.h.b16 %v4872
      %v4984 = vunpack.c.l.b16 %v4873
      %v4985 = vunpack.c.h.b16 %v4873
      %v4986 = vunpack.c.l.b16 %v4874
      %v4987 = vunpack.c.l.b16 %v4875
      %v4988 = vunpack.c.h.b16 %v4875
      %v4989 = vunpack.c.l.b16 %v4876
      %v4990 = vunpack.c.h.b16 %v4876
      %v4991 = vunpack.c.l.b16 %v4877
      %v4992 = vunpack.c.l.b16 %v4878
      %v4993 = vunpack.c.h.b16 %v4878
      %v4994 = vunpack.c.l.b16 %v4879
      %v4995 = vunpack.c.h.b16 %v4879
      %v4996 = vunpack.c.l.b16 %v4880
      %v4997 = vunpack.c.l.b16 %v4881
      %v4998 = vunpack.c.h.b16 %v4881
      %v4999 = vunpack.c.l.b16 %v4882
      %v5000 = vunpack.c.h.b16 %v4882
      %v5001 = vunpack.c.l.b16 %v4883
      %v5002 = vunpack.c.l.b16 %v4884
      %v5003 = vunpack.c.h.b16 %v4884
      %v5004 = vunpack.c.l.b16 %v4885
      %v5005 = vunpack.c.h.b16 %v4885
      %v5006 = vunpack.c.l.b16 %v4886
      %v5007 = vunpack.c.l.b16 %v4887
      %v5008 = vunpack.c.h.b16 %v4887
      %v5009 = vunpack.c.l.b16 %v4888
      %v5010 = vunpack.c.h.b16 %v4888
      %v5011 = vunpack.c.l.b16 %v4889
      %v5012 = vunpack.c.l.b16 %v4890
      %v5013 = vunpack.c.h.b16 %v4890
      %v5014 = vunpack.c.l.b16 %v4891
      %v5015 = vunpack.c.h.b16 %v4891
      %v5016 = vunpack.c.l.b16 %v4892
      %v5017 = vunpack.c.l.b16 %v4893
      %v5018 = vunpack.c.h.b16 %v4893
      %v5019 = vunpack.c.l.b16 %v4894
      %v5020 = vunpack.c.h.b16 %v4894
      %v5021 = vunpack.c.l.b16 %v4895
      %v5022 = vunpack.c.l.b16 %v4896
      %v5023 = vunpack.c.h.b16 %v4896
      %v5024 = vunpack.c.l.b16 %v4897
      %v5025 = vunpack.c.h.b16 %v4897
      %v5026 = vunpack.c.l.b16 %v4898
      %v5027 = vpack.c.b16 %v4952, %v4947
      %v5028 = vpack.c.b16 %v4953, %v4948
      %v5029 = vpack.c.b16 %v4954, %v4949
      %v5030 = vpack.c.b16 %v4955, %v4950
      %v5031 = vpack.c.b16 %v4956, %v4951
      %v5032 = vpack.c.b16 %v4962, %v4957
      %v5033 = vpack.c.b16 %v4963, %v4958
      %v5034 = vpack.c.b16 %v4964, %v4959
      %v5035 = vpack.c.b16 %v4965, %v4960
      %v5036 = vpack.c.b16 %v4966, %v4961
      %v5037 = vpack.c.b16 %v4972, %v4967
      %v5038 = vpack.c.b16 %v4973, %v4968
      %v5039 = vpack.c.b16 %v4974, %v4969
      %v5040 = vpack.c.b16 %v4975, %v4970
      %v5041 = vpack.c.b16 %v4976, %v4971
      %v5042 = vpack.c.b16 %v4982, %v4977
      %v5043 = vpack.c.b16 %v4983, %v4978
      %v5044 = vpack.c.b16 %v4984, %v4979
      %v5045 = vpack.c.b16 %v4985, %v4980
      %v5046 = vpack.c.b16 %v4986, %v4981
      %v5047 = vpack.c.b16 %v4992, %v4987
      %v5048 = vpack.c.b16 %v4993, %v4988
      %v5049 = vpack.c.b16 %v4994, %v4989
      %v5050 = vpack.c.b16 %v4995, %v4990
      %v5051 = vpack.c.b16 %v4996, %v4991
      %v5052 = vpack.c.b16 %v5002, %v4997
      %v5053 = vpack.c.b16 %v5003, %v4998
      %v5054 = vpack.c.b16 %v5004, %v4999
      %v5055 = vpack.c.b16 %v5005, %v5000
      %v5056 = vpack.c.b16 %v5006, %v5001
      %v5057 = vpack.c.b16 %v5012, %v5007
      %v5058 = vpack.c.b16 %v5013, %v5008
      %v5059 = vpack.c.b16 %v5014, %v5009
      %v5060 = vpack.c.b16 %v5015, %v5010
      %v5061 = vpack.c.b16 %v5016, %v5011
      %v5062 = vpack.c.b16 %v5022, %v5017
      %v5063 = vpack.c.b16 %v5023, %v5018
      %v5064 = vpack.c.b16 %v5024, %v5019
      %v5065 = vpack.c.b16 %v5025, %v5020
      %v5066 = vpack.c.b16 %v5026, %v5021
      %5107 = vmatpush.bf16.msra.mxu0 %v5062
      %5108 = vmatpush.bf16.msra.mxu0 %v5057
      %5109 = vmatpush.bf16.msra.mxu0 %v5052
      %5110 = vmatpush.bf16.msra.mxu0 %v5047
      %5111 = vmatpush.bf16.msra.mxu0 %v5042
      %5112 = vmatpush.bf16.msra.mxu0 %v5037
      %5113 = vmatpush.bf16.msra.mxu0 %v5032
      %5114 = vmatpush.bf16.msra.mxu0 %v5027
      %5115 = vmatmul.bf16.gmra.mxu0 %v2474
      %v5116 = vpop.f32.mrf.mxu0
      %v5117 = vadd.f32 0.0, %v5116
      %v5118 = vpop.f32.mrf.mxu0
      %v5119 = vadd.f32 0.0, %v5118
      %5120 = vdwg.mxu0
      %5121 = vmatpush.bf16.msra.mxu0 %v5063
      %5122 = vmatpush.bf16.msra.mxu0 %v5058
      %5123 = vmatpush.bf16.msra.mxu0 %v5053
      %5124 = vmatpush.bf16.msra.mxu0 %v5048
      %5125 = vmatpush.bf16.msra.mxu0 %v5043
      %5126 = vmatpush.bf16.msra.mxu0 %v5038
      %5127 = vmatpush.bf16.msra.mxu0 %v5033
      %5128 = vmatpush.bf16.msra.mxu0 %v5028
      %5129 = vmatmul.bf16.gmra.mxu0 %v2474
      %v5130 = vpop.f32.mrf.mxu0
      %v5131 = vadd.f32 0.0, %v5130
      %v5132 = vpop.f32.mrf.mxu0
      %v5133 = vadd.f32 0.0, %v5132
      %5134 = vdwg.mxu0
      %5135 = vmatpush.bf16.msra.mxu0 %v5064
      %5136 = vmatpush.bf16.msra.mxu0 %v5059
      %5137 = vmatpush.bf16.msra.mxu0 %v5054
      %5138 = vmatpush.bf16.msra.mxu0 %v5049
      %5139 = vmatpush.bf16.msra.mxu0 %v5044
      %5140 = vmatpush.bf16.msra.mxu0 %v5039
      %5141 = vmatpush.bf16.msra.mxu0 %v5034
      %5142 = vmatpush.bf16.msra.mxu0 %v5029
      %5143 = vmatmul.bf16.gmra.mxu0 %v2474
      %v5144 = vpop.f32.mrf.mxu0
      %v5145 = vadd.f32 0.0, %v5144
      %v5146 = vpop.f32.mrf.mxu0
      %v5147 = vadd.f32 0.0, %v5146
      %5148 = vdwg.mxu0
      %5149 = vmatpush.bf16.msra.mxu0 %v5065
      %5150 = vmatpush.bf16.msra.mxu0 %v5060
      %5151 = vmatpush.bf16.msra.mxu0 %v5055
      %5152 = vmatpush.bf16.msra.mxu0 %v5050
      %5153 = vmatpush.bf16.msra.mxu0 %v5045
      %5154 = vmatpush.bf16.msra.mxu0 %v5040
      %5155 = vmatpush.bf16.msra.mxu0 %v5035
      %5156 = vmatpush.bf16.msra.mxu0 %v5030
      %5157 = vmatmul.bf16.gmra.mxu0 %v2474
      %v5158 = vpop.f32.mrf.mxu0
      %v5159 = vadd.f32 0.0, %v5158
      %v5160 = vpop.f32.mrf.mxu0
      %v5161 = vadd.f32 0.0, %v5160
      %5162 = vdwg.mxu0
      %5163 = vmatpush.bf16.msra.mxu0 %v5066
      %5164 = vmatpush.bf16.msra.mxu0 %v5061
      %5165 = vmatpush.bf16.msra.mxu0 %v5056
      %5166 = vmatpush.bf16.msra.mxu0 %v5051
      %5167 = vmatpush.bf16.msra.mxu0 %v5046
      %5168 = vmatpush.bf16.msra.mxu0 %v5041
      %5169 = vmatpush.bf16.msra.mxu0 %v5036
      %5170 = vmatpush.bf16.msra.mxu0 %v5031
      %5171 = vmatmul.bf16.gmra.mxu0 %v2474
      %v5172 = vpop.f32.mrf.mxu0
      %v5173 = vadd.f32 0.0, %v5172
      %v5174 = vpop.f32.mrf.mxu0
      %v5175 = vadd.f32 0.0, %v5174
      %5176 = vdwg.mxu0
      %v5369 = vunpack.c.l.b16 %v4659
      %v5370 = vunpack.c.h.b16 %v4659
      %v5371 = vunpack.c.l.b16 %v4660
      %v5372 = vunpack.c.h.b16 %v4660
      %v5373 = vunpack.c.l.b16 %v4661
      %v5374 = vunpack.c.l.b16 %v4662
      %v5375 = vunpack.c.h.b16 %v4662
      %v5376 = vunpack.c.l.b16 %v4663
      %v5377 = vunpack.c.h.b16 %v4663
      %v5378 = vunpack.c.l.b16 %v4664
      %v5379 = vunpack.c.l.b16 %v4665
      %v5380 = vunpack.c.h.b16 %v4665
      %v5381 = vunpack.c.l.b16 %v4666
      %v5382 = vunpack.c.h.b16 %v4666
      %v5383 = vunpack.c.l.b16 %v4667
      %v5384 = vunpack.c.l.b16 %v4668
      %v5385 = vunpack.c.h.b16 %v4668
      %v5386 = vunpack.c.l.b16 %v4669
      %v5387 = vunpack.c.h.b16 %v4669
      %v5388 = vunpack.c.l.b16 %v4670
      %v5389 = vunpack.c.l.b16 %v4671
      %v5390 = vunpack.c.h.b16 %v4671
      %v5391 = vunpack.c.l.b16 %v4672
      %v5392 = vunpack.c.h.b16 %v4672
      %v5393 = vunpack.c.l.b16 %v4673
      %v5394 = vunpack.c.l.b16 %v4674
      %v5395 = vunpack.c.h.b16 %v4674
      %v5396 = vunpack.c.l.b16 %v4675
      %v5397 = vunpack.c.h.b16 %v4675
      %v5398 = vunpack.c.l.b16 %v4676
      %v5399 = vunpack.c.l.b16 %v4677
      %v5400 = vunpack.c.h.b16 %v4677
      %v5401 = vunpack.c.l.b16 %v4678
      %v5402 = vunpack.c.h.b16 %v4678
      %v5403 = vunpack.c.l.b16 %v4679
      %v5404 = vunpack.c.l.b16 %v4680
      %v5405 = vunpack.c.h.b16 %v4680
      %v5406 = vunpack.c.l.b16 %v4681
      %v5407 = vunpack.c.h.b16 %v4681
      %v5408 = vunpack.c.l.b16 %v4682
      %v5409 = vunpack.c.l.b16 %v4683
      %v5410 = vunpack.c.h.b16 %v4683
      %v5411 = vunpack.c.l.b16 %v4684
      %v5412 = vunpack.c.h.b16 %v4684
      %v5413 = vunpack.c.l.b16 %v4685
      %v5414 = vunpack.c.l.b16 %v4686
      %v5415 = vunpack.c.h.b16 %v4686
      %v5416 = vunpack.c.l.b16 %v4687
      %v5417 = vunpack.c.h.b16 %v4687
      %v5418 = vunpack.c.l.b16 %v4688
      %v5419 = vunpack.c.l.b16 %v4689
      %v5420 = vunpack.c.h.b16 %v4689
      %v5421 = vunpack.c.l.b16 %v4690
      %v5422 = vunpack.c.h.b16 %v4690
      %v5423 = vunpack.c.l.b16 %v4691
      %v5424 = vunpack.c.l.b16 %v4692
      %v5425 = vunpack.c.h.b16 %v4692
      %v5426 = vunpack.c.l.b16 %v4693
      %v5427 = vunpack.c.h.b16 %v4693
      %v5428 = vunpack.c.l.b16 %v4694
      %v5429 = vunpack.c.l.b16 %v4695
      %v5430 = vunpack.c.h.b16 %v4695
      %v5431 = vunpack.c.l.b16 %v4696
      %v5432 = vunpack.c.h.b16 %v4696
      %v5433 = vunpack.c.l.b16 %v4697
      %v5434 = vunpack.c.l.b16 %v4698
      %v5435 = vunpack.c.h.b16 %v4698
      %v5436 = vunpack.c.l.b16 %v4699
      %v5437 = vunpack.c.h.b16 %v4699
      %v5438 = vunpack.c.l.b16 %v4700
      %v5439 = vunpack.c.l.b16 %v4701
      %v5440 = vunpack.c.h.b16 %v4701
      %v5441 = vunpack.c.l.b16 %v4702
      %v5442 = vunpack.c.h.b16 %v4702
      %v5443 = vunpack.c.l.b16 %v4703
      %v5444 = vunpack.c.l.b16 %v4704
      %v5445 = vunpack.c.h.b16 %v4704
      %v5446 = vunpack.c.l.b16 %v4705
      %v5447 = vunpack.c.h.b16 %v4705
      %v5448 = vunpack.c.l.b16 %v4706
      %v5449 = vunpack.c.l.b16 %v4707
      %v5450 = vunpack.c.h.b16 %v4707
      %v5451 = vunpack.c.l.b16 %v4708
      %v5452 = vunpack.c.h.b16 %v4708
      %v5453 = vunpack.c.l.b16 %v4709
      %v5454 = vunpack.c.l.b16 %v4710
      %v5455 = vunpack.c.h.b16 %v4710
      %v5456 = vunpack.c.l.b16 %v4711
      %v5457 = vunpack.c.h.b16 %v4711
      %v5458 = vunpack.c.l.b16 %v4712
      %v5459 = vunpack.c.l.b16 %v4713
      %v5460 = vunpack.c.h.b16 %v4713
      %v5461 = vunpack.c.l.b16 %v4714
      %v5462 = vunpack.c.h.b16 %v4714
      %v5463 = vunpack.c.l.b16 %v4715
      %v5464 = vunpack.c.l.b16 %v4716
      %v5465 = vunpack.c.h.b16 %v4716
      %v5466 = vunpack.c.l.b16 %v4717
      %v5467 = vunpack.c.h.b16 %v4717
      %v5468 = vunpack.c.l.b16 %v4718
      %v5469 = vunpack.c.l.b16 %v4719
      %v5470 = vunpack.c.h.b16 %v4719
      %v5471 = vunpack.c.l.b16 %v4720
      %v5472 = vunpack.c.h.b16 %v4720
      %v5473 = vunpack.c.l.b16 %v4721
      %v5474 = vunpack.c.l.b16 %v4722
      %v5475 = vunpack.c.h.b16 %v4722
      %v5476 = vunpack.c.l.b16 %v4723
      %v5477 = vunpack.c.h.b16 %v4723
      %v5478 = vunpack.c.l.b16 %v4724
      %v5479 = vunpack.c.l.b16 %v4725
      %v5480 = vunpack.c.h.b16 %v4725
      %v5481 = vunpack.c.l.b16 %v4726
      %v5482 = vunpack.c.h.b16 %v4726
      %v5483 = vunpack.c.l.b16 %v4727
      %v5484 = vunpack.c.l.b16 %v4728
      %v5485 = vunpack.c.h.b16 %v4728
      %v5486 = vunpack.c.l.b16 %v4729
      %v5487 = vunpack.c.h.b16 %v4729
      %v5488 = vunpack.c.l.b16 %v4730
      %v5489 = vunpack.c.l.b16 %v4731
      %v5490 = vunpack.c.h.b16 %v4731
      %v5491 = vunpack.c.l.b16 %v4732
      %v5492 = vunpack.c.h.b16 %v4732
      %v5493 = vunpack.c.l.b16 %v4733
      %v5494 = vunpack.c.l.b16 %v4734
      %v5495 = vunpack.c.h.b16 %v4734
      %v5496 = vunpack.c.l.b16 %v4735
      %v5497 = vunpack.c.h.b16 %v4735
      %v5498 = vunpack.c.l.b16 %v4736
      %v5499 = vunpack.c.l.b16 %v4737
      %v5500 = vunpack.c.h.b16 %v4737
      %v5501 = vunpack.c.l.b16 %v4738
      %v5502 = vunpack.c.h.b16 %v4738
      %v5503 = vunpack.c.l.b16 %v4739
      %v5504 = vunpack.c.l.b16 %v4740
      %v5505 = vunpack.c.h.b16 %v4740
      %v5506 = vunpack.c.l.b16 %v4741
      %v5507 = vunpack.c.h.b16 %v4741
      %v5508 = vunpack.c.l.b16 %v4742
      %v5509 = vunpack.c.l.b16 %v4743
      %v5510 = vunpack.c.h.b16 %v4743
      %v5511 = vunpack.c.l.b16 %v4744
      %v5512 = vunpack.c.h.b16 %v4744
      %v5513 = vunpack.c.l.b16 %v4745
      %v5514 = vunpack.c.l.b16 %v4746
      %v5515 = vunpack.c.h.b16 %v4746
      %v5516 = vunpack.c.l.b16 %v4747
      %v5517 = vunpack.c.h.b16 %v4747
      %v5518 = vunpack.c.l.b16 %v4748
      %v5519 = vunpack.c.l.b16 %v4749
      %v5520 = vunpack.c.h.b16 %v4749
      %v5521 = vunpack.c.l.b16 %v4750
      %v5522 = vunpack.c.h.b16 %v4750
      %v5523 = vunpack.c.l.b16 %v4751
      %v5524 = vunpack.c.l.b16 %v4752
      %v5525 = vunpack.c.h.b16 %v4752
      %v5526 = vunpack.c.l.b16 %v4753
      %v5527 = vunpack.c.h.b16 %v4753
      %v5528 = vunpack.c.l.b16 %v4754
      %v5529 = vunpack.c.l.b16 %v4755
      %v5530 = vunpack.c.h.b16 %v4755
      %v5531 = vunpack.c.l.b16 %v4756
      %v5532 = vunpack.c.h.b16 %v4756
      %v5533 = vunpack.c.l.b16 %v4757
      %v5534 = vunpack.c.l.b16 %v4758
      %v5535 = vunpack.c.h.b16 %v4758
      %v5536 = vunpack.c.l.b16 %v4759
      %v5537 = vunpack.c.h.b16 %v4759
      %v5538 = vunpack.c.l.b16 %v4760
      %v5539 = vunpack.c.l.b16 %v4761
      %v5540 = vunpack.c.h.b16 %v4761
      %v5541 = vunpack.c.l.b16 %v4762
      %v5542 = vunpack.c.h.b16 %v4762
      %v5543 = vunpack.c.l.b16 %v4763
      %v5544 = vunpack.c.l.b16 %v4764
      %v5545 = vunpack.c.h.b16 %v4764
      %v5546 = vunpack.c.l.b16 %v4765
      %v5547 = vunpack.c.h.b16 %v4765
      %v5548 = vunpack.c.l.b16 %v4766
      %v5549 = vunpack.c.l.b16 %v4767
      %v5550 = vunpack.c.h.b16 %v4767
      %v5551 = vunpack.c.l.b16 %v4768
      %v5552 = vunpack.c.h.b16 %v4768
      %v5553 = vunpack.c.l.b16 %v4769
      %v5554 = vunpack.c.l.b16 %v4770
      %v5555 = vunpack.c.h.b16 %v4770
      %v5556 = vunpack.c.l.b16 %v4771
      %v5557 = vunpack.c.h.b16 %v4771
      %v5558 = vunpack.c.l.b16 %v4772
      %v5559 = vunpack.c.l.b16 %v4773
      %v5560 = vunpack.c.h.b16 %v4773
      %v5561 = vunpack.c.l.b16 %v4774
      %v5562 = vunpack.c.h.b16 %v4774
      %v5563 = vunpack.c.l.b16 %v4775
      %v5564 = vunpack.c.l.b16 %v4776
      %v5565 = vunpack.c.h.b16 %v4776
      %v5566 = vunpack.c.l.b16 %v4777
      %v5567 = vunpack.c.h.b16 %v4777
      %v5568 = vunpack.c.l.b16 %v4778
      %v5569 = vunpack.c.l.b16 %v4779
      %v5570 = vunpack.c.h.b16 %v4779
      %v5571 = vunpack.c.l.b16 %v4780
      %v5572 = vunpack.c.h.b16 %v4780
      %v5573 = vunpack.c.l.b16 %v4781
      %v5574 = vunpack.c.l.b16 %v4782
      %v5575 = vunpack.c.h.b16 %v4782
      %v5576 = vunpack.c.l.b16 %v4783
      %v5577 = vunpack.c.h.b16 %v4783
      %v5578 = vunpack.c.l.b16 %v4784
      %v5579 = vunpack.c.l.b16 %v4785
      %v5580 = vunpack.c.h.b16 %v4785
      %v5581 = vunpack.c.l.b16 %v4786
      %v5582 = vunpack.c.h.b16 %v4786
      %v5583 = vunpack.c.l.b16 %v4787
      %v5584 = vunpack.c.l.b16 %v4788
      %v5585 = vunpack.c.h.b16 %v4788
      %v5586 = vunpack.c.l.b16 %v4789
      %v5587 = vunpack.c.h.b16 %v4789
      %v5588 = vunpack.c.l.b16 %v4790
      %v5589 = vunpack.c.l.b16 %v4791
      %v5590 = vunpack.c.h.b16 %v4791
      %v5591 = vunpack.c.l.b16 %v4792
      %v5592 = vunpack.c.h.b16 %v4792
      %v5593 = vunpack.c.l.b16 %v4793
      %v5594 = vunpack.c.l.b16 %v4794
      %v5595 = vunpack.c.h.b16 %v4794
      %v5596 = vunpack.c.l.b16 %v4795
      %v5597 = vunpack.c.h.b16 %v4795
      %v5598 = vunpack.c.l.b16 %v4796
      %v5599 = vunpack.c.l.b16 %v4797
      %v5600 = vunpack.c.h.b16 %v4797
      %v5601 = vunpack.c.l.b16 %v4798
      %v5602 = vunpack.c.h.b16 %v4798
      %v5603 = vunpack.c.l.b16 %v4799
      %v5604 = vunpack.c.l.b16 %v4800
      %v5605 = vunpack.c.h.b16 %v4800
      %v5606 = vunpack.c.l.b16 %v4801
      %v5607 = vunpack.c.h.b16 %v4801
      %v5608 = vunpack.c.l.b16 %v4802
      %v5609 = vunpack.c.l.b16 %v4803
      %v5610 = vunpack.c.h.b16 %v4803
      %v5611 = vunpack.c.l.b16 %v4804
      %v5612 = vunpack.c.h.b16 %v4804
      %v5613 = vunpack.c.l.b16 %v4805
      %v5614 = vunpack.c.l.b16 %v4806
      %v5615 = vunpack.c.h.b16 %v4806
      %v5616 = vunpack.c.l.b16 %v4807
      %v5617 = vunpack.c.h.b16 %v4807
      %v5618 = vunpack.c.l.b16 %v4808
      %v5619 = vunpack.c.l.b16 %v4809
      %v5620 = vunpack.c.h.b16 %v4809
      %v5621 = vunpack.c.l.b16 %v4810
      %v5622 = vunpack.c.h.b16 %v4810
      %v5623 = vunpack.c.l.b16 %v4811
      %v5624 = vunpack.c.l.b16 %v4812
      %v5625 = vunpack.c.h.b16 %v4812
      %v5626 = vunpack.c.l.b16 %v4813
      %v5627 = vunpack.c.h.b16 %v4813
      %v5628 = vunpack.c.l.b16 %v4814
      %v5629 = vunpack.c.l.b16 %v4815
      %v5630 = vunpack.c.h.b16 %v4815
      %v5631 = vunpack.c.l.b16 %v4816
      %v5632 = vunpack.c.h.b16 %v4816
      %v5633 = vunpack.c.l.b16 %v4817
      %v5634 = vunpack.c.l.b16 %v4818
      %v5635 = vunpack.c.h.b16 %v4818
      %v5636 = vunpack.c.l.b16 %v4819
      %v5637 = vunpack.c.h.b16 %v4819
      %v5638 = vunpack.c.l.b16 %v4820
      %v5639 = vunpack.c.l.b16 %v4821
      %v5640 = vunpack.c.h.b16 %v4821
      %v5641 = vunpack.c.l.b16 %v4822
      %v5642 = vunpack.c.h.b16 %v4822
      %v5643 = vunpack.c.l.b16 %v4823
      %v5644 = vunpack.c.l.b16 %v4824
      %v5645 = vunpack.c.h.b16 %v4824
      %v5646 = vunpack.c.l.b16 %v4825
      %v5647 = vunpack.c.h.b16 %v4825
      %v5648 = vunpack.c.l.b16 %v4826
      %v5649 = vunpack.c.l.b16 %v4827
      %v5650 = vunpack.c.h.b16 %v4827
      %v5651 = vunpack.c.l.b16 %v4828
      %v5652 = vunpack.c.h.b16 %v4828
      %v5653 = vunpack.c.l.b16 %v4829
      %v5654 = vunpack.c.l.b16 %v4830
      %v5655 = vunpack.c.h.b16 %v4830
      %v5656 = vunpack.c.l.b16 %v4831
      %v5657 = vunpack.c.h.b16 %v4831
      %v5658 = vunpack.c.l.b16 %v4832
      %v5659 = vunpack.c.l.b16 %v4833
      %v5660 = vunpack.c.h.b16 %v4833
      %v5661 = vunpack.c.l.b16 %v4834
      %v5662 = vunpack.c.h.b16 %v4834
      %v5663 = vunpack.c.l.b16 %v4835
      %v5664 = vunpack.c.l.b16 %v4836
      %v5665 = vunpack.c.h.b16 %v4836
      %v5666 = vunpack.c.l.b16 %v4837
      %v5667 = vunpack.c.h.b16 %v4837
      %v5668 = vunpack.c.l.b16 %v4838
      %v5669 = vunpack.c.l.b16 %v4839
      %v5670 = vunpack.c.h.b16 %v4839
      %v5671 = vunpack.c.l.b16 %v4840
      %v5672 = vunpack.c.h.b16 %v4840
      %v5673 = vunpack.c.l.b16 %v4841
      %v5674 = vunpack.c.l.b16 %v4842
      %v5675 = vunpack.c.h.b16 %v4842
      %v5676 = vunpack.c.l.b16 %v4843
      %v5677 = vunpack.c.h.b16 %v4843
      %v5678 = vunpack.c.l.b16 %v4844
      %v5679 = vunpack.c.l.b16 %v4845
      %v5680 = vunpack.c.h.b16 %v4845
      %v5681 = vunpack.c.l.b16 %v4846
      %v5682 = vunpack.c.h.b16 %v4846
      %v5683 = vunpack.c.l.b16 %v4847
      %v5684 = vunpack.c.l.b16 %v4848
      %v5685 = vunpack.c.h.b16 %v4848
      %v5686 = vunpack.c.l.b16 %v4849
      %v5687 = vunpack.c.h.b16 %v4849
      %v5688 = vunpack.c.l.b16 %v4850
      %v5689 = vpack.c.b16 %v5374, %v5369
      %v5690 = vpack.c.b16 %v5375, %v5370
      %v5691 = vpack.c.b16 %v5376, %v5371
      %v5692 = vpack.c.b16 %v5377, %v5372
      %v5693 = vpack.c.b16 %v5378, %v5373
      %v5694 = vpack.c.b16 %v5384, %v5379
      %v5695 = vpack.c.b16 %v5385, %v5380
      %v5696 = vpack.c.b16 %v5386, %v5381
      %v5697 = vpack.c.b16 %v5387, %v5382
      %v5698 = vpack.c.b16 %v5388, %v5383
      %v5699 = vpack.c.b16 %v5394, %v5389
      %v5700 = vpack.c.b16 %v5395, %v5390
      %v5701 = vpack.c.b16 %v5396, %v5391
      %v5702 = vpack.c.b16 %v5397, %v5392
      %v5703 = vpack.c.b16 %v5398, %v5393
      %v5704 = vpack.c.b16 %v5404, %v5399
      %v5705 = vpack.c.b16 %v5405, %v5400
      %v5706 = vpack.c.b16 %v5406, %v5401
      %v5707 = vpack.c.b16 %v5407, %v5402
      %v5708 = vpack.c.b16 %v5408, %v5403
      %v5709 = vpack.c.b16 %v5414, %v5409
      %v5710 = vpack.c.b16 %v5415, %v5410
      %v5711 = vpack.c.b16 %v5416, %v5411
      %v5712 = vpack.c.b16 %v5417, %v5412
      %v5713 = vpack.c.b16 %v5418, %v5413
      %v5714 = vpack.c.b16 %v5424, %v5419
      %v5715 = vpack.c.b16 %v5425, %v5420
      %v5716 = vpack.c.b16 %v5426, %v5421
      %v5717 = vpack.c.b16 %v5427, %v5422
      %v5718 = vpack.c.b16 %v5428, %v5423
      %v5719 = vpack.c.b16 %v5434, %v5429
      %v5720 = vpack.c.b16 %v5435, %v5430
      %v5721 = vpack.c.b16 %v5436, %v5431
      %v5722 = vpack.c.b16 %v5437, %v5432
      %v5723 = vpack.c.b16 %v5438, %v5433
      %v5724 = vpack.c.b16 %v5444, %v5439
      %v5725 = vpack.c.b16 %v5445, %v5440
      %v5726 = vpack.c.b16 %v5446, %v5441
      %v5727 = vpack.c.b16 %v5447, %v5442
      %v5728 = vpack.c.b16 %v5448, %v5443
      %v5729 = vpack.c.b16 %v5454, %v5449
      %v5730 = vpack.c.b16 %v5455, %v5450
      %v5731 = vpack.c.b16 %v5456, %v5451
      %v5732 = vpack.c.b16 %v5457, %v5452
      %v5733 = vpack.c.b16 %v5458, %v5453
      %v5734 = vpack.c.b16 %v5464, %v5459
      %v5735 = vpack.c.b16 %v5465, %v5460
      %v5736 = vpack.c.b16 %v5466, %v5461
      %v5737 = vpack.c.b16 %v5467, %v5462
      %v5738 = vpack.c.b16 %v5468, %v5463
      %v5739 = vpack.c.b16 %v5474, %v5469
      %v5740 = vpack.c.b16 %v5475, %v5470
      %v5741 = vpack.c.b16 %v5476, %v5471
      %v5742 = vpack.c.b16 %v5477, %v5472
      %v5743 = vpack.c.b16 %v5478, %v5473
      %v5744 = vpack.c.b16 %v5484, %v5479
      %v5745 = vpack.c.b16 %v5485, %v5480
      %v5746 = vpack.c.b16 %v5486, %v5481
      %v5747 = vpack.c.b16 %v5487, %v5482
      %v5748 = vpack.c.b16 %v5488, %v5483
      %v5749 = vpack.c.b16 %v5494, %v5489
      %v5750 = vpack.c.b16 %v5495, %v5490
      %v5751 = vpack.c.b16 %v5496, %v5491
      %v5752 = vpack.c.b16 %v5497, %v5492
      %v5753 = vpack.c.b16 %v5498, %v5493
      %v5754 = vpack.c.b16 %v5504, %v5499
      %v5755 = vpack.c.b16 %v5505, %v5500
      %v5756 = vpack.c.b16 %v5506, %v5501
      %v5757 = vpack.c.b16 %v5507, %v5502
      %v5758 = vpack.c.b16 %v5508, %v5503
      %v5759 = vpack.c.b16 %v5514, %v5509
      %v5760 = vpack.c.b16 %v5515, %v5510
      %v5761 = vpack.c.b16 %v5516, %v5511
      %v5762 = vpack.c.b16 %v5517, %v5512
      %v5763 = vpack.c.b16 %v5518, %v5513
      %v5764 = vpack.c.b16 %v5524, %v5519
      %v5765 = vpack.c.b16 %v5525, %v5520
      %v5766 = vpack.c.b16 %v5526, %v5521
      %v5767 = vpack.c.b16 %v5527, %v5522
      %v5768 = vpack.c.b16 %v5528, %v5523
      %v5769 = vpack.c.b16 %v5534, %v5529
      %v5770 = vpack.c.b16 %v5535, %v5530
      %v5771 = vpack.c.b16 %v5536, %v5531
      %v5772 = vpack.c.b16 %v5537, %v5532
      %v5773 = vpack.c.b16 %v5538, %v5533
      %v5774 = vpack.c.b16 %v5544, %v5539
      %v5775 = vpack.c.b16 %v5545, %v5540
      %v5776 = vpack.c.b16 %v5546, %v5541
      %v5777 = vpack.c.b16 %v5547, %v5542
      %v5778 = vpack.c.b16 %v5548, %v5543
      %v5779 = vpack.c.b16 %v5554, %v5549
      %v5780 = vpack.c.b16 %v5555, %v5550
      %v5781 = vpack.c.b16 %v5556, %v5551
      %v5782 = vpack.c.b16 %v5557, %v5552
      %v5783 = vpack.c.b16 %v5558, %v5553
      %v5784 = vpack.c.b16 %v5564, %v5559
      %v5785 = vpack.c.b16 %v5565, %v5560
      %v5786 = vpack.c.b16 %v5566, %v5561
      %v5787 = vpack.c.b16 %v5567, %v5562
      %v5788 = vpack.c.b16 %v5568, %v5563
      %v5789 = vpack.c.b16 %v5574, %v5569
      %v5790 = vpack.c.b16 %v5575, %v5570
      %v5791 = vpack.c.b16 %v5576, %v5571
      %v5792 = vpack.c.b16 %v5577, %v5572
      %v5793 = vpack.c.b16 %v5578, %v5573
      %v5794 = vpack.c.b16 %v5584, %v5579
      %v5795 = vpack.c.b16 %v5585, %v5580
      %v5796 = vpack.c.b16 %v5586, %v5581
      %v5797 = vpack.c.b16 %v5587, %v5582
      %v5798 = vpack.c.b16 %v5588, %v5583
      %v5799 = vpack.c.b16 %v5594, %v5589
      %v5800 = vpack.c.b16 %v5595, %v5590
      %v5801 = vpack.c.b16 %v5596, %v5591
      %v5802 = vpack.c.b16 %v5597, %v5592
      %v5803 = vpack.c.b16 %v5598, %v5593
      %v5804 = vpack.c.b16 %v5604, %v5599
      %v5805 = vpack.c.b16 %v5605, %v5600
      %v5806 = vpack.c.b16 %v5606, %v5601
      %v5807 = vpack.c.b16 %v5607, %v5602
      %v5808 = vpack.c.b16 %v5608, %v5603
      %v5809 = vpack.c.b16 %v5614, %v5609
      %v5810 = vpack.c.b16 %v5615, %v5610
      %v5811 = vpack.c.b16 %v5616, %v5611
      %v5812 = vpack.c.b16 %v5617, %v5612
      %v5813 = vpack.c.b16 %v5618, %v5613
      %v5814 = vpack.c.b16 %v5624, %v5619
      %v5815 = vpack.c.b16 %v5625, %v5620
      %v5816 = vpack.c.b16 %v5626, %v5621
      %v5817 = vpack.c.b16 %v5627, %v5622
      %v5818 = vpack.c.b16 %v5628, %v5623
      %v5819 = vpack.c.b16 %v5634, %v5629
      %v5820 = vpack.c.b16 %v5635, %v5630
      %v5821 = vpack.c.b16 %v5636, %v5631
      %v5822 = vpack.c.b16 %v5637, %v5632
      %v5823 = vpack.c.b16 %v5638, %v5633
      %v5824 = vpack.c.b16 %v5644, %v5639
      %v5825 = vpack.c.b16 %v5645, %v5640
      %v5826 = vpack.c.b16 %v5646, %v5641
      %v5827 = vpack.c.b16 %v5647, %v5642
      %v5828 = vpack.c.b16 %v5648, %v5643
      %v5829 = vpack.c.b16 %v5654, %v5649
      %v5830 = vpack.c.b16 %v5655, %v5650
      %v5831 = vpack.c.b16 %v5656, %v5651
      %v5832 = vpack.c.b16 %v5657, %v5652
      %v5833 = vpack.c.b16 %v5658, %v5653
      %v5834 = vpack.c.b16 %v5664, %v5659
      %v5835 = vpack.c.b16 %v5665, %v5660
      %v5836 = vpack.c.b16 %v5666, %v5661
      %v5837 = vpack.c.b16 %v5667, %v5662
      %v5838 = vpack.c.b16 %v5668, %v5663
      %v5839 = vpack.c.b16 %v5674, %v5669
      %v5840 = vpack.c.b16 %v5675, %v5670
      %v5841 = vpack.c.b16 %v5676, %v5671
      %v5842 = vpack.c.b16 %v5677, %v5672
      %v5843 = vpack.c.b16 %v5678, %v5673
      %v5844 = vpack.c.b16 %v5684, %v5679
      %v5845 = vpack.c.b16 %v5685, %v5680
      %v5846 = vpack.c.b16 %v5686, %v5681
      %v5847 = vpack.c.b16 %v5687, %v5682
      %v5848 = vpack.c.b16 %v5688, %v5683
      %6009 = vmatpush.bf16.msra.mxu0 %v5724
      %6010 = vmatpush.bf16.msra.mxu0 %v5719
      %6011 = vmatpush.bf16.msra.mxu0 %v5714
      %6012 = vmatpush.bf16.msra.mxu0 %v5709
      %6013 = vmatpush.bf16.msra.mxu0 %v5704
      %6014 = vmatpush.bf16.msra.mxu0 %v5699
      %6015 = vmatpush.bf16.msra.mxu0 %v5694
      %6016 = vmatpush.bf16.msra.mxu0 %v5689
      %6017 = vmatmul.bf16.gmra.mxu0 %v2224
      %v6018 = vpop.f32.mrf.mxu0
      %v6019 = vadd.f32 %v5117, %v6018
      %v6020 = vpop.f32.mrf.mxu0
      %v6021 = vadd.f32 %v5119, %v6020
      %6022 = vdwg.mxu0
      %6023 = vmatpush.bf16.msra.mxu0 %v5764
      %6024 = vmatpush.bf16.msra.mxu0 %v5759
      %6025 = vmatpush.bf16.msra.mxu0 %v5754
      %6026 = vmatpush.bf16.msra.mxu0 %v5749
      %6027 = vmatpush.bf16.msra.mxu0 %v5744
      %6028 = vmatpush.bf16.msra.mxu0 %v5739
      %6029 = vmatpush.bf16.msra.mxu0 %v5734
      %6030 = vmatpush.bf16.msra.mxu0 %v5729
      %6031 = vmatmul.bf16.gmra.mxu0 %v2225
      %v6032 = vpop.f32.mrf.mxu0
      %v6033 = vadd.f32 %v6019, %v6032
      %v6034 = vpop.f32.mrf.mxu0
      %v6035 = vadd.f32 %v6021, %v6034
      %6036 = vdwg.mxu0
      %6037 = vmatpush.bf16.msra.mxu0 %v5804
      %6038 = vmatpush.bf16.msra.mxu0 %v5799
      %6039 = vmatpush.bf16.msra.mxu0 %v5794
      %6040 = vmatpush.bf16.msra.mxu0 %v5789
      %6041 = vmatpush.bf16.msra.mxu0 %v5784
      %6042 = vmatpush.bf16.msra.mxu0 %v5779
      %6043 = vmatpush.bf16.msra.mxu0 %v5774
      %6044 = vmatpush.bf16.msra.mxu0 %v5769
      %6045 = vmatmul.bf16.gmra.mxu0 %v2226
      %v6046 = vpop.f32.mrf.mxu0
      %v6047 = vadd.f32 %v6033, %v6046
      %v6048 = vpop.f32.mrf.mxu0
      %v6049 = vadd.f32 %v6035, %v6048
      %6050 = vdwg.mxu0
      %6051 = vmatpush.bf16.msra.mxu0 %v5844
      %6052 = vmatpush.bf16.msra.mxu0 %v5839
      %6053 = vmatpush.bf16.msra.mxu0 %v5834
      %6054 = vmatpush.bf16.msra.mxu0 %v5829
      %6055 = vmatpush.bf16.msra.mxu0 %v5824
      %6056 = vmatpush.bf16.msra.mxu0 %v5819
      %6057 = vmatpush.bf16.msra.mxu0 %v5814
      %6058 = vmatpush.bf16.msra.mxu0 %v5809
      %6059 = vmatmul.bf16.gmra.mxu0 %v2227
      %v6060 = vpop.f32.mrf.mxu0
      %v6061 = vadd.f32 %v6047, %v6060
      %v6062 = vpop.f32.mrf.mxu0
      %v6063 = vadd.f32 %v6049, %v6062
      %6064 = vdwg.mxu0
      %6065 = vmatpush.bf16.msra.mxu0 %v5725
      %6066 = vmatpush.bf16.msra.mxu0 %v5720
      %6067 = vmatpush.bf16.msra.mxu0 %v5715
      %6068 = vmatpush.bf16.msra.mxu0 %v5710
      %6069 = vmatpush.bf16.msra.mxu0 %v5705
      %6070 = vmatpush.bf16.msra.mxu0 %v5700
      %6071 = vmatpush.bf16.msra.mxu0 %v5695
      %6072 = vmatpush.bf16.msra.mxu0 %v5690
      %6073 = vmatmul.bf16.gmra.mxu0 %v2224
      %v6074 = vpop.f32.mrf.mxu0
      %v6075 = vadd.f32 %v5131, %v6074
      %v6076 = vpop.f32.mrf.mxu0
      %v6077 = vadd.f32 %v5133, %v6076
      %6078 = vdwg.mxu0
      %6079 = vmatpush.bf16.msra.mxu0 %v5765
      %6080 = vmatpush.bf16.msra.mxu0 %v5760
      %6081 = vmatpush.bf16.msra.mxu0 %v5755
      %6082 = vmatpush.bf16.msra.mxu0 %v5750
      %6083 = vmatpush.bf16.msra.mxu0 %v5745
      %6084 = vmatpush.bf16.msra.mxu0 %v5740
      %6085 = vmatpush.bf16.msra.mxu0 %v5735
      %6086 = vmatpush.bf16.msra.mxu0 %v5730
      %6087 = vmatmul.bf16.gmra.mxu0 %v2225
      %v6088 = vpop.f32.mrf.mxu0
      %v6089 = vadd.f32 %v6075, %v6088
      %v6090 = vpop.f32.mrf.mxu0
      %v6091 = vadd.f32 %v6077, %v6090
      %6092 = vdwg.mxu0
      %6093 = vmatpush.bf16.msra.mxu0 %v5805
      %6094 = vmatpush.bf16.msra.mxu0 %v5800
      %6095 = vmatpush.bf16.msra.mxu0 %v5795
      %6096 = vmatpush.bf16.msra.mxu0 %v5790
      %6097 = vmatpush.bf16.msra.mxu0 %v5785
      %6098 = vmatpush.bf16.msra.mxu0 %v5780
      %6099 = vmatpush.bf16.msra.mxu0 %v5775
      %6100 = vmatpush.bf16.msra.mxu0 %v5770
      %6101 = vmatmul.bf16.gmra.mxu0 %v2226
      %v6102 = vpop.f32.mrf.mxu0
      %v6103 = vadd.f32 %v6089, %v6102
      %v6104 = vpop.f32.mrf.mxu0
      %v6105 = vadd.f32 %v6091, %v6104
      %6106 = vdwg.mxu0
      %6107 = vmatpush.bf16.msra.mxu0 %v5845
      %6108 = vmatpush.bf16.msra.mxu0 %v5840
      %6109 = vmatpush.bf16.msra.mxu0 %v5835
      %6110 = vmatpush.bf16.msra.mxu0 %v5830
      %6111 = vmatpush.bf16.msra.mxu0 %v5825
      %6112 = vmatpush.bf16.msra.mxu0 %v5820
      %6113 = vmatpush.bf16.msra.mxu0 %v5815
      %6114 = vmatpush.bf16.msra.mxu0 %v5810
      %6115 = vmatmul.bf16.gmra.mxu0 %v2227
      %v6116 = vpop.f32.mrf.mxu0
      %v6117 = vadd.f32 %v6103, %v6116
      %v6118 = vpop.f32.mrf.mxu0
      %v6119 = vadd.f32 %v6105, %v6118
      %6120 = vdwg.mxu0
      %6121 = vmatpush.bf16.msra.mxu0 %v5726
      %6122 = vmatpush.bf16.msra.mxu0 %v5721
      %6123 = vmatpush.bf16.msra.mxu0 %v5716
      %6124 = vmatpush.bf16.msra.mxu0 %v5711
      %6125 = vmatpush.bf16.msra.mxu0 %v5706
      %6126 = vmatpush.bf16.msra.mxu0 %v5701
      %6127 = vmatpush.bf16.msra.mxu0 %v5696
      %6128 = vmatpush.bf16.msra.mxu0 %v5691
      %6129 = vmatmul.bf16.gmra.mxu0 %v2224
      %v6130 = vpop.f32.mrf.mxu0
      %v6131 = vadd.f32 %v5145, %v6130
      %v6132 = vpop.f32.mrf.mxu0
      %v6133 = vadd.f32 %v5147, %v6132
      %6134 = vdwg.mxu0
      %6135 = vmatpush.bf16.msra.mxu0 %v5766
      %6136 = vmatpush.bf16.msra.mxu0 %v5761
      %6137 = vmatpush.bf16.msra.mxu0 %v5756
      %6138 = vmatpush.bf16.msra.mxu0 %v5751
      %6139 = vmatpush.bf16.msra.mxu0 %v5746
      %6140 = vmatpush.bf16.msra.mxu0 %v5741
      %6141 = vmatpush.bf16.msra.mxu0 %v5736
      %6142 = vmatpush.bf16.msra.mxu0 %v5731
      %6143 = vmatmul.bf16.gmra.mxu0 %v2225
      %v6144 = vpop.f32.mrf.mxu0
      %v6145 = vadd.f32 %v6131, %v6144
      %v6146 = vpop.f32.mrf.mxu0
      %v6147 = vadd.f32 %v6133, %v6146
      %6148 = vdwg.mxu0
      %6149 = vmatpush.bf16.msra.mxu0 %v5806
      %6150 = vmatpush.bf16.msra.mxu0 %v5801
      %6151 = vmatpush.bf16.msra.mxu0 %v5796
      %6152 = vmatpush.bf16.msra.mxu0 %v5791
      %6153 = vmatpush.bf16.msra.mxu0 %v5786
      %6154 = vmatpush.bf16.msra.mxu0 %v5781
      %6155 = vmatpush.bf16.msra.mxu0 %v5776
      %6156 = vmatpush.bf16.msra.mxu0 %v5771
      %6157 = vmatmul.bf16.gmra.mxu0 %v2226
      %v6158 = vpop.f32.mrf.mxu0
      %v6159 = vadd.f32 %v6145, %v6158
      %v6160 = vpop.f32.mrf.mxu0
      %v6161 = vadd.f32 %v6147, %v6160
      %6162 = vdwg.mxu0
      %6163 = vmatpush.bf16.msra.mxu0 %v5846
      %6164 = vmatpush.bf16.msra.mxu0 %v5841
      %6165 = vmatpush.bf16.msra.mxu0 %v5836
      %6166 = vmatpush.bf16.msra.mxu0 %v5831
      %6167 = vmatpush.bf16.msra.mxu0 %v5826
      %6168 = vmatpush.bf16.msra.mxu0 %v5821
      %6169 = vmatpush.bf16.msra.mxu0 %v5816
      %6170 = vmatpush.bf16.msra.mxu0 %v5811
      %6171 = vmatmul.bf16.gmra.mxu0 %v2227
      %v6172 = vpop.f32.mrf.mxu0
      %v6173 = vadd.f32 %v6159, %v6172
      %v6174 = vpop.f32.mrf.mxu0
      %v6175 = vadd.f32 %v6161, %v6174
      %6176 = vdwg.mxu0
      %6177 = vmatpush.bf16.msra.mxu0 %v5727
      %6178 = vmatpush.bf16.msra.mxu0 %v5722
      %6179 = vmatpush.bf16.msra.mxu0 %v5717
      %6180 = vmatpush.bf16.msra.mxu0 %v5712
      %6181 = vmatpush.bf16.msra.mxu0 %v5707
      %6182 = vmatpush.bf16.msra.mxu0 %v5702
      %6183 = vmatpush.bf16.msra.mxu0 %v5697
      %6184 = vmatpush.bf16.msra.mxu0 %v5692
      %6185 = vmatmul.bf16.gmra.mxu0 %v2224
      %v6186 = vpop.f32.mrf.mxu0
      %v6187 = vadd.f32 %v5159, %v6186
      %v6188 = vpop.f32.mrf.mxu0
      %v6189 = vadd.f32 %v5161, %v6188
      %6190 = vdwg.mxu0
      %6191 = vmatpush.bf16.msra.mxu0 %v5767
      %6192 = vmatpush.bf16.msra.mxu0 %v5762
      %6193 = vmatpush.bf16.msra.mxu0 %v5757
      %6194 = vmatpush.bf16.msra.mxu0 %v5752
      %6195 = vmatpush.bf16.msra.mxu0 %v5747
      %6196 = vmatpush.bf16.msra.mxu0 %v5742
      %6197 = vmatpush.bf16.msra.mxu0 %v5737
      %6198 = vmatpush.bf16.msra.mxu0 %v5732
      %6199 = vmatmul.bf16.gmra.mxu0 %v2225
      %v6200 = vpop.f32.mrf.mxu0
      %v6201 = vadd.f32 %v6187, %v6200
      %v6202 = vpop.f32.mrf.mxu0
      %v6203 = vadd.f32 %v6189, %v6202
      %6204 = vdwg.mxu0
      %6205 = vmatpush.bf16.msra.mxu0 %v5807
      %6206 = vmatpush.bf16.msra.mxu0 %v5802
      %6207 = vmatpush.bf16.msra.mxu0 %v5797
      %6208 = vmatpush.bf16.msra.mxu0 %v5792
      %6209 = vmatpush.bf16.msra.mxu0 %v5787
      %6210 = vmatpush.bf16.msra.mxu0 %v5782
      %6211 = vmatpush.bf16.msra.mxu0 %v5777
      %6212 = vmatpush.bf16.msra.mxu0 %v5772
      %6213 = vmatmul.bf16.gmra.mxu0 %v2226
      %v6214 = vpop.f32.mrf.mxu0
      %v6215 = vadd.f32 %v6201, %v6214
      %v6216 = vpop.f32.mrf.mxu0
      %v6217 = vadd.f32 %v6203, %v6216
      %6218 = vdwg.mxu0
      %6219 = vmatpush.bf16.msra.mxu0 %v5847
      %6220 = vmatpush.bf16.msra.mxu0 %v5842
      %6221 = vmatpush.bf16.msra.mxu0 %v5837
      %6222 = vmatpush.bf16.msra.mxu0 %v5832
      %6223 = vmatpush.bf16.msra.mxu0 %v5827
      %6224 = vmatpush.bf16.msra.mxu0 %v5822
      %6225 = vmatpush.bf16.msra.mxu0 %v5817
      %6226 = vmatpush.bf16.msra.mxu0 %v5812
      %6227 = vmatmul.bf16.gmra.mxu0 %v2227
      %v6228 = vpop.f32.mrf.mxu0
      %v6229 = vadd.f32 %v6215, %v6228
      %v6230 = vpop.f32.mrf.mxu0
      %v6231 = vadd.f32 %v6217, %v6230
      %6232 = vdwg.mxu0
      %6233 = vmatpush.bf16.msra.mxu0 %v5728
      %6234 = vmatpush.bf16.msra.mxu0 %v5723
      %6235 = vmatpush.bf16.msra.mxu0 %v5718
      %6236 = vmatpush.bf16.msra.mxu0 %v5713
      %6237 = vmatpush.bf16.msra.mxu0 %v5708
      %6238 = vmatpush.bf16.msra.mxu0 %v5703
      %6239 = vmatpush.bf16.msra.mxu0 %v5698
      %6240 = vmatpush.bf16.msra.mxu0 %v5693
      %6241 = vmatmul.bf16.gmra.mxu0 %v2224
      %v6242 = vpop.f32.mrf.mxu0
      %v6243 = vadd.f32 %v5173, %v6242
      %v6244 = vpop.f32.mrf.mxu0
      %v6245 = vadd.f32 %v5175, %v6244
      %6246 = vdwg.mxu0
      %6247 = vmatpush.bf16.msra.mxu0 %v5768
      %6248 = vmatpush.bf16.msra.mxu0 %v5763
      %6249 = vmatpush.bf16.msra.mxu0 %v5758
      %6250 = vmatpush.bf16.msra.mxu0 %v5753
      %6251 = vmatpush.bf16.msra.mxu0 %v5748
      %6252 = vmatpush.bf16.msra.mxu0 %v5743
      %6253 = vmatpush.bf16.msra.mxu0 %v5738
      %6254 = vmatpush.bf16.msra.mxu0 %v5733
      %6255 = vmatmul.bf16.gmra.mxu0 %v2225
      %v6256 = vpop.f32.mrf.mxu0
      %v6257 = vadd.f32 %v6243, %v6256
      %v6258 = vpop.f32.mrf.mxu0
      %v6259 = vadd.f32 %v6245, %v6258
      %6260 = vdwg.mxu0
      %6261 = vmatpush.bf16.msra.mxu0 %v5808
      %6262 = vmatpush.bf16.msra.mxu0 %v5803
      %6263 = vmatpush.bf16.msra.mxu0 %v5798
      %6264 = vmatpush.bf16.msra.mxu0 %v5793
      %6265 = vmatpush.bf16.msra.mxu0 %v5788
      %6266 = vmatpush.bf16.msra.mxu0 %v5783
      %6267 = vmatpush.bf16.msra.mxu0 %v5778
      %6268 = vmatpush.bf16.msra.mxu0 %v5773
      %6269 = vmatmul.bf16.gmra.mxu0 %v2226
      %v6270 = vpop.f32.mrf.mxu0
      %v6271 = vadd.f32 %v6257, %v6270
      %v6272 = vpop.f32.mrf.mxu0
      %v6273 = vadd.f32 %v6259, %v6272
      %6274 = vdwg.mxu0
      %6275 = vmatpush.bf16.msra.mxu0 %v5848
      %6276 = vmatpush.bf16.msra.mxu0 %v5843
      %6277 = vmatpush.bf16.msra.mxu0 %v5838
      %6278 = vmatpush.bf16.msra.mxu0 %v5833
      %6279 = vmatpush.bf16.msra.mxu0 %v5828
      %6280 = vmatpush.bf16.msra.mxu0 %v5823
      %6281 = vmatpush.bf16.msra.mxu0 %v5818
      %6282 = vmatpush.bf16.msra.mxu0 %v5813
      %6283 = vmatmul.bf16.gmra.mxu0 %v2227
      %v6284 = vpop.f32.mrf.mxu0
      %v6285 = vadd.f32 %v6271, %v6284
      %v6286 = vpop.f32.mrf.mxu0
      %v6287 = vadd.f32 %v6273, %v6286
      %6288 = vdwg.mxu0
      %v6289 = vld [vmem:[%s17] sm:$0xff]
      %v6290 = vld [vmem:[%s17 + $0x8] sm:$0xff]
      %v6291 = vld [vmem:[%s17 + $0x10] sm:$0xf]
      %v6292 = vld [vmem:[%s17 + $0x14] sm:$0xff]
      %v6293 = vld [vmem:[%s17 + $0x1c] sm:$0xff]
      %v6294 = vld [vmem:[%s17 + $0x24] sm:$0xf]
      %v6295 = vld [vmem:[%s17 + $0x28] sm:$0xff]
      %v6296 = vld [vmem:[%s17 + $0x30] sm:$0xff]
      %v6297 = vld [vmem:[%s17 + $0x38] sm:$0xf]
      %v6298 = vld [vmem:[%s17 + $0x3c] sm:$0xff]
      %v6299 = vld [vmem:[%s17 + $0x44] sm:$0xff]
      %v6300 = vld [vmem:[%s17 + $0x4c] sm:$0xf]
      %v6301 = vld [vmem:[%s17 + $0x50] sm:$0xff]
      %v6302 = vld [vmem:[%s17 + $0x58] sm:$0xff]
      %v6303 = vld [vmem:[%s17 + $0x60] sm:$0xf]
      %v6304 = vld [vmem:[%s17 + $0x64] sm:$0xff]
      %v6305 = vld [vmem:[%s17 + $0x6c] sm:$0xff]
      %v6306 = vld [vmem:[%s17 + $0x74] sm:$0xf]
      %v6307 = vld [vmem:[%s17 + $0x78] sm:$0xff]
      %v6308 = vld [vmem:[%s17 + $0x80] sm:$0xff]
      %v6309 = vld [vmem:[%s17 + $0x88] sm:$0xf]
      %v6310 = vld [vmem:[%s17 + $0x8c] sm:$0xff]
      %v6311 = vld [vmem:[%s17 + $0x94] sm:$0xff]
      %v6312 = vld [vmem:[%s17 + $0x9c] sm:$0xf]
      %v6313 = vld [vmem:[%s17 + $0xa0] sm:$0xff]
      %v6314 = vld [vmem:[%s17 + $0xa8] sm:$0xff]
      %v6315 = vld [vmem:[%s17 + $0xb0] sm:$0xf]
      %v6316 = vld [vmem:[%s17 + $0xb4] sm:$0xff]
      %v6317 = vld [vmem:[%s17 + $0xbc] sm:$0xff]
      %v6318 = vld [vmem:[%s17 + $0xc4] sm:$0xf]
      %v6319 = vld [vmem:[%s17 + $0xc8] sm:$0xff]
      %v6320 = vld [vmem:[%s17 + $0xd0] sm:$0xff]
      %v6321 = vld [vmem:[%s17 + $0xd8] sm:$0xf]
      %v6322 = vld [vmem:[%s17 + $0xdc] sm:$0xff]
      %v6323 = vld [vmem:[%s17 + $0xe4] sm:$0xff]
      %v6324 = vld [vmem:[%s17 + $0xec] sm:$0xf]
      %v6325 = vld [vmem:[%s17 + $0xf0] sm:$0xff]
      %v6326 = vld [vmem:[%s17 + $0xf8] sm:$0xff]
      %v6327 = vld [vmem:[%s17 + $0x100] sm:$0xf]
      %v6328 = vld [vmem:[%s17 + $0x104] sm:$0xff]
      %v6329 = vld [vmem:[%s17 + $0x10c] sm:$0xff]
      %v6330 = vld [vmem:[%s17 + $0x114] sm:$0xf]
      %v6331 = vld [vmem:[%s17 + $0x118] sm:$0xff]
      %v6332 = vld [vmem:[%s17 + $0x120] sm:$0xff]
      %v6333 = vld [vmem:[%s17 + $0x128] sm:$0xf]
      %v6334 = vld [vmem:[%s17 + $0x12c] sm:$0xff]
      %v6335 = vld [vmem:[%s17 + $0x134] sm:$0xff]
      %v6336 = vld [vmem:[%s17 + $0x13c] sm:$0xf]
      %v6337 = vld [vmem:[%s17 + $0x140] sm:$0xff]
      %v6338 = vld [vmem:[%s17 + $0x148] sm:$0xff]
      %v6339 = vld [vmem:[%s17 + $0x150] sm:$0xf]
      %v6340 = vld [vmem:[%s17 + $0x154] sm:$0xff]
      %v6341 = vld [vmem:[%s17 + $0x15c] sm:$0xff]
      %v6342 = vld [vmem:[%s17 + $0x164] sm:$0xf]
      %v6343 = vld [vmem:[%s17 + $0x168] sm:$0xff]
      %v6344 = vld [vmem:[%s17 + $0x170] sm:$0xff]
      %v6345 = vld [vmem:[%s17 + $0x178] sm:$0xf]
      %v6346 = vld [vmem:[%s17 + $0x17c] sm:$0xff]
      %v6347 = vld [vmem:[%s17 + $0x184] sm:$0xff]
      %v6348 = vld [vmem:[%s17 + $0x18c] sm:$0xf]
      %v6349 = vld [vmem:[%s17 + $0x190] sm:$0xff]
      %v6350 = vld [vmem:[%s17 + $0x198] sm:$0xff]
      %v6351 = vld [vmem:[%s17 + $0x1a0] sm:$0xf]
      %v6352 = vld [vmem:[%s17 + $0x1a4] sm:$0xff]
      %v6353 = vld [vmem:[%s17 + $0x1ac] sm:$0xff]
      %v6354 = vld [vmem:[%s17 + $0x1b4] sm:$0xf]
      %v6355 = vld [vmem:[%s17 + $0x1b8] sm:$0xff]
      %v6356 = vld [vmem:[%s17 + $0x1c0] sm:$0xff]
      %v6357 = vld [vmem:[%s17 + $0x1c8] sm:$0xf]
      %v6358 = vld [vmem:[%s17 + $0x1cc] sm:$0xff]
      %v6359 = vld [vmem:[%s17 + $0x1d4] sm:$0xff]
      %v6360 = vld [vmem:[%s17 + $0x1dc] sm:$0xf]
      %v6361 = vld [vmem:[%s17 + $0x1e0] sm:$0xff]
      %v6362 = vld [vmem:[%s17 + $0x1e8] sm:$0xff]
      %v6363 = vld [vmem:[%s17 + $0x1f0] sm:$0xf]
      %v6364 = vld [vmem:[%s17 + $0x1f4] sm:$0xff]
      %v6365 = vld [vmem:[%s17 + $0x1fc] sm:$0xff]
      %v6366 = vld [vmem:[%s17 + $0x204] sm:$0xf]
      %v6367 = vld [vmem:[%s17 + $0x208] sm:$0xff]
      %v6368 = vld [vmem:[%s17 + $0x210] sm:$0xff]
      %v6369 = vld [vmem:[%s17 + $0x218] sm:$0xf]
      %v6370 = vld [vmem:[%s17 + $0x21c] sm:$0xff]
      %v6371 = vld [vmem:[%s17 + $0x224] sm:$0xff]
      %v6372 = vld [vmem:[%s17 + $0x22c] sm:$0xf]
      %v6373 = vld [vmem:[%s17 + $0x230] sm:$0xff]
      %v6374 = vld [vmem:[%s17 + $0x238] sm:$0xff]
      %v6375 = vld [vmem:[%s17 + $0x240] sm:$0xf]
      %v6376 = vld [vmem:[%s17 + $0x244] sm:$0xff]
      %v6377 = vld [vmem:[%s17 + $0x24c] sm:$0xff]
      %v6378 = vld [vmem:[%s17 + $0x254] sm:$0xf]
      %v6379 = vld [vmem:[%s17 + $0x258] sm:$0xff]
      %v6380 = vld [vmem:[%s17 + $0x260] sm:$0xff]
      %v6381 = vld [vmem:[%s17 + $0x268] sm:$0xf]
      %v6382 = vld [vmem:[%s17 + $0x26c] sm:$0xff]
      %v6383 = vld [vmem:[%s17 + $0x274] sm:$0xff]
      %v6384 = vld [vmem:[%s17 + $0x27c] sm:$0xf]
      %v6481 = vunpack.c.l.b16 %v6289
      %v6482 = vunpack.c.h.b16 %v6289
      %v6483 = vunpack.c.l.b16 %v6290
      %v6484 = vunpack.c.h.b16 %v6290
      %v6485 = vunpack.c.l.b16 %v6291
      %v6486 = vunpack.c.l.b16 %v6292
      %v6487 = vunpack.c.h.b16 %v6292
      %v6488 = vunpack.c.l.b16 %v6293
      %v6489 = vunpack.c.h.b16 %v6293
      %v6490 = vunpack.c.l.b16 %v6294
      %v6491 = vunpack.c.l.b16 %v6295
      %v6492 = vunpack.c.h.b16 %v6295
      %v6493 = vunpack.c.l.b16 %v6296
      %v6494 = vunpack.c.h.b16 %v6296
      %v6495 = vunpack.c.l.b16 %v6297
      %v6496 = vunpack.c.l.b16 %v6298
      %v6497 = vunpack.c.h.b16 %v6298
      %v6498 = vunpack.c.l.b16 %v6299
      %v6499 = vunpack.c.h.b16 %v6299
      %v6500 = vunpack.c.l.b16 %v6300
      %v6501 = vunpack.c.l.b16 %v6301
      %v6502 = vunpack.c.h.b16 %v6301
      %v6503 = vunpack.c.l.b16 %v6302
      %v6504 = vunpack.c.h.b16 %v6302
      %v6505 = vunpack.c.l.b16 %v6303
      %v6506 = vunpack.c.l.b16 %v6304
      %v6507 = vunpack.c.h.b16 %v6304
      %v6508 = vunpack.c.l.b16 %v6305
      %v6509 = vunpack.c.h.b16 %v6305
      %v6510 = vunpack.c.l.b16 %v6306
      %v6511 = vunpack.c.l.b16 %v6307
      %v6512 = vunpack.c.h.b16 %v6307
      %v6513 = vunpack.c.l.b16 %v6308
      %v6514 = vunpack.c.h.b16 %v6308
      %v6515 = vunpack.c.l.b16 %v6309
      %v6516 = vunpack.c.l.b16 %v6310
      %v6517 = vunpack.c.h.b16 %v6310
      %v6518 = vunpack.c.l.b16 %v6311
      %v6519 = vunpack.c.h.b16 %v6311
      %v6520 = vunpack.c.l.b16 %v6312
      %v6521 = vunpack.c.l.b16 %v6313
      %v6522 = vunpack.c.h.b16 %v6313
      %v6523 = vunpack.c.l.b16 %v6314
      %v6524 = vunpack.c.h.b16 %v6314
      %v6525 = vunpack.c.l.b16 %v6315
      %v6526 = vunpack.c.l.b16 %v6316
      %v6527 = vunpack.c.h.b16 %v6316
      %v6528 = vunpack.c.l.b16 %v6317
      %v6529 = vunpack.c.h.b16 %v6317
      %v6530 = vunpack.c.l.b16 %v6318
      %v6531 = vunpack.c.l.b16 %v6319
      %v6532 = vunpack.c.h.b16 %v6319
      %v6533 = vunpack.c.l.b16 %v6320
      %v6534 = vunpack.c.h.b16 %v6320
      %v6535 = vunpack.c.l.b16 %v6321
      %v6536 = vunpack.c.l.b16 %v6322
      %v6537 = vunpack.c.h.b16 %v6322
      %v6538 = vunpack.c.l.b16 %v6323
      %v6539 = vunpack.c.h.b16 %v6323
      %v6540 = vunpack.c.l.b16 %v6324
      %v6541 = vunpack.c.l.b16 %v6325
      %v6542 = vunpack.c.h.b16 %v6325
      %v6543 = vunpack.c.l.b16 %v6326
      %v6544 = vunpack.c.h.b16 %v6326
      %v6545 = vunpack.c.l.b16 %v6327
      %v6546 = vunpack.c.l.b16 %v6328
      %v6547 = vunpack.c.h.b16 %v6328
      %v6548 = vunpack.c.l.b16 %v6329
      %v6549 = vunpack.c.h.b16 %v6329
      %v6550 = vunpack.c.l.b16 %v6330
      %v6551 = vunpack.c.l.b16 %v6331
      %v6552 = vunpack.c.h.b16 %v6331
      %v6553 = vunpack.c.l.b16 %v6332
      %v6554 = vunpack.c.h.b16 %v6332
      %v6555 = vunpack.c.l.b16 %v6333
      %v6556 = vunpack.c.l.b16 %v6334
      %v6557 = vunpack.c.h.b16 %v6334
      %v6558 = vunpack.c.l.b16 %v6335
      %v6559 = vunpack.c.h.b16 %v6335
      %v6560 = vunpack.c.l.b16 %v6336
      %v6561 = vunpack.c.l.b16 %v6337
      %v6562 = vunpack.c.h.b16 %v6337
      %v6563 = vunpack.c.l.b16 %v6338
      %v6564 = vunpack.c.h.b16 %v6338
      %v6565 = vunpack.c.l.b16 %v6339
      %v6566 = vunpack.c.l.b16 %v6340
      %v6567 = vunpack.c.h.b16 %v6340
      %v6568 = vunpack.c.l.b16 %v6341
      %v6569 = vunpack.c.h.b16 %v6341
      %v6570 = vunpack.c.l.b16 %v6342
      %v6571 = vunpack.c.l.b16 %v6343
      %v6572 = vunpack.c.h.b16 %v6343
      %v6573 = vunpack.c.l.b16 %v6344
      %v6574 = vunpack.c.h.b16 %v6344
      %v6575 = vunpack.c.l.b16 %v6345
      %v6576 = vunpack.c.l.b16 %v6346
      %v6577 = vunpack.c.h.b16 %v6346
      %v6578 = vunpack.c.l.b16 %v6347
      %v6579 = vunpack.c.h.b16 %v6347
      %v6580 = vunpack.c.l.b16 %v6348
      %v6581 = vunpack.c.l.b16 %v6349
      %v6582 = vunpack.c.h.b16 %v6349
      %v6583 = vunpack.c.l.b16 %v6350
      %v6584 = vunpack.c.h.b16 %v6350
      %v6585 = vunpack.c.l.b16 %v6351
      %v6586 = vunpack.c.l.b16 %v6352
      %v6587 = vunpack.c.h.b16 %v6352
      %v6588 = vunpack.c.l.b16 %v6353
      %v6589 = vunpack.c.h.b16 %v6353
      %v6590 = vunpack.c.l.b16 %v6354
      %v6591 = vunpack.c.l.b16 %v6355
      %v6592 = vunpack.c.h.b16 %v6355
      %v6593 = vunpack.c.l.b16 %v6356
      %v6594 = vunpack.c.h.b16 %v6356
      %v6595 = vunpack.c.l.b16 %v6357
      %v6596 = vunpack.c.l.b16 %v6358
      %v6597 = vunpack.c.h.b16 %v6358
      %v6598 = vunpack.c.l.b16 %v6359
      %v6599 = vunpack.c.h.b16 %v6359
      %v6600 = vunpack.c.l.b16 %v6360
      %v6601 = vunpack.c.l.b16 %v6361
      %v6602 = vunpack.c.h.b16 %v6361
      %v6603 = vunpack.c.l.b16 %v6362
      %v6604 = vunpack.c.h.b16 %v6362
      %v6605 = vunpack.c.l.b16 %v6363
      %v6606 = vunpack.c.l.b16 %v6364
      %v6607 = vunpack.c.h.b16 %v6364
      %v6608 = vunpack.c.l.b16 %v6365
      %v6609 = vunpack.c.h.b16 %v6365
      %v6610 = vunpack.c.l.b16 %v6366
      %v6611 = vunpack.c.l.b16 %v6367
      %v6612 = vunpack.c.h.b16 %v6367
      %v6613 = vunpack.c.l.b16 %v6368
      %v6614 = vunpack.c.h.b16 %v6368
      %v6615 = vunpack.c.l.b16 %v6369
      %v6616 = vunpack.c.l.b16 %v6370
      %v6617 = vunpack.c.h.b16 %v6370
      %v6618 = vunpack.c.l.b16 %v6371
      %v6619 = vunpack.c.h.b16 %v6371
      %v6620 = vunpack.c.l.b16 %v6372
      %v6621 = vunpack.c.l.b16 %v6373
      %v6622 = vunpack.c.h.b16 %v6373
      %v6623 = vunpack.c.l.b16 %v6374
      %v6624 = vunpack.c.h.b16 %v6374
      %v6625 = vunpack.c.l.b16 %v6375
      %v6626 = vunpack.c.l.b16 %v6376
      %v6627 = vunpack.c.h.b16 %v6376
      %v6628 = vunpack.c.l.b16 %v6377
      %v6629 = vunpack.c.h.b16 %v6377
      %v6630 = vunpack.c.l.b16 %v6378
      %v6631 = vunpack.c.l.b16 %v6379
      %v6632 = vunpack.c.h.b16 %v6379
      %v6633 = vunpack.c.l.b16 %v6380
      %v6634 = vunpack.c.h.b16 %v6380
      %v6635 = vunpack.c.l.b16 %v6381
      %v6636 = vunpack.c.l.b16 %v6382
      %v6637 = vunpack.c.h.b16 %v6382
      %v6638 = vunpack.c.l.b16 %v6383
      %v6639 = vunpack.c.h.b16 %v6383
      %v6640 = vunpack.c.l.b16 %v6384
      %v6641 = vpack.c.b16 %v6486, %v6481
      %v6642 = vpack.c.b16 %v6487, %v6482
      %v6643 = vpack.c.b16 %v6488, %v6483
      %v6644 = vpack.c.b16 %v6489, %v6484
      %v6645 = vpack.c.b16 %v6490, %v6485
      %v6646 = vpack.c.b16 %v6496, %v6491
      %v6647 = vpack.c.b16 %v6497, %v6492
      %v6648 = vpack.c.b16 %v6498, %v6493
      %v6649 = vpack.c.b16 %v6499, %v6494
      %v6650 = vpack.c.b16 %v6500, %v6495
      %v6651 = vpack.c.b16 %v6506, %v6501
      %v6652 = vpack.c.b16 %v6507, %v6502
      %v6653 = vpack.c.b16 %v6508, %v6503
      %v6654 = vpack.c.b16 %v6509, %v6504
      %v6655 = vpack.c.b16 %v6510, %v6505
      %v6656 = vpack.c.b16 %v6516, %v6511
      %v6657 = vpack.c.b16 %v6517, %v6512
      %v6658 = vpack.c.b16 %v6518, %v6513
      %v6659 = vpack.c.b16 %v6519, %v6514
      %v6660 = vpack.c.b16 %v6520, %v6515
      %v6661 = vpack.c.b16 %v6526, %v6521
      %v6662 = vpack.c.b16 %v6527, %v6522
      %v6663 = vpack.c.b16 %v6528, %v6523
      %v6664 = vpack.c.b16 %v6529, %v6524
      %v6665 = vpack.c.b16 %v6530, %v6525
      %v6666 = vpack.c.b16 %v6536, %v6531
      %v6667 = vpack.c.b16 %v6537, %v6532
      %v6668 = vpack.c.b16 %v6538, %v6533
      %v6669 = vpack.c.b16 %v6539, %v6534
      %v6670 = vpack.c.b16 %v6540, %v6535
      %v6671 = vpack.c.b16 %v6546, %v6541
      %v6672 = vpack.c.b16 %v6547, %v6542
      %v6673 = vpack.c.b16 %v6548, %v6543
      %v6674 = vpack.c.b16 %v6549, %v6544
      %v6675 = vpack.c.b16 %v6550, %v6545
      %v6676 = vpack.c.b16 %v6556, %v6551
      %v6677 = vpack.c.b16 %v6557, %v6552
      %v6678 = vpack.c.b16 %v6558, %v6553
      %v6679 = vpack.c.b16 %v6559, %v6554
      %v6680 = vpack.c.b16 %v6560, %v6555
      %v6681 = vpack.c.b16 %v6566, %v6561
      %v6682 = vpack.c.b16 %v6567, %v6562
      %v6683 = vpack.c.b16 %v6568, %v6563
      %v6684 = vpack.c.b16 %v6569, %v6564
      %v6685 = vpack.c.b16 %v6570, %v6565
      %v6686 = vpack.c.b16 %v6576, %v6571
      %v6687 = vpack.c.b16 %v6577, %v6572
      %v6688 = vpack.c.b16 %v6578, %v6573
      %v6689 = vpack.c.b16 %v6579, %v6574
      %v6690 = vpack.c.b16 %v6580, %v6575
      %v6691 = vpack.c.b16 %v6586, %v6581
      %v6692 = vpack.c.b16 %v6587, %v6582
      %v6693 = vpack.c.b16 %v6588, %v6583
      %v6694 = vpack.c.b16 %v6589, %v6584
      %v6695 = vpack.c.b16 %v6590, %v6585
      %v6696 = vpack.c.b16 %v6596, %v6591
      %v6697 = vpack.c.b16 %v6597, %v6592
      %v6698 = vpack.c.b16 %v6598, %v6593
      %v6699 = vpack.c.b16 %v6599, %v6594
      %v6700 = vpack.c.b16 %v6600, %v6595
      %v6701 = vpack.c.b16 %v6606, %v6601
      %v6702 = vpack.c.b16 %v6607, %v6602
      %v6703 = vpack.c.b16 %v6608, %v6603
      %v6704 = vpack.c.b16 %v6609, %v6604
      %v6705 = vpack.c.b16 %v6610, %v6605
      %v6706 = vpack.c.b16 %v6616, %v6611
      %v6707 = vpack.c.b16 %v6617, %v6612
      %v6708 = vpack.c.b16 %v6618, %v6613
      %v6709 = vpack.c.b16 %v6619, %v6614
      %v6710 = vpack.c.b16 %v6620, %v6615
      %v6711 = vpack.c.b16 %v6626, %v6621
      %v6712 = vpack.c.b16 %v6627, %v6622
      %v6713 = vpack.c.b16 %v6628, %v6623
      %v6714 = vpack.c.b16 %v6629, %v6624
      %v6715 = vpack.c.b16 %v6630, %v6625
      %v6716 = vpack.c.b16 %v6636, %v6631
      %v6717 = vpack.c.b16 %v6637, %v6632
      %v6718 = vpack.c.b16 %v6638, %v6633
      %v6719 = vpack.c.b16 %v6639, %v6634
      %v6720 = vpack.c.b16 %v6640, %v6635
      %6801 = vmatpush.bf16.msra.mxu0 %v6676
      %6802 = vmatpush.bf16.msra.mxu0 %v6671
      %6803 = vmatpush.bf16.msra.mxu0 %v6666
      %6804 = vmatpush.bf16.msra.mxu0 %v6661
      %6805 = vmatpush.bf16.msra.mxu0 %v6656
      %6806 = vmatpush.bf16.msra.mxu0 %v6651
      %6807 = vmatpush.bf16.msra.mxu0 %v6646
      %6808 = vmatpush.bf16.msra.mxu0 %v6641
      %6809 = vmatmul.bf16.gmra.mxu0 %v4497
      %v6810 = vpop.f32.mrf.mxu0
      %v6811 = vadd.f32 0.0, %v6810
      %v6812 = vpop.f32.mrf.mxu0
      %v6813 = vadd.f32 0.0, %v6812
      %6814 = vdwg.mxu0
      %6815 = vmatpush.bf16.msra.mxu0 %v6716
      %6816 = vmatpush.bf16.msra.mxu0 %v6711
      %6817 = vmatpush.bf16.msra.mxu0 %v6706
      %6818 = vmatpush.bf16.msra.mxu0 %v6701
      %6819 = vmatpush.bf16.msra.mxu0 %v6696
      %6820 = vmatpush.bf16.msra.mxu0 %v6691
      %6821 = vmatpush.bf16.msra.mxu0 %v6686
      %6822 = vmatpush.bf16.msra.mxu0 %v6681
      %6823 = vmatmul.bf16.gmra.mxu0 %v4498
      %v6824 = vpop.f32.mrf.mxu0
      %v6825 = vadd.f32 %v6811, %v6824
      %v6826 = vpop.f32.mrf.mxu0
      %v6827 = vadd.f32 %v6813, %v6826
      %6828 = vdwg.mxu0
      %6829 = vmatpush.bf16.msra.mxu0 %v6677
      %6830 = vmatpush.bf16.msra.mxu0 %v6672
      %6831 = vmatpush.bf16.msra.mxu0 %v6667
      %6832 = vmatpush.bf16.msra.mxu0 %v6662
      %6833 = vmatpush.bf16.msra.mxu0 %v6657
      %6834 = vmatpush.bf16.msra.mxu0 %v6652
      %6835 = vmatpush.bf16.msra.mxu0 %v6647
      %6836 = vmatpush.bf16.msra.mxu0 %v6642
      %6837 = vmatmul.bf16.gmra.mxu0 %v4497
      %v6838 = vpop.f32.mrf.mxu0
      %v6839 = vadd.f32 0.0, %v6838
      %v6840 = vpop.f32.mrf.mxu0
      %v6841 = vadd.f32 0.0, %v6840
      %6842 = vdwg.mxu0
      %6843 = vmatpush.bf16.msra.mxu0 %v6717
      %6844 = vmatpush.bf16.msra.mxu0 %v6712
      %6845 = vmatpush.bf16.msra.mxu0 %v6707
      %6846 = vmatpush.bf16.msra.mxu0 %v6702
      %6847 = vmatpush.bf16.msra.mxu0 %v6697
      %6848 = vmatpush.bf16.msra.mxu0 %v6692
      %6849 = vmatpush.bf16.msra.mxu0 %v6687
      %6850 = vmatpush.bf16.msra.mxu0 %v6682
      %6851 = vmatmul.bf16.gmra.mxu0 %v4498
      %v6852 = vpop.f32.mrf.mxu0
      %v6853 = vadd.f32 %v6839, %v6852
      %v6854 = vpop.f32.mrf.mxu0
      %v6855 = vadd.f32 %v6841, %v6854
      %6856 = vdwg.mxu0
      %6857 = vmatpush.bf16.msra.mxu0 %v6678
      %6858 = vmatpush.bf16.msra.mxu0 %v6673
      %6859 = vmatpush.bf16.msra.mxu0 %v6668
      %6860 = vmatpush.bf16.msra.mxu0 %v6663
      %6861 = vmatpush.bf16.msra.mxu0 %v6658
      %6862 = vmatpush.bf16.msra.mxu0 %v6653
      %6863 = vmatpush.bf16.msra.mxu0 %v6648
      %6864 = vmatpush.bf16.msra.mxu0 %v6643
      %6865 = vmatmul.bf16.gmra.mxu0 %v4497
      %v6866 = vpop.f32.mrf.mxu0
      %v6867 = vadd.f32 0.0, %v6866
      %v6868 = vpop.f32.mrf.mxu0
      %v6869 = vadd.f32 0.0, %v6868
      %6870 = vdwg.mxu0
      %6871 = vmatpush.bf16.msra.mxu0 %v6718
      %6872 = vmatpush.bf16.msra.mxu0 %v6713
      %6873 = vmatpush.bf16.msra.mxu0 %v6708
      %6874 = vmatpush.bf16.msra.mxu0 %v6703
      %6875 = vmatpush.bf16.msra.mxu0 %v6698
      %6876 = vmatpush.bf16.msra.mxu0 %v6693
      %6877 = vmatpush.bf16.msra.mxu0 %v6688
      %6878 = vmatpush.bf16.msra.mxu0 %v6683
      %6879 = vmatmul.bf16.gmra.mxu0 %v4498
      %v6880 = vpop.f32.mrf.mxu0
      %v6881 = vadd.f32 %v6867, %v6880
      %v6882 = vpop.f32.mrf.mxu0
      %v6883 = vadd.f32 %v6869, %v6882
      %6884 = vdwg.mxu0
      %6885 = vmatpush.bf16.msra.mxu0 %v6679
      %6886 = vmatpush.bf16.msra.mxu0 %v6674
      %6887 = vmatpush.bf16.msra.mxu0 %v6669
      %6888 = vmatpush.bf16.msra.mxu0 %v6664
      %6889 = vmatpush.bf16.msra.mxu0 %v6659
      %6890 = vmatpush.bf16.msra.mxu0 %v6654
      %6891 = vmatpush.bf16.msra.mxu0 %v6649
      %6892 = vmatpush.bf16.msra.mxu0 %v6644
      %6893 = vmatmul.bf16.gmra.mxu0 %v4497
      %v6894 = vpop.f32.mrf.mxu0
      %v6895 = vadd.f32 0.0, %v6894
      %v6896 = vpop.f32.mrf.mxu0
      %v6897 = vadd.f32 0.0, %v6896
      %6898 = vdwg.mxu0
      %6899 = vmatpush.bf16.msra.mxu0 %v6719
      %6900 = vmatpush.bf16.msra.mxu0 %v6714
      %6901 = vmatpush.bf16.msra.mxu0 %v6709
      %6902 = vmatpush.bf16.msra.mxu0 %v6704
      %6903 = vmatpush.bf16.msra.mxu0 %v6699
      %6904 = vmatpush.bf16.msra.mxu0 %v6694
      %6905 = vmatpush.bf16.msra.mxu0 %v6689
      %6906 = vmatpush.bf16.msra.mxu0 %v6684
      %6907 = vmatmul.bf16.gmra.mxu0 %v4498
      %v6908 = vpop.f32.mrf.mxu0
      %v6909 = vadd.f32 %v6895, %v6908
      %v6910 = vpop.f32.mrf.mxu0
      %v6911 = vadd.f32 %v6897, %v6910
      %6912 = vdwg.mxu0
      %6913 = vmatpush.bf16.msra.mxu0 %v6680
      %6914 = vmatpush.bf16.msra.mxu0 %v6675
      %6915 = vmatpush.bf16.msra.mxu0 %v6670
      %6916 = vmatpush.bf16.msra.mxu0 %v6665
      %6917 = vmatpush.bf16.msra.mxu0 %v6660
      %6918 = vmatpush.bf16.msra.mxu0 %v6655
      %6919 = vmatpush.bf16.msra.mxu0 %v6650
      %6920 = vmatpush.bf16.msra.mxu0 %v6645
      %6921 = vmatmul.bf16.gmra.mxu0 %v4497
      %v6922 = vpop.f32.mrf.mxu0
      %v6923 = vadd.f32 0.0, %v6922
      %v6924 = vpop.f32.mrf.mxu0
      %v6925 = vadd.f32 0.0, %v6924
      %6926 = vdwg.mxu0
      %6927 = vmatpush.bf16.msra.mxu0 %v6720
      %6928 = vmatpush.bf16.msra.mxu0 %v6715
      %6929 = vmatpush.bf16.msra.mxu0 %v6710
      %6930 = vmatpush.bf16.msra.mxu0 %v6705
      %6931 = vmatpush.bf16.msra.mxu0 %v6700
      %6932 = vmatpush.bf16.msra.mxu0 %v6695
      %6933 = vmatpush.bf16.msra.mxu0 %v6690
      %6934 = vmatpush.bf16.msra.mxu0 %v6685
      %6935 = vmatmul.bf16.gmra.mxu0 %v4498
      %v6936 = vpop.f32.mrf.mxu0
      %v6937 = vadd.f32 %v6923, %v6936
      %v6938 = vpop.f32.mrf.mxu0
      %v6939 = vadd.f32 %v6925, %v6938
      %6940 = vdwg.mxu0
      %v6941 = vadd.f32 %v6061, %v6825
      %v6942 = vadd.f32 %v6117, %v6853
      %v6943 = vadd.f32 %v6173, %v6881
      %v6944 = vadd.f32 %v6229, %v6909
      %v6945 = vadd.f32 %v6285, %v6937
      %v6946 = vadd.f32 %v6063, %v6827
      %v6947 = vadd.f32 %v6119, %v6855
      %v6948 = vadd.f32 %v6175, %v6883
      %v6949 = vadd.f32 %v6231, %v6911
      %v6950 = vadd.f32 %v6287, %v6939
      %v6951 = vpack.c.bf16 %v6946, %v6941
      %v6952 = vpack.c.bf16 %v6947, %v6942
      %v6953 = vpack.c.bf16 %v6948, %v6943
      %v6954 = vpack.c.bf16 %v6949, %v6944
      %v6955 = vpack.c.bf16 %v6950, %v6945
      %v6956 = vld [vmem:[%s15] sm:$0xff]
      %v6957 = vld [vmem:[%s15 + $0x8] sm:$0xff]
      %v6958 = vld [vmem:[%s15 + $0x10] sm:$0xff]
      %v6959 = vld [vmem:[%s15 + $0x18] sm:$0xff]
      %v6960 = vld [vmem:[%s15 + $0x20] sm:$0xff]
      %v6961 = vld [vmem:[%s15 + $0x28] sm:$0xff]
      %v6962 = vld [vmem:[%s15 + $0x30] sm:$0xff]
      %v6963 = vld [vmem:[%s15 + $0x38] sm:$0xff]
      %v6964 = vld [vmem:[%s15 + $0x40] sm:$0xff]
      %v6965 = vld [vmem:[%s15 + $0x48] sm:$0xff]
      %v6966 = vld [vmem:[%s15 + $0x50] sm:$0xff]
      %v6967 = vld [vmem:[%s15 + $0x58] sm:$0xff]
      %v6968 = vld [vmem:[%s15 + $0x60] sm:$0xff]
      %v6969 = vld [vmem:[%s15 + $0x68] sm:$0xff]
      %v6970 = vld [vmem:[%s15 + $0x70] sm:$0xff]
      %v6971 = vld [vmem:[%s15 + $0x78] sm:$0xff]
      %v6972 = vld [vmem:[%s15 + $0x80] sm:$0xff]
      %v6973 = vld [vmem:[%s15 + $0x88] sm:$0xff]
      %v6974 = vld [vmem:[%s15 + $0x90] sm:$0xff]
      %v6975 = vld [vmem:[%s15 + $0x98] sm:$0xff]
      %v6976 = vld [vmem:[%s15 + $0xa0] sm:$0xff]
      %v6977 = vld [vmem:[%s15 + $0xa8] sm:$0xff]
      %v6978 = vld [vmem:[%s15 + $0xb0] sm:$0xff]
      %v6979 = vld [vmem:[%s15 + $0xb8] sm:$0xff]
      %v6980 = vld [vmem:[%s15 + $0xc0] sm:$0xff]
      %v6981 = vld [vmem:[%s15 + $0xc8] sm:$0xff]
      %v6982 = vld [vmem:[%s15 + $0xd0] sm:$0xff]
      %v6983 = vld [vmem:[%s15 + $0xd8] sm:$0xff]
      %v6984 = vld [vmem:[%s15 + $0xe0] sm:$0xff]
      %v6985 = vld [vmem:[%s15 + $0xe8] sm:$0xff]
      %v6986 = vld [vmem:[%s15 + $0xf0] sm:$0xff]
      %v6987 = vld [vmem:[%s15 + $0xf8] sm:$0xff]
      %v6988 = vld [vmem:[%s15 + $0x100] sm:$0xff]
      %v6989 = vld [vmem:[%s15 + $0x108] sm:$0xff]
      %v6990 = vld [vmem:[%s15 + $0x110] sm:$0xff]
      %v6991 = vld [vmem:[%s15 + $0x118] sm:$0xff]
      %v6992 = vld [vmem:[%s15 + $0x120] sm:$0xff]
      %v6993 = vld [vmem:[%s15 + $0x128] sm:$0xff]
      %v6994 = vld [vmem:[%s15 + $0x130] sm:$0xff]
      %v6995 = vld [vmem:[%s15 + $0x138] sm:$0xff]
      %v6996 = vld [vmem:[%s15 + $0x140] sm:$0xff]
      %v6997 = vld [vmem:[%s15 + $0x148] sm:$0xff]
      %v6998 = vld [vmem:[%s15 + $0x150] sm:$0xff]
      %v6999 = vld [vmem:[%s15 + $0x158] sm:$0xff]
      %v7000 = vld [vmem:[%s15 + $0x160] sm:$0xff]
      %v7001 = vld [vmem:[%s15 + $0x168] sm:$0xff]
      %v7002 = vld [vmem:[%s15 + $0x170] sm:$0xff]
      %v7003 = vld [vmem:[%s15 + $0x178] sm:$0xff]
      %v7004 = vld [vmem:[%s15 + $0x180] sm:$0xff]
      %v7005 = vld [vmem:[%s15 + $0x188] sm:$0xff]
      %v7006 = vld [vmem:[%s15 + $0x190] sm:$0xff]
      %v7007 = vld [vmem:[%s15 + $0x198] sm:$0xff]
      %v7008 = vld [vmem:[%s15 + $0x1a0] sm:$0xff]
      %v7009 = vld [vmem:[%s15 + $0x1a8] sm:$0xff]
      %v7010 = vld [vmem:[%s15 + $0x1b0] sm:$0xff]
      %v7011 = vld [vmem:[%s15 + $0x1b8] sm:$0xff]
      %v7012 = vld [vmem:[%s15 + $0x1c0] sm:$0xff]
      %v7013 = vld [vmem:[%s15 + $0x1c8] sm:$0xff]
      %v7014 = vld [vmem:[%s15 + $0x1d0] sm:$0xff]
      %v7015 = vld [vmem:[%s15 + $0x1d8] sm:$0xff]
      %v7016 = vld [vmem:[%s15 + $0x1e0] sm:$0xff]
      %v7017 = vld [vmem:[%s15 + $0x1e8] sm:$0xff]
      %v7018 = vld [vmem:[%s15 + $0x1f0] sm:$0xff]
      %v7019 = vld [vmem:[%s15 + $0x1f8] sm:$0xff]
      %v7020 = vld [vmem:[%s15 + $0x200] sm:$0xff]
      %v7021 = vld [vmem:[%s15 + $0x208] sm:$0xff]
      %v7022 = vld [vmem:[%s15 + $0x210] sm:$0xff]
      %v7023 = vld [vmem:[%s15 + $0x218] sm:$0xff]
      %v7024 = vld [vmem:[%s15 + $0x220] sm:$0xff]
      %v7025 = vld [vmem:[%s15 + $0x228] sm:$0xff]
      %v7026 = vld [vmem:[%s15 + $0x230] sm:$0xff]
      %v7027 = vld [vmem:[%s15 + $0x238] sm:$0xff]
      %v7028 = vld [vmem:[%s15 + $0x240] sm:$0xff]
      %v7029 = vld [vmem:[%s15 + $0x248] sm:$0xff]
      %v7030 = vld [vmem:[%s15 + $0x250] sm:$0xff]
      %v7031 = vld [vmem:[%s15 + $0x258] sm:$0xff]
      %v7032 = vld [vmem:[%s15 + $0x260] sm:$0xff]
      %v7033 = vld [vmem:[%s15 + $0x268] sm:$0xff]
      %v7034 = vld [vmem:[%s15 + $0x270] sm:$0xff]
      %v7035 = vld [vmem:[%s15 + $0x278] sm:$0xff]
      %v7036 = vld [vmem:[%s20] sm:$0x3]
      %v7038 = vperm.slane %v7036, 0
      %v7039 = vperm.slane %v7036, 1
      %v7122 = vunpack.c.l.b16 %v6956
      %v7123 = vunpack.c.h.b16 %v6956
      %v7124 = vunpack.c.l.b16 %v6957
      %v7125 = vunpack.c.h.b16 %v6957
      %v7126 = vunpack.c.l.b16 %v6958
      %v7127 = vunpack.c.h.b16 %v6958
      %v7128 = vunpack.c.l.b16 %v6959
      %v7129 = vunpack.c.h.b16 %v6959
      %v7130 = vunpack.c.l.b16 %v6960
      %v7131 = vunpack.c.h.b16 %v6960
      %v7132 = vunpack.c.l.b16 %v6961
      %v7133 = vunpack.c.h.b16 %v6961
      %v7134 = vunpack.c.l.b16 %v6962
      %v7135 = vunpack.c.h.b16 %v6962
      %v7136 = vunpack.c.l.b16 %v6963
      %v7137 = vunpack.c.h.b16 %v6963
      %v7138 = vunpack.c.l.b16 %v6964
      %v7139 = vunpack.c.h.b16 %v6964
      %v7140 = vunpack.c.l.b16 %v6965
      %v7141 = vunpack.c.h.b16 %v6965
      %v7142 = vunpack.c.l.b16 %v6966
      %v7143 = vunpack.c.h.b16 %v6966
      %v7144 = vunpack.c.l.b16 %v6967
      %v7145 = vunpack.c.h.b16 %v6967
      %v7146 = vunpack.c.l.b16 %v6968
      %v7147 = vunpack.c.h.b16 %v6968
      %v7148 = vunpack.c.l.b16 %v6969
      %v7149 = vunpack.c.h.b16 %v6969
      %v7150 = vunpack.c.l.b16 %v6970
      %v7151 = vunpack.c.h.b16 %v6970
      %v7152 = vunpack.c.l.b16 %v6971
      %v7153 = vunpack.c.h.b16 %v6971
      %v7154 = vunpack.c.l.b16 %v6972
      %v7155 = vunpack.c.h.b16 %v6972
      %v7156 = vunpack.c.l.b16 %v6973
      %v7157 = vunpack.c.h.b16 %v6973
      %v7158 = vunpack.c.l.b16 %v6974
      %v7159 = vunpack.c.h.b16 %v6974
      %v7160 = vunpack.c.l.b16 %v6975
      %v7161 = vunpack.c.h.b16 %v6975
      %v7162 = vunpack.c.l.b16 %v6976
      %v7163 = vunpack.c.h.b16 %v6976
      %v7164 = vunpack.c.l.b16 %v6977
      %v7165 = vunpack.c.h.b16 %v6977
      %v7166 = vunpack.c.l.b16 %v6978
      %v7167 = vunpack.c.h.b16 %v6978
      %v7168 = vunpack.c.l.b16 %v6979
      %v7169 = vunpack.c.h.b16 %v6979
      %v7170 = vunpack.c.l.b16 %v6980
      %v7171 = vunpack.c.h.b16 %v6980
      %v7172 = vunpack.c.l.b16 %v6981
      %v7173 = vunpack.c.h.b16 %v6981
      %v7174 = vunpack.c.l.b16 %v6982
      %v7175 = vunpack.c.h.b16 %v6982
      %v7176 = vunpack.c.l.b16 %v6983
      %v7177 = vunpack.c.h.b16 %v6983
      %v7178 = vunpack.c.l.b16 %v6984
      %v7179 = vunpack.c.h.b16 %v6984
      %v7180 = vunpack.c.l.b16 %v6985
      %v7181 = vunpack.c.h.b16 %v6985
      %v7182 = vunpack.c.l.b16 %v6986
      %v7183 = vunpack.c.h.b16 %v6986
      %v7184 = vunpack.c.l.b16 %v6987
      %v7185 = vunpack.c.h.b16 %v6987
      %v7186 = vunpack.c.l.b16 %v6988
      %v7187 = vunpack.c.h.b16 %v6988
      %v7188 = vunpack.c.l.b16 %v6989
      %v7189 = vunpack.c.h.b16 %v6989
      %v7190 = vunpack.c.l.b16 %v6990
      %v7191 = vunpack.c.h.b16 %v6990
      %v7192 = vunpack.c.l.b16 %v6991
      %v7193 = vunpack.c.h.b16 %v6991
      %v7194 = vunpack.c.l.b16 %v6992
      %v7195 = vunpack.c.h.b16 %v6992
      %v7196 = vunpack.c.l.b16 %v6993
      %v7197 = vunpack.c.h.b16 %v6993
      %v7198 = vunpack.c.l.b16 %v6994
      %v7199 = vunpack.c.h.b16 %v6994
      %v7200 = vunpack.c.l.b16 %v6995
      %v7201 = vunpack.c.h.b16 %v6995
      %v7202 = vunpack.c.l.b16 %v6996
      %v7203 = vunpack.c.h.b16 %v6996
      %v7204 = vunpack.c.l.b16 %v6997
      %v7205 = vunpack.c.h.b16 %v6997
      %v7206 = vunpack.c.l.b16 %v6998
      %v7207 = vunpack.c.h.b16 %v6998
      %v7208 = vunpack.c.l.b16 %v6999
      %v7209 = vunpack.c.h.b16 %v6999
      %v7210 = vunpack.c.l.b16 %v7000
      %v7211 = vunpack.c.h.b16 %v7000
      %v7212 = vunpack.c.l.b16 %v7001
      %v7213 = vunpack.c.h.b16 %v7001
      %v7214 = vunpack.c.l.b16 %v7002
      %v7215 = vunpack.c.h.b16 %v7002
      %v7216 = vunpack.c.l.b16 %v7003
      %v7217 = vunpack.c.h.b16 %v7003
      %v7218 = vunpack.c.l.b16 %v7004
      %v7219 = vunpack.c.h.b16 %v7004
      %v7220 = vunpack.c.l.b16 %v7005
      %v7221 = vunpack.c.h.b16 %v7005
      %v7222 = vunpack.c.l.b16 %v7006
      %v7223 = vunpack.c.h.b16 %v7006
      %v7224 = vunpack.c.l.b16 %v7007
      %v7225 = vunpack.c.h.b16 %v7007
      %v7226 = vunpack.c.l.b16 %v7008
      %v7227 = vunpack.c.h.b16 %v7008
      %v7228 = vunpack.c.l.b16 %v7009
      %v7229 = vunpack.c.h.b16 %v7009
      %v7230 = vunpack.c.l.b16 %v7010
      %v7231 = vunpack.c.h.b16 %v7010
      %v7232 = vunpack.c.l.b16 %v7011
      %v7233 = vunpack.c.h.b16 %v7011
      %v7234 = vunpack.c.l.b16 %v7012
      %v7235 = vunpack.c.h.b16 %v7012
      %v7236 = vunpack.c.l.b16 %v7013
      %v7237 = vunpack.c.h.b16 %v7013
      %v7238 = vunpack.c.l.b16 %v7014
      %v7239 = vunpack.c.h.b16 %v7014
      %v7240 = vunpack.c.l.b16 %v7015
      %v7241 = vunpack.c.h.b16 %v7015
      %v7242 = vunpack.c.l.b16 %v7016
      %v7243 = vunpack.c.h.b16 %v7016
      %v7244 = vunpack.c.l.b16 %v7017
      %v7245 = vunpack.c.h.b16 %v7017
      %v7246 = vunpack.c.l.b16 %v7018
      %v7247 = vunpack.c.h.b16 %v7018
      %v7248 = vunpack.c.l.b16 %v7019
      %v7249 = vunpack.c.h.b16 %v7019
      %v7250 = vunpack.c.l.b16 %v7020
      %v7251 = vunpack.c.h.b16 %v7020
      %v7252 = vunpack.c.l.b16 %v7021
      %v7253 = vunpack.c.h.b16 %v7021
      %v7254 = vunpack.c.l.b16 %v7022
      %v7255 = vunpack.c.h.b16 %v7022
      %v7256 = vunpack.c.l.b16 %v7023
      %v7257 = vunpack.c.h.b16 %v7023
      %v7258 = vunpack.c.l.b16 %v7024
      %v7259 = vunpack.c.h.b16 %v7024
      %v7260 = vunpack.c.l.b16 %v7025
      %v7261 = vunpack.c.h.b16 %v7025
      %v7262 = vunpack.c.l.b16 %v7026
      %v7263 = vunpack.c.h.b16 %v7026
      %v7264 = vunpack.c.l.b16 %v7027
      %v7265 = vunpack.c.h.b16 %v7027
      %v7266 = vunpack.c.l.b16 %v7028
      %v7267 = vunpack.c.h.b16 %v7028
      %v7268 = vunpack.c.l.b16 %v7029
      %v7269 = vunpack.c.h.b16 %v7029
      %v7270 = vunpack.c.l.b16 %v7030
      %v7271 = vunpack.c.h.b16 %v7030
      %v7272 = vunpack.c.l.b16 %v7031
      %v7273 = vunpack.c.h.b16 %v7031
      %v7274 = vunpack.c.l.b16 %v7032
      %v7275 = vunpack.c.h.b16 %v7032
      %v7276 = vunpack.c.l.b16 %v7033
      %v7277 = vunpack.c.h.b16 %v7033
      %v7278 = vunpack.c.l.b16 %v7034
      %v7279 = vunpack.c.h.b16 %v7034
      %v7280 = vunpack.c.l.b16 %v7035
      %v7281 = vunpack.c.h.b16 %v7035
      %v7282 = vpack.c.b16 %v7124, %v7122
      %v7283 = vpack.c.b16 %v7125, %v7123
      %v7284 = vpack.c.b16 %v7128, %v7126
      %v7285 = vpack.c.b16 %v7129, %v7127
      %v7286 = vpack.c.b16 %v7132, %v7130
      %v7287 = vpack.c.b16 %v7133, %v7131
      %v7288 = vpack.c.b16 %v7136, %v7134
      %v7289 = vpack.c.b16 %v7137, %v7135
      %v7290 = vpack.c.b16 %v7140, %v7138
      %v7291 = vpack.c.b16 %v7141, %v7139
      %v7292 = vpack.c.b16 %v7144, %v7142
      %v7293 = vpack.c.b16 %v7145, %v7143
      %v7294 = vpack.c.b16 %v7148, %v7146
      %v7295 = vpack.c.b16 %v7149, %v7147
      %v7296 = vpack.c.b16 %v7152, %v7150
      %v7297 = vpack.c.b16 %v7153, %v7151
      %v7298 = vpack.c.b16 %v7156, %v7154
      %v7299 = vpack.c.b16 %v7157, %v7155
      %v7300 = vpack.c.b16 %v7160, %v7158
      %v7301 = vpack.c.b16 %v7161, %v7159
      %v7302 = vpack.c.b16 %v7164, %v7162
      %v7303 = vpack.c.b16 %v7165, %v7163
      %v7304 = vpack.c.b16 %v7168, %v7166
      %v7305 = vpack.c.b16 %v7169, %v7167
      %v7306 = vpack.c.b16 %v7172, %v7170
      %v7307 = vpack.c.b16 %v7173, %v7171
      %v7308 = vpack.c.b16 %v7176, %v7174
      %v7309 = vpack.c.b16 %v7177, %v7175
      %v7310 = vpack.c.b16 %v7180, %v7178
      %v7311 = vpack.c.b16 %v7181, %v7179
      %v7312 = vpack.c.b16 %v7184, %v7182
      %v7313 = vpack.c.b16 %v7185, %v7183
      %v7314 = vpack.c.b16 %v7188, %v7186
      %v7315 = vpack.c.b16 %v7189, %v7187
      %v7316 = vpack.c.b16 %v7192, %v7190
      %v7317 = vpack.c.b16 %v7193, %v7191
      %v7318 = vpack.c.b16 %v7196, %v7194
      %v7319 = vpack.c.b16 %v7197, %v7195
      %v7320 = vpack.c.b16 %v7200, %v7198
      %v7321 = vpack.c.b16 %v7201, %v7199
      %v7322 = vpack.c.b16 %v7204, %v7202
      %v7323 = vpack.c.b16 %v7205, %v7203
      %v7324 = vpack.c.b16 %v7208, %v7206
      %v7325 = vpack.c.b16 %v7209, %v7207
      %v7326 = vpack.c.b16 %v7212, %v7210
      %v7327 = vpack.c.b16 %v7213, %v7211
      %v7328 = vpack.c.b16 %v7216, %v7214
      %v7329 = vpack.c.b16 %v7217, %v7215
      %v7330 = vpack.c.b16 %v7220, %v7218
      %v7331 = vpack.c.b16 %v7221, %v7219
      %v7332 = vpack.c.b16 %v7224, %v7222
      %v7333 = vpack.c.b16 %v7225, %v7223
      %v7334 = vpack.c.b16 %v7228, %v7226
      %v7335 = vpack.c.b16 %v7229, %v7227
      %v7336 = vpack.c.b16 %v7232, %v7230
      %v7337 = vpack.c.b16 %v7233, %v7231
      %v7338 = vpack.c.b16 %v7236, %v7234
      %v7339 = vpack.c.b16 %v7237, %v7235
      %v7340 = vpack.c.b16 %v7240, %v7238
      %v7341 = vpack.c.b16 %v7241, %v7239
      %v7342 = vpack.c.b16 %v7244, %v7242
      %v7343 = vpack.c.b16 %v7245, %v7243
      %v7344 = vpack.c.b16 %v7248, %v7246
      %v7345 = vpack.c.b16 %v7249, %v7247
      %v7346 = vpack.c.b16 %v7252, %v7250
      %v7347 = vpack.c.b16 %v7253, %v7251
      %v7348 = vpack.c.b16 %v7256, %v7254
      %v7349 = vpack.c.b16 %v7257, %v7255
      %v7350 = vpack.c.b16 %v7260, %v7258
      %v7351 = vpack.c.b16 %v7261, %v7259
      %v7352 = vpack.c.b16 %v7264, %v7262
      %v7353 = vpack.c.b16 %v7265, %v7263
      %v7354 = vpack.c.b16 %v7268, %v7266
      %v7355 = vpack.c.b16 %v7269, %v7267
      %v7356 = vpack.c.b16 %v7272, %v7270
      %v7357 = vpack.c.b16 %v7273, %v7271
      %v7358 = vpack.c.b16 %v7276, %v7274
      %v7359 = vpack.c.b16 %v7277, %v7275
      %v7360 = vpack.c.b16 %v7280, %v7278
      %v7361 = vpack.c.b16 %v7281, %v7279
      %7442 = vmatpush.bf16.msra.mxu0 %v7296
      %7443 = vmatpush.bf16.msra.mxu0 %v7294
      %7444 = vmatpush.bf16.msra.mxu0 %v7292
      %7445 = vmatpush.bf16.msra.mxu0 %v7290
      %7446 = vmatpush.bf16.msra.mxu0 %v7288
      %7447 = vmatpush.bf16.msra.mxu0 %v7286
      %7448 = vmatpush.bf16.msra.mxu0 %v7284
      %7449 = vmatpush.bf16.msra.mxu0 %v7282
      %7450 = vmatmul.bf16.gmra.mxu0 %v6951
      %v7451 = vpop.f32.mrf.mxu0
      %v7452 = vadd.f32 %v7038, %v7451
      %v7453 = vpop.f32.mrf.mxu0
      %v7454 = vadd.f32 %v7038, %v7453
      %7455 = vdwg.mxu0
      %7456 = vmatpush.bf16.msra.mxu0 %v7312
      %7457 = vmatpush.bf16.msra.mxu0 %v7310
      %7458 = vmatpush.bf16.msra.mxu0 %v7308
      %7459 = vmatpush.bf16.msra.mxu0 %v7306
      %7460 = vmatpush.bf16.msra.mxu0 %v7304
      %7461 = vmatpush.bf16.msra.mxu0 %v7302
      %7462 = vmatpush.bf16.msra.mxu0 %v7300
      %7463 = vmatpush.bf16.msra.mxu0 %v7298
      %7464 = vmatmul.bf16.gmra.mxu0 %v6952
      %v7465 = vpop.f32.mrf.mxu0
      %v7466 = vadd.f32 %v7452, %v7465
      %v7467 = vpop.f32.mrf.mxu0
      %v7468 = vadd.f32 %v7454, %v7467
      %7469 = vdwg.mxu0
      %7470 = vmatpush.bf16.msra.mxu0 %v7328
      %7471 = vmatpush.bf16.msra.mxu0 %v7326
      %7472 = vmatpush.bf16.msra.mxu0 %v7324
      %7473 = vmatpush.bf16.msra.mxu0 %v7322
      %7474 = vmatpush.bf16.msra.mxu0 %v7320
      %7475 = vmatpush.bf16.msra.mxu0 %v7318
      %7476 = vmatpush.bf16.msra.mxu0 %v7316
      %7477 = vmatpush.bf16.msra.mxu0 %v7314
      %7478 = vmatmul.bf16.gmra.mxu0 %v6953
      %v7479 = vpop.f32.mrf.mxu0
      %v7480 = vadd.f32 %v7466, %v7479
      %v7481 = vpop.f32.mrf.mxu0
      %v7482 = vadd.f32 %v7468, %v7481
      %7483 = vdwg.mxu0
      %7484 = vmatpush.bf16.msra.mxu0 %v7344
      %7485 = vmatpush.bf16.msra.mxu0 %v7342
      %7486 = vmatpush.bf16.msra.mxu0 %v7340
      %7487 = vmatpush.bf16.msra.mxu0 %v7338
      %7488 = vmatpush.bf16.msra.mxu0 %v7336
      %7489 = vmatpush.bf16.msra.mxu0 %v7334
      %7490 = vmatpush.bf16.msra.mxu0 %v7332
      %7491 = vmatpush.bf16.msra.mxu0 %v7330
      %7492 = vmatmul.bf16.gmra.mxu0 %v6954
      %v7493 = vpop.f32.mrf.mxu0
      %v7494 = vadd.f32 %v7480, %v7493
      %v7495 = vpop.f32.mrf.mxu0
      %v7496 = vadd.f32 %v7482, %v7495
      %7497 = vdwg.mxu0
      %7498 = vmatpush.bf16.msra.mxu0 %v7360
      %7499 = vmatpush.bf16.msra.mxu0 %v7358
      %7500 = vmatpush.bf16.msra.mxu0 %v7356
      %7501 = vmatpush.bf16.msra.mxu0 %v7354
      %7502 = vmatpush.bf16.msra.mxu0 %v7352
      %7503 = vmatpush.bf16.msra.mxu0 %v7350
      %7504 = vmatpush.bf16.msra.mxu0 %v7348
      %7505 = vmatpush.bf16.msra.mxu0 %v7346
      %7506 = vmatmul.bf16.gmra.mxu0 %v6955
      %v7507 = vpop.f32.mrf.mxu0
      %v7508 = vadd.f32 %v7494, %v7507
      %v7509 = vpop.f32.mrf.mxu0
      %v7510 = vadd.f32 %v7496, %v7509
      %7511 = vdwg.mxu0
      %7512 = vmatpush.bf16.msra.mxu0 %v7297
      %7513 = vmatpush.bf16.msra.mxu0 %v7295
      %7514 = vmatpush.bf16.msra.mxu0 %v7293
      %7515 = vmatpush.bf16.msra.mxu0 %v7291
      %7516 = vmatpush.bf16.msra.mxu0 %v7289
      %7517 = vmatpush.bf16.msra.mxu0 %v7287
      %7518 = vmatpush.bf16.msra.mxu0 %v7285
      %7519 = vmatpush.bf16.msra.mxu0 %v7283
      %7520 = vmatmul.bf16.gmra.mxu0 %v6951
      %v7521 = vpop.f32.mrf.mxu0
      %v7522 = vadd.f32 %v7039, %v7521
      %v7523 = vpop.f32.mrf.mxu0
      %v7524 = vadd.f32 %v7039, %v7523
      %7525 = vdwg.mxu0
      %7526 = vmatpush.bf16.msra.mxu0 %v7313
      %7527 = vmatpush.bf16.msra.mxu0 %v7311
      %7528 = vmatpush.bf16.msra.mxu0 %v7309
      %7529 = vmatpush.bf16.msra.mxu0 %v7307
      %7530 = vmatpush.bf16.msra.mxu0 %v7305
      %7531 = vmatpush.bf16.msra.mxu0 %v7303
      %7532 = vmatpush.bf16.msra.mxu0 %v7301
      %7533 = vmatpush.bf16.msra.mxu0 %v7299
      %7534 = vmatmul.bf16.gmra.mxu0 %v6952
      %v7535 = vpop.f32.mrf.mxu0
      %v7536 = vadd.f32 %v7522, %v7535
      %v7537 = vpop.f32.mrf.mxu0
      %v7538 = vadd.f32 %v7524, %v7537
      %7539 = vdwg.mxu0
      %7540 = vmatpush.bf16.msra.mxu0 %v7329
      %7541 = vmatpush.bf16.msra.mxu0 %v7327
      %7542 = vmatpush.bf16.msra.mxu0 %v7325
      %7543 = vmatpush.bf16.msra.mxu0 %v7323
      %7544 = vmatpush.bf16.msra.mxu0 %v7321
      %7545 = vmatpush.bf16.msra.mxu0 %v7319
      %7546 = vmatpush.bf16.msra.mxu0 %v7317
      %7547 = vmatpush.bf16.msra.mxu0 %v7315
      %7548 = vmatmul.bf16.gmra.mxu0 %v6953
      %v7549 = vpop.f32.mrf.mxu0
      %v7550 = vadd.f32 %v7536, %v7549
      %v7551 = vpop.f32.mrf.mxu0
      %v7552 = vadd.f32 %v7538, %v7551
      %7553 = vdwg.mxu0
      %7554 = vmatpush.bf16.msra.mxu0 %v7345
      %7555 = vmatpush.bf16.msra.mxu0 %v7343
      %7556 = vmatpush.bf16.msra.mxu0 %v7341
      %7557 = vmatpush.bf16.msra.mxu0 %v7339
      %7558 = vmatpush.bf16.msra.mxu0 %v7337
      %7559 = vmatpush.bf16.msra.mxu0 %v7335
      %7560 = vmatpush.bf16.msra.mxu0 %v7333
      %7561 = vmatpush.bf16.msra.mxu0 %v7331
      %7562 = vmatmul.bf16.gmra.mxu0 %v6954
      %v7563 = vpop.f32.mrf.mxu0
      %v7564 = vadd.f32 %v7550, %v7563
      %v7565 = vpop.f32.mrf.mxu0
      %v7566 = vadd.f32 %v7552, %v7565
      %7567 = vdwg.mxu0
      %7568 = vmatpush.bf16.msra.mxu0 %v7361
      %7569 = vmatpush.bf16.msra.mxu0 %v7359
      %7570 = vmatpush.bf16.msra.mxu0 %v7357
      %7571 = vmatpush.bf16.msra.mxu0 %v7355
      %7572 = vmatpush.bf16.msra.mxu0 %v7353
      %7573 = vmatpush.bf16.msra.mxu0 %v7351
      %7574 = vmatpush.bf16.msra.mxu0 %v7349
      %7575 = vmatpush.bf16.msra.mxu0 %v7347
      %7576 = vmatmul.bf16.gmra.mxu0 %v6955
      %v7577 = vpop.f32.mrf.mxu0
      %v7578 = vadd.f32 %v7564, %v7577
      %v7579 = vpop.f32.mrf.mxu0
      %v7580 = vadd.f32 %v7566, %v7579
      %7581 = vdwg.mxu0
      %v7582 = vpack.c.bf16 %v7510, %v7508
      %v7583 = vpack.c.bf16 %v7580, %v7578
      %v7584 = vld [vmem:[%s23] sm:$0xf]
      %v7585 = vld [vmem:[%s23 + $0x4] sm:$0xf]
      %v7586 = vld [vmem:[%s23 + $0x8] sm:$0xf]
      %v7587 = vld [vmem:[%s23 + $0xc] sm:$0xf]
      %v7588 = vld [vmem:[%s23 + $0x10] sm:$0xf]
      %v7589 = vld [vmem:[%s23 + $0x14] sm:$0xf]
      %v7590 = vld [vmem:[%s23 + $0x18] sm:$0xf]
      %v7591 = vld [vmem:[%s23 + $0x1c] sm:$0xf]
      %v7592 = vld [vmem:[%s23 + $0x20] sm:$0xf]
      %v7593 = vld [vmem:[%s23 + $0x24] sm:$0xf]
      %v7594 = vld [vmem:[%s23 + $0x28] sm:$0xf]
      %v7595 = vld [vmem:[%s23 + $0x2c] sm:$0xf]
      %v7596 = vld [vmem:[%s23 + $0x30] sm:$0xf]
      %v7597 = vld [vmem:[%s23 + $0x34] sm:$0xf]
      %v7598 = vld [vmem:[%s23 + $0x38] sm:$0xf]
      %v7599 = vld [vmem:[%s23 + $0x3c] sm:$0xf]
      %v7600 = vld [vmem:[%s23 + $0x40] sm:$0xf]
      %v7601 = vld [vmem:[%s23 + $0x44] sm:$0xf]
      %v7602 = vld [vmem:[%s23 + $0x48] sm:$0xf]
      %v7603 = vld [vmem:[%s23 + $0x4c] sm:$0xf]
      %v7604 = vld [vmem:[%s23 + $0x50] sm:$0xf]
      %v7605 = vld [vmem:[%s23 + $0x54] sm:$0xf]
      %v7606 = vld [vmem:[%s23 + $0x58] sm:$0xf]
      %v7607 = vld [vmem:[%s23 + $0x5c] sm:$0xf]
      %v7608 = vld [vmem:[%s23 + $0x60] sm:$0xf]
      %v7609 = vld [vmem:[%s23 + $0x64] sm:$0xf]
      %v7610 = vld [vmem:[%s23 + $0x68] sm:$0xf]
      %v7611 = vld [vmem:[%s23 + $0x6c] sm:$0xf]
      %v7612 = vld [vmem:[%s23 + $0x70] sm:$0xf]
      %v7613 = vld [vmem:[%s23 + $0x74] sm:$0xf]
      %v7614 = vld [vmem:[%s23 + $0x78] sm:$0xf]
      %v7615 = vld [vmem:[%s23 + $0x7c] sm:$0xf]
      %v7648 = vunpack.c.l.b16 %v7584
      %v7649 = vunpack.c.l.b16 %v7585
      %v7650 = vunpack.c.l.b16 %v7586
      %v7651 = vunpack.c.l.b16 %v7587
      %v7652 = vunpack.c.l.b16 %v7588
      %v7653 = vunpack.c.l.b16 %v7589
      %v7654 = vunpack.c.l.b16 %v7590
      %v7655 = vunpack.c.l.b16 %v7591
      %v7656 = vunpack.c.l.b16 %v7592
      %v7657 = vunpack.c.l.b16 %v7593
      %v7658 = vunpack.c.l.b16 %v7594
      %v7659 = vunpack.c.l.b16 %v7595
      %v7660 = vunpack.c.l.b16 %v7596
      %v7661 = vunpack.c.l.b16 %v7597
      %v7662 = vunpack.c.l.b16 %v7598
      %v7663 = vunpack.c.l.b16 %v7599
      %v7664 = vunpack.c.l.b16 %v7600
      %v7665 = vunpack.c.l.b16 %v7601
      %v7666 = vunpack.c.l.b16 %v7602
      %v7667 = vunpack.c.l.b16 %v7603
      %v7668 = vunpack.c.l.b16 %v7604
      %v7669 = vunpack.c.l.b16 %v7605
      %v7670 = vunpack.c.l.b16 %v7606
      %v7671 = vunpack.c.l.b16 %v7607
      %v7672 = vunpack.c.l.b16 %v7608
      %v7673 = vunpack.c.l.b16 %v7609
      %v7674 = vunpack.c.l.b16 %v7610
      %v7675 = vunpack.c.l.b16 %v7611
      %v7676 = vunpack.c.l.b16 %v7612
      %v7677 = vunpack.c.l.b16 %v7613
      %v7678 = vunpack.c.l.b16 %v7614
      %v7679 = vunpack.c.l.b16 %v7615
      %v7680 = vpack.c.b16 %v7649, %v7648
      %v7681 = vpack.c.b16 %v7651, %v7650
      %v7682 = vpack.c.b16 %v7653, %v7652
      %v7683 = vpack.c.b16 %v7655, %v7654
      %v7684 = vpack.c.b16 %v7657, %v7656
      %v7685 = vpack.c.b16 %v7659, %v7658
      %v7686 = vpack.c.b16 %v7661, %v7660
      %v7687 = vpack.c.b16 %v7663, %v7662
      %v7688 = vpack.c.b16 %v7665, %v7664
      %v7689 = vpack.c.b16 %v7667, %v7666
      %v7690 = vpack.c.b16 %v7669, %v7668
      %v7691 = vpack.c.b16 %v7671, %v7670
      %v7692 = vpack.c.b16 %v7673, %v7672
      %v7693 = vpack.c.b16 %v7675, %v7674
      %v7694 = vpack.c.b16 %v7677, %v7676
      %v7695 = vpack.c.b16 %v7679, %v7678
      %7712 = vmatpush.bf16.msra.mxu0 %v7687
      %7713 = vmatpush.bf16.msra.mxu0 %v7686
      %7714 = vmatpush.bf16.msra.mxu0 %v7685
      %7715 = vmatpush.bf16.msra.mxu0 %v7684
      %7716 = vmatpush.bf16.msra.mxu0 %v7683
      %7717 = vmatpush.bf16.msra.mxu0 %v7682
      %7718 = vmatpush.bf16.msra.mxu0 %v7681
      %7719 = vmatpush.bf16.msra.mxu0 %v7680
      %7720 = vmatmul.bf16.gmra.mxu0 %v7582
      %v7721 = vpop.f32.mrf.mxu0
      %v7722 = vadd.f32 0.0, %v7721
      %v7723 = vpop.f32.mrf.mxu0
      %v7724 = vadd.f32 0.0, %v7723
      %7725 = vdwg.mxu0
      %7726 = vmatpush.bf16.msra.mxu0 %v7695
      %7727 = vmatpush.bf16.msra.mxu0 %v7694
      %7728 = vmatpush.bf16.msra.mxu0 %v7693
      %7729 = vmatpush.bf16.msra.mxu0 %v7692
      %7730 = vmatpush.bf16.msra.mxu0 %v7691
      %7731 = vmatpush.bf16.msra.mxu0 %v7690
      %7732 = vmatpush.bf16.msra.mxu0 %v7689
      %7733 = vmatpush.bf16.msra.mxu0 %v7688
      %7734 = vmatmul.bf16.gmra.mxu0 %v7583
      %v7735 = vpop.f32.mrf.mxu0
      %v7736 = vadd.f32 %v7722, %v7735
      %v7737 = vpop.f32.mrf.mxu0
      %v7738 = vadd.f32 %v7724, %v7737
      %7739 = vdwg.mxu0
      %v7740 = vadd.f32 %v4655, %v7736
      %v7741 = vadd.f32 %v4657, %v7738
      %v7742 = vld [vmem:[%s10] sm:$0xff]
      %v7743 = vld [vmem:[%s10 + $0x8] sm:$0xff]
      %v7744 = vld [vmem:[%s10 + $0x10] sm:$0xf]
      %v7745 = vld [vmem:[%s10 + $0x14] sm:$0xff]
      %v7746 = vld [vmem:[%s10 + $0x1c] sm:$0xff]
      %v7747 = vld [vmem:[%s10 + $0x24] sm:$0xf]
      %v7748 = vld [vmem:[%s10 + $0x28] sm:$0xff]
      %v7749 = vld [vmem:[%s10 + $0x30] sm:$0xff]
      %v7750 = vld [vmem:[%s10 + $0x38] sm:$0xf]
      %v7751 = vld [vmem:[%s10 + $0x3c] sm:$0xff]
      %v7752 = vld [vmem:[%s10 + $0x44] sm:$0xff]
      %v7753 = vld [vmem:[%s10 + $0x4c] sm:$0xf]
      %v7754 = vld [vmem:[%s10 + $0x50] sm:$0xff]
      %v7755 = vld [vmem:[%s10 + $0x58] sm:$0xff]
      %v7756 = vld [vmem:[%s10 + $0x60] sm:$0xf]
      %v7757 = vld [vmem:[%s10 + $0x64] sm:$0xff]
      %v7758 = vld [vmem:[%s10 + $0x6c] sm:$0xff]
      %v7759 = vld [vmem:[%s10 + $0x74] sm:$0xf]
      %v7760 = vld [vmem:[%s10 + $0x78] sm:$0xff]
      %v7761 = vld [vmem:[%s10 + $0x80] sm:$0xff]
      %v7762 = vld [vmem:[%s10 + $0x88] sm:$0xf]
      %v7763 = vld [vmem:[%s10 + $0x8c] sm:$0xff]
      %v7764 = vld [vmem:[%s10 + $0x94] sm:$0xff]
      %v7765 = vld [vmem:[%s10 + $0x9c] sm:$0xf]
      %v7766 = vld [vmem:[%s10 + $0xa0] sm:$0xff]
      %v7767 = vld [vmem:[%s10 + $0xa8] sm:$0xff]
      %v7768 = vld [vmem:[%s10 + $0xb0] sm:$0xf]
      %v7769 = vld [vmem:[%s10 + $0xb4] sm:$0xff]
      %v7770 = vld [vmem:[%s10 + $0xbc] sm:$0xff]
      %v7771 = vld [vmem:[%s10 + $0xc4] sm:$0xf]
      %v7772 = vld [vmem:[%s10 + $0xc8] sm:$0xff]
      %v7773 = vld [vmem:[%s10 + $0xd0] sm:$0xff]
      %v7774 = vld [vmem:[%s10 + $0xd8] sm:$0xf]
      %v7775 = vld [vmem:[%s10 + $0xdc] sm:$0xff]
      %v7776 = vld [vmem:[%s10 + $0xe4] sm:$0xff]
      %v7777 = vld [vmem:[%s10 + $0xec] sm:$0xf]
      %v7778 = vld [vmem:[%s10 + $0xf0] sm:$0xff]
      %v7779 = vld [vmem:[%s10 + $0xf8] sm:$0xff]
      %v7780 = vld [vmem:[%s10 + $0x100] sm:$0xf]
      %v7781 = vld [vmem:[%s10 + $0x104] sm:$0xff]
      %v7782 = vld [vmem:[%s10 + $0x10c] sm:$0xff]
      %v7783 = vld [vmem:[%s10 + $0x114] sm:$0xf]
      %v7784 = vld [vmem:[%s10 + $0x118] sm:$0xff]
      %v7785 = vld [vmem:[%s10 + $0x120] sm:$0xff]
      %v7786 = vld [vmem:[%s10 + $0x128] sm:$0xf]
      %v7787 = vld [vmem:[%s10 + $0x12c] sm:$0xff]
      %v7788 = vld [vmem:[%s10 + $0x134] sm:$0xff]
      %v7789 = vld [vmem:[%s10 + $0x13c] sm:$0xf]
      %v7790 = vld [vmem:[%s10 + $0x140] sm:$0xff]
      %v7791 = vld [vmem:[%s10 + $0x148] sm:$0xff]
      %v7792 = vld [vmem:[%s10 + $0x150] sm:$0xf]
      %v7793 = vld [vmem:[%s10 + $0x154] sm:$0xff]
      %v7794 = vld [vmem:[%s10 + $0x15c] sm:$0xff]
      %v7795 = vld [vmem:[%s10 + $0x164] sm:$0xf]
      %v7796 = vld [vmem:[%s10 + $0x168] sm:$0xff]
      %v7797 = vld [vmem:[%s10 + $0x170] sm:$0xff]
      %v7798 = vld [vmem:[%s10 + $0x178] sm:$0xf]
      %v7799 = vld [vmem:[%s10 + $0x17c] sm:$0xff]
      %v7800 = vld [vmem:[%s10 + $0x184] sm:$0xff]
      %v7801 = vld [vmem:[%s10 + $0x18c] sm:$0xf]
      %v7802 = vld [vmem:[%s10 + $0x190] sm:$0xff]
      %v7803 = vld [vmem:[%s10 + $0x198] sm:$0xff]
      %v7804 = vld [vmem:[%s10 + $0x1a0] sm:$0xf]
      %v7805 = vld [vmem:[%s10 + $0x1a4] sm:$0xff]
      %v7806 = vld [vmem:[%s10 + $0x1ac] sm:$0xff]
      %v7807 = vld [vmem:[%s10 + $0x1b4] sm:$0xf]
      %v7808 = vld [vmem:[%s10 + $0x1b8] sm:$0xff]
      %v7809 = vld [vmem:[%s10 + $0x1c0] sm:$0xff]
      %v7810 = vld [vmem:[%s10 + $0x1c8] sm:$0xf]
      %v7811 = vld [vmem:[%s10 + $0x1cc] sm:$0xff]
      %v7812 = vld [vmem:[%s10 + $0x1d4] sm:$0xff]
      %v7813 = vld [vmem:[%s10 + $0x1dc] sm:$0xf]
      %v7814 = vld [vmem:[%s10 + $0x1e0] sm:$0xff]
      %v7815 = vld [vmem:[%s10 + $0x1e8] sm:$0xff]
      %v7816 = vld [vmem:[%s10 + $0x1f0] sm:$0xf]
      %v7817 = vld [vmem:[%s10 + $0x1f4] sm:$0xff]
      %v7818 = vld [vmem:[%s10 + $0x1fc] sm:$0xff]
      %v7819 = vld [vmem:[%s10 + $0x204] sm:$0xf]
      %v7820 = vld [vmem:[%s10 + $0x208] sm:$0xff]
      %v7821 = vld [vmem:[%s10 + $0x210] sm:$0xff]
      %v7822 = vld [vmem:[%s10 + $0x218] sm:$0xf]
      %v7823 = vld [vmem:[%s10 + $0x21c] sm:$0xff]
      %v7824 = vld [vmem:[%s10 + $0x224] sm:$0xff]
      %v7825 = vld [vmem:[%s10 + $0x22c] sm:$0xf]
      %v7826 = vld [vmem:[%s10 + $0x230] sm:$0xff]
      %v7827 = vld [vmem:[%s10 + $0x238] sm:$0xff]
      %v7828 = vld [vmem:[%s10 + $0x240] sm:$0xf]
      %v7829 = vld [vmem:[%s10 + $0x244] sm:$0xff]
      %v7830 = vld [vmem:[%s10 + $0x24c] sm:$0xff]
      %v7831 = vld [vmem:[%s10 + $0x254] sm:$0xf]
      %v7832 = vld [vmem:[%s10 + $0x258] sm:$0xff]
      %v7833 = vld [vmem:[%s10 + $0x260] sm:$0xff]
      %v7834 = vld [vmem:[%s10 + $0x268] sm:$0xf]
      %v7835 = vld [vmem:[%s10 + $0x26c] sm:$0xff]
      %v7836 = vld [vmem:[%s10 + $0x274] sm:$0xff]
      %v7837 = vld [vmem:[%s10 + $0x27c] sm:$0xf]
      %v7838 = vld [vmem:[%s10 + $0x280] sm:$0xff]
      %v7839 = vld [vmem:[%s10 + $0x288] sm:$0xff]
      %v7840 = vld [vmem:[%s10 + $0x290] sm:$0xf]
      %v7841 = vld [vmem:[%s10 + $0x294] sm:$0xff]
      %v7842 = vld [vmem:[%s10 + $0x29c] sm:$0xff]
      %v7843 = vld [vmem:[%s10 + $0x2a4] sm:$0xf]
      %v7844 = vld [vmem:[%s10 + $0x2a8] sm:$0xff]
      %v7845 = vld [vmem:[%s10 + $0x2b0] sm:$0xff]
      %v7846 = vld [vmem:[%s10 + $0x2b8] sm:$0xf]
      %v7847 = vld [vmem:[%s10 + $0x2bc] sm:$0xff]
      %v7848 = vld [vmem:[%s10 + $0x2c4] sm:$0xff]
      %v7849 = vld [vmem:[%s10 + $0x2cc] sm:$0xf]
      %v7850 = vld [vmem:[%s10 + $0x2d0] sm:$0xff]
      %v7851 = vld [vmem:[%s10 + $0x2d8] sm:$0xff]
      %v7852 = vld [vmem:[%s10 + $0x2e0] sm:$0xf]
      %v7853 = vld [vmem:[%s10 + $0x2e4] sm:$0xff]
      %v7854 = vld [vmem:[%s10 + $0x2ec] sm:$0xff]
      %v7855 = vld [vmem:[%s10 + $0x2f4] sm:$0xf]
      %v7856 = vld [vmem:[%s10 + $0x2f8] sm:$0xff]
      %v7857 = vld [vmem:[%s10 + $0x300] sm:$0xff]
      %v7858 = vld [vmem:[%s10 + $0x308] sm:$0xf]
      %v7859 = vld [vmem:[%s10 + $0x30c] sm:$0xff]
      %v7860 = vld [vmem:[%s10 + $0x314] sm:$0xff]
      %v7861 = vld [vmem:[%s10 + $0x31c] sm:$0xf]
      %v7862 = vld [vmem:[%s10 + $0x320] sm:$0xff]
      %v7863 = vld [vmem:[%s10 + $0x328] sm:$0xff]
      %v7864 = vld [vmem:[%s10 + $0x330] sm:$0xf]
      %v7865 = vld [vmem:[%s10 + $0x334] sm:$0xff]
      %v7866 = vld [vmem:[%s10 + $0x33c] sm:$0xff]
      %v7867 = vld [vmem:[%s10 + $0x344] sm:$0xf]
      %v7868 = vld [vmem:[%s10 + $0x348] sm:$0xff]
      %v7869 = vld [vmem:[%s10 + $0x350] sm:$0xff]
      %v7870 = vld [vmem:[%s10 + $0x358] sm:$0xf]
      %v7871 = vld [vmem:[%s10 + $0x35c] sm:$0xff]
      %v7872 = vld [vmem:[%s10 + $0x364] sm:$0xff]
      %v7873 = vld [vmem:[%s10 + $0x36c] sm:$0xf]
      %v7874 = vld [vmem:[%s10 + $0x370] sm:$0xff]
      %v7875 = vld [vmem:[%s10 + $0x378] sm:$0xff]
      %v7876 = vld [vmem:[%s10 + $0x380] sm:$0xf]
      %v7877 = vld [vmem:[%s10 + $0x384] sm:$0xff]
      %v7878 = vld [vmem:[%s10 + $0x38c] sm:$0xff]
      %v7879 = vld [vmem:[%s10 + $0x394] sm:$0xf]
      %v7880 = vld [vmem:[%s10 + $0x398] sm:$0xff]
      %v7881 = vld [vmem:[%s10 + $0x3a0] sm:$0xff]
      %v7882 = vld [vmem:[%s10 + $0x3a8] sm:$0xf]
      %v7883 = vld [vmem:[%s10 + $0x3ac] sm:$0xff]
      %v7884 = vld [vmem:[%s10 + $0x3b4] sm:$0xff]
      %v7885 = vld [vmem:[%s10 + $0x3bc] sm:$0xf]
      %v7886 = vld [vmem:[%s10 + $0x3c0] sm:$0xff]
      %v7887 = vld [vmem:[%s10 + $0x3c8] sm:$0xff]
      %v7888 = vld [vmem:[%s10 + $0x3d0] sm:$0xf]
      %v7889 = vld [vmem:[%s10 + $0x3d4] sm:$0xff]
      %v7890 = vld [vmem:[%s10 + $0x3dc] sm:$0xff]
      %v7891 = vld [vmem:[%s10 + $0x3e4] sm:$0xf]
      %v7892 = vld [vmem:[%s10 + $0x3e8] sm:$0xff]
      %v7893 = vld [vmem:[%s10 + $0x3f0] sm:$0xff]
      %v7894 = vld [vmem:[%s10 + $0x3f8] sm:$0xf]
      %v7895 = vld [vmem:[%s10 + $0x3fc] sm:$0xff]
      %v7896 = vld [vmem:[%s10 + $0x404] sm:$0xff]
      %v7897 = vld [vmem:[%s10 + $0x40c] sm:$0xf]
      %v7898 = vld [vmem:[%s10 + $0x410] sm:$0xff]
      %v7899 = vld [vmem:[%s10 + $0x418] sm:$0xff]
      %v7900 = vld [vmem:[%s10 + $0x420] sm:$0xf]
      %v7901 = vld [vmem:[%s10 + $0x424] sm:$0xff]
      %v7902 = vld [vmem:[%s10 + $0x42c] sm:$0xff]
      %v7903 = vld [vmem:[%s10 + $0x434] sm:$0xf]
      %v7904 = vld [vmem:[%s10 + $0x438] sm:$0xff]
      %v7905 = vld [vmem:[%s10 + $0x440] sm:$0xff]
      %v7906 = vld [vmem:[%s10 + $0x448] sm:$0xf]
      %v7907 = vld [vmem:[%s10 + $0x44c] sm:$0xff]
      %v7908 = vld [vmem:[%s10 + $0x454] sm:$0xff]
      %v7909 = vld [vmem:[%s10 + $0x45c] sm:$0xf]
      %v7910 = vld [vmem:[%s10 + $0x460] sm:$0xff]
      %v7911 = vld [vmem:[%s10 + $0x468] sm:$0xff]
      %v7912 = vld [vmem:[%s10 + $0x470] sm:$0xf]
      %v7913 = vld [vmem:[%s10 + $0x474] sm:$0xff]
      %v7914 = vld [vmem:[%s10 + $0x47c] sm:$0xff]
      %v7915 = vld [vmem:[%s10 + $0x484] sm:$0xf]
      %v7916 = vld [vmem:[%s10 + $0x488] sm:$0xff]
      %v7917 = vld [vmem:[%s10 + $0x490] sm:$0xff]
      %v7918 = vld [vmem:[%s10 + $0x498] sm:$0xf]
      %v7919 = vld [vmem:[%s10 + $0x49c] sm:$0xff]
      %v7920 = vld [vmem:[%s10 + $0x4a4] sm:$0xff]
      %v7921 = vld [vmem:[%s10 + $0x4ac] sm:$0xf]
      %v7922 = vld [vmem:[%s10 + $0x4b0] sm:$0xff]
      %v7923 = vld [vmem:[%s10 + $0x4b8] sm:$0xff]
      %v7924 = vld [vmem:[%s10 + $0x4c0] sm:$0xf]
      %v7925 = vld [vmem:[%s10 + $0x4c4] sm:$0xff]
      %v7926 = vld [vmem:[%s10 + $0x4cc] sm:$0xff]
      %v7927 = vld [vmem:[%s10 + $0x4d4] sm:$0xf]
      %v7928 = vld [vmem:[%s10 + $0x4d8] sm:$0xff]
      %v7929 = vld [vmem:[%s10 + $0x4e0] sm:$0xff]
      %v7930 = vld [vmem:[%s10 + $0x4e8] sm:$0xf]
      %v7931 = vld [vmem:[%s10 + $0x4ec] sm:$0xff]
      %v7932 = vld [vmem:[%s10 + $0x4f4] sm:$0xff]
      %v7933 = vld [vmem:[%s10 + $0x4fc] sm:$0xf]
      %v7934 = vld [vmem:[%s13] sm:$0xff]
      %v7935 = vld [vmem:[%s13 + $0x8] sm:$0xff]
      %v7936 = vld [vmem:[%s13 + $0x10] sm:$0xf]
      %v7937 = vld [vmem:[%s13 + $0x14] sm:$0xff]
      %v7938 = vld [vmem:[%s13 + $0x1c] sm:$0xff]
      %v7939 = vld [vmem:[%s13 + $0x24] sm:$0xf]
      %v7940 = vld [vmem:[%s13 + $0x28] sm:$0xff]
      %v7941 = vld [vmem:[%s13 + $0x30] sm:$0xff]
      %v7942 = vld [vmem:[%s13 + $0x38] sm:$0xf]
      %v7943 = vld [vmem:[%s13 + $0x3c] sm:$0xff]
      %v7944 = vld [vmem:[%s13 + $0x44] sm:$0xff]
      %v7945 = vld [vmem:[%s13 + $0x4c] sm:$0xf]
      %v7946 = vld [vmem:[%s13 + $0x50] sm:$0xff]
      %v7947 = vld [vmem:[%s13 + $0x58] sm:$0xff]
      %v7948 = vld [vmem:[%s13 + $0x60] sm:$0xf]
      %v7949 = vld [vmem:[%s13 + $0x64] sm:$0xff]
      %v7950 = vld [vmem:[%s13 + $0x6c] sm:$0xff]
      %v7951 = vld [vmem:[%s13 + $0x74] sm:$0xf]
      %v7952 = vld [vmem:[%s13 + $0x78] sm:$0xff]
      %v7953 = vld [vmem:[%s13 + $0x80] sm:$0xff]
      %v7954 = vld [vmem:[%s13 + $0x88] sm:$0xf]
      %v7955 = vld [vmem:[%s13 + $0x8c] sm:$0xff]
      %v7956 = vld [vmem:[%s13 + $0x94] sm:$0xff]
      %v7957 = vld [vmem:[%s13 + $0x9c] sm:$0xf]
      %v7958 = vld [vmem:[%s13 + $0xa0] sm:$0xff]
      %v7959 = vld [vmem:[%s13 + $0xa8] sm:$0xff]
      %v7960 = vld [vmem:[%s13 + $0xb0] sm:$0xf]
      %v7961 = vld [vmem:[%s13 + $0xb4] sm:$0xff]
      %v7962 = vld [vmem:[%s13 + $0xbc] sm:$0xff]
      %v7963 = vld [vmem:[%s13 + $0xc4] sm:$0xf]
      %v7964 = vld [vmem:[%s13 + $0xc8] sm:$0xff]
      %v7965 = vld [vmem:[%s13 + $0xd0] sm:$0xff]
      %v7966 = vld [vmem:[%s13 + $0xd8] sm:$0xf]
      %v7967 = vld [vmem:[%s13 + $0xdc] sm:$0xff]
      %v7968 = vld [vmem:[%s13 + $0xe4] sm:$0xff]
      %v7969 = vld [vmem:[%s13 + $0xec] sm:$0xf]
      %v7970 = vld [vmem:[%s13 + $0xf0] sm:$0xff]
      %v7971 = vld [vmem:[%s13 + $0xf8] sm:$0xff]
      %v7972 = vld [vmem:[%s13 + $0x100] sm:$0xf]
      %v7973 = vld [vmem:[%s13 + $0x104] sm:$0xff]
      %v7974 = vld [vmem:[%s13 + $0x10c] sm:$0xff]
      %v7975 = vld [vmem:[%s13 + $0x114] sm:$0xf]
      %v7976 = vld [vmem:[%s13 + $0x118] sm:$0xff]
      %v7977 = vld [vmem:[%s13 + $0x120] sm:$0xff]
      %v7978 = vld [vmem:[%s13 + $0x128] sm:$0xf]
      %v7979 = vld [vmem:[%s13 + $0x12c] sm:$0xff]
      %v7980 = vld [vmem:[%s13 + $0x134] sm:$0xff]
      %v7981 = vld [vmem:[%s13 + $0x13c] sm:$0xf]
      %v8030 = vunpack.c.l.b16 %v7934
      %v8031 = vunpack.c.h.b16 %v7934
      %v8032 = vunpack.c.l.b16 %v7935
      %v8033 = vunpack.c.h.b16 %v7935
      %v8034 = vunpack.c.l.b16 %v7936
      %v8035 = vunpack.c.l.b16 %v7937
      %v8036 = vunpack.c.h.b16 %v7937
      %v8037 = vunpack.c.l.b16 %v7938
      %v8038 = vunpack.c.h.b16 %v7938
      %v8039 = vunpack.c.l.b16 %v7939
      %v8040 = vunpack.c.l.b16 %v7940
      %v8041 = vunpack.c.h.b16 %v7940
      %v8042 = vunpack.c.l.b16 %v7941
      %v8043 = vunpack.c.h.b16 %v7941
      %v8044 = vunpack.c.l.b16 %v7942
      %v8045 = vunpack.c.l.b16 %v7943
      %v8046 = vunpack.c.h.b16 %v7943
      %v8047 = vunpack.c.l.b16 %v7944
      %v8048 = vunpack.c.h.b16 %v7944
      %v8049 = vunpack.c.l.b16 %v7945
      %v8050 = vunpack.c.l.b16 %v7946
      %v8051 = vunpack.c.h.b16 %v7946
      %v8052 = vunpack.c.l.b16 %v7947
      %v8053 = vunpack.c.h.b16 %v7947
      %v8054 = vunpack.c.l.b16 %v7948
      %v8055 = vunpack.c.l.b16 %v7949
      %v8056 = vunpack.c.h.b16 %v7949
      %v8057 = vunpack.c.l.b16 %v7950
      %v8058 = vunpack.c.h.b16 %v7950
      %v8059 = vunpack.c.l.b16 %v7951
      %v8060 = vunpack.c.l.b16 %v7952
      %v8061 = vunpack.c.h.b16 %v7952
      %v8062 = vunpack.c.l.b16 %v7953
      %v8063 = vunpack.c.h.b16 %v7953
      %v8064 = vunpack.c.l.b16 %v7954
      %v8065 = vunpack.c.l.b16 %v7955
      %v8066 = vunpack.c.h.b16 %v7955
      %v8067 = vunpack.c.l.b16 %v7956
      %v8068 = vunpack.c.h.b16 %v7956
      %v8069 = vunpack.c.l.b16 %v7957
      %v8070 = vunpack.c.l.b16 %v7958
      %v8071 = vunpack.c.h.b16 %v7958
      %v8072 = vunpack.c.l.b16 %v7959
      %v8073 = vunpack.c.h.b16 %v7959
      %v8074 = vunpack.c.l.b16 %v7960
      %v8075 = vunpack.c.l.b16 %v7961
      %v8076 = vunpack.c.h.b16 %v7961
      %v8077 = vunpack.c.l.b16 %v7962
      %v8078 = vunpack.c.h.b16 %v7962
      %v8079 = vunpack.c.l.b16 %v7963
      %v8080 = vunpack.c.l.b16 %v7964
      %v8081 = vunpack.c.h.b16 %v7964
      %v8082 = vunpack.c.l.b16 %v7965
      %v8083 = vunpack.c.h.b16 %v7965
      %v8084 = vunpack.c.l.b16 %v7966
      %v8085 = vunpack.c.l.b16 %v7967
      %v8086 = vunpack.c.h.b16 %v7967
      %v8087 = vunpack.c.l.b16 %v7968
      %v8088 = vunpack.c.h.b16 %v7968
      %v8089 = vunpack.c.l.b16 %v7969
      %v8090 = vunpack.c.l.b16 %v7970
      %v8091 = vunpack.c.h.b16 %v7970
      %v8092 = vunpack.c.l.b16 %v7971
      %v8093 = vunpack.c.h.b16 %v7971
      %v8094 = vunpack.c.l.b16 %v7972
      %v8095 = vunpack.c.l.b16 %v7973
      %v8096 = vunpack.c.h.b16 %v7973
      %v8097 = vunpack.c.l.b16 %v7974
      %v8098 = vunpack.c.h.b16 %v7974
      %v8099 = vunpack.c.l.b16 %v7975
      %v8100 = vunpack.c.l.b16 %v7976
      %v8101 = vunpack.c.h.b16 %v7976
      %v8102 = vunpack.c.l.b16 %v7977
      %v8103 = vunpack.c.h.b16 %v7977
      %v8104 = vunpack.c.l.b16 %v7978
      %v8105 = vunpack.c.l.b16 %v7979
      %v8106 = vunpack.c.h.b16 %v7979
      %v8107 = vunpack.c.l.b16 %v7980
      %v8108 = vunpack.c.h.b16 %v7980
      %v8109 = vunpack.c.l.b16 %v7981
      %v8110 = vpack.c.b16 %v8035, %v8030
      %v8111 = vpack.c.b16 %v8036, %v8031
      %v8112 = vpack.c.b16 %v8037, %v8032
      %v8113 = vpack.c.b16 %v8038, %v8033
      %v8114 = vpack.c.b16 %v8039, %v8034
      %v8115 = vpack.c.b16 %v8045, %v8040
      %v8116 = vpack.c.b16 %v8046, %v8041
      %v8117 = vpack.c.b16 %v8047, %v8042
      %v8118 = vpack.c.b16 %v8048, %v8043
      %v8119 = vpack.c.b16 %v8049, %v8044
      %v8120 = vpack.c.b16 %v8055, %v8050
      %v8121 = vpack.c.b16 %v8056, %v8051
      %v8122 = vpack.c.b16 %v8057, %v8052
      %v8123 = vpack.c.b16 %v8058, %v8053
      %v8124 = vpack.c.b16 %v8059, %v8054
      %v8125 = vpack.c.b16 %v8065, %v8060
      %v8126 = vpack.c.b16 %v8066, %v8061
      %v8127 = vpack.c.b16 %v8067, %v8062
      %v8128 = vpack.c.b16 %v8068, %v8063
      %v8129 = vpack.c.b16 %v8069, %v8064
      %v8130 = vpack.c.b16 %v8075, %v8070
      %v8131 = vpack.c.b16 %v8076, %v8071
      %v8132 = vpack.c.b16 %v8077, %v8072
      %v8133 = vpack.c.b16 %v8078, %v8073
      %v8134 = vpack.c.b16 %v8079, %v8074
      %v8135 = vpack.c.b16 %v8085, %v8080
      %v8136 = vpack.c.b16 %v8086, %v8081
      %v8137 = vpack.c.b16 %v8087, %v8082
      %v8138 = vpack.c.b16 %v8088, %v8083
      %v8139 = vpack.c.b16 %v8089, %v8084
      %v8140 = vpack.c.b16 %v8095, %v8090
      %v8141 = vpack.c.b16 %v8096, %v8091
      %v8142 = vpack.c.b16 %v8097, %v8092
      %v8143 = vpack.c.b16 %v8098, %v8093
      %v8144 = vpack.c.b16 %v8099, %v8094
      %v8145 = vpack.c.b16 %v8105, %v8100
      %v8146 = vpack.c.b16 %v8106, %v8101
      %v8147 = vpack.c.b16 %v8107, %v8102
      %v8148 = vpack.c.b16 %v8108, %v8103
      %v8149 = vpack.c.b16 %v8109, %v8104
      %8190 = vmatpush.bf16.msra.mxu0 %v8145
      %8191 = vmatpush.bf16.msra.mxu0 %v8140
      %8192 = vmatpush.bf16.msra.mxu0 %v8135
      %8193 = vmatpush.bf16.msra.mxu0 %v8130
      %8194 = vmatpush.bf16.msra.mxu0 %v8125
      %8195 = vmatpush.bf16.msra.mxu0 %v8120
      %8196 = vmatpush.bf16.msra.mxu0 %v8115
      %8197 = vmatpush.bf16.msra.mxu0 %v8110
      %8198 = vmatmul.bf16.gmra.mxu0 %v2474
      %v8199 = vpop.f32.mrf.mxu0
      %v8200 = vadd.f32 0.0, %v8199
      %v8201 = vpop.f32.mrf.mxu0
      %v8202 = vadd.f32 0.0, %v8201
      %8203 = vdwg.mxu0
      %8204 = vmatpush.bf16.msra.mxu0 %v8146
      %8205 = vmatpush.bf16.msra.mxu0 %v8141
      %8206 = vmatpush.bf16.msra.mxu0 %v8136
      %8207 = vmatpush.bf16.msra.mxu0 %v8131
      %8208 = vmatpush.bf16.msra.mxu0 %v8126
      %8209 = vmatpush.bf16.msra.mxu0 %v8121
      %8210 = vmatpush.bf16.msra.mxu0 %v8116
      %8211 = vmatpush.bf16.msra.mxu0 %v8111
      %8212 = vmatmul.bf16.gmra.mxu0 %v2474
      %v8213 = vpop.f32.mrf.mxu0
      %v8214 = vadd.f32 0.0, %v8213
      %v8215 = vpop.f32.mrf.mxu0
      %v8216 = vadd.f32 0.0, %v8215
      %8217 = vdwg.mxu0
      %8218 = vmatpush.bf16.msra.mxu0 %v8147
      %8219 = vmatpush.bf16.msra.mxu0 %v8142
      %8220 = vmatpush.bf16.msra.mxu0 %v8137
      %8221 = vmatpush.bf16.msra.mxu0 %v8132
      %8222 = vmatpush.bf16.msra.mxu0 %v8127
      %8223 = vmatpush.bf16.msra.mxu0 %v8122
      %8224 = vmatpush.bf16.msra.mxu0 %v8117
      %8225 = vmatpush.bf16.msra.mxu0 %v8112
      %8226 = vmatmul.bf16.gmra.mxu0 %v2474
      %v8227 = vpop.f32.mrf.mxu0
      %v8228 = vadd.f32 0.0, %v8227
      %v8229 = vpop.f32.mrf.mxu0
      %v8230 = vadd.f32 0.0, %v8229
      %8231 = vdwg.mxu0
      %8232 = vmatpush.bf16.msra.mxu0 %v8148
      %8233 = vmatpush.bf16.msra.mxu0 %v8143
      %8234 = vmatpush.bf16.msra.mxu0 %v8138
      %8235 = vmatpush.bf16.msra.mxu0 %v8133
      %8236 = vmatpush.bf16.msra.mxu0 %v8128
      %8237 = vmatpush.bf16.msra.mxu0 %v8123
      %8238 = vmatpush.bf16.msra.mxu0 %v8118
      %8239 = vmatpush.bf16.msra.mxu0 %v8113
      %8240 = vmatmul.bf16.gmra.mxu0 %v2474
      %v8241 = vpop.f32.mrf.mxu0
      %v8242 = vadd.f32 0.0, %v8241
      %v8243 = vpop.f32.mrf.mxu0
      %v8244 = vadd.f32 0.0, %v8243
      %8245 = vdwg.mxu0
      %8246 = vmatpush.bf16.msra.mxu0 %v8149
      %8247 = vmatpush.bf16.msra.mxu0 %v8144
      %8248 = vmatpush.bf16.msra.mxu0 %v8139
      %8249 = vmatpush.bf16.msra.mxu0 %v8134
      %8250 = vmatpush.bf16.msra.mxu0 %v8129
      %8251 = vmatpush.bf16.msra.mxu0 %v8124
      %8252 = vmatpush.bf16.msra.mxu0 %v8119
      %8253 = vmatpush.bf16.msra.mxu0 %v8114
      %8254 = vmatmul.bf16.gmra.mxu0 %v2474
      %v8255 = vpop.f32.mrf.mxu0
      %v8256 = vadd.f32 0.0, %v8255
      %v8257 = vpop.f32.mrf.mxu0
      %v8258 = vadd.f32 0.0, %v8257
      %8259 = vdwg.mxu0
      %v8452 = vunpack.c.l.b16 %v7742
      %v8453 = vunpack.c.h.b16 %v7742
      %v8454 = vunpack.c.l.b16 %v7743
      %v8455 = vunpack.c.h.b16 %v7743
      %v8456 = vunpack.c.l.b16 %v7744
      %v8457 = vunpack.c.l.b16 %v7745
      %v8458 = vunpack.c.h.b16 %v7745
      %v8459 = vunpack.c.l.b16 %v7746
      %v8460 = vunpack.c.h.b16 %v7746
      %v8461 = vunpack.c.l.b16 %v7747
      %v8462 = vunpack.c.l.b16 %v7748
      %v8463 = vunpack.c.h.b16 %v7748
      %v8464 = vunpack.c.l.b16 %v7749
      %v8465 = vunpack.c.h.b16 %v7749
      %v8466 = vunpack.c.l.b16 %v7750
      %v8467 = vunpack.c.l.b16 %v7751
      %v8468 = vunpack.c.h.b16 %v7751
      %v8469 = vunpack.c.l.b16 %v7752
      %v8470 = vunpack.c.h.b16 %v7752
      %v8471 = vunpack.c.l.b16 %v7753
      %v8472 = vunpack.c.l.b16 %v7754
      %v8473 = vunpack.c.h.b16 %v7754
      %v8474 = vunpack.c.l.b16 %v7755
      %v8475 = vunpack.c.h.b16 %v7755
      %v8476 = vunpack.c.l.b16 %v7756
      %v8477 = vunpack.c.l.b16 %v7757
      %v8478 = vunpack.c.h.b16 %v7757
      %v8479 = vunpack.c.l.b16 %v7758
      %v8480 = vunpack.c.h.b16 %v7758
      %v8481 = vunpack.c.l.b16 %v7759
      %v8482 = vunpack.c.l.b16 %v7760
      %v8483 = vunpack.c.h.b16 %v7760
      %v8484 = vunpack.c.l.b16 %v7761
      %v8485 = vunpack.c.h.b16 %v7761
      %v8486 = vunpack.c.l.b16 %v7762
      %v8487 = vunpack.c.l.b16 %v7763
      %v8488 = vunpack.c.h.b16 %v7763
      %v8489 = vunpack.c.l.b16 %v7764
      %v8490 = vunpack.c.h.b16 %v7764
      %v8491 = vunpack.c.l.b16 %v7765
      %v8492 = vunpack.c.l.b16 %v7766
      %v8493 = vunpack.c.h.b16 %v7766
      %v8494 = vunpack.c.l.b16 %v7767
      %v8495 = vunpack.c.h.b16 %v7767
      %v8496 = vunpack.c.l.b16 %v7768
      %v8497 = vunpack.c.l.b16 %v7769
      %v8498 = vunpack.c.h.b16 %v7769
      %v8499 = vunpack.c.l.b16 %v7770
      %v8500 = vunpack.c.h.b16 %v7770
      %v8501 = vunpack.c.l.b16 %v7771
      %v8502 = vunpack.c.l.b16 %v7772
      %v8503 = vunpack.c.h.b16 %v7772
      %v8504 = vunpack.c.l.b16 %v7773
      %v8505 = vunpack.c.h.b16 %v7773
      %v8506 = vunpack.c.l.b16 %v7774
      %v8507 = vunpack.c.l.b16 %v7775
      %v8508 = vunpack.c.h.b16 %v7775
      %v8509 = vunpack.c.l.b16 %v7776
      %v8510 = vunpack.c.h.b16 %v7776
      %v8511 = vunpack.c.l.b16 %v7777
      %v8512 = vunpack.c.l.b16 %v7778
      %v8513 = vunpack.c.h.b16 %v7778
      %v8514 = vunpack.c.l.b16 %v7779
      %v8515 = vunpack.c.h.b16 %v7779
      %v8516 = vunpack.c.l.b16 %v7780
      %v8517 = vunpack.c.l.b16 %v7781
      %v8518 = vunpack.c.h.b16 %v7781
      %v8519 = vunpack.c.l.b16 %v7782
      %v8520 = vunpack.c.h.b16 %v7782
      %v8521 = vunpack.c.l.b16 %v7783
      %v8522 = vunpack.c.l.b16 %v7784
      %v8523 = vunpack.c.h.b16 %v7784
      %v8524 = vunpack.c.l.b16 %v7785
      %v8525 = vunpack.c.h.b16 %v7785
      %v8526 = vunpack.c.l.b16 %v7786
      %v8527 = vunpack.c.l.b16 %v7787
      %v8528 = vunpack.c.h.b16 %v7787
      %v8529 = vunpack.c.l.b16 %v7788
      %v8530 = vunpack.c.h.b16 %v7788
      %v8531 = vunpack.c.l.b16 %v7789
      %v8532 = vunpack.c.l.b16 %v7790
      %v8533 = vunpack.c.h.b16 %v7790
      %v8534 = vunpack.c.l.b16 %v7791
      %v8535 = vunpack.c.h.b16 %v7791
      %v8536 = vunpack.c.l.b16 %v7792
      %v8537 = vunpack.c.l.b16 %v7793
      %v8538 = vunpack.c.h.b16 %v7793
      %v8539 = vunpack.c.l.b16 %v7794
      %v8540 = vunpack.c.h.b16 %v7794
      %v8541 = vunpack.c.l.b16 %v7795
      %v8542 = vunpack.c.l.b16 %v7796
      %v8543 = vunpack.c.h.b16 %v7796
      %v8544 = vunpack.c.l.b16 %v7797
      %v8545 = vunpack.c.h.b16 %v7797
      %v8546 = vunpack.c.l.b16 %v7798
      %v8547 = vunpack.c.l.b16 %v7799
      %v8548 = vunpack.c.h.b16 %v7799
      %v8549 = vunpack.c.l.b16 %v7800
      %v8550 = vunpack.c.h.b16 %v7800
      %v8551 = vunpack.c.l.b16 %v7801
      %v8552 = vunpack.c.l.b16 %v7802
      %v8553 = vunpack.c.h.b16 %v7802
      %v8554 = vunpack.c.l.b16 %v7803
      %v8555 = vunpack.c.h.b16 %v7803
      %v8556 = vunpack.c.l.b16 %v7804
      %v8557 = vunpack.c.l.b16 %v7805
      %v8558 = vunpack.c.h.b16 %v7805
      %v8559 = vunpack.c.l.b16 %v7806
      %v8560 = vunpack.c.h.b16 %v7806
      %v8561 = vunpack.c.l.b16 %v7807
      %v8562 = vunpack.c.l.b16 %v7808
      %v8563 = vunpack.c.h.b16 %v7808
      %v8564 = vunpack.c.l.b16 %v7809
      %v8565 = vunpack.c.h.b16 %v7809
      %v8566 = vunpack.c.l.b16 %v7810
      %v8567 = vunpack.c.l.b16 %v7811
      %v8568 = vunpack.c.h.b16 %v7811
      %v8569 = vunpack.c.l.b16 %v7812
      %v8570 = vunpack.c.h.b16 %v7812
      %v8571 = vunpack.c.l.b16 %v7813
      %v8572 = vunpack.c.l.b16 %v7814
      %v8573 = vunpack.c.h.b16 %v7814
      %v8574 = vunpack.c.l.b16 %v7815
      %v8575 = vunpack.c.h.b16 %v7815
      %v8576 = vunpack.c.l.b16 %v7816
      %v8577 = vunpack.c.l.b16 %v7817
      %v8578 = vunpack.c.h.b16 %v7817
      %v8579 = vunpack.c.l.b16 %v7818
      %v8580 = vunpack.c.h.b16 %v7818
      %v8581 = vunpack.c.l.b16 %v7819
      %v8582 = vunpack.c.l.b16 %v7820
      %v8583 = vunpack.c.h.b16 %v7820
      %v8584 = vunpack.c.l.b16 %v7821
      %v8585 = vunpack.c.h.b16 %v7821
      %v8586 = vunpack.c.l.b16 %v7822
      %v8587 = vunpack.c.l.b16 %v7823
      %v8588 = vunpack.c.h.b16 %v7823
      %v8589 = vunpack.c.l.b16 %v7824
      %v8590 = vunpack.c.h.b16 %v7824
      %v8591 = vunpack.c.l.b16 %v7825
      %v8592 = vunpack.c.l.b16 %v7826
      %v8593 = vunpack.c.h.b16 %v7826
      %v8594 = vunpack.c.l.b16 %v7827
      %v8595 = vunpack.c.h.b16 %v7827
      %v8596 = vunpack.c.l.b16 %v7828
      %v8597 = vunpack.c.l.b16 %v7829
      %v8598 = vunpack.c.h.b16 %v7829
      %v8599 = vunpack.c.l.b16 %v7830
      %v8600 = vunpack.c.h.b16 %v7830
      %v8601 = vunpack.c.l.b16 %v7831
      %v8602 = vunpack.c.l.b16 %v7832
      %v8603 = vunpack.c.h.b16 %v7832
      %v8604 = vunpack.c.l.b16 %v7833
      %v8605 = vunpack.c.h.b16 %v7833
      %v8606 = vunpack.c.l.b16 %v7834
      %v8607 = vunpack.c.l.b16 %v7835
      %v8608 = vunpack.c.h.b16 %v7835
      %v8609 = vunpack.c.l.b16 %v7836
      %v8610 = vunpack.c.h.b16 %v7836
      %v8611 = vunpack.c.l.b16 %v7837
      %v8612 = vunpack.c.l.b16 %v7838
      %v8613 = vunpack.c.h.b16 %v7838
      %v8614 = vunpack.c.l.b16 %v7839
      %v8615 = vunpack.c.h.b16 %v7839
      %v8616 = vunpack.c.l.b16 %v7840
      %v8617 = vunpack.c.l.b16 %v7841
      %v8618 = vunpack.c.h.b16 %v7841
      %v8619 = vunpack.c.l.b16 %v7842
      %v8620 = vunpack.c.h.b16 %v7842
      %v8621 = vunpack.c.l.b16 %v7843
      %v8622 = vunpack.c.l.b16 %v7844
      %v8623 = vunpack.c.h.b16 %v7844
      %v8624 = vunpack.c.l.b16 %v7845
      %v8625 = vunpack.c.h.b16 %v7845
      %v8626 = vunpack.c.l.b16 %v7846
      %v8627 = vunpack.c.l.b16 %v7847
      %v8628 = vunpack.c.h.b16 %v7847
      %v8629 = vunpack.c.l.b16 %v7848
      %v8630 = vunpack.c.h.b16 %v7848
      %v8631 = vunpack.c.l.b16 %v7849
      %v8632 = vunpack.c.l.b16 %v7850
      %v8633 = vunpack.c.h.b16 %v7850
      %v8634 = vunpack.c.l.b16 %v7851
      %v8635 = vunpack.c.h.b16 %v7851
      %v8636 = vunpack.c.l.b16 %v7852
      %v8637 = vunpack.c.l.b16 %v7853
      %v8638 = vunpack.c.h.b16 %v7853
      %v8639 = vunpack.c.l.b16 %v7854
      %v8640 = vunpack.c.h.b16 %v7854
      %v8641 = vunpack.c.l.b16 %v7855
      %v8642 = vunpack.c.l.b16 %v7856
      %v8643 = vunpack.c.h.b16 %v7856
      %v8644 = vunpack.c.l.b16 %v7857
      %v8645 = vunpack.c.h.b16 %v7857
      %v8646 = vunpack.c.l.b16 %v7858
      %v8647 = vunpack.c.l.b16 %v7859
      %v8648 = vunpack.c.h.b16 %v7859
      %v8649 = vunpack.c.l.b16 %v7860
      %v8650 = vunpack.c.h.b16 %v7860
      %v8651 = vunpack.c.l.b16 %v7861
      %v8652 = vunpack.c.l.b16 %v7862
      %v8653 = vunpack.c.h.b16 %v7862
      %v8654 = vunpack.c.l.b16 %v7863
      %v8655 = vunpack.c.h.b16 %v7863
      %v8656 = vunpack.c.l.b16 %v7864
      %v8657 = vunpack.c.l.b16 %v7865
      %v8658 = vunpack.c.h.b16 %v7865
      %v8659 = vunpack.c.l.b16 %v7866
      %v8660 = vunpack.c.h.b16 %v7866
      %v8661 = vunpack.c.l.b16 %v7867
      %v8662 = vunpack.c.l.b16 %v7868
      %v8663 = vunpack.c.h.b16 %v7868
      %v8664 = vunpack.c.l.b16 %v7869
      %v8665 = vunpack.c.h.b16 %v7869
      %v8666 = vunpack.c.l.b16 %v7870
      %v8667 = vunpack.c.l.b16 %v7871
      %v8668 = vunpack.c.h.b16 %v7871
      %v8669 = vunpack.c.l.b16 %v7872
      %v8670 = vunpack.c.h.b16 %v7872
      %v8671 = vunpack.c.l.b16 %v7873
      %v8672 = vunpack.c.l.b16 %v7874
      %v8673 = vunpack.c.h.b16 %v7874
      %v8674 = vunpack.c.l.b16 %v7875
      %v8675 = vunpack.c.h.b16 %v7875
      %v8676 = vunpack.c.l.b16 %v7876
      %v8677 = vunpack.c.l.b16 %v7877
      %v8678 = vunpack.c.h.b16 %v7877
      %v8679 = vunpack.c.l.b16 %v7878
      %v8680 = vunpack.c.h.b16 %v7878
      %v8681 = vunpack.c.l.b16 %v7879
      %v8682 = vunpack.c.l.b16 %v7880
      %v8683 = vunpack.c.h.b16 %v7880
      %v8684 = vunpack.c.l.b16 %v7881
      %v8685 = vunpack.c.h.b16 %v7881
      %v8686 = vunpack.c.l.b16 %v7882
      %v8687 = vunpack.c.l.b16 %v7883
      %v8688 = vunpack.c.h.b16 %v7883
      %v8689 = vunpack.c.l.b16 %v7884
      %v8690 = vunpack.c.h.b16 %v7884
      %v8691 = vunpack.c.l.b16 %v7885
      %v8692 = vunpack.c.l.b16 %v7886
      %v8693 = vunpack.c.h.b16 %v7886
      %v8694 = vunpack.c.l.b16 %v7887
      %v8695 = vunpack.c.h.b16 %v7887
      %v8696 = vunpack.c.l.b16 %v7888
      %v8697 = vunpack.c.l.b16 %v7889
      %v8698 = vunpack.c.h.b16 %v7889
      %v8699 = vunpack.c.l.b16 %v7890
      %v8700 = vunpack.c.h.b16 %v7890
      %v8701 = vunpack.c.l.b16 %v7891
      %v8702 = vunpack.c.l.b16 %v7892
      %v8703 = vunpack.c.h.b16 %v7892
      %v8704 = vunpack.c.l.b16 %v7893
      %v8705 = vunpack.c.h.b16 %v7893
      %v8706 = vunpack.c.l.b16 %v7894
      %v8707 = vunpack.c.l.b16 %v7895
      %v8708 = vunpack.c.h.b16 %v7895
      %v8709 = vunpack.c.l.b16 %v7896
      %v8710 = vunpack.c.h.b16 %v7896
      %v8711 = vunpack.c.l.b16 %v7897
      %v8712 = vunpack.c.l.b16 %v7898
      %v8713 = vunpack.c.h.b16 %v7898
      %v8714 = vunpack.c.l.b16 %v7899
      %v8715 = vunpack.c.h.b16 %v7899
      %v8716 = vunpack.c.l.b16 %v7900
      %v8717 = vunpack.c.l.b16 %v7901
      %v8718 = vunpack.c.h.b16 %v7901
      %v8719 = vunpack.c.l.b16 %v7902
      %v8720 = vunpack.c.h.b16 %v7902
      %v8721 = vunpack.c.l.b16 %v7903
      %v8722 = vunpack.c.l.b16 %v7904
      %v8723 = vunpack.c.h.b16 %v7904
      %v8724 = vunpack.c.l.b16 %v7905
      %v8725 = vunpack.c.h.b16 %v7905
      %v8726 = vunpack.c.l.b16 %v7906
      %v8727 = vunpack.c.l.b16 %v7907
      %v8728 = vunpack.c.h.b16 %v7907
      %v8729 = vunpack.c.l.b16 %v7908
      %v8730 = vunpack.c.h.b16 %v7908
      %v8731 = vunpack.c.l.b16 %v7909
      %v8732 = vunpack.c.l.b16 %v7910
      %v8733 = vunpack.c.h.b16 %v7910
      %v8734 = vunpack.c.l.b16 %v7911
      %v8735 = vunpack.c.h.b16 %v7911
      %v8736 = vunpack.c.l.b16 %v7912
      %v8737 = vunpack.c.l.b16 %v7913
      %v8738 = vunpack.c.h.b16 %v7913
      %v8739 = vunpack.c.l.b16 %v7914
      %v8740 = vunpack.c.h.b16 %v7914
      %v8741 = vunpack.c.l.b16 %v7915
      %v8742 = vunpack.c.l.b16 %v7916
      %v8743 = vunpack.c.h.b16 %v7916
      %v8744 = vunpack.c.l.b16 %v7917
      %v8745 = vunpack.c.h.b16 %v7917
      %v8746 = vunpack.c.l.b16 %v7918
      %v8747 = vunpack.c.l.b16 %v7919
      %v8748 = vunpack.c.h.b16 %v7919
      %v8749 = vunpack.c.l.b16 %v7920
      %v8750 = vunpack.c.h.b16 %v7920
      %v8751 = vunpack.c.l.b16 %v7921
      %v8752 = vunpack.c.l.b16 %v7922
      %v8753 = vunpack.c.h.b16 %v7922
      %v8754 = vunpack.c.l.b16 %v7923
      %v8755 = vunpack.c.h.b16 %v7923
      %v8756 = vunpack.c.l.b16 %v7924
      %v8757 = vunpack.c.l.b16 %v7925
      %v8758 = vunpack.c.h.b16 %v7925
      %v8759 = vunpack.c.l.b16 %v7926
      %v8760 = vunpack.c.h.b16 %v7926
      %v8761 = vunpack.c.l.b16 %v7927
      %v8762 = vunpack.c.l.b16 %v7928
      %v8763 = vunpack.c.h.b16 %v7928
      %v8764 = vunpack.c.l.b16 %v7929
      %v8765 = vunpack.c.h.b16 %v7929
      %v8766 = vunpack.c.l.b16 %v7930
      %v8767 = vunpack.c.l.b16 %v7931
      %v8768 = vunpack.c.h.b16 %v7931
      %v8769 = vunpack.c.l.b16 %v7932
      %v8770 = vunpack.c.h.b16 %v7932
      %v8771 = vunpack.c.l.b16 %v7933
      %v8772 = vpack.c.b16 %v8457, %v8452
      %v8773 = vpack.c.b16 %v8458, %v8453
      %v8774 = vpack.c.b16 %v8459, %v8454
      %v8775 = vpack.c.b16 %v8460, %v8455
      %v8776 = vpack.c.b16 %v8461, %v8456
      %v8777 = vpack.c.b16 %v8467, %v8462
      %v8778 = vpack.c.b16 %v8468, %v8463
      %v8779 = vpack.c.b16 %v8469, %v8464
      %v8780 = vpack.c.b16 %v8470, %v8465
      %v8781 = vpack.c.b16 %v8471, %v8466
      %v8782 = vpack.c.b16 %v8477, %v8472
      %v8783 = vpack.c.b16 %v8478, %v8473
      %v8784 = vpack.c.b16 %v8479, %v8474
      %v8785 = vpack.c.b16 %v8480, %v8475
      %v8786 = vpack.c.b16 %v8481, %v8476
      %v8787 = vpack.c.b16 %v8487, %v8482
      %v8788 = vpack.c.b16 %v8488, %v8483
      %v8789 = vpack.c.b16 %v8489, %v8484
      %v8790 = vpack.c.b16 %v8490, %v8485
      %v8791 = vpack.c.b16 %v8491, %v8486
      %v8792 = vpack.c.b16 %v8497, %v8492
      %v8793 = vpack.c.b16 %v8498, %v8493
      %v8794 = vpack.c.b16 %v8499, %v8494
      %v8795 = vpack.c.b16 %v8500, %v8495
      %v8796 = vpack.c.b16 %v8501, %v8496
      %v8797 = vpack.c.b16 %v8507, %v8502
      %v8798 = vpack.c.b16 %v8508, %v8503
      %v8799 = vpack.c.b16 %v8509, %v8504
      %v8800 = vpack.c.b16 %v8510, %v8505
      %v8801 = vpack.c.b16 %v8511, %v8506
      %v8802 = vpack.c.b16 %v8517, %v8512
      %v8803 = vpack.c.b16 %v8518, %v8513
      %v8804 = vpack.c.b16 %v8519, %v8514
      %v8805 = vpack.c.b16 %v8520, %v8515
      %v8806 = vpack.c.b16 %v8521, %v8516
      %v8807 = vpack.c.b16 %v8527, %v8522
      %v8808 = vpack.c.b16 %v8528, %v8523
      %v8809 = vpack.c.b16 %v8529, %v8524
      %v8810 = vpack.c.b16 %v8530, %v8525
      %v8811 = vpack.c.b16 %v8531, %v8526
      %v8812 = vpack.c.b16 %v8537, %v8532
      %v8813 = vpack.c.b16 %v8538, %v8533
      %v8814 = vpack.c.b16 %v8539, %v8534
      %v8815 = vpack.c.b16 %v8540, %v8535
      %v8816 = vpack.c.b16 %v8541, %v8536
      %v8817 = vpack.c.b16 %v8547, %v8542
      %v8818 = vpack.c.b16 %v8548, %v8543
      %v8819 = vpack.c.b16 %v8549, %v8544
      %v8820 = vpack.c.b16 %v8550, %v8545
      %v8821 = vpack.c.b16 %v8551, %v8546
      %v8822 = vpack.c.b16 %v8557, %v8552
      %v8823 = vpack.c.b16 %v8558, %v8553
      %v8824 = vpack.c.b16 %v8559, %v8554
      %v8825 = vpack.c.b16 %v8560, %v8555
      %v8826 = vpack.c.b16 %v8561, %v8556
      %v8827 = vpack.c.b16 %v8567, %v8562
      %v8828 = vpack.c.b16 %v8568, %v8563
      %v8829 = vpack.c.b16 %v8569, %v8564
      %v8830 = vpack.c.b16 %v8570, %v8565
      %v8831 = vpack.c.b16 %v8571, %v8566
      %v8832 = vpack.c.b16 %v8577, %v8572
      %v8833 = vpack.c.b16 %v8578, %v8573
      %v8834 = vpack.c.b16 %v8579, %v8574
      %v8835 = vpack.c.b16 %v8580, %v8575
      %v8836 = vpack.c.b16 %v8581, %v8576
      %v8837 = vpack.c.b16 %v8587, %v8582
      %v8838 = vpack.c.b16 %v8588, %v8583
      %v8839 = vpack.c.b16 %v8589, %v8584
      %v8840 = vpack.c.b16 %v8590, %v8585
      %v8841 = vpack.c.b16 %v8591, %v8586
      %v8842 = vpack.c.b16 %v8597, %v8592
      %v8843 = vpack.c.b16 %v8598, %v8593
      %v8844 = vpack.c.b16 %v8599, %v8594
      %v8845 = vpack.c.b16 %v8600, %v8595
      %v8846 = vpack.c.b16 %v8601, %v8596
      %v8847 = vpack.c.b16 %v8607, %v8602
      %v8848 = vpack.c.b16 %v8608, %v8603
      %v8849 = vpack.c.b16 %v8609, %v8604
      %v8850 = vpack.c.b16 %v8610, %v8605
      %v8851 = vpack.c.b16 %v8611, %v8606
      %v8852 = vpack.c.b16 %v8617, %v8612
      %v8853 = vpack.c.b16 %v8618, %v8613
      %v8854 = vpack.c.b16 %v8619, %v8614
      %v8855 = vpack.c.b16 %v8620, %v8615
      %v8856 = vpack.c.b16 %v8621, %v8616
      %v8857 = vpack.c.b16 %v8627, %v8622
      %v8858 = vpack.c.b16 %v8628, %v8623
      %v8859 = vpack.c.b16 %v8629, %v8624
      %v8860 = vpack.c.b16 %v8630, %v8625
      %v8861 = vpack.c.b16 %v8631, %v8626
      %v8862 = vpack.c.b16 %v8637, %v8632
      %v8863 = vpack.c.b16 %v8638, %v8633
      %v8864 = vpack.c.b16 %v8639, %v8634
      %v8865 = vpack.c.b16 %v8640, %v8635
      %v8866 = vpack.c.b16 %v8641, %v8636
      %v8867 = vpack.c.b16 %v8647, %v8642
      %v8868 = vpack.c.b16 %v8648, %v8643
      %v8869 = vpack.c.b16 %v8649, %v8644
      %v8870 = vpack.c.b16 %v8650, %v8645
      %v8871 = vpack.c.b16 %v8651, %v8646
      %v8872 = vpack.c.b16 %v8657, %v8652
      %v8873 = vpack.c.b16 %v8658, %v8653
      %v8874 = vpack.c.b16 %v8659, %v8654
      %v8875 = vpack.c.b16 %v8660, %v8655
      %v8876 = vpack.c.b16 %v8661, %v8656
      %v8877 = vpack.c.b16 %v8667, %v8662
      %v8878 = vpack.c.b16 %v8668, %v8663
      %v8879 = vpack.c.b16 %v8669, %v8664
      %v8880 = vpack.c.b16 %v8670, %v8665
      %v8881 = vpack.c.b16 %v8671, %v8666
      %v8882 = vpack.c.b16 %v8677, %v8672
      %v8883 = vpack.c.b16 %v8678, %v8673
      %v8884 = vpack.c.b16 %v8679, %v8674
      %v8885 = vpack.c.b16 %v8680, %v8675
      %v8886 = vpack.c.b16 %v8681, %v8676
      %v8887 = vpack.c.b16 %v8687, %v8682
      %v8888 = vpack.c.b16 %v8688, %v8683
      %v8889 = vpack.c.b16 %v8689, %v8684
      %v8890 = vpack.c.b16 %v8690, %v8685
      %v8891 = vpack.c.b16 %v8691, %v8686
      %v8892 = vpack.c.b16 %v8697, %v8692
      %v8893 = vpack.c.b16 %v8698, %v8693
      %v8894 = vpack.c.b16 %v8699, %v8694
      %v8895 = vpack.c.b16 %v8700, %v8695
      %v8896 = vpack.c.b16 %v8701, %v8696
      %v8897 = vpack.c.b16 %v8707, %v8702
      %v8898 = vpack.c.b16 %v8708, %v8703
      %v8899 = vpack.c.b16 %v8709, %v8704
      %v8900 = vpack.c.b16 %v8710, %v8705
      %v8901 = vpack.c.b16 %v8711, %v8706
      %v8902 = vpack.c.b16 %v8717, %v8712
      %v8903 = vpack.c.b16 %v8718, %v8713
      %v8904 = vpack.c.b16 %v8719, %v8714
      %v8905 = vpack.c.b16 %v8720, %v8715
      %v8906 = vpack.c.b16 %v8721, %v8716
      %v8907 = vpack.c.b16 %v8727, %v8722
      %v8908 = vpack.c.b16 %v8728, %v8723
      %v8909 = vpack.c.b16 %v8729, %v8724
      %v8910 = vpack.c.b16 %v8730, %v8725
      %v8911 = vpack.c.b16 %v8731, %v8726
      %v8912 = vpack.c.b16 %v8737, %v8732
      %v8913 = vpack.c.b16 %v8738, %v8733
      %v8914 = vpack.c.b16 %v8739, %v8734
      %v8915 = vpack.c.b16 %v8740, %v8735
      %v8916 = vpack.c.b16 %v8741, %v8736
      %v8917 = vpack.c.b16 %v8747, %v8742
      %v8918 = vpack.c.b16 %v8748, %v8743
      %v8919 = vpack.c.b16 %v8749, %v8744
      %v8920 = vpack.c.b16 %v8750, %v8745
      %v8921 = vpack.c.b16 %v8751, %v8746
      %v8922 = vpack.c.b16 %v8757, %v8752
      %v8923 = vpack.c.b16 %v8758, %v8753
      %v8924 = vpack.c.b16 %v8759, %v8754
      %v8925 = vpack.c.b16 %v8760, %v8755
      %v8926 = vpack.c.b16 %v8761, %v8756
      %v8927 = vpack.c.b16 %v8767, %v8762
      %v8928 = vpack.c.b16 %v8768, %v8763
      %v8929 = vpack.c.b16 %v8769, %v8764
      %v8930 = vpack.c.b16 %v8770, %v8765
      %v8931 = vpack.c.b16 %v8771, %v8766
      %9092 = vmatpush.bf16.msra.mxu0 %v8807
      %9093 = vmatpush.bf16.msra.mxu0 %v8802
      %9094 = vmatpush.bf16.msra.mxu0 %v8797
      %9095 = vmatpush.bf16.msra.mxu0 %v8792
      %9096 = vmatpush.bf16.msra.mxu0 %v8787
      %9097 = vmatpush.bf16.msra.mxu0 %v8782
      %9098 = vmatpush.bf16.msra.mxu0 %v8777
      %9099 = vmatpush.bf16.msra.mxu0 %v8772
      %9100 = vmatmul.bf16.gmra.mxu0 %v2224
      %v9101 = vpop.f32.mrf.mxu0
      %v9102 = vadd.f32 %v8200, %v9101
      %v9103 = vpop.f32.mrf.mxu0
      %v9104 = vadd.f32 %v8202, %v9103
      %9105 = vdwg.mxu0
      %9106 = vmatpush.bf16.msra.mxu0 %v8847
      %9107 = vmatpush.bf16.msra.mxu0 %v8842
      %9108 = vmatpush.bf16.msra.mxu0 %v8837
      %9109 = vmatpush.bf16.msra.mxu0 %v8832
      %9110 = vmatpush.bf16.msra.mxu0 %v8827
      %9111 = vmatpush.bf16.msra.mxu0 %v8822
      %9112 = vmatpush.bf16.msra.mxu0 %v8817
      %9113 = vmatpush.bf16.msra.mxu0 %v8812
      %9114 = vmatmul.bf16.gmra.mxu0 %v2225
      %v9115 = vpop.f32.mrf.mxu0
      %v9116 = vadd.f32 %v9102, %v9115
      %v9117 = vpop.f32.mrf.mxu0
      %v9118 = vadd.f32 %v9104, %v9117
      %9119 = vdwg.mxu0
      %9120 = vmatpush.bf16.msra.mxu0 %v8887
      %9121 = vmatpush.bf16.msra.mxu0 %v8882
      %9122 = vmatpush.bf16.msra.mxu0 %v8877
      %9123 = vmatpush.bf16.msra.mxu0 %v8872
      %9124 = vmatpush.bf16.msra.mxu0 %v8867
      %9125 = vmatpush.bf16.msra.mxu0 %v8862
      %9126 = vmatpush.bf16.msra.mxu0 %v8857
      %9127 = vmatpush.bf16.msra.mxu0 %v8852
      %9128 = vmatmul.bf16.gmra.mxu0 %v2226
      %v9129 = vpop.f32.mrf.mxu0
      %v9130 = vadd.f32 %v9116, %v9129
      %v9131 = vpop.f32.mrf.mxu0
      %v9132 = vadd.f32 %v9118, %v9131
      %9133 = vdwg.mxu0
      %9134 = vmatpush.bf16.msra.mxu0 %v8927
      %9135 = vmatpush.bf16.msra.mxu0 %v8922
      %9136 = vmatpush.bf16.msra.mxu0 %v8917
      %9137 = vmatpush.bf16.msra.mxu0 %v8912
      %9138 = vmatpush.bf16.msra.mxu0 %v8907
      %9139 = vmatpush.bf16.msra.mxu0 %v8902
      %9140 = vmatpush.bf16.msra.mxu0 %v8897
      %9141 = vmatpush.bf16.msra.mxu0 %v8892
      %9142 = vmatmul.bf16.gmra.mxu0 %v2227
      %v9143 = vpop.f32.mrf.mxu0
      %v9144 = vadd.f32 %v9130, %v9143
      %v9145 = vpop.f32.mrf.mxu0
      %v9146 = vadd.f32 %v9132, %v9145
      %9147 = vdwg.mxu0
      %9148 = vmatpush.bf16.msra.mxu0 %v8808
      %9149 = vmatpush.bf16.msra.mxu0 %v8803
      %9150 = vmatpush.bf16.msra.mxu0 %v8798
      %9151 = vmatpush.bf16.msra.mxu0 %v8793
      %9152 = vmatpush.bf16.msra.mxu0 %v8788
      %9153 = vmatpush.bf16.msra.mxu0 %v8783
      %9154 = vmatpush.bf16.msra.mxu0 %v8778
      %9155 = vmatpush.bf16.msra.mxu0 %v8773
      %9156 = vmatmul.bf16.gmra.mxu0 %v2224
      %v9157 = vpop.f32.mrf.mxu0
      %v9158 = vadd.f32 %v8214, %v9157
      %v9159 = vpop.f32.mrf.mxu0
      %v9160 = vadd.f32 %v8216, %v9159
      %9161 = vdwg.mxu0
      %9162 = vmatpush.bf16.msra.mxu0 %v8848
      %9163 = vmatpush.bf16.msra.mxu0 %v8843
      %9164 = vmatpush.bf16.msra.mxu0 %v8838
      %9165 = vmatpush.bf16.msra.mxu0 %v8833
      %9166 = vmatpush.bf16.msra.mxu0 %v8828
      %9167 = vmatpush.bf16.msra.mxu0 %v8823
      %9168 = vmatpush.bf16.msra.mxu0 %v8818
      %9169 = vmatpush.bf16.msra.mxu0 %v8813
      %9170 = vmatmul.bf16.gmra.mxu0 %v2225
      %v9171 = vpop.f32.mrf.mxu0
      %v9172 = vadd.f32 %v9158, %v9171
      %v9173 = vpop.f32.mrf.mxu0
      %v9174 = vadd.f32 %v9160, %v9173
      %9175 = vdwg.mxu0
      %9176 = vmatpush.bf16.msra.mxu0 %v8888
      %9177 = vmatpush.bf16.msra.mxu0 %v8883
      %9178 = vmatpush.bf16.msra.mxu0 %v8878
      %9179 = vmatpush.bf16.msra.mxu0 %v8873
      %9180 = vmatpush.bf16.msra.mxu0 %v8868
      %9181 = vmatpush.bf16.msra.mxu0 %v8863
      %9182 = vmatpush.bf16.msra.mxu0 %v8858
      %9183 = vmatpush.bf16.msra.mxu0 %v8853
      %9184 = vmatmul.bf16.gmra.mxu0 %v2226
      %v9185 = vpop.f32.mrf.mxu0
      %v9186 = vadd.f32 %v9172, %v9185
      %v9187 = vpop.f32.mrf.mxu0
      %v9188 = vadd.f32 %v9174, %v9187
      %9189 = vdwg.mxu0
      %9190 = vmatpush.bf16.msra.mxu0 %v8928
      %9191 = vmatpush.bf16.msra.mxu0 %v8923
      %9192 = vmatpush.bf16.msra.mxu0 %v8918
      %9193 = vmatpush.bf16.msra.mxu0 %v8913
      %9194 = vmatpush.bf16.msra.mxu0 %v8908
      %9195 = vmatpush.bf16.msra.mxu0 %v8903
      %9196 = vmatpush.bf16.msra.mxu0 %v8898
      %9197 = vmatpush.bf16.msra.mxu0 %v8893
      %9198 = vmatmul.bf16.gmra.mxu0 %v2227
      %v9199 = vpop.f32.mrf.mxu0
      %v9200 = vadd.f32 %v9186, %v9199
      %v9201 = vpop.f32.mrf.mxu0
      %v9202 = vadd.f32 %v9188, %v9201
      %9203 = vdwg.mxu0
      %9204 = vmatpush.bf16.msra.mxu0 %v8809
      %9205 = vmatpush.bf16.msra.mxu0 %v8804
      %9206 = vmatpush.bf16.msra.mxu0 %v8799
      %9207 = vmatpush.bf16.msra.mxu0 %v8794
      %9208 = vmatpush.bf16.msra.mxu0 %v8789
      %9209 = vmatpush.bf16.msra.mxu0 %v8784
      %9210 = vmatpush.bf16.msra.mxu0 %v8779
      %9211 = vmatpush.bf16.msra.mxu0 %v8774
      %9212 = vmatmul.bf16.gmra.mxu0 %v2224
      %v9213 = vpop.f32.mrf.mxu0
      %v9214 = vadd.f32 %v8228, %v9213
      %v9215 = vpop.f32.mrf.mxu0
      %v9216 = vadd.f32 %v8230, %v9215
      %9217 = vdwg.mxu0
      %9218 = vmatpush.bf16.msra.mxu0 %v8849
      %9219 = vmatpush.bf16.msra.mxu0 %v8844
      %9220 = vmatpush.bf16.msra.mxu0 %v8839
      %9221 = vmatpush.bf16.msra.mxu0 %v8834
      %9222 = vmatpush.bf16.msra.mxu0 %v8829
      %9223 = vmatpush.bf16.msra.mxu0 %v8824
      %9224 = vmatpush.bf16.msra.mxu0 %v8819
      %9225 = vmatpush.bf16.msra.mxu0 %v8814
      %9226 = vmatmul.bf16.gmra.mxu0 %v2225
      %v9227 = vpop.f32.mrf.mxu0
      %v9228 = vadd.f32 %v9214, %v9227
      %v9229 = vpop.f32.mrf.mxu0
      %v9230 = vadd.f32 %v9216, %v9229
      %9231 = vdwg.mxu0
      %9232 = vmatpush.bf16.msra.mxu0 %v8889
      %9233 = vmatpush.bf16.msra.mxu0 %v8884
      %9234 = vmatpush.bf16.msra.mxu0 %v8879
      %9235 = vmatpush.bf16.msra.mxu0 %v8874
      %9236 = vmatpush.bf16.msra.mxu0 %v8869
      %9237 = vmatpush.bf16.msra.mxu0 %v8864
      %9238 = vmatpush.bf16.msra.mxu0 %v8859
      %9239 = vmatpush.bf16.msra.mxu0 %v8854
      %9240 = vmatmul.bf16.gmra.mxu0 %v2226
      %v9241 = vpop.f32.mrf.mxu0
      %v9242 = vadd.f32 %v9228, %v9241
      %v9243 = vpop.f32.mrf.mxu0
      %v9244 = vadd.f32 %v9230, %v9243
      %9245 = vdwg.mxu0
      %9246 = vmatpush.bf16.msra.mxu0 %v8929
      %9247 = vmatpush.bf16.msra.mxu0 %v8924
      %9248 = vmatpush.bf16.msra.mxu0 %v8919
      %9249 = vmatpush.bf16.msra.mxu0 %v8914
      %9250 = vmatpush.bf16.msra.mxu0 %v8909
      %9251 = vmatpush.bf16.msra.mxu0 %v8904
      %9252 = vmatpush.bf16.msra.mxu0 %v8899
      %9253 = vmatpush.bf16.msra.mxu0 %v8894
      %9254 = vmatmul.bf16.gmra.mxu0 %v2227
      %v9255 = vpop.f32.mrf.mxu0
      %v9256 = vadd.f32 %v9242, %v9255
      %v9257 = vpop.f32.mrf.mxu0
      %v9258 = vadd.f32 %v9244, %v9257
      %9259 = vdwg.mxu0
      %9260 = vmatpush.bf16.msra.mxu0 %v8810
      %9261 = vmatpush.bf16.msra.mxu0 %v8805
      %9262 = vmatpush.bf16.msra.mxu0 %v8800
      %9263 = vmatpush.bf16.msra.mxu0 %v8795
      %9264 = vmatpush.bf16.msra.mxu0 %v8790
      %9265 = vmatpush.bf16.msra.mxu0 %v8785
      %9266 = vmatpush.bf16.msra.mxu0 %v8780
      %9267 = vmatpush.bf16.msra.mxu0 %v8775
      %9268 = vmatmul.bf16.gmra.mxu0 %v2224
      %v9269 = vpop.f32.mrf.mxu0
      %v9270 = vadd.f32 %v8242, %v9269
      %v9271 = vpop.f32.mrf.mxu0
      %v9272 = vadd.f32 %v8244, %v9271
      %9273 = vdwg.mxu0
      %9274 = vmatpush.bf16.msra.mxu0 %v8850
      %9275 = vmatpush.bf16.msra.mxu0 %v8845
      %9276 = vmatpush.bf16.msra.mxu0 %v8840
      %9277 = vmatpush.bf16.msra.mxu0 %v8835
      %9278 = vmatpush.bf16.msra.mxu0 %v8830
      %9279 = vmatpush.bf16.msra.mxu0 %v8825
      %9280 = vmatpush.bf16.msra.mxu0 %v8820
      %9281 = vmatpush.bf16.msra.mxu0 %v8815
      %9282 = vmatmul.bf16.gmra.mxu0 %v2225
      %v9283 = vpop.f32.mrf.mxu0
      %v9284 = vadd.f32 %v9270, %v9283
      %v9285 = vpop.f32.mrf.mxu0
      %v9286 = vadd.f32 %v9272, %v9285
      %9287 = vdwg.mxu0
      %9288 = vmatpush.bf16.msra.mxu0 %v8890
      %9289 = vmatpush.bf16.msra.mxu0 %v8885
      %9290 = vmatpush.bf16.msra.mxu0 %v8880
      %9291 = vmatpush.bf16.msra.mxu0 %v8875
      %9292 = vmatpush.bf16.msra.mxu0 %v8870
      %9293 = vmatpush.bf16.msra.mxu0 %v8865
      %9294 = vmatpush.bf16.msra.mxu0 %v8860
      %9295 = vmatpush.bf16.msra.mxu0 %v8855
      %9296 = vmatmul.bf16.gmra.mxu0 %v2226
      %v9297 = vpop.f32.mrf.mxu0
      %v9298 = vadd.f32 %v9284, %v9297
      %v9299 = vpop.f32.mrf.mxu0
      %v9300 = vadd.f32 %v9286, %v9299
      %9301 = vdwg.mxu0
      %9302 = vmatpush.bf16.msra.mxu0 %v8930
      %9303 = vmatpush.bf16.msra.mxu0 %v8925
      %9304 = vmatpush.bf16.msra.mxu0 %v8920
      %9305 = vmatpush.bf16.msra.mxu0 %v8915
      %9306 = vmatpush.bf16.msra.mxu0 %v8910
      %9307 = vmatpush.bf16.msra.mxu0 %v8905
      %9308 = vmatpush.bf16.msra.mxu0 %v8900
      %9309 = vmatpush.bf16.msra.mxu0 %v8895
      %9310 = vmatmul.bf16.gmra.mxu0 %v2227
      %v9311 = vpop.f32.mrf.mxu0
      %v9312 = vadd.f32 %v9298, %v9311
      %v9313 = vpop.f32.mrf.mxu0
      %v9314 = vadd.f32 %v9300, %v9313
      %9315 = vdwg.mxu0
      %9316 = vmatpush.bf16.msra.mxu0 %v8811
      %9317 = vmatpush.bf16.msra.mxu0 %v8806
      %9318 = vmatpush.bf16.msra.mxu0 %v8801
      %9319 = vmatpush.bf16.msra.mxu0 %v8796
      %9320 = vmatpush.bf16.msra.mxu0 %v8791
      %9321 = vmatpush.bf16.msra.mxu0 %v8786
      %9322 = vmatpush.bf16.msra.mxu0 %v8781
      %9323 = vmatpush.bf16.msra.mxu0 %v8776
      %9324 = vmatmul.bf16.gmra.mxu0 %v2224
      %v9325 = vpop.f32.mrf.mxu0
      %v9326 = vadd.f32 %v8256, %v9325
      %v9327 = vpop.f32.mrf.mxu0
      %v9328 = vadd.f32 %v8258, %v9327
      %9329 = vdwg.mxu0
      %9330 = vmatpush.bf16.msra.mxu0 %v8851
      %9331 = vmatpush.bf16.msra.mxu0 %v8846
      %9332 = vmatpush.bf16.msra.mxu0 %v8841
      %9333 = vmatpush.bf16.msra.mxu0 %v8836
      %9334 = vmatpush.bf16.msra.mxu0 %v8831
      %9335 = vmatpush.bf16.msra.mxu0 %v8826
      %9336 = vmatpush.bf16.msra.mxu0 %v8821
      %9337 = vmatpush.bf16.msra.mxu0 %v8816
      %9338 = vmatmul.bf16.gmra.mxu0 %v2225
      %v9339 = vpop.f32.mrf.mxu0
      %v9340 = vadd.f32 %v9326, %v9339
      %v9341 = vpop.f32.mrf.mxu0
      %v9342 = vadd.f32 %v9328, %v9341
      %9343 = vdwg.mxu0
      %9344 = vmatpush.bf16.msra.mxu0 %v8891
      %9345 = vmatpush.bf16.msra.mxu0 %v8886
      %9346 = vmatpush.bf16.msra.mxu0 %v8881
      %9347 = vmatpush.bf16.msra.mxu0 %v8876
      %9348 = vmatpush.bf16.msra.mxu0 %v8871
      %9349 = vmatpush.bf16.msra.mxu0 %v8866
      %9350 = vmatpush.bf16.msra.mxu0 %v8861
      %9351 = vmatpush.bf16.msra.mxu0 %v8856
      %9352 = vmatmul.bf16.gmra.mxu0 %v2226
      %v9353 = vpop.f32.mrf.mxu0
      %v9354 = vadd.f32 %v9340, %v9353
      %v9355 = vpop.f32.mrf.mxu0
      %v9356 = vadd.f32 %v9342, %v9355
      %9357 = vdwg.mxu0
      %9358 = vmatpush.bf16.msra.mxu0 %v8931
      %9359 = vmatpush.bf16.msra.mxu0 %v8926
      %9360 = vmatpush.bf16.msra.mxu0 %v8921
      %9361 = vmatpush.bf16.msra.mxu0 %v8916
      %9362 = vmatpush.bf16.msra.mxu0 %v8911
      %9363 = vmatpush.bf16.msra.mxu0 %v8906
      %9364 = vmatpush.bf16.msra.mxu0 %v8901
      %9365 = vmatpush.bf16.msra.mxu0 %v8896
      %9366 = vmatmul.bf16.gmra.mxu0 %v2227
      %v9367 = vpop.f32.mrf.mxu0
      %v9368 = vadd.f32 %v9354, %v9367
      %v9369 = vpop.f32.mrf.mxu0
      %v9370 = vadd.f32 %v9356, %v9369
      %9371 = vdwg.mxu0
      %v9372 = vld [vmem:[%s18] sm:$0xff]
      %v9373 = vld [vmem:[%s18 + $0x8] sm:$0xff]
      %v9374 = vld [vmem:[%s18 + $0x10] sm:$0xf]
      %v9375 = vld [vmem:[%s18 + $0x14] sm:$0xff]
      %v9376 = vld [vmem:[%s18 + $0x1c] sm:$0xff]
      %v9377 = vld [vmem:[%s18 + $0x24] sm:$0xf]
      %v9378 = vld [vmem:[%s18 + $0x28] sm:$0xff]
      %v9379 = vld [vmem:[%s18 + $0x30] sm:$0xff]
      %v9380 = vld [vmem:[%s18 + $0x38] sm:$0xf]
      %v9381 = vld [vmem:[%s18 + $0x3c] sm:$0xff]
      %v9382 = vld [vmem:[%s18 + $0x44] sm:$0xff]
      %v9383 = vld [vmem:[%s18 + $0x4c] sm:$0xf]
      %v9384 = vld [vmem:[%s18 + $0x50] sm:$0xff]
      %v9385 = vld [vmem:[%s18 + $0x58] sm:$0xff]
      %v9386 = vld [vmem:[%s18 + $0x60] sm:$0xf]
      %v9387 = vld [vmem:[%s18 + $0x64] sm:$0xff]
      %v9388 = vld [vmem:[%s18 + $0x6c] sm:$0xff]
      %v9389 = vld [vmem:[%s18 + $0x74] sm:$0xf]
      %v9390 = vld [vmem:[%s18 + $0x78] sm:$0xff]
      %v9391 = vld [vmem:[%s18 + $0x80] sm:$0xff]
      %v9392 = vld [vmem:[%s18 + $0x88] sm:$0xf]
      %v9393 = vld [vmem:[%s18 + $0x8c] sm:$0xff]
      %v9394 = vld [vmem:[%s18 + $0x94] sm:$0xff]
      %v9395 = vld [vmem:[%s18 + $0x9c] sm:$0xf]
      %v9396 = vld [vmem:[%s18 + $0xa0] sm:$0xff]
      %v9397 = vld [vmem:[%s18 + $0xa8] sm:$0xff]
      %v9398 = vld [vmem:[%s18 + $0xb0] sm:$0xf]
      %v9399 = vld [vmem:[%s18 + $0xb4] sm:$0xff]
      %v9400 = vld [vmem:[%s18 + $0xbc] sm:$0xff]
      %v9401 = vld [vmem:[%s18 + $0xc4] sm:$0xf]
      %v9402 = vld [vmem:[%s18 + $0xc8] sm:$0xff]
      %v9403 = vld [vmem:[%s18 + $0xd0] sm:$0xff]
      %v9404 = vld [vmem:[%s18 + $0xd8] sm:$0xf]
      %v9405 = vld [vmem:[%s18 + $0xdc] sm:$0xff]
      %v9406 = vld [vmem:[%s18 + $0xe4] sm:$0xff]
      %v9407 = vld [vmem:[%s18 + $0xec] sm:$0xf]
      %v9408 = vld [vmem:[%s18 + $0xf0] sm:$0xff]
      %v9409 = vld [vmem:[%s18 + $0xf8] sm:$0xff]
      %v9410 = vld [vmem:[%s18 + $0x100] sm:$0xf]
      %v9411 = vld [vmem:[%s18 + $0x104] sm:$0xff]
      %v9412 = vld [vmem:[%s18 + $0x10c] sm:$0xff]
      %v9413 = vld [vmem:[%s18 + $0x114] sm:$0xf]
      %v9414 = vld [vmem:[%s18 + $0x118] sm:$0xff]
      %v9415 = vld [vmem:[%s18 + $0x120] sm:$0xff]
      %v9416 = vld [vmem:[%s18 + $0x128] sm:$0xf]
      %v9417 = vld [vmem:[%s18 + $0x12c] sm:$0xff]
      %v9418 = vld [vmem:[%s18 + $0x134] sm:$0xff]
      %v9419 = vld [vmem:[%s18 + $0x13c] sm:$0xf]
      %v9420 = vld [vmem:[%s18 + $0x140] sm:$0xff]
      %v9421 = vld [vmem:[%s18 + $0x148] sm:$0xff]
      %v9422 = vld [vmem:[%s18 + $0x150] sm:$0xf]
      %v9423 = vld [vmem:[%s18 + $0x154] sm:$0xff]
      %v9424 = vld [vmem:[%s18 + $0x15c] sm:$0xff]
      %v9425 = vld [vmem:[%s18 + $0x164] sm:$0xf]
      %v9426 = vld [vmem:[%s18 + $0x168] sm:$0xff]
      %v9427 = vld [vmem:[%s18 + $0x170] sm:$0xff]
      %v9428 = vld [vmem:[%s18 + $0x178] sm:$0xf]
      %v9429 = vld [vmem:[%s18 + $0x17c] sm:$0xff]
      %v9430 = vld [vmem:[%s18 + $0x184] sm:$0xff]
      %v9431 = vld [vmem:[%s18 + $0x18c] sm:$0xf]
      %v9432 = vld [vmem:[%s18 + $0x190] sm:$0xff]
      %v9433 = vld [vmem:[%s18 + $0x198] sm:$0xff]
      %v9434 = vld [vmem:[%s18 + $0x1a0] sm:$0xf]
      %v9435 = vld [vmem:[%s18 + $0x1a4] sm:$0xff]
      %v9436 = vld [vmem:[%s18 + $0x1ac] sm:$0xff]
      %v9437 = vld [vmem:[%s18 + $0x1b4] sm:$0xf]
      %v9438 = vld [vmem:[%s18 + $0x1b8] sm:$0xff]
      %v9439 = vld [vmem:[%s18 + $0x1c0] sm:$0xff]
      %v9440 = vld [vmem:[%s18 + $0x1c8] sm:$0xf]
      %v9441 = vld [vmem:[%s18 + $0x1cc] sm:$0xff]
      %v9442 = vld [vmem:[%s18 + $0x1d4] sm:$0xff]
      %v9443 = vld [vmem:[%s18 + $0x1dc] sm:$0xf]
      %v9444 = vld [vmem:[%s18 + $0x1e0] sm:$0xff]
      %v9445 = vld [vmem:[%s18 + $0x1e8] sm:$0xff]
      %v9446 = vld [vmem:[%s18 + $0x1f0] sm:$0xf]
      %v9447 = vld [vmem:[%s18 + $0x1f4] sm:$0xff]
      %v9448 = vld [vmem:[%s18 + $0x1fc] sm:$0xff]
      %v9449 = vld [vmem:[%s18 + $0x204] sm:$0xf]
      %v9450 = vld [vmem:[%s18 + $0x208] sm:$0xff]
      %v9451 = vld [vmem:[%s18 + $0x210] sm:$0xff]
      %v9452 = vld [vmem:[%s18 + $0x218] sm:$0xf]
      %v9453 = vld [vmem:[%s18 + $0x21c] sm:$0xff]
      %v9454 = vld [vmem:[%s18 + $0x224] sm:$0xff]
      %v9455 = vld [vmem:[%s18 + $0x22c] sm:$0xf]
      %v9456 = vld [vmem:[%s18 + $0x230] sm:$0xff]
      %v9457 = vld [vmem:[%s18 + $0x238] sm:$0xff]
      %v9458 = vld [vmem:[%s18 + $0x240] sm:$0xf]
      %v9459 = vld [vmem:[%s18 + $0x244] sm:$0xff]
      %v9460 = vld [vmem:[%s18 + $0x24c] sm:$0xff]
      %v9461 = vld [vmem:[%s18 + $0x254] sm:$0xf]
      %v9462 = vld [vmem:[%s18 + $0x258] sm:$0xff]
      %v9463 = vld [vmem:[%s18 + $0x260] sm:$0xff]
      %v9464 = vld [vmem:[%s18 + $0x268] sm:$0xf]
      %v9465 = vld [vmem:[%s18 + $0x26c] sm:$0xff]
      %v9466 = vld [vmem:[%s18 + $0x274] sm:$0xff]
      %v9467 = vld [vmem:[%s18 + $0x27c] sm:$0xf]
      %v9564 = vunpack.c.l.b16 %v9372
      %v9565 = vunpack.c.h.b16 %v9372
      %v9566 = vunpack.c.l.b16 %v9373
      %v9567 = vunpack.c.h.b16 %v9373
      %v9568 = vunpack.c.l.b16 %v9374
      %v9569 = vunpack.c.l.b16 %v9375
      %v9570 = vunpack.c.h.b16 %v9375
      %v9571 = vunpack.c.l.b16 %v9376
      %v9572 = vunpack.c.h.b16 %v9376
      %v9573 = vunpack.c.l.b16 %v9377
      %v9574 = vunpack.c.l.b16 %v9378
      %v9575 = vunpack.c.h.b16 %v9378
      %v9576 = vunpack.c.l.b16 %v9379
      %v9577 = vunpack.c.h.b16 %v9379
      %v9578 = vunpack.c.l.b16 %v9380
      %v9579 = vunpack.c.l.b16 %v9381
      %v9580 = vunpack.c.h.b16 %v9381
      %v9581 = vunpack.c.l.b16 %v9382
      %v9582 = vunpack.c.h.b16 %v9382
      %v9583 = vunpack.c.l.b16 %v9383
      %v9584 = vunpack.c.l.b16 %v9384
      %v9585 = vunpack.c.h.b16 %v9384
      %v9586 = vunpack.c.l.b16 %v9385
      %v9587 = vunpack.c.h.b16 %v9385
      %v9588 = vunpack.c.l.b16 %v9386
      %v9589 = vunpack.c.l.b16 %v9387
      %v9590 = vunpack.c.h.b16 %v9387
      %v9591 = vunpack.c.l.b16 %v9388
      %v9592 = vunpack.c.h.b16 %v9388
      %v9593 = vunpack.c.l.b16 %v9389
      %v9594 = vunpack.c.l.b16 %v9390
      %v9595 = vunpack.c.h.b16 %v9390
      %v9596 = vunpack.c.l.b16 %v9391
      %v9597 = vunpack.c.h.b16 %v9391
      %v9598 = vunpack.c.l.b16 %v9392
      %v9599 = vunpack.c.l.b16 %v9393
      %v9600 = vunpack.c.h.b16 %v9393
      %v9601 = vunpack.c.l.b16 %v9394
      %v9602 = vunpack.c.h.b16 %v9394
      %v9603 = vunpack.c.l.b16 %v9395
      %v9604 = vunpack.c.l.b16 %v9396
      %v9605 = vunpack.c.h.b16 %v9396
      %v9606 = vunpack.c.l.b16 %v9397
      %v9607 = vunpack.c.h.b16 %v9397
      %v9608 = vunpack.c.l.b16 %v9398
      %v9609 = vunpack.c.l.b16 %v9399
      %v9610 = vunpack.c.h.b16 %v9399
      %v9611 = vunpack.c.l.b16 %v9400
      %v9612 = vunpack.c.h.b16 %v9400
      %v9613 = vunpack.c.l.b16 %v9401
      %v9614 = vunpack.c.l.b16 %v9402
      %v9615 = vunpack.c.h.b16 %v9402
      %v9616 = vunpack.c.l.b16 %v9403
      %v9617 = vunpack.c.h.b16 %v9403
      %v9618 = vunpack.c.l.b16 %v9404
      %v9619 = vunpack.c.l.b16 %v9405
      %v9620 = vunpack.c.h.b16 %v9405
      %v9621 = vunpack.c.l.b16 %v9406
      %v9622 = vunpack.c.h.b16 %v9406
      %v9623 = vunpack.c.l.b16 %v9407
      %v9624 = vunpack.c.l.b16 %v9408
      %v9625 = vunpack.c.h.b16 %v9408
      %v9626 = vunpack.c.l.b16 %v9409
      %v9627 = vunpack.c.h.b16 %v9409
      %v9628 = vunpack.c.l.b16 %v9410
      %v9629 = vunpack.c.l.b16 %v9411
      %v9630 = vunpack.c.h.b16 %v9411
      %v9631 = vunpack.c.l.b16 %v9412
      %v9632 = vunpack.c.h.b16 %v9412
      %v9633 = vunpack.c.l.b16 %v9413
      %v9634 = vunpack.c.l.b16 %v9414
      %v9635 = vunpack.c.h.b16 %v9414
      %v9636 = vunpack.c.l.b16 %v9415
      %v9637 = vunpack.c.h.b16 %v9415
      %v9638 = vunpack.c.l.b16 %v9416
      %v9639 = vunpack.c.l.b16 %v9417
      %v9640 = vunpack.c.h.b16 %v9417
      %v9641 = vunpack.c.l.b16 %v9418
      %v9642 = vunpack.c.h.b16 %v9418
      %v9643 = vunpack.c.l.b16 %v9419
      %v9644 = vunpack.c.l.b16 %v9420
      %v9645 = vunpack.c.h.b16 %v9420
      %v9646 = vunpack.c.l.b16 %v9421
      %v9647 = vunpack.c.h.b16 %v9421
      %v9648 = vunpack.c.l.b16 %v9422
      %v9649 = vunpack.c.l.b16 %v9423
      %v9650 = vunpack.c.h.b16 %v9423
      %v9651 = vunpack.c.l.b16 %v9424
      %v9652 = vunpack.c.h.b16 %v9424
      %v9653 = vunpack.c.l.b16 %v9425
      %v9654 = vunpack.c.l.b16 %v9426
      %v9655 = vunpack.c.h.b16 %v9426
      %v9656 = vunpack.c.l.b16 %v9427
      %v9657 = vunpack.c.h.b16 %v9427
      %v9658 = vunpack.c.l.b16 %v9428
      %v9659 = vunpack.c.l.b16 %v9429
      %v9660 = vunpack.c.h.b16 %v9429
      %v9661 = vunpack.c.l.b16 %v9430
      %v9662 = vunpack.c.h.b16 %v9430
      %v9663 = vunpack.c.l.b16 %v9431
      %v9664 = vunpack.c.l.b16 %v9432
      %v9665 = vunpack.c.h.b16 %v9432
      %v9666 = vunpack.c.l.b16 %v9433
      %v9667 = vunpack.c.h.b16 %v9433
      %v9668 = vunpack.c.l.b16 %v9434
      %v9669 = vunpack.c.l.b16 %v9435
      %v9670 = vunpack.c.h.b16 %v9435
      %v9671 = vunpack.c.l.b16 %v9436
      %v9672 = vunpack.c.h.b16 %v9436
      %v9673 = vunpack.c.l.b16 %v9437
      %v9674 = vunpack.c.l.b16 %v9438
      %v9675 = vunpack.c.h.b16 %v9438
      %v9676 = vunpack.c.l.b16 %v9439
      %v9677 = vunpack.c.h.b16 %v9439
      %v9678 = vunpack.c.l.b16 %v9440
      %v9679 = vunpack.c.l.b16 %v9441
      %v9680 = vunpack.c.h.b16 %v9441
      %v9681 = vunpack.c.l.b16 %v9442
      %v9682 = vunpack.c.h.b16 %v9442
      %v9683 = vunpack.c.l.b16 %v9443
      %v9684 = vunpack.c.l.b16 %v9444
      %v9685 = vunpack.c.h.b16 %v9444
      %v9686 = vunpack.c.l.b16 %v9445
      %v9687 = vunpack.c.h.b16 %v9445
      %v9688 = vunpack.c.l.b16 %v9446
      %v9689 = vunpack.c.l.b16 %v9447
      %v9690 = vunpack.c.h.b16 %v9447
      %v9691 = vunpack.c.l.b16 %v9448
      %v9692 = vunpack.c.h.b16 %v9448
      %v9693 = vunpack.c.l.b16 %v9449
      %v9694 = vunpack.c.l.b16 %v9450
      %v9695 = vunpack.c.h.b16 %v9450
      %v9696 = vunpack.c.l.b16 %v9451
      %v9697 = vunpack.c.h.b16 %v9451
      %v9698 = vunpack.c.l.b16 %v9452
      %v9699 = vunpack.c.l.b16 %v9453
      %v9700 = vunpack.c.h.b16 %v9453
      %v9701 = vunpack.c.l.b16 %v9454
      %v9702 = vunpack.c.h.b16 %v9454
      %v9703 = vunpack.c.l.b16 %v9455
      %v9704 = vunpack.c.l.b16 %v9456
      %v9705 = vunpack.c.h.b16 %v9456
      %v9706 = vunpack.c.l.b16 %v9457
      %v9707 = vunpack.c.h.b16 %v9457
      %v9708 = vunpack.c.l.b16 %v9458
      %v9709 = vunpack.c.l.b16 %v9459
      %v9710 = vunpack.c.h.b16 %v9459
      %v9711 = vunpack.c.l.b16 %v9460
      %v9712 = vunpack.c.h.b16 %v9460
      %v9713 = vunpack.c.l.b16 %v9461
      %v9714 = vunpack.c.l.b16 %v9462
      %v9715 = vunpack.c.h.b16 %v9462
      %v9716 = vunpack.c.l.b16 %v9463
      %v9717 = vunpack.c.h.b16 %v9463
      %v9718 = vunpack.c.l.b16 %v9464
      %v9719 = vunpack.c.l.b16 %v9465
      %v9720 = vunpack.c.h.b16 %v9465
      %v9721 = vunpack.c.l.b16 %v9466
      %v9722 = vunpack.c.h.b16 %v9466
      %v9723 = vunpack.c.l.b16 %v9467
      %v9724 = vpack.c.b16 %v9569, %v9564
      %v9725 = vpack.c.b16 %v9570, %v9565
      %v9726 = vpack.c.b16 %v9571, %v9566
      %v9727 = vpack.c.b16 %v9572, %v9567
      %v9728 = vpack.c.b16 %v9573, %v9568
      %v9729 = vpack.c.b16 %v9579, %v9574
      %v9730 = vpack.c.b16 %v9580, %v9575
      %v9731 = vpack.c.b16 %v9581, %v9576
      %v9732 = vpack.c.b16 %v9582, %v9577
      %v9733 = vpack.c.b16 %v9583, %v9578
      %v9734 = vpack.c.b16 %v9589, %v9584
      %v9735 = vpack.c.b16 %v9590, %v9585
      %v9736 = vpack.c.b16 %v9591, %v9586
      %v9737 = vpack.c.b16 %v9592, %v9587
      %v9738 = vpack.c.b16 %v9593, %v9588
      %v9739 = vpack.c.b16 %v9599, %v9594
      %v9740 = vpack.c.b16 %v9600, %v9595
      %v9741 = vpack.c.b16 %v9601, %v9596
      %v9742 = vpack.c.b16 %v9602, %v9597
      %v9743 = vpack.c.b16 %v9603, %v9598
      %v9744 = vpack.c.b16 %v9609, %v9604
      %v9745 = vpack.c.b16 %v9610, %v9605
      %v9746 = vpack.c.b16 %v9611, %v9606
      %v9747 = vpack.c.b16 %v9612, %v9607
      %v9748 = vpack.c.b16 %v9613, %v9608
      %v9749 = vpack.c.b16 %v9619, %v9614
      %v9750 = vpack.c.b16 %v9620, %v9615
      %v9751 = vpack.c.b16 %v9621, %v9616
      %v9752 = vpack.c.b16 %v9622, %v9617
      %v9753 = vpack.c.b16 %v9623, %v9618
      %v9754 = vpack.c.b16 %v9629, %v9624
      %v9755 = vpack.c.b16 %v9630, %v9625
      %v9756 = vpack.c.b16 %v9631, %v9626
      %v9757 = vpack.c.b16 %v9632, %v9627
      %v9758 = vpack.c.b16 %v9633, %v9628
      %v9759 = vpack.c.b16 %v9639, %v9634
      %v9760 = vpack.c.b16 %v9640, %v9635
      %v9761 = vpack.c.b16 %v9641, %v9636
      %v9762 = vpack.c.b16 %v9642, %v9637
      %v9763 = vpack.c.b16 %v9643, %v9638
      %v9764 = vpack.c.b16 %v9649, %v9644
      %v9765 = vpack.c.b16 %v9650, %v9645
      %v9766 = vpack.c.b16 %v9651, %v9646
      %v9767 = vpack.c.b16 %v9652, %v9647
      %v9768 = vpack.c.b16 %v9653, %v9648
      %v9769 = vpack.c.b16 %v9659, %v9654
      %v9770 = vpack.c.b16 %v9660, %v9655
      %v9771 = vpack.c.b16 %v9661, %v9656
      %v9772 = vpack.c.b16 %v9662, %v9657
      %v9773 = vpack.c.b16 %v9663, %v9658
      %v9774 = vpack.c.b16 %v9669, %v9664
      %v9775 = vpack.c.b16 %v9670, %v9665
      %v9776 = vpack.c.b16 %v9671, %v9666
      %v9777 = vpack.c.b16 %v9672, %v9667
      %v9778 = vpack.c.b16 %v9673, %v9668
      %v9779 = vpack.c.b16 %v9679, %v9674
      %v9780 = vpack.c.b16 %v9680, %v9675
      %v9781 = vpack.c.b16 %v9681, %v9676
      %v9782 = vpack.c.b16 %v9682, %v9677
      %v9783 = vpack.c.b16 %v9683, %v9678
      %v9784 = vpack.c.b16 %v9689, %v9684
      %v9785 = vpack.c.b16 %v9690, %v9685
      %v9786 = vpack.c.b16 %v9691, %v9686
      %v9787 = vpack.c.b16 %v9692, %v9687
      %v9788 = vpack.c.b16 %v9693, %v9688
      %v9789 = vpack.c.b16 %v9699, %v9694
      %v9790 = vpack.c.b16 %v9700, %v9695
      %v9791 = vpack.c.b16 %v9701, %v9696
      %v9792 = vpack.c.b16 %v9702, %v9697
      %v9793 = vpack.c.b16 %v9703, %v9698
      %v9794 = vpack.c.b16 %v9709, %v9704
      %v9795 = vpack.c.b16 %v9710, %v9705
      %v9796 = vpack.c.b16 %v9711, %v9706
      %v9797 = vpack.c.b16 %v9712, %v9707
      %v9798 = vpack.c.b16 %v9713, %v9708
      %v9799 = vpack.c.b16 %v9719, %v9714
      %v9800 = vpack.c.b16 %v9720, %v9715
      %v9801 = vpack.c.b16 %v9721, %v9716
      %v9802 = vpack.c.b16 %v9722, %v9717
      %v9803 = vpack.c.b16 %v9723, %v9718
      %9884 = vmatpush.bf16.msra.mxu0 %v9759
      %9885 = vmatpush.bf16.msra.mxu0 %v9754
      %9886 = vmatpush.bf16.msra.mxu0 %v9749
      %9887 = vmatpush.bf16.msra.mxu0 %v9744
      %9888 = vmatpush.bf16.msra.mxu0 %v9739
      %9889 = vmatpush.bf16.msra.mxu0 %v9734
      %9890 = vmatpush.bf16.msra.mxu0 %v9729
      %9891 = vmatpush.bf16.msra.mxu0 %v9724
      %9892 = vmatmul.bf16.gmra.mxu0 %v7582
      %v9893 = vpop.f32.mrf.mxu0
      %v9894 = vadd.f32 0.0, %v9893
      %v9895 = vpop.f32.mrf.mxu0
      %v9896 = vadd.f32 0.0, %v9895
      %9897 = vdwg.mxu0
      %9898 = vmatpush.bf16.msra.mxu0 %v9799
      %9899 = vmatpush.bf16.msra.mxu0 %v9794
      %9900 = vmatpush.bf16.msra.mxu0 %v9789
      %9901 = vmatpush.bf16.msra.mxu0 %v9784
      %9902 = vmatpush.bf16.msra.mxu0 %v9779
      %9903 = vmatpush.bf16.msra.mxu0 %v9774
      %9904 = vmatpush.bf16.msra.mxu0 %v9769
      %9905 = vmatpush.bf16.msra.mxu0 %v9764
      %9906 = vmatmul.bf16.gmra.mxu0 %v7583
      %v9907 = vpop.f32.mrf.mxu0
      %v9908 = vadd.f32 %v9894, %v9907
      %v9909 = vpop.f32.mrf.mxu0
      %v9910 = vadd.f32 %v9896, %v9909
      %9911 = vdwg.mxu0
      %9912 = vmatpush.bf16.msra.mxu0 %v9760
      %9913 = vmatpush.bf16.msra.mxu0 %v9755
      %9914 = vmatpush.bf16.msra.mxu0 %v9750
      %9915 = vmatpush.bf16.msra.mxu0 %v9745
      %9916 = vmatpush.bf16.msra.mxu0 %v9740
      %9917 = vmatpush.bf16.msra.mxu0 %v9735
      %9918 = vmatpush.bf16.msra.mxu0 %v9730
      %9919 = vmatpush.bf16.msra.mxu0 %v9725
      %9920 = vmatmul.bf16.gmra.mxu0 %v7582
      %v9921 = vpop.f32.mrf.mxu0
      %v9922 = vadd.f32 0.0, %v9921
      %v9923 = vpop.f32.mrf.mxu0
      %v9924 = vadd.f32 0.0, %v9923
      %9925 = vdwg.mxu0
      %9926 = vmatpush.bf16.msra.mxu0 %v9800
      %9927 = vmatpush.bf16.msra.mxu0 %v9795
      %9928 = vmatpush.bf16.msra.mxu0 %v9790
      %9929 = vmatpush.bf16.msra.mxu0 %v9785
      %9930 = vmatpush.bf16.msra.mxu0 %v9780
      %9931 = vmatpush.bf16.msra.mxu0 %v9775
      %9932 = vmatpush.bf16.msra.mxu0 %v9770
      %9933 = vmatpush.bf16.msra.mxu0 %v9765
      %9934 = vmatmul.bf16.gmra.mxu0 %v7583
      %v9935 = vpop.f32.mrf.mxu0
      %v9936 = vadd.f32 %v9922, %v9935
      %v9937 = vpop.f32.mrf.mxu0
      %v9938 = vadd.f32 %v9924, %v9937
      %9939 = vdwg.mxu0
      %9940 = vmatpush.bf16.msra.mxu0 %v9761
      %9941 = vmatpush.bf16.msra.mxu0 %v9756
      %9942 = vmatpush.bf16.msra.mxu0 %v9751
      %9943 = vmatpush.bf16.msra.mxu0 %v9746
      %9944 = vmatpush.bf16.msra.mxu0 %v9741
      %9945 = vmatpush.bf16.msra.mxu0 %v9736
      %9946 = vmatpush.bf16.msra.mxu0 %v9731
      %9947 = vmatpush.bf16.msra.mxu0 %v9726
      %9948 = vmatmul.bf16.gmra.mxu0 %v7582
      %v9949 = vpop.f32.mrf.mxu0
      %v9950 = vadd.f32 0.0, %v9949
      %v9951 = vpop.f32.mrf.mxu0
      %v9952 = vadd.f32 0.0, %v9951
      %9953 = vdwg.mxu0
      %9954 = vmatpush.bf16.msra.mxu0 %v9801
      %9955 = vmatpush.bf16.msra.mxu0 %v9796
      %9956 = vmatpush.bf16.msra.mxu0 %v9791
      %9957 = vmatpush.bf16.msra.mxu0 %v9786
      %9958 = vmatpush.bf16.msra.mxu0 %v9781
      %9959 = vmatpush.bf16.msra.mxu0 %v9776
      %9960 = vmatpush.bf16.msra.mxu0 %v9771
      %9961 = vmatpush.bf16.msra.mxu0 %v9766
      %9962 = vmatmul.bf16.gmra.mxu0 %v7583
      %v9963 = vpop.f32.mrf.mxu0
      %v9964 = vadd.f32 %v9950, %v9963
      %v9965 = vpop.f32.mrf.mxu0
      %v9966 = vadd.f32 %v9952, %v9965
      %9967 = vdwg.mxu0
      %9968 = vmatpush.bf16.msra.mxu0 %v9762
      %9969 = vmatpush.bf16.msra.mxu0 %v9757
      %9970 = vmatpush.bf16.msra.mxu0 %v9752
      %9971 = vmatpush.bf16.msra.mxu0 %v9747
      %9972 = vmatpush.bf16.msra.mxu0 %v9742
      %9973 = vmatpush.bf16.msra.mxu0 %v9737
      %9974 = vmatpush.bf16.msra.mxu0 %v9732
      %9975 = vmatpush.bf16.msra.mxu0 %v9727
      %9976 = vmatmul.bf16.gmra.mxu0 %v7582
      %v9977 = vpop.f32.mrf.mxu0
      %v9978 = vadd.f32 0.0, %v9977
      %v9979 = vpop.f32.mrf.mxu0
      %v9980 = vadd.f32 0.0, %v9979
      %9981 = vdwg.mxu0
      %9982 = vmatpush.bf16.msra.mxu0 %v9802
      %9983 = vmatpush.bf16.msra.mxu0 %v9797
      %9984 = vmatpush.bf16.msra.mxu0 %v9792
      %9985 = vmatpush.bf16.msra.mxu0 %v9787
      %9986 = vmatpush.bf16.msra.mxu0 %v9782
      %9987 = vmatpush.bf16.msra.mxu0 %v9777
      %9988 = vmatpush.bf16.msra.mxu0 %v9772
      %9989 = vmatpush.bf16.msra.mxu0 %v9767
      %9990 = vmatmul.bf16.gmra.mxu0 %v7583
      %v9991 = vpop.f32.mrf.mxu0
      %v9992 = vadd.f32 %v9978, %v9991
      %v9993 = vpop.f32.mrf.mxu0
      %v9994 = vadd.f32 %v9980, %v9993
      %9995 = vdwg.mxu0
      %9996 = vmatpush.bf16.msra.mxu0 %v9763
      %9997 = vmatpush.bf16.msra.mxu0 %v9758
      %9998 = vmatpush.bf16.msra.mxu0 %v9753
      %9999 = vmatpush.bf16.msra.mxu0 %v9748
      %10000 = vmatpush.bf16.msra.mxu0 %v9743
      %10001 = vmatpush.bf16.msra.mxu0 %v9738
      %10002 = vmatpush.bf16.msra.mxu0 %v9733
      %10003 = vmatpush.bf16.msra.mxu0 %v9728
      %10004 = vmatmul.bf16.gmra.mxu0 %v7582
      %v10005 = vpop.f32.mrf.mxu0
      %v10006 = vadd.f32 0.0, %v10005
      %v10007 = vpop.f32.mrf.mxu0
      %v10008 = vadd.f32 0.0, %v10007
      %10009 = vdwg.mxu0
      %10010 = vmatpush.bf16.msra.mxu0 %v9803
      %10011 = vmatpush.bf16.msra.mxu0 %v9798
      %10012 = vmatpush.bf16.msra.mxu0 %v9793
      %10013 = vmatpush.bf16.msra.mxu0 %v9788
      %10014 = vmatpush.bf16.msra.mxu0 %v9783
      %10015 = vmatpush.bf16.msra.mxu0 %v9778
      %10016 = vmatpush.bf16.msra.mxu0 %v9773
      %10017 = vmatpush.bf16.msra.mxu0 %v9768
      %10018 = vmatmul.bf16.gmra.mxu0 %v7583
      %v10019 = vpop.f32.mrf.mxu0
      %v10020 = vadd.f32 %v10006, %v10019
      %v10021 = vpop.f32.mrf.mxu0
      %v10022 = vadd.f32 %v10008, %v10021
      %10023 = vdwg.mxu0
      %v10024 = vadd.f32 %v9144, %v9908
      %v10025 = vadd.f32 %v9200, %v9936
      %v10026 = vadd.f32 %v9256, %v9964
      %v10027 = vadd.f32 %v9312, %v9992
      %v10028 = vadd.f32 %v9368, %v10020
      %v10029 = vadd.f32 %v9146, %v9910
      %v10030 = vadd.f32 %v9202, %v9938
      %v10031 = vadd.f32 %v9258, %v9966
      %v10032 = vadd.f32 %v9314, %v9994
      %v10033 = vadd.f32 %v9370, %v10022
      %v10034 = vpack.c.bf16 %v10029, %v10024
      %v10035 = vpack.c.bf16 %v10030, %v10025
      %v10036 = vpack.c.bf16 %v10031, %v10026
      %v10037 = vpack.c.bf16 %v10032, %v10027
      %v10038 = vpack.c.bf16 %v10033, %v10028
      %v10039 = vld [vmem:[%s16] sm:$0xff]
      %v10040 = vld [vmem:[%s16 + $0x8] sm:$0xff]
      %v10041 = vld [vmem:[%s16 + $0x10] sm:$0xff]
      %v10042 = vld [vmem:[%s16 + $0x18] sm:$0xff]
      %v10043 = vld [vmem:[%s16 + $0x20] sm:$0xff]
      %v10044 = vld [vmem:[%s16 + $0x28] sm:$0xff]
      %v10045 = vld [vmem:[%s16 + $0x30] sm:$0xff]
      %v10046 = vld [vmem:[%s16 + $0x38] sm:$0xff]
      %v10047 = vld [vmem:[%s16 + $0x40] sm:$0xff]
      %v10048 = vld [vmem:[%s16 + $0x48] sm:$0xff]
      %v10049 = vld [vmem:[%s16 + $0x50] sm:$0xff]
      %v10050 = vld [vmem:[%s16 + $0x58] sm:$0xff]
      %v10051 = vld [vmem:[%s16 + $0x60] sm:$0xff]
      %v10052 = vld [vmem:[%s16 + $0x68] sm:$0xff]
      %v10053 = vld [vmem:[%s16 + $0x70] sm:$0xff]
      %v10054 = vld [vmem:[%s16 + $0x78] sm:$0xff]
      %v10055 = vld [vmem:[%s16 + $0x80] sm:$0xff]
      %v10056 = vld [vmem:[%s16 + $0x88] sm:$0xff]
      %v10057 = vld [vmem:[%s16 + $0x90] sm:$0xff]
      %v10058 = vld [vmem:[%s16 + $0x98] sm:$0xff]
      %v10059 = vld [vmem:[%s16 + $0xa0] sm:$0xff]
      %v10060 = vld [vmem:[%s16 + $0xa8] sm:$0xff]
      %v10061 = vld [vmem:[%s16 + $0xb0] sm:$0xff]
      %v10062 = vld [vmem:[%s16 + $0xb8] sm:$0xff]
      %v10063 = vld [vmem:[%s16 + $0xc0] sm:$0xff]
      %v10064 = vld [vmem:[%s16 + $0xc8] sm:$0xff]
      %v10065 = vld [vmem:[%s16 + $0xd0] sm:$0xff]
      %v10066 = vld [vmem:[%s16 + $0xd8] sm:$0xff]
      %v10067 = vld [vmem:[%s16 + $0xe0] sm:$0xff]
      %v10068 = vld [vmem:[%s16 + $0xe8] sm:$0xff]
      %v10069 = vld [vmem:[%s16 + $0xf0] sm:$0xff]
      %v10070 = vld [vmem:[%s16 + $0xf8] sm:$0xff]
      %v10071 = vld [vmem:[%s16 + $0x100] sm:$0xff]
      %v10072 = vld [vmem:[%s16 + $0x108] sm:$0xff]
      %v10073 = vld [vmem:[%s16 + $0x110] sm:$0xff]
      %v10074 = vld [vmem:[%s16 + $0x118] sm:$0xff]
      %v10075 = vld [vmem:[%s16 + $0x120] sm:$0xff]
      %v10076 = vld [vmem:[%s16 + $0x128] sm:$0xff]
      %v10077 = vld [vmem:[%s16 + $0x130] sm:$0xff]
      %v10078 = vld [vmem:[%s16 + $0x138] sm:$0xff]
      %v10079 = vld [vmem:[%s16 + $0x140] sm:$0xff]
      %v10080 = vld [vmem:[%s16 + $0x148] sm:$0xff]
      %v10081 = vld [vmem:[%s16 + $0x150] sm:$0xff]
      %v10082 = vld [vmem:[%s16 + $0x158] sm:$0xff]
      %v10083 = vld [vmem:[%s16 + $0x160] sm:$0xff]
      %v10084 = vld [vmem:[%s16 + $0x168] sm:$0xff]
      %v10085 = vld [vmem:[%s16 + $0x170] sm:$0xff]
      %v10086 = vld [vmem:[%s16 + $0x178] sm:$0xff]
      %v10087 = vld [vmem:[%s16 + $0x180] sm:$0xff]
      %v10088 = vld [vmem:[%s16 + $0x188] sm:$0xff]
      %v10089 = vld [vmem:[%s16 + $0x190] sm:$0xff]
      %v10090 = vld [vmem:[%s16 + $0x198] sm:$0xff]
      %v10091 = vld [vmem:[%s16 + $0x1a0] sm:$0xff]
      %v10092 = vld [vmem:[%s16 + $0x1a8] sm:$0xff]
      %v10093 = vld [vmem:[%s16 + $0x1b0] sm:$0xff]
      %v10094 = vld [vmem:[%s16 + $0x1b8] sm:$0xff]
      %v10095 = vld [vmem:[%s16 + $0x1c0] sm:$0xff]
      %v10096 = vld [vmem:[%s16 + $0x1c8] sm:$0xff]
      %v10097 = vld [vmem:[%s16 + $0x1d0] sm:$0xff]
      %v10098 = vld [vmem:[%s16 + $0x1d8] sm:$0xff]
      %v10099 = vld [vmem:[%s16 + $0x1e0] sm:$0xff]
      %v10100 = vld [vmem:[%s16 + $0x1e8] sm:$0xff]
      %v10101 = vld [vmem:[%s16 + $0x1f0] sm:$0xff]
      %v10102 = vld [vmem:[%s16 + $0x1f8] sm:$0xff]
      %v10103 = vld [vmem:[%s16 + $0x200] sm:$0xff]
      %v10104 = vld [vmem:[%s16 + $0x208] sm:$0xff]
      %v10105 = vld [vmem:[%s16 + $0x210] sm:$0xff]
      %v10106 = vld [vmem:[%s16 + $0x218] sm:$0xff]
      %v10107 = vld [vmem:[%s16 + $0x220] sm:$0xff]
      %v10108 = vld [vmem:[%s16 + $0x228] sm:$0xff]
      %v10109 = vld [vmem:[%s16 + $0x230] sm:$0xff]
      %v10110 = vld [vmem:[%s16 + $0x238] sm:$0xff]
      %v10111 = vld [vmem:[%s16 + $0x240] sm:$0xff]
      %v10112 = vld [vmem:[%s16 + $0x248] sm:$0xff]
      %v10113 = vld [vmem:[%s16 + $0x250] sm:$0xff]
      %v10114 = vld [vmem:[%s16 + $0x258] sm:$0xff]
      %v10115 = vld [vmem:[%s16 + $0x260] sm:$0xff]
      %v10116 = vld [vmem:[%s16 + $0x268] sm:$0xff]
      %v10117 = vld [vmem:[%s16 + $0x270] sm:$0xff]
      %v10118 = vld [vmem:[%s16 + $0x278] sm:$0xff]
      %v10119 = vld [vmem:[%s21] sm:$0x3]
      %v10121 = vperm.slane %v10119, 0
      %v10122 = vperm.slane %v10119, 1
      %v10205 = vunpack.c.l.b16 %v10039
      %v10206 = vunpack.c.h.b16 %v10039
      %v10207 = vunpack.c.l.b16 %v10040
      %v10208 = vunpack.c.h.b16 %v10040
      %v10209 = vunpack.c.l.b16 %v10041
      %v10210 = vunpack.c.h.b16 %v10041
      %v10211 = vunpack.c.l.b16 %v10042
      %v10212 = vunpack.c.h.b16 %v10042
      %v10213 = vunpack.c.l.b16 %v10043
      %v10214 = vunpack.c.h.b16 %v10043
      %v10215 = vunpack.c.l.b16 %v10044
      %v10216 = vunpack.c.h.b16 %v10044
      %v10217 = vunpack.c.l.b16 %v10045
      %v10218 = vunpack.c.h.b16 %v10045
      %v10219 = vunpack.c.l.b16 %v10046
      %v10220 = vunpack.c.h.b16 %v10046
      %v10221 = vunpack.c.l.b16 %v10047
      %v10222 = vunpack.c.h.b16 %v10047
      %v10223 = vunpack.c.l.b16 %v10048
      %v10224 = vunpack.c.h.b16 %v10048
      %v10225 = vunpack.c.l.b16 %v10049
      %v10226 = vunpack.c.h.b16 %v10049
      %v10227 = vunpack.c.l.b16 %v10050
      %v10228 = vunpack.c.h.b16 %v10050
      %v10229 = vunpack.c.l.b16 %v10051
      %v10230 = vunpack.c.h.b16 %v10051
      %v10231 = vunpack.c.l.b16 %v10052
      %v10232 = vunpack.c.h.b16 %v10052
      %v10233 = vunpack.c.l.b16 %v10053
      %v10234 = vunpack.c.h.b16 %v10053
      %v10235 = vunpack.c.l.b16 %v10054
      %v10236 = vunpack.c.h.b16 %v10054
      %v10237 = vunpack.c.l.b16 %v10055
      %v10238 = vunpack.c.h.b16 %v10055
      %v10239 = vunpack.c.l.b16 %v10056
      %v10240 = vunpack.c.h.b16 %v10056
      %v10241 = vunpack.c.l.b16 %v10057
      %v10242 = vunpack.c.h.b16 %v10057
      %v10243 = vunpack.c.l.b16 %v10058
      %v10244 = vunpack.c.h.b16 %v10058
      %v10245 = vunpack.c.l.b16 %v10059
      %v10246 = vunpack.c.h.b16 %v10059
      %v10247 = vunpack.c.l.b16 %v10060
      %v10248 = vunpack.c.h.b16 %v10060
      %v10249 = vunpack.c.l.b16 %v10061
      %v10250 = vunpack.c.h.b16 %v10061
      %v10251 = vunpack.c.l.b16 %v10062
      %v10252 = vunpack.c.h.b16 %v10062
      %v10253 = vunpack.c.l.b16 %v10063
      %v10254 = vunpack.c.h.b16 %v10063
      %v10255 = vunpack.c.l.b16 %v10064
      %v10256 = vunpack.c.h.b16 %v10064
      %v10257 = vunpack.c.l.b16 %v10065
      %v10258 = vunpack.c.h.b16 %v10065
      %v10259 = vunpack.c.l.b16 %v10066
      %v10260 = vunpack.c.h.b16 %v10066
      %v10261 = vunpack.c.l.b16 %v10067
      %v10262 = vunpack.c.h.b16 %v10067
      %v10263 = vunpack.c.l.b16 %v10068
      %v10264 = vunpack.c.h.b16 %v10068
      %v10265 = vunpack.c.l.b16 %v10069
      %v10266 = vunpack.c.h.b16 %v10069
      %v10267 = vunpack.c.l.b16 %v10070
      %v10268 = vunpack.c.h.b16 %v10070
      %v10269 = vunpack.c.l.b16 %v10071
      %v10270 = vunpack.c.h.b16 %v10071
      %v10271 = vunpack.c.l.b16 %v10072
      %v10272 = vunpack.c.h.b16 %v10072
      %v10273 = vunpack.c.l.b16 %v10073
      %v10274 = vunpack.c.h.b16 %v10073
      %v10275 = vunpack.c.l.b16 %v10074
      %v10276 = vunpack.c.h.b16 %v10074
      %v10277 = vunpack.c.l.b16 %v10075
      %v10278 = vunpack.c.h.b16 %v10075
      %v10279 = vunpack.c.l.b16 %v10076
      %v10280 = vunpack.c.h.b16 %v10076
      %v10281 = vunpack.c.l.b16 %v10077
      %v10282 = vunpack.c.h.b16 %v10077
      %v10283 = vunpack.c.l.b16 %v10078
      %v10284 = vunpack.c.h.b16 %v10078
      %v10285 = vunpack.c.l.b16 %v10079
      %v10286 = vunpack.c.h.b16 %v10079
      %v10287 = vunpack.c.l.b16 %v10080
      %v10288 = vunpack.c.h.b16 %v10080
      %v10289 = vunpack.c.l.b16 %v10081
      %v10290 = vunpack.c.h.b16 %v10081
      %v10291 = vunpack.c.l.b16 %v10082
      %v10292 = vunpack.c.h.b16 %v10082
      %v10293 = vunpack.c.l.b16 %v10083
      %v10294 = vunpack.c.h.b16 %v10083
      %v10295 = vunpack.c.l.b16 %v10084
      %v10296 = vunpack.c.h.b16 %v10084
      %v10297 = vunpack.c.l.b16 %v10085
      %v10298 = vunpack.c.h.b16 %v10085
      %v10299 = vunpack.c.l.b16 %v10086
      %v10300 = vunpack.c.h.b16 %v10086
      %v10301 = vunpack.c.l.b16 %v10087
      %v10302 = vunpack.c.h.b16 %v10087
      %v10303 = vunpack.c.l.b16 %v10088
      %v10304 = vunpack.c.h.b16 %v10088
      %v10305 = vunpack.c.l.b16 %v10089
      %v10306 = vunpack.c.h.b16 %v10089
      %v10307 = vunpack.c.l.b16 %v10090
      %v10308 = vunpack.c.h.b16 %v10090
      %v10309 = vunpack.c.l.b16 %v10091
      %v10310 = vunpack.c.h.b16 %v10091
      %v10311 = vunpack.c.l.b16 %v10092
      %v10312 = vunpack.c.h.b16 %v10092
      %v10313 = vunpack.c.l.b16 %v10093
      %v10314 = vunpack.c.h.b16 %v10093
      %v10315 = vunpack.c.l.b16 %v10094
      %v10316 = vunpack.c.h.b16 %v10094
      %v10317 = vunpack.c.l.b16 %v10095
      %v10318 = vunpack.c.h.b16 %v10095
      %v10319 = vunpack.c.l.b16 %v10096
      %v10320 = vunpack.c.h.b16 %v10096
      %v10321 = vunpack.c.l.b16 %v10097
      %v10322 = vunpack.c.h.b16 %v10097
      %v10323 = vunpack.c.l.b16 %v10098
      %v10324 = vunpack.c.h.b16 %v10098
      %v10325 = vunpack.c.l.b16 %v10099
      %v10326 = vunpack.c.h.b16 %v10099
      %v10327 = vunpack.c.l.b16 %v10100
      %v10328 = vunpack.c.h.b16 %v10100
      %v10329 = vunpack.c.l.b16 %v10101
      %v10330 = vunpack.c.h.b16 %v10101
      %v10331 = vunpack.c.l.b16 %v10102
      %v10332 = vunpack.c.h.b16 %v10102
      %v10333 = vunpack.c.l.b16 %v10103
      %v10334 = vunpack.c.h.b16 %v10103
      %v10335 = vunpack.c.l.b16 %v10104
      %v10336 = vunpack.c.h.b16 %v10104
      %v10337 = vunpack.c.l.b16 %v10105
      %v10338 = vunpack.c.h.b16 %v10105
      %v10339 = vunpack.c.l.b16 %v10106
      %v10340 = vunpack.c.h.b16 %v10106
      %v10341 = vunpack.c.l.b16 %v10107
      %v10342 = vunpack.c.h.b16 %v10107
      %v10343 = vunpack.c.l.b16 %v10108
      %v10344 = vunpack.c.h.b16 %v10108
      %v10345 = vunpack.c.l.b16 %v10109
      %v10346 = vunpack.c.h.b16 %v10109
      %v10347 = vunpack.c.l.b16 %v10110
      %v10348 = vunpack.c.h.b16 %v10110
      %v10349 = vunpack.c.l.b16 %v10111
      %v10350 = vunpack.c.h.b16 %v10111
      %v10351 = vunpack.c.l.b16 %v10112
      %v10352 = vunpack.c.h.b16 %v10112
      %v10353 = vunpack.c.l.b16 %v10113
      %v10354 = vunpack.c.h.b16 %v10113
      %v10355 = vunpack.c.l.b16 %v10114
      %v10356 = vunpack.c.h.b16 %v10114
      %v10357 = vunpack.c.l.b16 %v10115
      %v10358 = vunpack.c.h.b16 %v10115
      %v10359 = vunpack.c.l.b16 %v10116
      %v10360 = vunpack.c.h.b16 %v10116
      %v10361 = vunpack.c.l.b16 %v10117
      %v10362 = vunpack.c.h.b16 %v10117
      %v10363 = vunpack.c.l.b16 %v10118
      %v10364 = vunpack.c.h.b16 %v10118
      %v10365 = vpack.c.b16 %v10207, %v10205
      %v10366 = vpack.c.b16 %v10208, %v10206
      %v10367 = vpack.c.b16 %v10211, %v10209
      %v10368 = vpack.c.b16 %v10212, %v10210
      %v10369 = vpack.c.b16 %v10215, %v10213
      %v10370 = vpack.c.b16 %v10216, %v10214
      %v10371 = vpack.c.b16 %v10219, %v10217
      %v10372 = vpack.c.b16 %v10220, %v10218
      %v10373 = vpack.c.b16 %v10223, %v10221
      %v10374 = vpack.c.b16 %v10224, %v10222
      %v10375 = vpack.c.b16 %v10227, %v10225
      %v10376 = vpack.c.b16 %v10228, %v10226
      %v10377 = vpack.c.b16 %v10231, %v10229
      %v10378 = vpack.c.b16 %v10232, %v10230
      %v10379 = vpack.c.b16 %v10235, %v10233
      %v10380 = vpack.c.b16 %v10236, %v10234
      %v10381 = vpack.c.b16 %v10239, %v10237
      %v10382 = vpack.c.b16 %v10240, %v10238
      %v10383 = vpack.c.b16 %v10243, %v10241
      %v10384 = vpack.c.b16 %v10244, %v10242
      %v10385 = vpack.c.b16 %v10247, %v10245
      %v10386 = vpack.c.b16 %v10248, %v10246
      %v10387 = vpack.c.b16 %v10251, %v10249
      %v10388 = vpack.c.b16 %v10252, %v10250
      %v10389 = vpack.c.b16 %v10255, %v10253
      %v10390 = vpack.c.b16 %v10256, %v10254
      %v10391 = vpack.c.b16 %v10259, %v10257
      %v10392 = vpack.c.b16 %v10260, %v10258
      %v10393 = vpack.c.b16 %v10263, %v10261
      %v10394 = vpack.c.b16 %v10264, %v10262
      %v10395 = vpack.c.b16 %v10267, %v10265
      %v10396 = vpack.c.b16 %v10268, %v10266
      %v10397 = vpack.c.b16 %v10271, %v10269
      %v10398 = vpack.c.b16 %v10272, %v10270
      %v10399 = vpack.c.b16 %v10275, %v10273
      %v10400 = vpack.c.b16 %v10276, %v10274
      %v10401 = vpack.c.b16 %v10279, %v10277
      %v10402 = vpack.c.b16 %v10280, %v10278
      %v10403 = vpack.c.b16 %v10283, %v10281
      %v10404 = vpack.c.b16 %v10284, %v10282
      %v10405 = vpack.c.b16 %v10287, %v10285
      %v10406 = vpack.c.b16 %v10288, %v10286
      %v10407 = vpack.c.b16 %v10291, %v10289
      %v10408 = vpack.c.b16 %v10292, %v10290
      %v10409 = vpack.c.b16 %v10295, %v10293
      %v10410 = vpack.c.b16 %v10296, %v10294
      %v10411 = vpack.c.b16 %v10299, %v10297
      %v10412 = vpack.c.b16 %v10300, %v10298
      %v10413 = vpack.c.b16 %v10303, %v10301
      %v10414 = vpack.c.b16 %v10304, %v10302
      %v10415 = vpack.c.b16 %v10307, %v10305
      %v10416 = vpack.c.b16 %v10308, %v10306
      %v10417 = vpack.c.b16 %v10311, %v10309
      %v10418 = vpack.c.b16 %v10312, %v10310
      %v10419 = vpack.c.b16 %v10315, %v10313
      %v10420 = vpack.c.b16 %v10316, %v10314
      %v10421 = vpack.c.b16 %v10319, %v10317
      %v10422 = vpack.c.b16 %v10320, %v10318
      %v10423 = vpack.c.b16 %v10323, %v10321
      %v10424 = vpack.c.b16 %v10324, %v10322
      %v10425 = vpack.c.b16 %v10327, %v10325
      %v10426 = vpack.c.b16 %v10328, %v10326
      %v10427 = vpack.c.b16 %v10331, %v10329
      %v10428 = vpack.c.b16 %v10332, %v10330
      %v10429 = vpack.c.b16 %v10335, %v10333
      %v10430 = vpack.c.b16 %v10336, %v10334
      %v10431 = vpack.c.b16 %v10339, %v10337
      %v10432 = vpack.c.b16 %v10340, %v10338
      %v10433 = vpack.c.b16 %v10343, %v10341
      %v10434 = vpack.c.b16 %v10344, %v10342
      %v10435 = vpack.c.b16 %v10347, %v10345
      %v10436 = vpack.c.b16 %v10348, %v10346
      %v10437 = vpack.c.b16 %v10351, %v10349
      %v10438 = vpack.c.b16 %v10352, %v10350
      %v10439 = vpack.c.b16 %v10355, %v10353
      %v10440 = vpack.c.b16 %v10356, %v10354
      %v10441 = vpack.c.b16 %v10359, %v10357
      %v10442 = vpack.c.b16 %v10360, %v10358
      %v10443 = vpack.c.b16 %v10363, %v10361
      %v10444 = vpack.c.b16 %v10364, %v10362
      %10525 = vmatpush.bf16.msra.mxu0 %v10379
      %10526 = vmatpush.bf16.msra.mxu0 %v10377
      %10527 = vmatpush.bf16.msra.mxu0 %v10375
      %10528 = vmatpush.bf16.msra.mxu0 %v10373
      %10529 = vmatpush.bf16.msra.mxu0 %v10371
      %10530 = vmatpush.bf16.msra.mxu0 %v10369
      %10531 = vmatpush.bf16.msra.mxu0 %v10367
      %10532 = vmatpush.bf16.msra.mxu0 %v10365
      %10533 = vmatmul.bf16.gmra.mxu0 %v10034
      %v10534 = vpop.f32.mrf.mxu0
      %v10535 = vadd.f32 %v10121, %v10534
      %v10536 = vpop.f32.mrf.mxu0
      %v10537 = vadd.f32 %v10121, %v10536
      %10538 = vdwg.mxu0
      %10539 = vmatpush.bf16.msra.mxu0 %v10395
      %10540 = vmatpush.bf16.msra.mxu0 %v10393
      %10541 = vmatpush.bf16.msra.mxu0 %v10391
      %10542 = vmatpush.bf16.msra.mxu0 %v10389
      %10543 = vmatpush.bf16.msra.mxu0 %v10387
      %10544 = vmatpush.bf16.msra.mxu0 %v10385
      %10545 = vmatpush.bf16.msra.mxu0 %v10383
      %10546 = vmatpush.bf16.msra.mxu0 %v10381
      %10547 = vmatmul.bf16.gmra.mxu0 %v10035
      %v10548 = vpop.f32.mrf.mxu0
      %v10549 = vadd.f32 %v10535, %v10548
      %v10550 = vpop.f32.mrf.mxu0
      %v10551 = vadd.f32 %v10537, %v10550
      %10552 = vdwg.mxu0
      %10553 = vmatpush.bf16.msra.mxu0 %v10411
      %10554 = vmatpush.bf16.msra.mxu0 %v10409
      %10555 = vmatpush.bf16.msra.mxu0 %v10407
      %10556 = vmatpush.bf16.msra.mxu0 %v10405
      %10557 = vmatpush.bf16.msra.mxu0 %v10403
      %10558 = vmatpush.bf16.msra.mxu0 %v10401
      %10559 = vmatpush.bf16.msra.mxu0 %v10399
      %10560 = vmatpush.bf16.msra.mxu0 %v10397
      %10561 = vmatmul.bf16.gmra.mxu0 %v10036
      %v10562 = vpop.f32.mrf.mxu0
      %v10563 = vadd.f32 %v10549, %v10562
      %v10564 = vpop.f32.mrf.mxu0
      %v10565 = vadd.f32 %v10551, %v10564
      %10566 = vdwg.mxu0
      %10567 = vmatpush.bf16.msra.mxu0 %v10427
      %10568 = vmatpush.bf16.msra.mxu0 %v10425
      %10569 = vmatpush.bf16.msra.mxu0 %v10423
      %10570 = vmatpush.bf16.msra.mxu0 %v10421
      %10571 = vmatpush.bf16.msra.mxu0 %v10419
      %10572 = vmatpush.bf16.msra.mxu0 %v10417
      %10573 = vmatpush.bf16.msra.mxu0 %v10415
      %10574 = vmatpush.bf16.msra.mxu0 %v10413
      %10575 = vmatmul.bf16.gmra.mxu0 %v10037
      %v10576 = vpop.f32.mrf.mxu0
      %v10577 = vadd.f32 %v10563, %v10576
      %v10578 = vpop.f32.mrf.mxu0
      %v10579 = vadd.f32 %v10565, %v10578
      %10580 = vdwg.mxu0
      %10581 = vmatpush.bf16.msra.mxu0 %v10443
      %10582 = vmatpush.bf16.msra.mxu0 %v10441
      %10583 = vmatpush.bf16.msra.mxu0 %v10439
      %10584 = vmatpush.bf16.msra.mxu0 %v10437
      %10585 = vmatpush.bf16.msra.mxu0 %v10435
      %10586 = vmatpush.bf16.msra.mxu0 %v10433
      %10587 = vmatpush.bf16.msra.mxu0 %v10431
      %10588 = vmatpush.bf16.msra.mxu0 %v10429
      %10589 = vmatmul.bf16.gmra.mxu0 %v10038
      %v10590 = vpop.f32.mrf.mxu0
      %v10591 = vadd.f32 %v10577, %v10590
      %v10592 = vpop.f32.mrf.mxu0
      %v10593 = vadd.f32 %v10579, %v10592
      %10594 = vdwg.mxu0
      %10595 = vmatpush.bf16.msra.mxu0 %v10380
      %10596 = vmatpush.bf16.msra.mxu0 %v10378
      %10597 = vmatpush.bf16.msra.mxu0 %v10376
      %10598 = vmatpush.bf16.msra.mxu0 %v10374
      %10599 = vmatpush.bf16.msra.mxu0 %v10372
      %10600 = vmatpush.bf16.msra.mxu0 %v10370
      %10601 = vmatpush.bf16.msra.mxu0 %v10368
      %10602 = vmatpush.bf16.msra.mxu0 %v10366
      %10603 = vmatmul.bf16.gmra.mxu0 %v10034
      %v10604 = vpop.f32.mrf.mxu0
      %v10605 = vadd.f32 %v10122, %v10604
      %v10606 = vpop.f32.mrf.mxu0
      %v10607 = vadd.f32 %v10122, %v10606
      %10608 = vdwg.mxu0
      %10609 = vmatpush.bf16.msra.mxu0 %v10396
      %10610 = vmatpush.bf16.msra.mxu0 %v10394
      %10611 = vmatpush.bf16.msra.mxu0 %v10392
      %10612 = vmatpush.bf16.msra.mxu0 %v10390
      %10613 = vmatpush.bf16.msra.mxu0 %v10388
      %10614 = vmatpush.bf16.msra.mxu0 %v10386
      %10615 = vmatpush.bf16.msra.mxu0 %v10384
      %10616 = vmatpush.bf16.msra.mxu0 %v10382
      %10617 = vmatmul.bf16.gmra.mxu0 %v10035
      %v10618 = vpop.f32.mrf.mxu0
      %v10619 = vadd.f32 %v10605, %v10618
      %v10620 = vpop.f32.mrf.mxu0
      %v10621 = vadd.f32 %v10607, %v10620
      %10622 = vdwg.mxu0
      %10623 = vmatpush.bf16.msra.mxu0 %v10412
      %10624 = vmatpush.bf16.msra.mxu0 %v10410
      %10625 = vmatpush.bf16.msra.mxu0 %v10408
      %10626 = vmatpush.bf16.msra.mxu0 %v10406
      %10627 = vmatpush.bf16.msra.mxu0 %v10404
      %10628 = vmatpush.bf16.msra.mxu0 %v10402
      %10629 = vmatpush.bf16.msra.mxu0 %v10400
      %10630 = vmatpush.bf16.msra.mxu0 %v10398
      %10631 = vmatmul.bf16.gmra.mxu0 %v10036
      %v10632 = vpop.f32.mrf.mxu0
      %v10633 = vadd.f32 %v10619, %v10632
      %v10634 = vpop.f32.mrf.mxu0
      %v10635 = vadd.f32 %v10621, %v10634
      %10636 = vdwg.mxu0
      %10637 = vmatpush.bf16.msra.mxu0 %v10428
      %10638 = vmatpush.bf16.msra.mxu0 %v10426
      %10639 = vmatpush.bf16.msra.mxu0 %v10424
      %10640 = vmatpush.bf16.msra.mxu0 %v10422
      %10641 = vmatpush.bf16.msra.mxu0 %v10420
      %10642 = vmatpush.bf16.msra.mxu0 %v10418
      %10643 = vmatpush.bf16.msra.mxu0 %v10416
      %10644 = vmatpush.bf16.msra.mxu0 %v10414
      %10645 = vmatmul.bf16.gmra.mxu0 %v10037
      %v10646 = vpop.f32.mrf.mxu0
      %v10647 = vadd.f32 %v10633, %v10646
      %v10648 = vpop.f32.mrf.mxu0
      %v10649 = vadd.f32 %v10635, %v10648
      %10650 = vdwg.mxu0
      %10651 = vmatpush.bf16.msra.mxu0 %v10444
      %10652 = vmatpush.bf16.msra.mxu0 %v10442
      %10653 = vmatpush.bf16.msra.mxu0 %v10440
      %10654 = vmatpush.bf16.msra.mxu0 %v10438
      %10655 = vmatpush.bf16.msra.mxu0 %v10436
      %10656 = vmatpush.bf16.msra.mxu0 %v10434
      %10657 = vmatpush.bf16.msra.mxu0 %v10432
      %10658 = vmatpush.bf16.msra.mxu0 %v10430
      %10659 = vmatmul.bf16.gmra.mxu0 %v10038
      %v10660 = vpop.f32.mrf.mxu0
      %v10661 = vadd.f32 %v10647, %v10660
      %v10662 = vpop.f32.mrf.mxu0
      %v10663 = vadd.f32 %v10649, %v10662
      %10664 = vdwg.mxu0
      %v10665 = vpack.c.bf16 %v10593, %v10591
      %v10666 = vpack.c.bf16 %v10663, %v10661
      %v10667 = vld [vmem:[%s24] sm:$0xf]
      %v10668 = vld [vmem:[%s24 + $0x4] sm:$0xf]
      %v10669 = vld [vmem:[%s24 + $0x8] sm:$0xf]
      %v10670 = vld [vmem:[%s24 + $0xc] sm:$0xf]
      %v10671 = vld [vmem:[%s24 + $0x10] sm:$0xf]
      %v10672 = vld [vmem:[%s24 + $0x14] sm:$0xf]
      %v10673 = vld [vmem:[%s24 + $0x18] sm:$0xf]
      %v10674 = vld [vmem:[%s24 + $0x1c] sm:$0xf]
      %v10675 = vld [vmem:[%s24 + $0x20] sm:$0xf]
      %v10676 = vld [vmem:[%s24 + $0x24] sm:$0xf]
      %v10677 = vld [vmem:[%s24 + $0x28] sm:$0xf]
      %v10678 = vld [vmem:[%s24 + $0x2c] sm:$0xf]
      %v10679 = vld [vmem:[%s24 + $0x30] sm:$0xf]
      %v10680 = vld [vmem:[%s24 + $0x34] sm:$0xf]
      %v10681 = vld [vmem:[%s24 + $0x38] sm:$0xf]
      %v10682 = vld [vmem:[%s24 + $0x3c] sm:$0xf]
      %v10683 = vld [vmem:[%s24 + $0x40] sm:$0xf]
      %v10684 = vld [vmem:[%s24 + $0x44] sm:$0xf]
      %v10685 = vld [vmem:[%s24 + $0x48] sm:$0xf]
      %v10686 = vld [vmem:[%s24 + $0x4c] sm:$0xf]
      %v10687 = vld [vmem:[%s24 + $0x50] sm:$0xf]
      %v10688 = vld [vmem:[%s24 + $0x54] sm:$0xf]
      %v10689 = vld [vmem:[%s24 + $0x58] sm:$0xf]
      %v10690 = vld [vmem:[%s24 + $0x5c] sm:$0xf]
      %v10691 = vld [vmem:[%s24 + $0x60] sm:$0xf]
      %v10692 = vld [vmem:[%s24 + $0x64] sm:$0xf]
      %v10693 = vld [vmem:[%s24 + $0x68] sm:$0xf]
      %v10694 = vld [vmem:[%s24 + $0x6c] sm:$0xf]
      %v10695 = vld [vmem:[%s24 + $0x70] sm:$0xf]
      %v10696 = vld [vmem:[%s24 + $0x74] sm:$0xf]
      %v10697 = vld [vmem:[%s24 + $0x78] sm:$0xf]
      %v10698 = vld [vmem:[%s24 + $0x7c] sm:$0xf]
      %v10731 = vunpack.c.l.b16 %v10667
      %v10732 = vunpack.c.l.b16 %v10668
      %v10733 = vunpack.c.l.b16 %v10669
      %v10734 = vunpack.c.l.b16 %v10670
      %v10735 = vunpack.c.l.b16 %v10671
      %v10736 = vunpack.c.l.b16 %v10672
      %v10737 = vunpack.c.l.b16 %v10673
      %v10738 = vunpack.c.l.b16 %v10674
      %v10739 = vunpack.c.l.b16 %v10675
      %v10740 = vunpack.c.l.b16 %v10676
      %v10741 = vunpack.c.l.b16 %v10677
      %v10742 = vunpack.c.l.b16 %v10678
      %v10743 = vunpack.c.l.b16 %v10679
      %v10744 = vunpack.c.l.b16 %v10680
      %v10745 = vunpack.c.l.b16 %v10681
      %v10746 = vunpack.c.l.b16 %v10682
      %v10747 = vunpack.c.l.b16 %v10683
      %v10748 = vunpack.c.l.b16 %v10684
      %v10749 = vunpack.c.l.b16 %v10685
      %v10750 = vunpack.c.l.b16 %v10686
      %v10751 = vunpack.c.l.b16 %v10687
      %v10752 = vunpack.c.l.b16 %v10688
      %v10753 = vunpack.c.l.b16 %v10689
      %v10754 = vunpack.c.l.b16 %v10690
      %v10755 = vunpack.c.l.b16 %v10691
      %v10756 = vunpack.c.l.b16 %v10692
      %v10757 = vunpack.c.l.b16 %v10693
      %v10758 = vunpack.c.l.b16 %v10694
      %v10759 = vunpack.c.l.b16 %v10695
      %v10760 = vunpack.c.l.b16 %v10696
      %v10761 = vunpack.c.l.b16 %v10697
      %v10762 = vunpack.c.l.b16 %v10698
      %v10763 = vpack.c.b16 %v10732, %v10731
      %v10764 = vpack.c.b16 %v10734, %v10733
      %v10765 = vpack.c.b16 %v10736, %v10735
      %v10766 = vpack.c.b16 %v10738, %v10737
      %v10767 = vpack.c.b16 %v10740, %v10739
      %v10768 = vpack.c.b16 %v10742, %v10741
      %v10769 = vpack.c.b16 %v10744, %v10743
      %v10770 = vpack.c.b16 %v10746, %v10745
      %v10771 = vpack.c.b16 %v10748, %v10747
      %v10772 = vpack.c.b16 %v10750, %v10749
      %v10773 = vpack.c.b16 %v10752, %v10751
      %v10774 = vpack.c.b16 %v10754, %v10753
      %v10775 = vpack.c.b16 %v10756, %v10755
      %v10776 = vpack.c.b16 %v10758, %v10757
      %v10777 = vpack.c.b16 %v10760, %v10759
      %v10778 = vpack.c.b16 %v10762, %v10761
      %10795 = vmatpush.bf16.msra.mxu0 %v10770
      %10796 = vmatpush.bf16.msra.mxu0 %v10769
      %10797 = vmatpush.bf16.msra.mxu0 %v10768
      %10798 = vmatpush.bf16.msra.mxu0 %v10767
      %10799 = vmatpush.bf16.msra.mxu0 %v10766
      %10800 = vmatpush.bf16.msra.mxu0 %v10765
      %10801 = vmatpush.bf16.msra.mxu0 %v10764
      %10802 = vmatpush.bf16.msra.mxu0 %v10763
      %10803 = vmatmul.bf16.gmra.mxu0 %v10665
      %v10804 = vpop.f32.mrf.mxu0
      %v10805 = vadd.f32 0.0, %v10804
      %v10806 = vpop.f32.mrf.mxu0
      %v10807 = vadd.f32 0.0, %v10806
      %10808 = vdwg.mxu0
      %10809 = vmatpush.bf16.msra.mxu0 %v10778
      %10810 = vmatpush.bf16.msra.mxu0 %v10777
      %10811 = vmatpush.bf16.msra.mxu0 %v10776
      %10812 = vmatpush.bf16.msra.mxu0 %v10775
      %10813 = vmatpush.bf16.msra.mxu0 %v10774
      %10814 = vmatpush.bf16.msra.mxu0 %v10773
      %10815 = vmatpush.bf16.msra.mxu0 %v10772
      %10816 = vmatpush.bf16.msra.mxu0 %v10771
      %10817 = vmatmul.bf16.gmra.mxu0 %v10666
      %v10818 = vpop.f32.mrf.mxu0
      %v10819 = vadd.f32 %v10805, %v10818
      %v10820 = vpop.f32.mrf.mxu0
      %v10821 = vadd.f32 %v10807, %v10820
      %10822 = vdwg.mxu0
      %v10823 = vadd.f32 %v7740, %v10819
      %v10824 = vadd.f32 %v7741, %v10821
      %v10825 = vxor.u32 %v10823, 2147483648
      %v10826 = vxor.u32 %v10824, 2147483648
      %v10827 = vmul.f32 %v10825, 1.442695
      %v10828 = vpow.pop %v10827
      %v10829 = vmul.f32 %v10826, 1.442695
      %v10830 = vpow.pop %v10829
      %v10831 = vadd.f32 %v10828, 1.0
      %v10832 = vadd.f32 %v10830, 1.0
      %v10833 = vrcp.pop %v10831
      %v10834 = vmul.f32 %v10831, %v10833
      %v10835 = vsub.f32 1.0, %v10834
      %v10836 = vmul.f32 %v10833, %v10835
      %v10837 = vadd.f32 %v10833, %v10836
      %vm10838 = vweird.f32 %v10831
      %vm10839 = vweird.f32 %v10833
      %vm10840 = vmor %vm10838, %vm10839
      %v10841 = vsel %vm10840, %v10833, %v10837
      %v10842 = vand.u32 2147483647, %v10831
      %vm10843 = vcmp.eq.f32.partialorder %v10842, 8.507059e+37
      %v10844 = vand.u32 %v10831, 2147483648
      %v10845 = vor.u32 1.1754944e-38, %v10844
      %v10846 = vsel %vm10843, %v10845, %v10841
      %v10847 = vmul.f32 1.0, %v10846
      %v10848 = vrcp.pop %v10832
      %v10849 = vmul.f32 %v10832, %v10848
      %v10850 = vsub.f32 1.0, %v10849
      %v10851 = vmul.f32 %v10848, %v10850
      %v10852 = vadd.f32 %v10848, %v10851
      %vm10853 = vweird.f32 %v10832
      %vm10854 = vweird.f32 %v10848
      %vm10855 = vmor %vm10853, %vm10854
      %v10856 = vsel %vm10855, %v10848, %v10852
      %v10857 = vand.u32 2147483647, %v10832
      %vm10858 = vcmp.eq.f32.partialorder %v10857, 8.507059e+37
      %v10859 = vand.u32 %v10832, 2147483648
      %v10860 = vor.u32 1.1754944e-38, %v10859
      %v10861 = vsel %vm10858, %v10860, %v10856
      %v10862 = vmul.f32 1.0, %v10861
      %10863 = vst [vmem:[%s815] sm:$0xff] %v10847
      %10864 = vst [vmem:[%s815 + $0x8] sm:$0xff] %v10862
      %s10865 = smul.u32 2, %s37
      %p10866 = scmp.lt.s32.totalorder %s10865, 3
      %s10867 = scalar_select %p10866, %s10865, 3
      %s10868 = smul.addr %s10867, 8
      %s10869 = scalar_lea.vmem %s26, %s10868
      // Predicated region
      $region125: #{gbnn_forward.1} parent=123 // pred_check
        %p10870 = pneg %p611
      $region126: #{gbnn_forward.1} parent=123 // pred_check_branch
        %10872 = sbr.rel (%p10870) target = $region128
      $region127: #{gbnn_forward.1} parent=123 // pred_region
        %s10873 = smul.u32 2, %s37
      $region128: #{gbnn_forward.1} parent=123 // pred_fallthru
        _
    $region124: #{gbnn_forward.1} parent=5 // pred_fallthru
      _
    %p10874 = scmp.le.s32.totalorder 2, %s32
    // Predicated region
    $region129: #{gbnn_forward.1} parent=5 // pred_check
      %p10875 = pneg %p10874
    $region130: #{gbnn_forward.1} parent=5 // pred_check_branch
      %10877 = sbr.rel (%p10875) target = $region132
    $region131: #{gbnn_forward.1} parent=5 // pred_region
      %s10878 = ssub.s32 %s32, 2
      // Predicated region
      $region133: #{gbnn_forward.1} parent=131 // pred_check
        %p10879 = pneg %p617
      $region134: #{gbnn_forward.1} parent=131 // pred_check_branch
        %10881 = sbr.rel (%p10879) target = $region136
      $region135: #{gbnn_forward.1} parent=131 // pred_region
        %s10882 = smul.u32 2, %s38
        %p10883 = scmp.lt.s32.totalorder %s10882, 3
        %s10884 = scalar_select %p10883, %s10882, 3
        %s10885 = smul.addr %s10884, 8
        %s10886 = scalar_lea.vmem %s26, %s10885
      $region136: #{gbnn_forward.1} parent=131 // pred_fallthru
        _
    $region132: #{gbnn_forward.1} parent=5 // pred_fallthru
      _
  $region6: #{gbnn_forward.1} parent=0 // loop_footer
    %s36 = sadd.s32 1, %s32
  $region7: #{gbnn_forward.1} parent=0 // loop_footer_branch
    %31 = sbr.rel target = $region3
  $region8: #{gbnn_forward.1} parent=0 // loop_exit
    _

</llo_original>
